<compile_context>
chip_gen: v5e
topology: v5e:2x2
jax: 0.10.0
libtpu: 0.0.40
codegen_flags: <defaults>
</compile_context>

<pallas_src>
import functools
import math

import jax
import jax.numpy as jnp
from jax.experimental import pallas as pl
from jax.experimental.pallas import tpu as pltpu


def _ln(z, gamma, beta, eps=1e-5):
    # PyTorch nn.LayerNorm: biased variance, eps inside sqrt
    mu = jnp.mean(z, axis=-1, keepdims=True)
    var = jnp.mean((z - mu) ** 2, axis=-1, keepdims=True)
    return (z - mu) * jax.lax.rsqrt(var + eps) * gamma + beta


def transformer_block_kernel(
    x_ref,                      # (Bt, T, D)   f32
    wqkv_ref,                   # (D, 3D)      bf16
    gq_ref, bq_ref,             # (1, hs)      f32   query layernorm
    gk_ref, bk_ref,             # (1, hs)      f32   key   layernorm
    wo_ref, bo_ref,             # (D, D) bf16, (1, D) f32   unify-heads projection
    w1_ref, b1_ref,             # (D, Dh) bf16, (1, Dh) f32
    w2_ref, b2_ref,             # (Dh, D) bf16, (1, D) f32
    g1_ref, be1_ref,            # (1, D) f32   layer_norm_attended
    g2_ref, be2_ref,            # (1, D) f32   layer_norm_transformed
    o_ref,                      # (Bt, T, D)
    *, num_heads, mlp_chunk,
):
    Bt, T, D = x_ref.shape
    hs = D // num_heads
    scale = 1.0 / math.sqrt(hs)
    M = Bt * T

    x = x_ref[...].reshape(M, D)                     # f32 rows (leading-dim merge, layout-free)
    xb = x.astype(jnp.bfloat16)

    # ---- fused QKV projection: one big MXU matmul over all Bt*T rows ----
    qkv = jnp.dot(xb, wqkv_ref[...], preferred_element_type=jnp.float32)   # (M, 3D) f32

    # hoisted K/Q layernorm params (single broadcast, shared across heads)
    gq, bq = gq_ref[...], bq_ref[...]
    gk, bk = gk_ref[...], bk_ref[...]

    # ---- multi-head attention: batched over the head axis per batch element ----
    att_rows = []
    for b in range(Bt):                              # small static loop over batch elems
        r0 = b * T
        q = qkv[r0:r0 + T, 0 * D:1 * D]              # (T, D) f32, D-aligned lane slices
        k = qkv[r0:r0 + T, 1 * D:2 * D]
        v = qkv[r0:r0 + T, 2 * D:3 * D]

        # (T, D) -> (H, T, hs): the head axis becomes a dot_general batch dim
        qh = pltpu.einshape("thd->htd", q.reshape(T, num_heads, hs))
        kh = pltpu.einshape("thd->htd", k.reshape(T, num_heads, hs))
        vh = pltpu.einshape("thd->htd", v.reshape(T, num_heads, hs))

        qh = _ln(qh, gq, bq)                         # kqnorm (LayerNorm over head dim)
        kh = _ln(kh, gk, bk)

        # scores: batched dot_general contracting last dims (no explicit .T)
        s = jnp.einsum("hqd,hkd->hqk",
                       qh.astype(jnp.bfloat16), kh.astype(jnp.bfloat16),
                       preferred_element_type=jnp.float32) * scale          # (H, T, T)
        s = s - jnp.max(s, axis=-1, keepdims=True)
        p = jnp.exp(s)
        p = p * pl.reciprocal(jnp.sum(p, axis=-1, keepdims=True), approx=True)

        ho = jnp.einsum("hqk,hkd->hqd",
                        p.astype(jnp.bfloat16), vh.astype(jnp.bfloat16),
                        preferred_element_type=jnp.float32)                 # (H, T, hs)

        # merge heads back to (T, D) with one relayout (no lane-wise concatenate)
        att_rows.append(pltpu.einshape("htd->thd", ho).reshape(T, D))

    attn = att_rows[0] if Bt == 1 else jnp.concatenate(att_rows, axis=0)    # (M, D) rows

    attended = jnp.dot(attn.astype(jnp.bfloat16), wo_ref[...],
                       preferred_element_type=jnp.float32) + bo_ref[...]

    # ---- residual + LayerNorm, hidden-chunked MLP, residual + LayerNorm ----
    x1 = _ln(x + attended, g1_ref[...], be1_ref[...])                       # (M, D) f32
    x1b = x1.astype(jnp.bfloat16)

    Dh = w1_ref.shape[1]
    n_chunks = Dh // mlp_chunk
    t = jnp.zeros((M, D), jnp.float32)
    # Chunking keeps the (M, Dh) ReLU intermediate out of VMEM; W1 column / W2 row
    # slices are taken at mlp_chunk (128-multiple) boundaries.
    for c in range(n_chunks):
        lo, hi = c * mlp_chunk, (c + 1) * mlp_chunk
        h = jnp.dot(x1b, w1_ref[:, lo:hi], preferred_element_type=jnp.float32)
        h = jnp.maximum(h + b1_ref[:, lo:hi], 0.0).astype(jnp.bfloat16)
        t = t + jnp.dot(h, w2_ref[lo:hi, :], preferred_element_type=jnp.float32)
    t = t + b2_ref[...]

    out = _ln(x1 + t, g2_ref[...], be2_ref[...])
    o_ref[...] = out.reshape(Bt, T, D).astype(o_ref.dtype)


def transformer_block(x, params, num_heads, *, batch_block=2, mlp_chunk=128):
    B, T, D = x.shape
    (wqkv, gq, bq, gk, bk, wo, bo, w1, b1, w2, b2, g1, be1, g2, be2) = params

    # Big matmul weights stored bf16 (MXU-native, half the VMEM); LN/bias stay f32.
    kernel_params = (
        wqkv.astype(jnp.bfloat16), gq, bq, gk, bk,
        wo.astype(jnp.bfloat16), bo,
        w1.astype(jnp.bfloat16), b1,
        w2.astype(jnp.bfloat16), b2,
        g1, be1, g2, be2,
    )

    Bt = batch_block if (B % batch_block == 0) else 1
    Dh = w1.shape[1]
    mc = mlp_chunk if (Dh % mlp_chunk == 0) else Dh

    def _const_spec(a):
        zeros = (0,) * a.ndim
        return pl.BlockSpec(a.shape, lambda i, _z=zeros: _z)   # grid-invariant block

    in_specs = [pl.BlockSpec((Bt, T, D), lambda i: (i, 0, 0))]
    in_specs += [_const_spec(p) for p in kernel_params]

    return pl.pallas_call(
        functools.partial(transformer_block_kernel, num_heads=num_heads, mlp_chunk=mc),
        out_shape=jax.ShapeDtypeStruct((B, T, D), x.dtype),
        grid=(B // Bt,),
        in_specs=in_specs,
        out_specs=pl.BlockSpec((Bt, T, D), lambda i: (i, 0, 0)),
        compiler_params=pltpu.CompilerParams(
            dimension_semantics=("parallel",),
            vmem_limit_bytes=64 * 1024 * 1024,
        ),
    )(x, *kernel_params)


# ---------------- pure-JAX f32 reference (for correctness check) ----------------
def reference(x, params, num_heads):
    (wqkv, gq, bq, gk, bk, wo, bo, w1, b1, w2, b2, g1, be1, g2, be2) = params
    B, T, D = x.shape
    hs = D // num_heads
    qkv = x @ wqkv
    q, k, v = qkv[..., :D], qkv[..., D:2 * D], qkv[..., 2 * D:]

    def split_heads(z):
        return z.reshape(B, T, num_heads, hs).transpose(0, 2, 1, 3)  # (B,H,T,hs)

    qh = _ln(split_heads(q), gq[0], bq[0])
    kh = _ln(split_heads(k), gk[0], bk[0])
    vh = split_heads(v)
    scores = jnp.einsum('bhtd,bhsd->bhts', qh, kh) / math.sqrt(hs)
    p = jax.nn.softmax(scores, axis=-1)
    attn = jnp.einsum('bhts,bhsd->bhtd', p, vh).transpose(0, 2, 1, 3).reshape(B, T, D)
    attended = attn @ wo + bo[0]
    x1 = _ln(x + attended, g1[0], be1[0])
    t = jnp.maximum(x1 @ w1 + b1[0], 0.0) @ w2 + b2[0]
    return _ln(x1 + t, g2[0], be2[0])


def init_params(key, D, num_heads, expansion):
    hs = D // num_heads
    ks = jax.random.split(key, 4)
    s = 0.02
    wqkv = s * jax.random.normal(ks[0], (D, 3 * D), jnp.float32)
    wo = s * jax.random.normal(ks[1], (D, D), jnp.float32)
    w1 = s * jax.random.normal(ks[2], (D, D * expansion), jnp.float32)
    w2 = s * jax.random.normal(ks[3], (D * expansion, D), jnp.float32)
    params = (
        wqkv,
        jnp.ones((1, hs), jnp.float32), jnp.zeros((1, hs), jnp.float32),   # q LN
        jnp.ones((1, hs), jnp.float32), jnp.zeros((1, hs), jnp.float32),   # k LN
        wo, jnp.zeros((1, D), jnp.float32),
        w1, jnp.zeros((1, D * expansion), jnp.float32),
        w2, jnp.zeros((1, D), jnp.float32),
        jnp.ones((1, D), jnp.float32), jnp.zeros((1, D), jnp.float32),     # LN attended
        jnp.ones((1, D), jnp.float32), jnp.zeros((1, D), jnp.float32),     # LN transformed
    )
    return params


if __name__ == "__main__":
    # small but TPU-friendly shapes: D lane-aligned (128), hs=16, hidden=256
    B, T, D = 4, 16, 128
    num_heads, expansion = 8, 2

    key = jax.random.PRNGKey(0)
    kx, kp = jax.random.split(key)
    x = jax.random.normal(kx, (B, T, D), jnp.float32)
    params = init_params(kp, D, num_heads, expansion)

    out = jax.block_until_ready(transformer_block(x, params, num_heads))
    ref = reference(x, params, num_heads)

    assert out.shape == (B, T, D)
    # bf16 MXU operands + approx reciprocal => loosened tolerance vs the f32 reference
    err = jnp.max(jnp.abs(out - ref))
    assert jnp.allclose(out, ref, atol=2.5e-2, rtol=2.5e-2), f"mismatch, max abs err={err}"

    print("KERNEL_OK")
</pallas_src>

<mosaic_0001>
module attributes {stable_mosaic.version = 11 : i64} {
  func.func @transformer_block_kernel(%arg0: i32, %arg1: memref<2x16x128xf32, #tpu.memory_space<vmem>>, %arg2: memref<128x384xbf16, #tpu.memory_space<vmem>>, %arg3: memref<1x16xf32, #tpu.memory_space<vmem>>, %arg4: memref<1x16xf32, #tpu.memory_space<vmem>>, %arg5: memref<1x16xf32, #tpu.memory_space<vmem>>, %arg6: memref<1x16xf32, #tpu.memory_space<vmem>>, %arg7: memref<128x128xbf16, #tpu.memory_space<vmem>>, %arg8: memref<1x128xf32, #tpu.memory_space<vmem>>, %arg9: memref<128x256xbf16, #tpu.memory_space<vmem>>, %arg10: memref<1x256xf32, #tpu.memory_space<vmem>>, %arg11: memref<256x128xbf16, #tpu.memory_space<vmem>>, %arg12: memref<1x128xf32, #tpu.memory_space<vmem>>, %arg13: memref<1x128xf32, #tpu.memory_space<vmem>>, %arg14: memref<1x128xf32, #tpu.memory_space<vmem>>, %arg15: memref<1x128xf32, #tpu.memory_space<vmem>>, %arg16: memref<1x128xf32, #tpu.memory_space<vmem>>, %arg17: memref<2x16x128xf32, #tpu.memory_space<vmem>>) attributes {dimension_semantics = [#tpu.dimension_semantics<parallel>], iteration_bounds = array<i64: 2>, scalar_prefetch = 0 : i64, scratch_operands = 0 : i64, tpu.core_type = #tpu.core_type<tc>, window_params = [{transform_indices = @transform_0, window_bounds = array<i64: 2, 16, 128>}, {pipeline_mode = #tpu.pipeline_mode<synchronous>, transform_indices = @transform_1, window_bounds = array<i64: 128, 384>}, {pipeline_mode = #tpu.pipeline_mode<synchronous>, transform_indices = @transform_2, window_bounds = array<i64: 1, 16>}, {pipeline_mode = #tpu.pipeline_mode<synchronous>, transform_indices = @transform_3, window_bounds = array<i64: 1, 16>}, {pipeline_mode = #tpu.pipeline_mode<synchronous>, transform_indices = @transform_4, window_bounds = array<i64: 1, 16>}, {pipeline_mode = #tpu.pipeline_mode<synchronous>, transform_indices = @transform_5, window_bounds = array<i64: 1, 16>}, {pipeline_mode = #tpu.pipeline_mode<synchronous>, transform_indices = @transform_6, window_bounds = array<i64: 128, 128>}, {pipeline_mode = #tpu.pipeline_mode<synchronous>, transform_indices = @transform_7, window_bounds = array<i64: 1, 128>}, {pipeline_mode = #tpu.pipeline_mode<synchronous>, transform_indices = @transform_8, window_bounds = array<i64: 128, 256>}, {pipeline_mode = #tpu.pipeline_mode<synchronous>, transform_indices = @transform_9, window_bounds = array<i64: 1, 256>}, {pipeline_mode = #tpu.pipeline_mode<synchronous>, transform_indices = @transform_10, window_bounds = array<i64: 256, 128>}, {pipeline_mode = #tpu.pipeline_mode<synchronous>, transform_indices = @transform_11, window_bounds = array<i64: 1, 128>}, {pipeline_mode = #tpu.pipeline_mode<synchronous>, transform_indices = @transform_12, window_bounds = array<i64: 1, 128>}, {pipeline_mode = #tpu.pipeline_mode<synchronous>, transform_indices = @transform_13, window_bounds = array<i64: 1, 128>}, {pipeline_mode = #tpu.pipeline_mode<synchronous>, transform_indices = @transform_14, window_bounds = array<i64: 1, 128>}, {pipeline_mode = #tpu.pipeline_mode<synchronous>, transform_indices = @transform_15, window_bounds = array<i64: 1, 128>}, {transform_indices = @transform_16, window_bounds = array<i64: 2, 16, 128>}]} {
    %c0 = arith.constant 0 : index
    %c0_0 = arith.constant 0 : index
    %c0_1 = arith.constant 0 : index
    %0 = vector.load %arg1[%c0, %c0_0, %c0_1] : memref<2x16x128xf32, #tpu.memory_space<vmem>>, vector<2x16x128xf32>
    %1 = vector.shape_cast %0 : vector<2x16x128xf32> to vector<32x128xf32>
    %2 = arith.truncf %1 : vector<32x128xf32> to vector<32x128xbf16>
    %c0_2 = arith.constant 0 : index
    %c0_3 = arith.constant 0 : index
    %3 = vector.load %arg2[%c0_2, %c0_3] : memref<128x384xbf16, #tpu.memory_space<vmem>>, vector<128x384xbf16>
    %cst = arith.constant dense<0.000000e+00> : vector<32x384xf32>
    %4 = tpu.matmul %2, %3, %cst {dimension_numbers = #tpu.dot_dimension_numbers<[1], [0], [0], [1], [0, 0, 1, 1], [], []>} : vector<32x128xbf16>, vector<128x384xbf16>, vector<32x384xf32> -> vector<32x384xf32>
    %c0_4 = arith.constant 0 : index
    %c0_5 = arith.constant 0 : index
    %5 = vector.load %arg3[%c0_4, %c0_5] : memref<1x16xf32, #tpu.memory_space<vmem>>, vector<1x16xf32>
    %c0_6 = arith.constant 0 : index
    %c0_7 = arith.constant 0 : index
    %6 = vector.load %arg4[%c0_6, %c0_7] : memref<1x16xf32, #tpu.memory_space<vmem>>, vector<1x16xf32>
    %c0_8 = arith.constant 0 : index
    %c0_9 = arith.constant 0 : index
    %7 = vector.load %arg5[%c0_8, %c0_9] : memref<1x16xf32, #tpu.memory_space<vmem>>, vector<1x16xf32>
    %c0_10 = arith.constant 0 : index
    %c0_11 = arith.constant 0 : index
    %8 = vector.load %arg6[%c0_10, %c0_11] : memref<1x16xf32, #tpu.memory_space<vmem>>, vector<1x16xf32>
    %9 = vector.extract_strided_slice %4 {offsets = [0, 0], sizes = [16, 128], strides = [1, 1]} : vector<32x384xf32> to vector<16x128xf32>
    %10 = vector.extract_strided_slice %4 {offsets = [0, 128], sizes = [16, 128], strides = [1, 1]} : vector<32x384xf32> to vector<16x128xf32>
    %11 = vector.extract_strided_slice %4 {offsets = [0, 256], sizes = [16, 128], strides = [1, 1]} : vector<32x384xf32> to vector<16x128xf32>
    %12 = vector.shape_cast %9 : vector<16x128xf32> to vector<16x8x16xf32>
    %13 = tpu.transpose %12, [1, 0, 2] : vector<16x8x16xf32> -> vector<8x16x16xf32>
    %14 = vector.shape_cast %10 : vector<16x128xf32> to vector<16x8x16xf32>
    %15 = tpu.transpose %14, [1, 0, 2] : vector<16x8x16xf32> -> vector<8x16x16xf32>
    %16 = vector.shape_cast %11 : vector<16x128xf32> to vector<16x8x16xf32>
    %17 = tpu.transpose %16, [1, 0, 2] : vector<16x8x16xf32> -> vector<8x16x16xf32>
    %cst_12 = arith.constant dense<0.000000e+00> : vector<8x16xf32>
    %18 = vector.multi_reduction <add>, %13, %cst_12 [2] : vector<8x16x16xf32> to vector<8x16xf32>
    %19 = vector.shape_cast %18 : vector<8x16xf32> to vector<8x16x1xf32>
    %cst_13 = arith.constant 1.600000e+01 : f32
    %20 = vector.broadcast %cst_13 : f32 to vector<8x16x1xf32>
    %21 = arith.divf %19, %20 : vector<8x16x1xf32>
    %22 = vector.broadcast %21 : vector<8x16x1xf32> to vector<8x16x16xf32>
    %23 = arith.subf %13, %22 : vector<8x16x16xf32>
    %24 = arith.mulf %23, %23 : vector<8x16x16xf32>
    %cst_14 = arith.constant dense<0.000000e+00> : vector<8x16xf32>
    %25 = vector.multi_reduction <add>, %24, %cst_14 [2] : vector<8x16x16xf32> to vector<8x16xf32>
    %26 = vector.shape_cast %25 : vector<8x16xf32> to vector<8x16x1xf32>
    %cst_15 = arith.constant 1.600000e+01 : f32
    %27 = vector.broadcast %cst_15 : f32 to vector<8x16x1xf32>
    %28 = arith.divf %26, %27 : vector<8x16x1xf32>
    %29 = vector.broadcast %21 : vector<8x16x1xf32> to vector<8x16x16xf32>
    %30 = arith.subf %13, %29 : vector<8x16x16xf32>
    %cst_16 = arith.constant 9.99999974E-6 : f32
    %31 = vector.broadcast %cst_16 : f32 to vector<8x16x1xf32>
    %32 = arith.addf %28, %31 : vector<8x16x1xf32>
    %33 = math.rsqrt %32 : vector<8x16x1xf32>
    %34 = vector.broadcast %33 : vector<8x16x1xf32> to vector<8x16x16xf32>
    %35 = arith.mulf %30, %34 : vector<8x16x16xf32>
    %36 = vector.shape_cast %5 : vector<1x16xf32> to vector<1x1x16xf32>
    %37 = vector.broadcast %36 : vector<1x1x16xf32> to vector<8x16x16xf32>
    %38 = arith.mulf %35, %37 : vector<8x16x16xf32>
    %39 = vector.shape_cast %6 : vector<1x16xf32> to vector<1x1x16xf32>
    %40 = vector.broadcast %39 : vector<1x1x16xf32> to vector<8x16x16xf32>
    %41 = arith.addf %38, %40 : vector<8x16x16xf32>
    %cst_17 = arith.constant dense<0.000000e+00> : vector<8x16xf32>
    %42 = vector.multi_reduction <add>, %15, %cst_17 [2] : vector<8x16x16xf32> to vector<8x16xf32>
    %43 = vector.shape_cast %42 : vector<8x16xf32> to vector<8x16x1xf32>
    %cst_18 = arith.constant 1.600000e+01 : f32
    %44 = vector.broadcast %cst_18 : f32 to vector<8x16x1xf32>
    %45 = arith.divf %43, %44 : vector<8x16x1xf32>
    %46 = vector.broadcast %45 : vector<8x16x1xf32> to vector<8x16x16xf32>
    %47 = arith.subf %15, %46 : vector<8x16x16xf32>
    %48 = arith.mulf %47, %47 : vector<8x16x16xf32>
    %cst_19 = arith.constant dense<0.000000e+00> : vector<8x16xf32>
    %49 = vector.multi_reduction <add>, %48, %cst_19 [2] : vector<8x16x16xf32> to vector<8x16xf32>
    %50 = vector.shape_cast %49 : vector<8x16xf32> to vector<8x16x1xf32>
    %cst_20 = arith.constant 1.600000e+01 : f32
    %51 = vector.broadcast %cst_20 : f32 to vector<8x16x1xf32>
    %52 = arith.divf %50, %51 : vector<8x16x1xf32>
    %53 = vector.broadcast %45 : vector<8x16x1xf32> to vector<8x16x16xf32>
    %54 = arith.subf %15, %53 : vector<8x16x16xf32>
    %cst_21 = arith.constant 9.99999974E-6 : f32
    %55 = vector.broadcast %cst_21 : f32 to vector<8x16x1xf32>
    %56 = arith.addf %52, %55 : vector<8x16x1xf32>
    %57 = math.rsqrt %56 : vector<8x16x1xf32>
    %58 = vector.broadcast %57 : vector<8x16x1xf32> to vector<8x16x16xf32>
    %59 = arith.mulf %54, %58 : vector<8x16x16xf32>
    %60 = vector.shape_cast %7 : vector<1x16xf32> to vector<1x1x16xf32>
    %61 = vector.broadcast %60 : vector<1x1x16xf32> to vector<8x16x16xf32>
    %62 = arith.mulf %59, %61 : vector<8x16x16xf32>
    %63 = vector.shape_cast %8 : vector<1x16xf32> to vector<1x1x16xf32>
    %64 = vector.broadcast %63 : vector<1x1x16xf32> to vector<8x16x16xf32>
    %65 = arith.addf %62, %64 : vector<8x16x16xf32>
    %66 = arith.truncf %41 : vector<8x16x16xf32> to vector<8x16x16xbf16>
    %67 = arith.truncf %65 : vector<8x16x16xf32> to vector<8x16x16xbf16>
    "tpu.trace_start"() <{level = 10 : i32, message = "hqd,hkd->hqk"}> : () -> ()
    %cst_22 = arith.constant dense<0.000000e+00> : vector<8x16x16xf32>
    %68 = tpu.matmul %66, %67, %cst_22 {dimension_numbers = #tpu.dot_dimension_numbers<[2], [2], [1], [1], [0, 0, 0, 1, 1, 1], [0], [0]>} : vector<8x16x16xbf16>, vector<8x16x16xbf16>, vector<8x16x16xf32> -> vector<8x16x16xf32>
    "tpu.trace_stop"() : () -> ()
    %cst_23 = arith.constant 2.500000e-01 : f32
    %69 = vector.broadcast %cst_23 : f32 to vector<8x16x16xf32>
    %70 = arith.mulf %68, %69 : vector<8x16x16xf32>
    %cst_24 = arith.constant dense<0xFF800000> : vector<8x16xf32>
    %71 = vector.multi_reduction <maximumf>, %70, %cst_24 [2] : vector<8x16x16xf32> to vector<8x16xf32>
    %72 = vector.shape_cast %71 : vector<8x16xf32> to vector<8x16x1xf32>
    %73 = vector.broadcast %72 : vector<8x16x1xf32> to vector<8x16x16xf32>
    %74 = arith.subf %70, %73 : vector<8x16x16xf32>
    %75 = math.exp %74 : vector<8x16x16xf32>
    %cst_25 = arith.constant dense<0.000000e+00> : vector<8x16xf32>
    %76 = vector.multi_reduction <add>, %75, %cst_25 [2] : vector<8x16x16xf32> to vector<8x16xf32>
    %77 = vector.shape_cast %76 : vector<8x16xf32> to vector<8x16x1xf32>
    %78 = tpu.reciprocal %77 {approx = true} : vector<8x16x1xf32> -> vector<8x16x1xf32>
    %79 = vector.broadcast %78 : vector<8x16x1xf32> to vector<8x16x16xf32>
    %80 = arith.mulf %75, %79 : vector<8x16x16xf32>
    %81 = arith.truncf %80 : vector<8x16x16xf32> to vector<8x16x16xbf16>
    %82 = arith.truncf %17 : vector<8x16x16xf32> to vector<8x16x16xbf16>
    "tpu.trace_start"() <{level = 10 : i32, message = "hqk,hkd->hqd"}> : () -> ()
    %cst_26 = arith.constant dense<0.000000e+00> : vector<8x16x16xf32>
    %83 = tpu.matmul %81, %82, %cst_26 {dimension_numbers = #tpu.dot_dimension_numbers<[2], [1], [1], [2], [0, 0, 0, 1, 1, 2], [0], [0]>} : vector<8x16x16xbf16>, vector<8x16x16xbf16>, vector<8x16x16xf32> -> vector<8x16x16xf32>
    "tpu.trace_stop"() : () -> ()
    %84 = tpu.transpose %83, [1, 0, 2] : vector<8x16x16xf32> -> vector<16x8x16xf32>
    %85 = vector.shape_cast %84 : vector<16x8x16xf32> to vector<16x128xf32>
    %86 = vector.extract_strided_slice %4 {offsets = [16, 0], sizes = [16, 128], strides = [1, 1]} : vector<32x384xf32> to vector<16x128xf32>
    %87 = vector.extract_strided_slice %4 {offsets = [16, 128], sizes = [16, 128], strides = [1, 1]} : vector<32x384xf32> to vector<16x128xf32>
    %88 = vector.extract_strided_slice %4 {offsets = [16, 256], sizes = [16, 128], strides = [1, 1]} : vector<32x384xf32> to vector<16x128xf32>
    %89 = vector.shape_cast %86 : vector<16x128xf32> to vector<16x8x16xf32>
    %90 = tpu.transpose %89, [1, 0, 2] : vector<16x8x16xf32> -> vector<8x16x16xf32>
    %91 = vector.shape_cast %87 : vector<16x128xf32> to vector<16x8x16xf32>
    %92 = tpu.transpose %91, [1, 0, 2] : vector<16x8x16xf32> -> vector<8x16x16xf32>
    %93 = vector.shape_cast %88 : vector<16x128xf32> to vector<16x8x16xf32>
    %94 = tpu.transpose %93, [1, 0, 2] : vector<16x8x16xf32> -> vector<8x16x16xf32>
    %cst_27 = arith.constant dense<0.000000e+00> : vector<8x16xf32>
    %95 = vector.multi_reduction <add>, %90, %cst_27 [2] : vector<8x16x16xf32> to vector<8x16xf32>
    %96 = vector.shape_cast %95 : vector<8x16xf32> to vector<8x16x1xf32>
    %cst_28 = arith.constant 1.600000e+01 : f32
    %97 = vector.broadcast %cst_28 : f32 to vector<8x16x1xf32>
    %98 = arith.divf %96, %97 : vector<8x16x1xf32>
    %99 = vector.broadcast %98 : vector<8x16x1xf32> to vector<8x16x16xf32>
    %100 = arith.subf %90, %99 : vector<8x16x16xf32>
    %101 = arith.mulf %100, %100 : vector<8x16x16xf32>
    %cst_29 = arith.constant dense<0.000000e+00> : vector<8x16xf32>
    %102 = vector.multi_reduction <add>, %101, %cst_29 [2] : vector<8x16x16xf32> to vector<8x16xf32>
    %103 = vector.shape_cast %102 : vector<8x16xf32> to vector<8x16x1xf32>
    %cst_30 = arith.constant 1.600000e+01 : f32
    %104 = vector.broadcast %cst_30 : f32 to vector<8x16x1xf32>
    %105 = arith.divf %103, %104 : vector<8x16x1xf32>
    %106 = vector.broadcast %98 : vector<8x16x1xf32> to vector<8x16x16xf32>
    %107 = arith.subf %90, %106 : vector<8x16x16xf32>
    %cst_31 = arith.constant 9.99999974E-6 : f32
    %108 = vector.broadcast %cst_31 : f32 to vector<8x16x1xf32>
    %109 = arith.addf %105, %108 : vector<8x16x1xf32>
    %110 = math.rsqrt %109 : vector<8x16x1xf32>
    %111 = vector.broadcast %110 : vector<8x16x1xf32> to vector<8x16x16xf32>
    %112 = arith.mulf %107, %111 : vector<8x16x16xf32>
    %113 = vector.shape_cast %5 : vector<1x16xf32> to vector<1x1x16xf32>
    %114 = vector.broadcast %113 : vector<1x1x16xf32> to vector<8x16x16xf32>
    %115 = arith.mulf %112, %114 : vector<8x16x16xf32>
    %116 = vector.shape_cast %6 : vector<1x16xf32> to vector<1x1x16xf32>
    %117 = vector.broadcast %116 : vector<1x1x16xf32> to vector<8x16x16xf32>
    %118 = arith.addf %115, %117 : vector<8x16x16xf32>
    %cst_32 = arith.constant dense<0.000000e+00> : vector<8x16xf32>
    %119 = vector.multi_reduction <add>, %92, %cst_32 [2] : vector<8x16x16xf32> to vector<8x16xf32>
    %120 = vector.shape_cast %119 : vector<8x16xf32> to vector<8x16x1xf32>
    %cst_33 = arith.constant 1.600000e+01 : f32
    %121 = vector.broadcast %cst_33 : f32 to vector<8x16x1xf32>
    %122 = arith.divf %120, %121 : vector<8x16x1xf32>
    %123 = vector.broadcast %122 : vector<8x16x1xf32> to vector<8x16x16xf32>
    %124 = arith.subf %92, %123 : vector<8x16x16xf32>
    %125 = arith.mulf %124, %124 : vector<8x16x16xf32>
    %cst_34 = arith.constant dense<0.000000e+00> : vector<8x16xf32>
    %126 = vector.multi_reduction <add>, %125, %cst_34 [2] : vector<8x16x16xf32> to vector<8x16xf32>
    %127 = vector.shape_cast %126 : vector<8x16xf32> to vector<8x16x1xf32>
    %cst_35 = arith.constant 1.600000e+01 : f32
    %128 = vector.broadcast %cst_35 : f32 to vector<8x16x1xf32>
    %129 = arith.divf %127, %128 : vector<8x16x1xf32>
    %130 = vector.broadcast %122 : vector<8x16x1xf32> to vector<8x16x16xf32>
    %131 = arith.subf %92, %130 : vector<8x16x16xf32>
    %cst_36 = arith.constant 9.99999974E-6 : f32
    %132 = vector.broadcast %cst_36 : f32 to vector<8x16x1xf32>
    %133 = arith.addf %129, %132 : vector<8x16x1xf32>
    %134 = math.rsqrt %133 : vector<8x16x1xf32>
    %135 = vector.broadcast %134 : vector<8x16x1xf32> to vector<8x16x16xf32>
    %136 = arith.mulf %131, %135 : vector<8x16x16xf32>
    %137 = vector.shape_cast %7 : vector<1x16xf32> to vector<1x1x16xf32>
    %138 = vector.broadcast %137 : vector<1x1x16xf32> to vector<8x16x16xf32>
    %139 = arith.mulf %136, %138 : vector<8x16x16xf32>
    %140 = vector.shape_cast %8 : vector<1x16xf32> to vector<1x1x16xf32>
    %141 = vector.broadcast %140 : vector<1x1x16xf32> to vector<8x16x16xf32>
    %142 = arith.addf %139, %141 : vector<8x16x16xf32>
    %143 = arith.truncf %118 : vector<8x16x16xf32> to vector<8x16x16xbf16>
    %144 = arith.truncf %142 : vector<8x16x16xf32> to vector<8x16x16xbf16>
    "tpu.trace_start"() <{level = 10 : i32, message = "hqd,hkd->hqk"}> : () -> ()
    %cst_37 = arith.constant dense<0.000000e+00> : vector<8x16x16xf32>
    %145 = tpu.matmul %143, %144, %cst_37 {dimension_numbers = #tpu.dot_dimension_numbers<[2], [2], [1], [1], [0, 0, 0, 1, 1, 1], [0], [0]>} : vector<8x16x16xbf16>, vector<8x16x16xbf16>, vector<8x16x16xf32> -> vector<8x16x16xf32>
    "tpu.trace_stop"() : () -> ()
    %cst_38 = arith.constant 2.500000e-01 : f32
    %146 = vector.broadcast %cst_38 : f32 to vector<8x16x16xf32>
    %147 = arith.mulf %145, %146 : vector<8x16x16xf32>
    %cst_39 = arith.constant dense<0xFF800000> : vector<8x16xf32>
    %148 = vector.multi_reduction <maximumf>, %147, %cst_39 [2] : vector<8x16x16xf32> to vector<8x16xf32>
    %149 = vector.shape_cast %148 : vector<8x16xf32> to vector<8x16x1xf32>
    %150 = vector.broadcast %149 : vector<8x16x1xf32> to vector<8x16x16xf32>
    %151 = arith.subf %147, %150 : vector<8x16x16xf32>
    %152 = math.exp %151 : vector<8x16x16xf32>
    %cst_40 = arith.constant dense<0.000000e+00> : vector<8x16xf32>
    %153 = vector.multi_reduction <add>, %152, %cst_40 [2] : vector<8x16x16xf32> to vector<8x16xf32>
    %154 = vector.shape_cast %153 : vector<8x16xf32> to vector<8x16x1xf32>
    %155 = tpu.reciprocal %154 {approx = true} : vector<8x16x1xf32> -> vector<8x16x1xf32>
    %156 = vector.broadcast %155 : vector<8x16x1xf32> to vector<8x16x16xf32>
    %157 = arith.mulf %152, %156 : vector<8x16x16xf32>
    %158 = arith.truncf %157 : vector<8x16x16xf32> to vector<8x16x16xbf16>
    %159 = arith.truncf %94 : vector<8x16x16xf32> to vector<8x16x16xbf16>
    "tpu.trace_start"() <{level = 10 : i32, message = "hqk,hkd->hqd"}> : () -> ()
    %cst_41 = arith.constant dense<0.000000e+00> : vector<8x16x16xf32>
    %160 = tpu.matmul %158, %159, %cst_41 {dimension_numbers = #tpu.dot_dimension_numbers<[2], [1], [1], [2], [0, 0, 0, 1, 1, 2], [0], [0]>} : vector<8x16x16xbf16>, vector<8x16x16xbf16>, vector<8x16x16xf32> -> vector<8x16x16xf32>
    "tpu.trace_stop"() : () -> ()
    %161 = tpu.transpose %160, [1, 0, 2] : vector<8x16x16xf32> -> vector<16x8x16xf32>
    %162 = vector.shape_cast %161 : vector<16x8x16xf32> to vector<16x128xf32>
    %163 = tpu.concatenate %85, %162 in 0 : vector<16x128xf32>, vector<16x128xf32> -> vector<32x128xf32>
    %164 = arith.truncf %163 : vector<32x128xf32> to vector<32x128xbf16>
    %c0_42 = arith.constant 0 : index
    %c0_43 = arith.constant 0 : index
    %165 = vector.load %arg7[%c0_42, %c0_43] : memref<128x128xbf16, #tpu.memory_space<vmem>>, vector<128x128xbf16>
    %cst_44 = arith.constant dense<0.000000e+00> : vector<32x128xf32>
    %166 = tpu.matmul %164, %165, %cst_44 {dimension_numbers = #tpu.dot_dimension_numbers<[1], [0], [0], [1], [0, 0, 1, 1], [], []>} : vector<32x128xbf16>, vector<128x128xbf16>, vector<32x128xf32> -> vector<32x128xf32>
    %c0_45 = arith.constant 0 : index
    %c0_46 = arith.constant 0 : index
    %167 = vector.load %arg8[%c0_45, %c0_46] : memref<1x128xf32, #tpu.memory_space<vmem>>, vector<1x128xf32>
    %168 = vector.broadcast %167 : vector<1x128xf32> to vector<32x128xf32>
    %169 = arith.addf %166, %168 : vector<32x128xf32>
    %170 = arith.addf %1, %169 : vector<32x128xf32>
    %c0_47 = arith.constant 0 : index
    %c0_48 = arith.constant 0 : index
    %171 = vector.load %arg13[%c0_47, %c0_48] : memref<1x128xf32, #tpu.memory_space<vmem>>, vector<1x128xf32>
    %c0_49 = arith.constant 0 : index
    %c0_50 = arith.constant 0 : index
    %172 = vector.load %arg14[%c0_49, %c0_50] : memref<1x128xf32, #tpu.memory_space<vmem>>, vector<1x128xf32>
    %cst_51 = arith.constant dense<0.000000e+00> : vector<32xf32>
    %173 = vector.multi_reduction <add>, %170, %cst_51 [1] : vector<32x128xf32> to vector<32xf32>
    %174 = vector.shape_cast %173 : vector<32xf32> to vector<32x1xf32>
    %cst_52 = arith.constant 1.280000e+02 : f32
    %175 = vector.broadcast %cst_52 : f32 to vector<32x1xf32>
    %176 = arith.divf %174, %175 : vector<32x1xf32>
    %177 = vector.broadcast %176 : vector<32x1xf32> to vector<32x128xf32>
    %178 = arith.subf %170, %177 : vector<32x128xf32>
    %179 = arith.mulf %178, %178 : vector<32x128xf32>
    %cst_53 = arith.constant dense<0.000000e+00> : vector<32xf32>
    %180 = vector.multi_reduction <add>, %179, %cst_53 [1] : vector<32x128xf32> to vector<32xf32>
    %181 = vector.shape_cast %180 : vector<32xf32> to vector<32x1xf32>
    %cst_54 = arith.constant 1.280000e+02 : f32
    %182 = vector.broadcast %cst_54 : f32 to vector<32x1xf32>
    %183 = arith.divf %181, %182 : vector<32x1xf32>
    %184 = vector.broadcast %176 : vector<32x1xf32> to vector<32x128xf32>
    %185 = arith.subf %170, %184 : vector<32x128xf32>
    %cst_55 = arith.constant 9.99999974E-6 : f32
    %186 = vector.broadcast %cst_55 : f32 to vector<32x1xf32>
    %187 = arith.addf %183, %186 : vector<32x1xf32>
    %188 = math.rsqrt %187 : vector<32x1xf32>
    %189 = vector.broadcast %188 : vector<32x1xf32> to vector<32x128xf32>
    %190 = arith.mulf %185, %189 : vector<32x128xf32>
    %191 = vector.broadcast %171 : vector<1x128xf32> to vector<32x128xf32>
    %192 = arith.mulf %190, %191 : vector<32x128xf32>
    %193 = vector.broadcast %172 : vector<1x128xf32> to vector<32x128xf32>
    %194 = arith.addf %192, %193 : vector<32x128xf32>
    %195 = arith.truncf %194 : vector<32x128xf32> to vector<32x128xbf16>
    %cst_56 = arith.constant 0.000000e+00 : f32
    %196 = vector.broadcast %cst_56 : f32 to vector<32x128xf32>
    %c0_57 = arith.constant 0 : index
    %c0_58 = arith.constant 0 : index
    %197 = vector.load %arg9[%c0_57, %c0_58] : memref<128x256xbf16, #tpu.memory_space<vmem>>, vector<128x128xbf16>
    %cst_59 = arith.constant dense<0.000000e+00> : vector<32x128xf32>
    %198 = tpu.matmul %195, %197, %cst_59 {dimension_numbers = #tpu.dot_dimension_numbers<[1], [0], [0], [1], [0, 0, 1, 1], [], []>} : vector<32x128xbf16>, vector<128x128xbf16>, vector<32x128xf32> -> vector<32x128xf32>
    %c0_60 = arith.constant 0 : index
    %c0_61 = arith.constant 0 : index
    %199 = vector.load %arg10[%c0_60, %c0_61] : memref<1x256xf32, #tpu.memory_space<vmem>>, vector<1x128xf32>
    %200 = vector.broadcast %199 : vector<1x128xf32> to vector<32x128xf32>
    %201 = arith.addf %198, %200 : vector<32x128xf32>
    %cst_62 = arith.constant 0.000000e+00 : f32
    %202 = vector.broadcast %cst_62 : f32 to vector<32x128xf32>
    %203 = arith.maximumf %201, %202 : vector<32x128xf32>
    %204 = arith.truncf %203 : vector<32x128xf32> to vector<32x128xbf16>
    %c0_63 = arith.constant 0 : index
    %c0_64 = arith.constant 0 : index
    %205 = vector.load %arg11[%c0_63, %c0_64] : memref<256x128xbf16, #tpu.memory_space<vmem>>, vector<128x128xbf16>
    %cst_65 = arith.constant dense<0.000000e+00> : vector<32x128xf32>
    %206 = tpu.matmul %204, %205, %cst_65 {dimension_numbers = #tpu.dot_dimension_numbers<[1], [0], [0], [1], [0, 0, 1, 1], [], []>} : vector<32x128xbf16>, vector<128x128xbf16>, vector<32x128xf32> -> vector<32x128xf32>
    %207 = arith.addf %196, %206 : vector<32x128xf32>
    %c0_66 = arith.constant 0 : index
    %c128 = arith.constant 128 : index
    %208 = vector.load %arg9[%c0_66, %c128] : memref<128x256xbf16, #tpu.memory_space<vmem>>, vector<128x128xbf16>
    %cst_67 = arith.constant dense<0.000000e+00> : vector<32x128xf32>
    %209 = tpu.matmul %195, %208, %cst_67 {dimension_numbers = #tpu.dot_dimension_numbers<[1], [0], [0], [1], [0, 0, 1, 1], [], []>} : vector<32x128xbf16>, vector<128x128xbf16>, vector<32x128xf32> -> vector<32x128xf32>
    %c0_68 = arith.constant 0 : index
    %c128_69 = arith.constant 128 : index
    %210 = vector.load %arg10[%c0_68, %c128_69] : memref<1x256xf32, #tpu.memory_space<vmem>>, vector<1x128xf32>
    %211 = vector.broadcast %210 : vector<1x128xf32> to vector<32x128xf32>
    %212 = arith.addf %209, %211 : vector<32x128xf32>
    %cst_70 = arith.constant 0.000000e+00 : f32
    %213 = vector.broadcast %cst_70 : f32 to vector<32x128xf32>
    %214 = arith.maximumf %212, %213 : vector<32x128xf32>
    %215 = arith.truncf %214 : vector<32x128xf32> to vector<32x128xbf16>
    %c128_71 = arith.constant 128 : index
    %c0_72 = arith.constant 0 : index
    %216 = vector.load %arg11[%c128_71, %c0_72] : memref<256x128xbf16, #tpu.memory_space<vmem>>, vector<128x128xbf16>
    %cst_73 = arith.constant dense<0.000000e+00> : vector<32x128xf32>
    %217 = tpu.matmul %215, %216, %cst_73 {dimension_numbers = #tpu.dot_dimension_numbers<[1], [0], [0], [1], [0, 0, 1, 1], [], []>} : vector<32x128xbf16>, vector<128x128xbf16>, vector<32x128xf32> -> vector<32x128xf32>
    %218 = arith.addf %207, %217 : vector<32x128xf32>
    %c0_74 = arith.constant 0 : index
    %c0_75 = arith.constant 0 : index
    %219 = vector.load %arg12[%c0_74, %c0_75] : memref<1x128xf32, #tpu.memory_space<vmem>>, vector<1x128xf32>
    %220 = vector.broadcast %219 : vector<1x128xf32> to vector<32x128xf32>
    %221 = arith.addf %218, %220 : vector<32x128xf32>
    %222 = arith.addf %194, %221 : vector<32x128xf32>
    %c0_76 = arith.constant 0 : index
    %c0_77 = arith.constant 0 : index
    %223 = vector.load %arg15[%c0_76, %c0_77] : memref<1x128xf32, #tpu.memory_space<vmem>>, vector<1x128xf32>
    %c0_78 = arith.constant 0 : index
    %c0_79 = arith.constant 0 : index
    %224 = vector.load %arg16[%c0_78, %c0_79] : memref<1x128xf32, #tpu.memory_space<vmem>>, vector<1x128xf32>
    %cst_80 = arith.constant dense<0.000000e+00> : vector<32xf32>
    %225 = vector.multi_reduction <add>, %222, %cst_80 [1] : vector<32x128xf32> to vector<32xf32>
    %226 = vector.shape_cast %225 : vector<32xf32> to vector<32x1xf32>
    %cst_81 = arith.constant 1.280000e+02 : f32
    %227 = vector.broadcast %cst_81 : f32 to vector<32x1xf32>
    %228 = arith.divf %226, %227 : vector<32x1xf32>
    %229 = vector.broadcast %228 : vector<32x1xf32> to vector<32x128xf32>
    %230 = arith.subf %222, %229 : vector<32x128xf32>
    %231 = arith.mulf %230, %230 : vector<32x128xf32>
    %cst_82 = arith.constant dense<0.000000e+00> : vector<32xf32>
    %232 = vector.multi_reduction <add>, %231, %cst_82 [1] : vector<32x128xf32> to vector<32xf32>
    %233 = vector.shape_cast %232 : vector<32xf32> to vector<32x1xf32>
    %cst_83 = arith.constant 1.280000e+02 : f32
    %234 = vector.broadcast %cst_83 : f32 to vector<32x1xf32>
    %235 = arith.divf %233, %234 : vector<32x1xf32>
    %236 = vector.broadcast %228 : vector<32x1xf32> to vector<32x128xf32>
    %237 = arith.subf %222, %236 : vector<32x128xf32>
    %cst_84 = arith.constant 9.99999974E-6 : f32
    %238 = vector.broadcast %cst_84 : f32 to vector<32x1xf32>
    %239 = arith.addf %235, %238 : vector<32x1xf32>
    %240 = math.rsqrt %239 : vector<32x1xf32>
    %241 = vector.broadcast %240 : vector<32x1xf32> to vector<32x128xf32>
    %242 = arith.mulf %237, %241 : vector<32x128xf32>
    %243 = vector.broadcast %223 : vector<1x128xf32> to vector<32x128xf32>
    %244 = arith.mulf %242, %243 : vector<32x128xf32>
    %245 = vector.broadcast %224 : vector<1x128xf32> to vector<32x128xf32>
    %246 = arith.addf %244, %245 : vector<32x128xf32>
    %247 = vector.shape_cast %246 : vector<32x128xf32> to vector<2x16x128xf32>
    %c0_85 = arith.constant 0 : index
    %c0_86 = arith.constant 0 : index
    %c0_87 = arith.constant 0 : index
    %248 = vector.load %arg17[%c0_85, %c0_86, %c0_87] : memref<2x16x128xf32, #tpu.memory_space<vmem>>, vector<2x16x128xf32>
    tpu.vector_store %arg17[%c0_85, %c0_86, %c0_87], %247 {strides = array<i32>} : memref<2x16x128xf32, #tpu.memory_space<vmem>>, vector<2x16x128xf32>,
    return
  }
  func.func @transform_0(%arg0: i32) -> (i32, i32, i32) {
    %c0_i32 = arith.constant 0 : i32
    %c0_i32_0 = arith.constant 0 : i32
    %c0_i32_1 = arith.constant 0 : i32
    return %arg0, %c0_i32, %c0_i32_0 : i32, i32, i32
  }
  func.func @transform_1(%arg0: i32) -> (i32, i32) {
    %c0_i32 = arith.constant 0 : i32
    %c0_i32_0 = arith.constant 0 : i32
    %c0_i32_1 = arith.constant 0 : i32
    return %c0_i32, %c0_i32_0 : i32, i32
  }
  func.func @transform_2(%arg0: i32) -> (i32, i32) {
    %c0_i32 = arith.constant 0 : i32
    %c0_i32_0 = arith.constant 0 : i32
    %c0_i32_1 = arith.constant 0 : i32
    return %c0_i32, %c0_i32_0 : i32, i32
  }
  func.func @transform_3(%arg0: i32) -> (i32, i32) {
    %c0_i32 = arith.constant 0 : i32
    %c0_i32_0 = arith.constant 0 : i32
    %c0_i32_1 = arith.constant 0 : i32
    return %c0_i32, %c0_i32_0 : i32, i32
  }
  func.func @transform_4(%arg0: i32) -> (i32, i32) {
    %c0_i32 = arith.constant 0 : i32
    %c0_i32_0 = arith.constant 0 : i32
    %c0_i32_1 = arith.constant 0 : i32
    return %c0_i32, %c0_i32_0 : i32, i32
  }
  func.func @transform_5(%arg0: i32) -> (i32, i32) {
    %c0_i32 = arith.constant 0 : i32
    %c0_i32_0 = arith.constant 0 : i32
    %c0_i32_1 = arith.constant 0 : i32
    return %c0_i32, %c0_i32_0 : i32, i32
  }
  func.func @transform_6(%arg0: i32) -> (i32, i32) {
    %c0_i32 = arith.constant 0 : i32
    %c0_i32_0 = arith.constant 0 : i32
    %c0_i32_1 = arith.constant 0 : i32
    return %c0_i32, %c0_i32_0 : i32, i32
  }
  func.func @transform_7(%arg0: i32) -> (i32, i32) {
    %c0_i32 = arith.constant 0 : i32
    %c0_i32_0 = arith.constant 0 : i32
    %c0_i32_1 = arith.constant 0 : i32
    return %c0_i32, %c0_i32_0 : i32, i32
  }
  func.func @transform_8(%arg0: i32) -> (i32, i32) {
    %c0_i32 = arith.constant 0 : i32
    %c0_i32_0 = arith.constant 0 : i32
    %c0_i32_1 = arith.constant 0 : i32
    return %c0_i32, %c0_i32_0 : i32, i32
  }
  func.func @transform_9(%arg0: i32) -> (i32, i32) {
    %c0_i32 = arith.constant 0 : i32
    %c0_i32_0 = arith.constant 0 : i32
    %c0_i32_1 = arith.constant 0 : i32
    return %c0_i32, %c0_i32_0 : i32, i32
  }
  func.func @transform_10(%arg0: i32) -> (i32, i32) {
    %c0_i32 = arith.constant 0 : i32
    %c0_i32_0 = arith.constant 0 : i32
    %c0_i32_1 = arith.constant 0 : i32
    return %c0_i32, %c0_i32_0 : i32, i32
  }
  func.func @transform_11(%arg0: i32) -> (i32, i32) {
    %c0_i32 = arith.constant 0 : i32
    %c0_i32_0 = arith.constant 0 : i32
    %c0_i32_1 = arith.constant 0 : i32
    return %c0_i32, %c0_i32_0 : i32, i32
  }
  func.func @transform_12(%arg0: i32) -> (i32, i32) {
    %c0_i32 = arith.constant 0 : i32
    %c0_i32_0 = arith.constant 0 : i32
    %c0_i32_1 = arith.constant 0 : i32
    return %c0_i32, %c0_i32_0 : i32, i32
  }
  func.func @transform_13(%arg0: i32) -> (i32, i32) {
    %c0_i32 = arith.constant 0 : i32
    %c0_i32_0 = arith.constant 0 : i32
    %c0_i32_1 = arith.constant 0 : i32
    return %c0_i32, %c0_i32_0 : i32, i32
  }
  func.func @transform_14(%arg0: i32) -> (i32, i32) {
    %c0_i32 = arith.constant 0 : i32
    %c0_i32_0 = arith.constant 0 : i32
    %c0_i32_1 = arith.constant 0 : i32
    return %c0_i32, %c0_i32_0 : i32, i32
  }
  func.func @transform_15(%arg0: i32) -> (i32, i32) {
    %c0_i32 = arith.constant 0 : i32
    %c0_i32_0 = arith.constant 0 : i32
    %c0_i32_1 = arith.constant 0 : i32
    return %c0_i32, %c0_i32_0 : i32, i32
  }
  func.func @transform_16(%arg0: i32) -> (i32, i32, i32) {
    %c0_i32 = arith.constant 0 : i32
    %c0_i32_0 = arith.constant 0 : i32
    %c0_i32_1 = arith.constant 0 : i32
    return %arg0, %c0_i32, %c0_i32_0 : i32, i32, i32
  }
}

</mosaic_0001>

<llo_original>
// kernel: tpu_custom_call.1
$region0: #{tpu_custom_call.1}
  #allocation0 [shape = 'u32[]', space=smem, size = 0x4, offset = 0x4, fixed_abs, tag = 'smem constant byte address 0x4 - core index']
  #allocation1 [shape = 'u32[72,128]{1,0:T(1,128)}', space=vmem, size = 0x9000, scoped, tag = 'internal scratch']
  %s0 = inlined_call_operand.hbm [shape: f32[4,16,128], index: 0, kind: input, shape index: {}]
  %s1 = inlined_call_operand.hbm [shape: bf16[128,384], index: 1, kind: input, shape index: {}]
  %s2 = inlined_call_operand.vmem [shape: f32[1,16], index: 2, kind: input, shape index: {}]
  %s3 = inlined_call_operand.hbm [shape: f32[1,16], index: 3, kind: input, shape index: {}]
  %s4 = inlined_call_operand.hbm [shape: f32[1,16], index: 4, kind: input, shape index: {}]
  %s5 = inlined_call_operand.vmem [shape: f32[1,16], index: 5, kind: input, shape index: {}]
  %s6 = inlined_call_operand.hbm [shape: bf16[128,128], index: 6, kind: input, shape index: {}]
  %s7 = inlined_call_operand.vmem [shape: f32[1,128], index: 7, kind: input, shape index: {}]
  %s8 = inlined_call_operand.hbm [shape: bf16[128,256], index: 8, kind: input, shape index: {}]
  %s9 = inlined_call_operand.vmem [shape: f32[1,256], index: 9, kind: input, shape index: {}]
  %s10 = inlined_call_operand.hbm [shape: bf16[256,128], index: 10, kind: input, shape index: {}]
  %s11 = inlined_call_operand.vmem [shape: f32[1,128], index: 11, kind: input, shape index: {}]
  %s12 = inlined_call_operand.vmem [shape: f32[1,128], index: 12, kind: input, shape index: {}]
  %s13 = inlined_call_operand.vmem [shape: f32[1,128], index: 13, kind: input, shape index: {}]
  %s14 = inlined_call_operand.vmem [shape: f32[1,128], index: 14, kind: input, shape index: {}]
  %s15 = inlined_call_operand.vmem [shape: f32[1,128], index: 15, kind: input, shape index: {}]
  %s16 = inlined_call_operand.hbm [shape: f32[4,16,128], index: 16, kind: output, shape index: {}]
  %s17 = sld [smem:[#allocation0]]
  $region125: #{tpu_custom_call.1} parent=0
    _
  %s19 = ssub.s32 1, %s17
  %s20 = scalar_select 0, %s19, %s17
  $region1: #{tpu_custom_call.1} parent=0
    #allocation2 [shape = 'u8[32768]{0}', space=vmem, size = 0x8000, scoped, tag = 'input window, operand 0']
    #allocation3 [shape = 's32[2]{0}', space=sflag, size = 0x8, scoped, tag = 'scoped memory for tpu_custom_call.1']
    #allocation4 [shape = 's32[2]{0}', space=sflag, size = 0x8, scoped, tag = 'scoped memory for tpu_custom_call.1']
    #allocation5 [shape = 'u8[98304]{0}', space=vmem, size = 0x18000, scoped, tag = 'input window, operand 1, single buffered']
    #allocation6 [shape = 's32[1]{0}', space=sflag, size = 0x4, scoped, tag = 'scoped memory for tpu_custom_call.1']
    #allocation7 [shape = 'u8[512]{0}', space=vmem, size = 0x400, scoped, tag = 'input window, operand 3, single buffered']
    #allocation8 [shape = 'u8[512]{0}', space=vmem, size = 0x400, scoped, tag = 'input window, operand 4, single buffered']
    #allocation9 [shape = 's32[1]{0}', space=sflag, size = 0x4, scoped, tag = 'scoped memory for tpu_custom_call.1']
    #allocation10 [shape = 'u8[32768]{0}', space=vmem, size = 0x8000, scoped, tag = 'input window, operand 6, single buffered']
    #allocation11 [shape = 'u8[65536]{0}', space=vmem, size = 0x10000, scoped, tag = 'input window, operand 8, single buffered']
    #allocation12 [shape = 's32[1]{0}', space=sflag, size = 0x4, scoped, tag = 'scoped memory for tpu_custom_call.1']
    #allocation13 [shape = 'u8[65536]{0}', space=vmem, size = 0x10000, scoped, tag = 'input window, operand 10, single buffered']
    #allocation14 [shape = 'u8[32768]{0}', space=vmem, size = 0x8000, scoped, tag = 'output window, operand 0']
    %21 = vsyncpa [#allocation3], 0
    %s22 = scalar_lea.sflag [#allocation3], 1
    %23 = vsyncpa %s22, 0
    %24 = vsyncpa [#allocation6], 0
    %25 = vsyncpa [#allocation9], 0
    %26 = vsyncpa [#allocation12], 0
    %27 = vsyncpa [#allocation4], 0
    %s28 = scalar_lea.sflag [#allocation4], 1
    %29 = vsyncpa %s28, 0
    loop: start=0, step=1, limit=4
    $region2: #{tpu_custom_call.1} parent=1 // loop_pre_header
      _
    $region3: #{tpu_custom_call.1} parent=1 // loop_header
      %s31 = sphi 0, %s35
      %p32 = scmp.ge.s32.totalorder %s31, 4
      %s41 = sphi 0, %s43
      %s44 = sphi 0, %s41
      %s45 = sphi 0, %s44
      %s61 = sphi 0, %s45
      %s65 = sphi 0, %s65
      %s67 = sphi 0, %s65
      %s68 = sphi 0, %s67
      %s82 = sphi 0, %s68
      %s86 = sphi 0, %s86
      %s88 = sphi 0, %s86
      %s89 = sphi 0, %s88
      %s103 = sphi 0, %s89
      %s107 = sphi 0, %s107
      %s109 = sphi 0, %s107
      %s110 = sphi 0, %s109
      %s124 = sphi 0, %s110
      %s128 = sphi 0, %s128
      %s130 = sphi 0, %s128
      %s131 = sphi 0, %s130
      %s145 = sphi 0, %s131
      %s149 = sphi 0, %s149
      %s151 = sphi 0, %s149
      %s152 = sphi 0, %s151
      %s166 = sphi 0, %s152
      %s170 = sphi 0, %s170
      %s172 = sphi 0, %s170
      %s173 = sphi 0, %s172
      %s187 = sphi 0, %s173
      %s191 = sphi 0, %s191
      %s193 = sphi 0, %s191
      %s194 = sphi 0, %s193
      %s208 = sphi 0, %s194
      %s212 = sphi 0, %s212
      %s214 = sphi 0, %s212
      %s215 = sphi 0, %s214
      %s229 = sphi 0, %s215
      %s233 = sphi 0, %s233
      %s235 = sphi 0, %s233
      %s236 = sphi 0, %s235
      %s250 = sphi 0, %s236
      %s254 = sphi 0, %s254
      %s256 = sphi 0, %s254
      %s257 = sphi 0, %s256
      %s271 = sphi 0, %s257
      %s275 = sphi 0, %s275
      %s277 = sphi 0, %s275
      %s278 = sphi 0, %s277
      %s292 = sphi 0, %s278
      %s296 = sphi 0, %s296
      %s298 = sphi 0, %s296
      %s299 = sphi 0, %s298
      %s313 = sphi 0, %s299
      %s317 = sphi 0, %s317
      %s319 = sphi 0, %s317
      %s320 = sphi 0, %s319
      %s334 = sphi 0, %s320
      %s338 = sphi 0, %s338
      %s340 = sphi 0, %s338
      %s341 = sphi 0, %s340
      %s355 = sphi 0, %s341
      %s359 = sphi 0, %s359
      %s361 = sphi 0, %s359
      %s362 = sphi 0, %s361
      %s376 = sphi 0, %s362
      %s382 = sphi 0, %s384
      %s385 = sphi 0, %s382
      %s386 = sphi 0, %s385
      %s402 = sphi 0, %s386
    $region4: #{tpu_custom_call.1} parent=1 // loop_header_branch
      %34 = sbr.rel (%p32) target = $region8
    $region5: #{tpu_custom_call.1} parent=1 // loop_body
      %s36 = ssub.s32 %s31, 1
      %s37 = ssub.s32 %s31, 2
      %s38 = sadd.s32 %s31, 1
      %s39 = ssub.s32 %s31, %s38
      %p40 = scmp.eq.s32.totalorder %s39, 0
      %s42 = sadd.s32 %s41, 1
      %s43 = scalar_select %p40, %s41, %s42
      %p46 = pneg %p40
      %p47 = scmp.eq.s32.totalorder %s31, 1
      %p48 = por %p46, %p47
      %p49 = scmp.ne.s32.totalorder %s41, %s44
      %p50 = scmp.eq.s32.totalorder %s31, 0
      %p51 = por %p49, %p50
      %p52 = scmp.ne.s32.totalorder %s41, %s44
      %p53 = scmp.eq.s32.totalorder %s36, 1
      %p54 = por %p52, %p53
      %p55 = scmp.ne.s32.totalorder %s44, %s45
      %p56 = scmp.eq.s32.totalorder %s36, 0
      %p57 = por %p55, %p56
      %p58 = scmp.ne.s32.totalorder %s44, %s45
      %p59 = scmp.eq.s32.totalorder %s37, 1
      %p60 = por %p58, %p59
      %p62 = scmp.ne.s32.totalorder %s45, %s61
      %p63 = scmp.eq.s32.totalorder %s37, 0
      %p64 = por %p62, %p63
      %s66 = sadd.s32 %s65, 1
      %p69 = scmp.eq.s32.totalorder %s31, 1
      %p70 = scmp.ne.s32.totalorder %s65, %s67
      %p71 = scmp.eq.s32.totalorder %s31, 0
      %p72 = por %p70, %p71
      %p73 = scmp.ne.s32.totalorder %s65, %s67
      %p74 = scmp.eq.s32.totalorder %s36, 1
      %p75 = por %p73, %p74
      %p76 = scmp.ne.s32.totalorder %s67, %s68
      %p77 = scmp.eq.s32.totalorder %s36, 0
      %p78 = por %p76, %p77
      %p79 = scmp.ne.s32.totalorder %s67, %s68
      %p80 = scmp.eq.s32.totalorder %s37, 1
      %p81 = por %p79, %p80
      %p83 = scmp.ne.s32.totalorder %s68, %s82
      %p84 = scmp.eq.s32.totalorder %s37, 0
      %p85 = por %p83, %p84
      %s87 = sadd.s32 %s86, 1
      %p90 = scmp.eq.s32.totalorder %s31, 1
      %p91 = scmp.ne.s32.totalorder %s86, %s88
      %p92 = scmp.eq.s32.totalorder %s31, 0
      %p93 = por %p91, %p92
      %p94 = scmp.ne.s32.totalorder %s86, %s88
      %p95 = scmp.eq.s32.totalorder %s36, 1
      %p96 = por %p94, %p95
      %p97 = scmp.ne.s32.totalorder %s88, %s89
      %p98 = scmp.eq.s32.totalorder %s36, 0
      %p99 = por %p97, %p98
      %p100 = scmp.ne.s32.totalorder %s88, %s89
      %p101 = scmp.eq.s32.totalorder %s37, 1
      %p102 = por %p100, %p101
      %p104 = scmp.ne.s32.totalorder %s89, %s103
      %p105 = scmp.eq.s32.totalorder %s37, 0
      %p106 = por %p104, %p105
      %s108 = sadd.s32 %s107, 1
      %p111 = scmp.eq.s32.totalorder %s31, 1
      %p112 = scmp.ne.s32.totalorder %s107, %s109
      %p113 = scmp.eq.s32.totalorder %s31, 0
      %p114 = por %p112, %p113
      %p115 = scmp.ne.s32.totalorder %s107, %s109
      %p116 = scmp.eq.s32.totalorder %s36, 1
      %p117 = por %p115, %p116
      %p118 = scmp.ne.s32.totalorder %s109, %s110
      %p119 = scmp.eq.s32.totalorder %s36, 0
      %p120 = por %p118, %p119
      %p121 = scmp.ne.s32.totalorder %s109, %s110
      %p122 = scmp.eq.s32.totalorder %s37, 1
      %p123 = por %p121, %p122
      %p125 = scmp.ne.s32.totalorder %s110, %s124
      %p126 = scmp.eq.s32.totalorder %s37, 0
      %p127 = por %p125, %p126
      %s129 = sadd.s32 %s128, 1
      %p132 = scmp.eq.s32.totalorder %s31, 1
      %p133 = scmp.ne.s32.totalorder %s128, %s130
      %p134 = scmp.eq.s32.totalorder %s31, 0
      %p135 = por %p133, %p134
      %p136 = scmp.ne.s32.totalorder %s128, %s130
      %p137 = scmp.eq.s32.totalorder %s36, 1
      %p138 = por %p136, %p137
      %p139 = scmp.ne.s32.totalorder %s130, %s131
      %p140 = scmp.eq.s32.totalorder %s36, 0
      %p141 = por %p139, %p140
      %p142 = scmp.ne.s32.totalorder %s130, %s131
      %p143 = scmp.eq.s32.totalorder %s37, 1
      %p144 = por %p142, %p143
      %p146 = scmp.ne.s32.totalorder %s131, %s145
      %p147 = scmp.eq.s32.totalorder %s37, 0
      %p148 = por %p146, %p147
      %s150 = sadd.s32 %s149, 1
      %p153 = scmp.eq.s32.totalorder %s31, 1
      %p154 = scmp.ne.s32.totalorder %s149, %s151
      %p155 = scmp.eq.s32.totalorder %s31, 0
      %p156 = por %p154, %p155
      %p157 = scmp.ne.s32.totalorder %s149, %s151
      %p158 = scmp.eq.s32.totalorder %s36, 1
      %p159 = por %p157, %p158
      %p160 = scmp.ne.s32.totalorder %s151, %s152
      %p161 = scmp.eq.s32.totalorder %s36, 0
      %p162 = por %p160, %p161
      %p163 = scmp.ne.s32.totalorder %s151, %s152
      %p164 = scmp.eq.s32.totalorder %s37, 1
      %p165 = por %p163, %p164
      %p167 = scmp.ne.s32.totalorder %s152, %s166
      %p168 = scmp.eq.s32.totalorder %s37, 0
      %p169 = por %p167, %p168
      %s171 = sadd.s32 %s170, 1
      %p174 = scmp.eq.s32.totalorder %s31, 1
      %p175 = scmp.ne.s32.totalorder %s170, %s172
      %p176 = scmp.eq.s32.totalorder %s31, 0
      %p177 = por %p175, %p176
      %p178 = scmp.ne.s32.totalorder %s170, %s172
      %p179 = scmp.eq.s32.totalorder %s36, 1
      %p180 = por %p178, %p179
      %p181 = scmp.ne.s32.totalorder %s172, %s173
      %p182 = scmp.eq.s32.totalorder %s36, 0
      %p183 = por %p181, %p182
      %p184 = scmp.ne.s32.totalorder %s172, %s173
      %p185 = scmp.eq.s32.totalorder %s37, 1
      %p186 = por %p184, %p185
      %p188 = scmp.ne.s32.totalorder %s173, %s187
      %p189 = scmp.eq.s32.totalorder %s37, 0
      %p190 = por %p188, %p189
      %s192 = sadd.s32 %s191, 1
      %p195 = scmp.eq.s32.totalorder %s31, 1
      %p196 = scmp.ne.s32.totalorder %s191, %s193
      %p197 = scmp.eq.s32.totalorder %s31, 0
      %p198 = por %p196, %p197
      %p199 = scmp.ne.s32.totalorder %s191, %s193
      %p200 = scmp.eq.s32.totalorder %s36, 1
      %p201 = por %p199, %p200
      %p202 = scmp.ne.s32.totalorder %s193, %s194
      %p203 = scmp.eq.s32.totalorder %s36, 0
      %p204 = por %p202, %p203
      %p205 = scmp.ne.s32.totalorder %s193, %s194
      %p206 = scmp.eq.s32.totalorder %s37, 1
      %p207 = por %p205, %p206
      %p209 = scmp.ne.s32.totalorder %s194, %s208
      %p210 = scmp.eq.s32.totalorder %s37, 0
      %p211 = por %p209, %p210
      %s213 = sadd.s32 %s212, 1
      %p216 = scmp.eq.s32.totalorder %s31, 1
      %p217 = scmp.ne.s32.totalorder %s212, %s214
      %p218 = scmp.eq.s32.totalorder %s31, 0
      %p219 = por %p217, %p218
      %p220 = scmp.ne.s32.totalorder %s212, %s214
      %p221 = scmp.eq.s32.totalorder %s36, 1
      %p222 = por %p220, %p221
      %p223 = scmp.ne.s32.totalorder %s214, %s215
      %p224 = scmp.eq.s32.totalorder %s36, 0
      %p225 = por %p223, %p224
      %p226 = scmp.ne.s32.totalorder %s214, %s215
      %p227 = scmp.eq.s32.totalorder %s37, 1
      %p228 = por %p226, %p227
      %p230 = scmp.ne.s32.totalorder %s215, %s229
      %p231 = scmp.eq.s32.totalorder %s37, 0
      %p232 = por %p230, %p231
      %s234 = sadd.s32 %s233, 1
      %p237 = scmp.eq.s32.totalorder %s31, 1
      %p238 = scmp.ne.s32.totalorder %s233, %s235
      %p239 = scmp.eq.s32.totalorder %s31, 0
      %p240 = por %p238, %p239
      %p241 = scmp.ne.s32.totalorder %s233, %s235
      %p242 = scmp.eq.s32.totalorder %s36, 1
      %p243 = por %p241, %p242
      %p244 = scmp.ne.s32.totalorder %s235, %s236
      %p245 = scmp.eq.s32.totalorder %s36, 0
      %p246 = por %p244, %p245
      %p247 = scmp.ne.s32.totalorder %s235, %s236
      %p248 = scmp.eq.s32.totalorder %s37, 1
      %p249 = por %p247, %p248
      %p251 = scmp.ne.s32.totalorder %s236, %s250
      %p252 = scmp.eq.s32.totalorder %s37, 0
      %p253 = por %p251, %p252
      %s255 = sadd.s32 %s254, 1
      %p258 = scmp.eq.s32.totalorder %s31, 1
      %p259 = scmp.ne.s32.totalorder %s254, %s256
      %p260 = scmp.eq.s32.totalorder %s31, 0
      %p261 = por %p259, %p260
      %p262 = scmp.ne.s32.totalorder %s254, %s256
      %p263 = scmp.eq.s32.totalorder %s36, 1
      %p264 = por %p262, %p263
      %p265 = scmp.ne.s32.totalorder %s256, %s257
      %p266 = scmp.eq.s32.totalorder %s36, 0
      %p267 = por %p265, %p266
      %p268 = scmp.ne.s32.totalorder %s256, %s257
      %p269 = scmp.eq.s32.totalorder %s37, 1
      %p270 = por %p268, %p269
      %p272 = scmp.ne.s32.totalorder %s257, %s271
      %p273 = scmp.eq.s32.totalorder %s37, 0
      %p274 = por %p272, %p273
      %s276 = sadd.s32 %s275, 1
      %p279 = scmp.eq.s32.totalorder %s31, 1
      %p280 = scmp.ne.s32.totalorder %s275, %s277
      %p281 = scmp.eq.s32.totalorder %s31, 0
      %p282 = por %p280, %p281
      %p283 = scmp.ne.s32.totalorder %s275, %s277
      %p284 = scmp.eq.s32.totalorder %s36, 1
      %p285 = por %p283, %p284
      %p286 = scmp.ne.s32.totalorder %s277, %s278
      %p287 = scmp.eq.s32.totalorder %s36, 0
      %p288 = por %p286, %p287
      %p289 = scmp.ne.s32.totalorder %s277, %s278
      %p290 = scmp.eq.s32.totalorder %s37, 1
      %p291 = por %p289, %p290
      %p293 = scmp.ne.s32.totalorder %s278, %s292
      %p294 = scmp.eq.s32.totalorder %s37, 0
      %p295 = por %p293, %p294
      %s297 = sadd.s32 %s296, 1
      %p300 = scmp.eq.s32.totalorder %s31, 1
      %p301 = scmp.ne.s32.totalorder %s296, %s298
      %p302 = scmp.eq.s32.totalorder %s31, 0
      %p303 = por %p301, %p302
      %p304 = scmp.ne.s32.totalorder %s296, %s298
      %p305 = scmp.eq.s32.totalorder %s36, 1
      %p306 = por %p304, %p305
      %p307 = scmp.ne.s32.totalorder %s298, %s299
      %p308 = scmp.eq.s32.totalorder %s36, 0
      %p309 = por %p307, %p308
      %p310 = scmp.ne.s32.totalorder %s298, %s299
      %p311 = scmp.eq.s32.totalorder %s37, 1
      %p312 = por %p310, %p311
      %p314 = scmp.ne.s32.totalorder %s299, %s313
      %p315 = scmp.eq.s32.totalorder %s37, 0
      %p316 = por %p314, %p315
      %s318 = sadd.s32 %s317, 1
      %p321 = scmp.eq.s32.totalorder %s31, 1
      %p322 = scmp.ne.s32.totalorder %s317, %s319
      %p323 = scmp.eq.s32.totalorder %s31, 0
      %p324 = por %p322, %p323
      %p325 = scmp.ne.s32.totalorder %s317, %s319
      %p326 = scmp.eq.s32.totalorder %s36, 1
      %p327 = por %p325, %p326
      %p328 = scmp.ne.s32.totalorder %s319, %s320
      %p329 = scmp.eq.s32.totalorder %s36, 0
      %p330 = por %p328, %p329
      %p331 = scmp.ne.s32.totalorder %s319, %s320
      %p332 = scmp.eq.s32.totalorder %s37, 1
      %p333 = por %p331, %p332
      %p335 = scmp.ne.s32.totalorder %s320, %s334
      %p336 = scmp.eq.s32.totalorder %s37, 0
      %p337 = por %p335, %p336
      %s339 = sadd.s32 %s338, 1
      %p342 = scmp.eq.s32.totalorder %s31, 1
      %p343 = scmp.ne.s32.totalorder %s338, %s340
      %p344 = scmp.eq.s32.totalorder %s31, 0
      %p345 = por %p343, %p344
      %p346 = scmp.ne.s32.totalorder %s338, %s340
      %p347 = scmp.eq.s32.totalorder %s36, 1
      %p348 = por %p346, %p347
      %p349 = scmp.ne.s32.totalorder %s340, %s341
      %p350 = scmp.eq.s32.totalorder %s36, 0
      %p351 = por %p349, %p350
      %p352 = scmp.ne.s32.totalorder %s340, %s341
      %p353 = scmp.eq.s32.totalorder %s37, 1
      %p354 = por %p352, %p353
      %p356 = scmp.ne.s32.totalorder %s341, %s355
      %p357 = scmp.eq.s32.totalorder %s37, 0
      %p358 = por %p356, %p357
      %s360 = sadd.s32 %s359, 1
      %p363 = scmp.eq.s32.totalorder %s31, 1
      %p364 = scmp.ne.s32.totalorder %s359, %s361
      %p365 = scmp.eq.s32.totalorder %s31, 0
      %p366 = por %p364, %p365
      %p367 = scmp.ne.s32.totalorder %s359, %s361
      %p368 = scmp.eq.s32.totalorder %s36, 1
      %p369 = por %p367, %p368
      %p370 = scmp.ne.s32.totalorder %s361, %s362
      %p371 = scmp.eq.s32.totalorder %s36, 0
      %p372 = por %p370, %p371
      %p373 = scmp.ne.s32.totalorder %s361, %s362
      %p374 = scmp.eq.s32.totalorder %s37, 1
      %p375 = por %p373, %p374
      %p377 = scmp.ne.s32.totalorder %s362, %s376
      %p378 = scmp.eq.s32.totalorder %s37, 0
      %p379 = por %p377, %p378
      %s380 = ssub.s32 %s31, %s38
      %p381 = scmp.eq.s32.totalorder %s380, 0
      %s383 = sadd.s32 %s382, 1
      %s384 = scalar_select %p381, %s382, %s383
      %p387 = pneg %p381
      %p388 = scmp.eq.s32.totalorder %s31, 1
      %p389 = por %p387, %p388
      %p390 = scmp.ne.s32.totalorder %s382, %s385
      %p391 = scmp.eq.s32.totalorder %s31, 0
      %p392 = por %p390, %p391
      %p393 = scmp.ne.s32.totalorder %s382, %s385
      %p394 = scmp.eq.s32.totalorder %s36, 1
      %p395 = por %p393, %p394
      %p396 = scmp.ne.s32.totalorder %s385, %s386
      %p397 = scmp.eq.s32.totalorder %s36, 0
      %p398 = por %p396, %p397
      %p399 = scmp.ne.s32.totalorder %s385, %s386
      %p400 = scmp.eq.s32.totalorder %s37, 1
      %p401 = por %p399, %p400
      %p403 = scmp.ne.s32.totalorder %s386, %s402
      %p404 = scmp.eq.s32.totalorder %s37, 0
      %p405 = por %p403, %p404
      %p406 = scmp.le.s32.totalorder 1, %s31
      %p407 = scmp.lt.s32.totalorder %s31, 3
      %p408 = pnand %p406, %p407
      %p409 = pneg %p408
      // Predicated region
      $region9: #{tpu_custom_call.1} parent=5 // pred_check
        _
      $region10: #{tpu_custom_call.1} parent=5 // pred_check_branch
        %411 = sbr.rel (%p408) target = $region12
      $region11: #{tpu_custom_call.1} parent=5 // pred_region
        %s412 = ssub.s32 %s31, 1
        // Predicated region
        $region13: #{tpu_custom_call.1} parent=11 // pred_check
          %p413 = pneg %p78
        $region14: #{tpu_custom_call.1} parent=11 // pred_check_branch
          %415 = sbr.rel (%p413) target = $region16
        $region15: #{tpu_custom_call.1} parent=11 // pred_region
          %417 = vsyncadd [#allocation6], 0
          %s418 = sshll.u32 %s1, 4
          %s419 = int_to_ptr.hbm [resolvable:$true] %s418
          %s420 = sshll.u32 [#allocation5], 4
          %s421 = int_to_ptr.vmem [resolvable:$true] %s420
          %426 = dma.hbm_to_vmem [thread:$0]  %s419, 3072, %s421, [#allocation6], 192, 192, 12
        $region16: #{tpu_custom_call.1} parent=11 // pred_fallthru
          _
        // Predicated region
        $region17: #{tpu_custom_call.1} parent=11 // pred_check
          %p427 = pneg %p99
        $region18: #{tpu_custom_call.1} parent=11 // pred_check_branch
          %429 = sbr.rel (%p427) target = $region20
        $region19: #{tpu_custom_call.1} parent=11 // pred_region
          _
        $region20: #{tpu_custom_call.1} parent=11 // pred_fallthru
          _
        // Predicated region
        $region21: #{tpu_custom_call.1} parent=11 // pred_check
          %p430 = pneg %p120
        $region22: #{tpu_custom_call.1} parent=11 // pred_check_branch
          %432 = sbr.rel (%p430) target = $region24
        $region23: #{tpu_custom_call.1} parent=11 // pred_region
          %434 = vsyncadd [#allocation6], 0
          %s436 = sshll.u32 %s3, 4
          %s437 = int_to_ptr.hbm [resolvable:$true] %s436
          %s438 = sshll.u32 [#allocation7], 4
          %s439 = int_to_ptr.vmem [resolvable:$true] %s438
          %441 = dma.hbm_to_vmem [thread:$0]  %s437, 16, %s439, [#allocation6]
        $region24: #{tpu_custom_call.1} parent=11 // pred_fallthru
          _
        // Predicated region
        $region25: #{tpu_custom_call.1} parent=11 // pred_check
          %p442 = pneg %p141
        $region26: #{tpu_custom_call.1} parent=11 // pred_check_branch
          %444 = sbr.rel (%p442) target = $region28
        $region27: #{tpu_custom_call.1} parent=11 // pred_region
          %446 = vsyncadd [#allocation9], 0
          %s448 = sshll.u32 %s4, 4
          %s449 = int_to_ptr.hbm [resolvable:$true] %s448
          %s450 = sshll.u32 [#allocation8], 4
          %s451 = int_to_ptr.vmem [resolvable:$true] %s450
          %453 = dma.hbm_to_vmem [thread:$0]  %s449, 16, %s451, [#allocation9]
        $region28: #{tpu_custom_call.1} parent=11 // pred_fallthru
          _
        // Predicated region
        $region29: #{tpu_custom_call.1} parent=11 // pred_check
          %p454 = pneg %p162
        $region30: #{tpu_custom_call.1} parent=11 // pred_check_branch
          %456 = sbr.rel (%p454) target = $region32
        $region31: #{tpu_custom_call.1} parent=11 // pred_region
          _
        $region32: #{tpu_custom_call.1} parent=11 // pred_fallthru
          _
        // Predicated region
        $region33: #{tpu_custom_call.1} parent=11 // pred_check
          %p457 = pneg %p183
        $region34: #{tpu_custom_call.1} parent=11 // pred_check_branch
          %459 = sbr.rel (%p457) target = $region36
        $region35: #{tpu_custom_call.1} parent=11 // pred_region
          %461 = vsyncadd [#allocation9], 0
          %s462 = sshll.u32 %s6, 4
          %s463 = int_to_ptr.hbm [resolvable:$true] %s462
          %s464 = sshll.u32 [#allocation10], 4
          %s465 = int_to_ptr.vmem [resolvable:$true] %s464
          %470 = dma.hbm_to_vmem [thread:$0]  %s463, 1024, %s465, [#allocation9], 64, 64, 4
        $region36: #{tpu_custom_call.1} parent=11 // pred_fallthru
          _
        // Predicated region
        $region37: #{tpu_custom_call.1} parent=11 // pred_check
          %p471 = pneg %p204
        $region38: #{tpu_custom_call.1} parent=11 // pred_check_branch
          %473 = sbr.rel (%p471) target = $region40
        $region39: #{tpu_custom_call.1} parent=11 // pred_region
          _
        $region40: #{tpu_custom_call.1} parent=11 // pred_fallthru
          _
        // Predicated region
        $region41: #{tpu_custom_call.1} parent=11 // pred_check
          %p474 = pneg %p225
        $region42: #{tpu_custom_call.1} parent=11 // pred_check_branch
          %476 = sbr.rel (%p474) target = $region44
        $region43: #{tpu_custom_call.1} parent=11 // pred_region
          %478 = vsyncadd [#allocation12], 0
          %s479 = sshll.u32 %s8, 4
          %s480 = int_to_ptr.hbm [resolvable:$true] %s479
          %s481 = sshll.u32 [#allocation11], 4
          %s482 = int_to_ptr.vmem [resolvable:$true] %s481
          %487 = dma.hbm_to_vmem [thread:$0]  %s480, 2048, %s482, [#allocation12], 128, 128, 8
        $region44: #{tpu_custom_call.1} parent=11 // pred_fallthru
          _
        // Predicated region
        $region45: #{tpu_custom_call.1} parent=11 // pred_check
          %p488 = pneg %p246
        $region46: #{tpu_custom_call.1} parent=11 // pred_check_branch
          %490 = sbr.rel (%p488) target = $region48
        $region47: #{tpu_custom_call.1} parent=11 // pred_region
          _
        $region48: #{tpu_custom_call.1} parent=11 // pred_fallthru
          _
        // Predicated region
        $region49: #{tpu_custom_call.1} parent=11 // pred_check
          %p491 = pneg %p267
        $region50: #{tpu_custom_call.1} parent=11 // pred_check_branch
          %493 = sbr.rel (%p491) target = $region52
        $region51: #{tpu_custom_call.1} parent=11 // pred_region
          %495 = vsyncadd [#allocation12], 0
          %s496 = sshll.u32 %s10, 4
          %s497 = int_to_ptr.hbm [resolvable:$true] %s496
          %s498 = sshll.u32 [#allocation13], 4
          %s499 = int_to_ptr.vmem [resolvable:$true] %s498
          %504 = dma.hbm_to_vmem [thread:$0]  %s497, 2048, %s499, [#allocation12], 64, 64, 4
        $region52: #{tpu_custom_call.1} parent=11 // pred_fallthru
          _
        // Predicated region
        $region53: #{tpu_custom_call.1} parent=11 // pred_check
          %p505 = pneg %p288
        $region54: #{tpu_custom_call.1} parent=11 // pred_check_branch
          %507 = sbr.rel (%p505) target = $region56
        $region55: #{tpu_custom_call.1} parent=11 // pred_region
          _
        $region56: #{tpu_custom_call.1} parent=11 // pred_fallthru
          _
        // Predicated region
        $region57: #{tpu_custom_call.1} parent=11 // pred_check
          %p508 = pneg %p309
        $region58: #{tpu_custom_call.1} parent=11 // pred_check_branch
          %510 = sbr.rel (%p508) target = $region60
        $region59: #{tpu_custom_call.1} parent=11 // pred_region
          _
        $region60: #{tpu_custom_call.1} parent=11 // pred_fallthru
          _
        // Predicated region
        $region61: #{tpu_custom_call.1} parent=11 // pred_check
          %p511 = pneg %p330
        $region62: #{tpu_custom_call.1} parent=11 // pred_check_branch
          %513 = sbr.rel (%p511) target = $region64
        $region63: #{tpu_custom_call.1} parent=11 // pred_region
          _
        $region64: #{tpu_custom_call.1} parent=11 // pred_fallthru
          _
        // Predicated region
        $region65: #{tpu_custom_call.1} parent=11 // pred_check
          %p514 = pneg %p351
        $region66: #{tpu_custom_call.1} parent=11 // pred_check_branch
          %516 = sbr.rel (%p514) target = $region68
        $region67: #{tpu_custom_call.1} parent=11 // pred_region
          _
        $region68: #{tpu_custom_call.1} parent=11 // pred_fallthru
          _
        // Predicated region
        $region69: #{tpu_custom_call.1} parent=11 // pred_check
          %p517 = pneg %p372
        $region70: #{tpu_custom_call.1} parent=11 // pred_check_branch
          %519 = sbr.rel (%p517) target = $region72
        $region71: #{tpu_custom_call.1} parent=11 // pred_region
          _
        $region72: #{tpu_custom_call.1} parent=11 // pred_fallthru
          _
      $region12: #{tpu_custom_call.1} parent=5 // pred_fallthru
        _
      %p520 = scmp.lt.s32.totalorder %s31, 2
      // Predicated region
      $region73: #{tpu_custom_call.1} parent=5 // pred_check
        %p521 = pneg %p520
      $region74: #{tpu_custom_call.1} parent=5 // pred_check_branch
        %523 = sbr.rel (%p521) target = $region76
      $region75: #{tpu_custom_call.1} parent=5 // pred_region
        // Predicated region
        $region77: #{tpu_custom_call.1} parent=75 // pred_check
          %p524 = pneg %p51
        $region78: #{tpu_custom_call.1} parent=75 // pred_check_branch
          %526 = sbr.rel (%p524) target = $region80
        $region79: #{tpu_custom_call.1} parent=75 // pred_region
          %s527 = sand.u32 %s41, 1
          %s528 = scalar_lea.sflag [#allocation3], %s527
          %s529 = sand.u32 %s41, 1
          %s530 = smul.addr %s529, 32
          %s531 = scalar_lea.vmem [#allocation2], %s530
          %s532 = smul.u32 2, %s31
          %534 = vsyncadd %s528, 0
          %s535 = smul.addr %s532, 2
          %s536 = smul.addr %s535, 8
          %s537 = scalar_lea.hbm %s0, %s536
          %s538 = sshll.u32 %s537, 4
          %s539 = int_to_ptr.hbm [resolvable:$true] %s538
          %s540 = sshll.u32 %s531, 4
          %s541 = int_to_ptr.vmem [resolvable:$true] %s540
          %546 = dma.hbm_to_vmem [thread:$0]  %s539, 512, %s541, %s528, 128, 128, 8
        $region80: #{tpu_custom_call.1} parent=75 // pred_fallthru
          _
      $region76: #{tpu_custom_call.1} parent=5 // pred_fallthru
        _
      %p547 = scmp.le.s32.totalorder 1, %s31
      %p548 = scmp.lt.s32.totalorder %s31, 3
      %p549 = pnand %p547, %p548
      %p550 = pneg %p549
      // Predicated region
      $region81: #{tpu_custom_call.1} parent=5 // pred_check
        _
      $region82: #{tpu_custom_call.1} parent=5 // pred_check_branch
        %552 = sbr.rel (%p549) target = $region84
      $region83: #{tpu_custom_call.1} parent=5 // pred_region
        %s553 = ssub.s32 %s31, 1
        %s554 = sand.u32 %s44, 1
        %s555 = scalar_lea.sflag [#allocation3], %s554
        %s556 = sand.u32 %s44, 1
        %s557 = smul.addr %s556, 32
        %s558 = scalar_lea.vmem [#allocation2], %s557
        // Predicated region
        $region85: #{tpu_custom_call.1} parent=83 // pred_check
          %p559 = pneg %p57
        $region86: #{tpu_custom_call.1} parent=83 // pred_check_branch
          %561 = sbr.rel (%p559) target = $region88
        $region87: #{tpu_custom_call.1} parent=83 // pred_region
          %563 = dma.done %s555, 512
        $region88: #{tpu_custom_call.1} parent=83 // pred_fallthru
          _
        // Predicated region
        $region89: #{tpu_custom_call.1} parent=83 // pred_check
          %p564 = pneg %p78
        $region90: #{tpu_custom_call.1} parent=83 // pred_check_branch
          %566 = sbr.rel (%p564) target = $region92
        $region91: #{tpu_custom_call.1} parent=83 // pred_region
          %568 = dma.done [#allocation6], 3072
        $region92: #{tpu_custom_call.1} parent=83 // pred_fallthru
          _
        // Predicated region
        $region93: #{tpu_custom_call.1} parent=83 // pred_check
          %p569 = pneg %p120
        $region94: #{tpu_custom_call.1} parent=83 // pred_check_branch
          %571 = sbr.rel (%p569) target = $region96
        $region95: #{tpu_custom_call.1} parent=83 // pred_region
          %573 = dma.done [#allocation6], 16
        $region96: #{tpu_custom_call.1} parent=83 // pred_fallthru
          _
        // Predicated region
        $region97: #{tpu_custom_call.1} parent=83 // pred_check
          %p574 = pneg %p141
        $region98: #{tpu_custom_call.1} parent=83 // pred_check_branch
          %576 = sbr.rel (%p574) target = $region100
        $region99: #{tpu_custom_call.1} parent=83 // pred_region
          %578 = dma.done [#allocation9], 16
        $region100: #{tpu_custom_call.1} parent=83 // pred_fallthru
          _
        // Predicated region
        $region101: #{tpu_custom_call.1} parent=83 // pred_check
          %p579 = pneg %p183
        $region102: #{tpu_custom_call.1} parent=83 // pred_check_branch
          %581 = sbr.rel (%p579) target = $region104
        $region103: #{tpu_custom_call.1} parent=83 // pred_region
          %583 = dma.done [#allocation9], 1024
        $region104: #{tpu_custom_call.1} parent=83 // pred_fallthru
          _
        // Predicated region
        $region105: #{tpu_custom_call.1} parent=83 // pred_check
          %p584 = pneg %p225
        $region106: #{tpu_custom_call.1} parent=83 // pred_check_branch
          %586 = sbr.rel (%p584) target = $region108
        $region107: #{tpu_custom_call.1} parent=83 // pred_region
          %588 = dma.done [#allocation12], 2048
        $region108: #{tpu_custom_call.1} parent=83 // pred_fallthru
          _
        // Predicated region
        $region109: #{tpu_custom_call.1} parent=83 // pred_check
          %p589 = pneg %p267
        $region110: #{tpu_custom_call.1} parent=83 // pred_check_branch
          %591 = sbr.rel (%p589) target = $region112
        $region111: #{tpu_custom_call.1} parent=83 // pred_region
          %593 = dma.done [#allocation12], 2048
        $region112: #{tpu_custom_call.1} parent=83 // pred_fallthru
          _
        %s594 = sand.u32 %s44, 1
        %s595 = scalar_lea.sflag [#allocation3], %s594
        %s596 = sand.u32 %s44, 1
        %s597 = smul.addr %s596, 32
        %s598 = scalar_lea.vmem [#allocation2], %s597
        %p599 = pneg %p57
        %p600 = pneg %p54
        %p601 = pneg %p78
        %p602 = pneg %p75
        %p603 = pneg %p99
        %p604 = pneg %p96
        %p605 = pneg %p120
        %p606 = pneg %p117
        %p607 = pneg %p141
        %p608 = pneg %p138
        %p609 = pneg %p162
        %p610 = pneg %p159
        %p611 = pneg %p183
        %p612 = pneg %p180
        %p613 = pneg %p204
        %p614 = pneg %p201
        %p615 = pneg %p225
        %p616 = pneg %p222
        %p617 = pneg %p246
        %p618 = pneg %p243
        %p619 = pneg %p267
        %p620 = pneg %p264
        %p621 = pneg %p288
        %p622 = pneg %p285
        %p623 = pneg %p309
        %p624 = pneg %p306
        %p625 = pneg %p330
        %p626 = pneg %p327
        %p627 = pneg %p351
        %p628 = pneg %p348
        %p629 = pneg %p372
        %p630 = pneg %p369
        %p631 = pneg %p398
        %p632 = pneg %p395
        %s633 = sand.u32 %s385, 1
        %s634 = scalar_lea.sflag [#allocation4], %s633
        %s635 = sand.u32 %s385, 1
        %s636 = smul.addr %s635, 32
        %s637 = scalar_lea.vmem [#allocation14], %s636
        %s638 = smul.u32 2, %s36
        %s639 = smul.u32 2, %s36
        %v641 = vld [vmem:[%s558] sm:$0xff]
        %v642 = vld [vmem:[%s558 + $0x8] sm:$0xff]
        %v643 = vld [vmem:[%s558 + $0x10] sm:$0xff]
        %v644 = vld [vmem:[%s558 + $0x18] sm:$0xff]
        %v645 = vpack.c.bf16 %v642, %v641
        %v646 = vpack.c.bf16 %v644, %v643
        %v647 = vld [vmem:[#allocation5] sm:$0xff]
        %v648 = vld [vmem:[#allocation5 + $0x8] sm:$0xf]
        %v649 = vld [vmem:[#allocation5 + $0xc] sm:$0xff]
        %v650 = vld [vmem:[#allocation5 + $0x14] sm:$0xf]
        %v651 = vld [vmem:[#allocation5 + $0x18] sm:$0xff]
        %v652 = vld [vmem:[#allocation5 + $0x20] sm:$0xf]
        %v653 = vld [vmem:[#allocation5 + $0x24] sm:$0xff]
        %v654 = vld [vmem:[#allocation5 + $0x2c] sm:$0xf]
        %v655 = vld [vmem:[#allocation5 + $0x30] sm:$0xff]
        %v656 = vld [vmem:[#allocation5 + $0x38] sm:$0xf]
        %v657 = vld [vmem:[#allocation5 + $0x3c] sm:$0xff]
        %v658 = vld [vmem:[#allocation5 + $0x44] sm:$0xf]
        %v659 = vld [vmem:[#allocation5 + $0x48] sm:$0xff]
        %v660 = vld [vmem:[#allocation5 + $0x50] sm:$0xf]
        %v661 = vld [vmem:[#allocation5 + $0x54] sm:$0xff]
        %v662 = vld [vmem:[#allocation5 + $0x5c] sm:$0xf]
        %v663 = vld [vmem:[#allocation5 + $0x60] sm:$0xff]
        %v664 = vld [vmem:[#allocation5 + $0x68] sm:$0xf]
        %v665 = vld [vmem:[#allocation5 + $0x6c] sm:$0xff]
        %v666 = vld [vmem:[#allocation5 + $0x74] sm:$0xf]
        %v667 = vld [vmem:[#allocation5 + $0x78] sm:$0xff]
        %v668 = vld [vmem:[#allocation5 + $0x80] sm:$0xf]
        %v669 = vld [vmem:[#allocation5 + $0x84] sm:$0xff]
        %v670 = vld [vmem:[#allocation5 + $0x8c] sm:$0xf]
        %v671 = vld [vmem:[#allocation5 + $0x90] sm:$0xff]
        %v672 = vld [vmem:[#allocation5 + $0x98] sm:$0xf]
        %v673 = vld [vmem:[#allocation5 + $0x9c] sm:$0xff]
        %v674 = vld [vmem:[#allocation5 + $0xa4] sm:$0xf]
        %v675 = vld [vmem:[#allocation5 + $0xa8] sm:$0xff]
        %v676 = vld [vmem:[#allocation5 + $0xb0] sm:$0xf]
        %v677 = vld [vmem:[#allocation5 + $0xb4] sm:$0xff]
        %v678 = vld [vmem:[#allocation5 + $0xbc] sm:$0xf]
        %v711 = vunpack.c.l.b16 %v647
        %v712 = vunpack.c.h.b16 %v647
        %v713 = vunpack.c.l.b16 %v648
        %v714 = vunpack.c.l.b16 %v649
        %v715 = vunpack.c.h.b16 %v649
        %v716 = vunpack.c.l.b16 %v650
        %v717 = vunpack.c.l.b16 %v651
        %v718 = vunpack.c.h.b16 %v651
        %v719 = vunpack.c.l.b16 %v652
        %v720 = vunpack.c.l.b16 %v653
        %v721 = vunpack.c.h.b16 %v653
        %v722 = vunpack.c.l.b16 %v654
        %v723 = vunpack.c.l.b16 %v655
        %v724 = vunpack.c.h.b16 %v655
        %v725 = vunpack.c.l.b16 %v656
        %v726 = vunpack.c.l.b16 %v657
        %v727 = vunpack.c.h.b16 %v657
        %v728 = vunpack.c.l.b16 %v658
        %v729 = vunpack.c.l.b16 %v659
        %v730 = vunpack.c.h.b16 %v659
        %v731 = vunpack.c.l.b16 %v660
        %v732 = vunpack.c.l.b16 %v661
        %v733 = vunpack.c.h.b16 %v661
        %v734 = vunpack.c.l.b16 %v662
        %v735 = vunpack.c.l.b16 %v663
        %v736 = vunpack.c.h.b16 %v663
        %v737 = vunpack.c.l.b16 %v664
        %v738 = vunpack.c.l.b16 %v665
        %v739 = vunpack.c.h.b16 %v665
        %v740 = vunpack.c.l.b16 %v666
        %v741 = vunpack.c.l.b16 %v667
        %v742 = vunpack.c.h.b16 %v667
        %v743 = vunpack.c.l.b16 %v668
        %v744 = vunpack.c.l.b16 %v669
        %v745 = vunpack.c.h.b16 %v669
        %v746 = vunpack.c.l.b16 %v670
        %v747 = vunpack.c.l.b16 %v671
        %v748 = vunpack.c.h.b16 %v671
        %v749 = vunpack.c.l.b16 %v672
        %v750 = vunpack.c.l.b16 %v673
        %v751 = vunpack.c.h.b16 %v673
        %v752 = vunpack.c.l.b16 %v674
        %v753 = vunpack.c.l.b16 %v675
        %v754 = vunpack.c.h.b16 %v675
        %v755 = vunpack.c.l.b16 %v676
        %v756 = vunpack.c.l.b16 %v677
        %v757 = vunpack.c.h.b16 %v677
        %v758 = vunpack.c.l.b16 %v678
        %v759 = vpack.c.b16 %v714, %v711
        %v760 = vpack.c.b16 %v715, %v712
        %v761 = vpack.c.b16 %v716, %v713
        %v762 = vpack.c.b16 %v720, %v717
        %v763 = vpack.c.b16 %v721, %v718
        %v764 = vpack.c.b16 %v722, %v719
        %v765 = vpack.c.b16 %v726, %v723
        %v766 = vpack.c.b16 %v727, %v724
        %v767 = vpack.c.b16 %v728, %v725
        %v768 = vpack.c.b16 %v732, %v729
        %v769 = vpack.c.b16 %v733, %v730
        %v770 = vpack.c.b16 %v734, %v731
        %v771 = vpack.c.b16 %v738, %v735
        %v772 = vpack.c.b16 %v739, %v736
        %v773 = vpack.c.b16 %v740, %v737
        %v774 = vpack.c.b16 %v744, %v741
        %v775 = vpack.c.b16 %v745, %v742
        %v776 = vpack.c.b16 %v746, %v743
        %v777 = vpack.c.b16 %v750, %v747
        %v778 = vpack.c.b16 %v751, %v748
        %v779 = vpack.c.b16 %v752, %v749
        %v780 = vpack.c.b16 %v756, %v753
        %v781 = vpack.c.b16 %v757, %v754
        %v782 = vpack.c.b16 %v758, %v755
        %807 = vmatpush.bf16.msra.mxu0 %v780
        %808 = vmatpush.bf16.msra.mxu0 %v777
        %809 = vmatpush.bf16.msra.mxu0 %v774
        %810 = vmatpush.bf16.msra.mxu0 %v771
        %811 = vmatpush.bf16.msra.mxu0 %v768
        %812 = vmatpush.bf16.msra.mxu0 %v765
        %813 = vmatpush.bf16.msra.mxu0 %v762
        %814 = vmatpush.bf16.msra.mxu0 %v759
        %815 = vmatmul.bf16.gmra.mxu0 %v645
        %v816 = vpop.f32.mrf.mxu0
        %v817 = vadd.f32 0.0, %v816
        %v818 = vpop.f32.mrf.mxu0
        %v819 = vadd.f32 0.0, %v818
        %820 = vmatmul.bf16.gmra.mxu0 %v646
        %v821 = vpop.f32.mrf.mxu0
        %v822 = vadd.f32 0.0, %v821
        %v823 = vpop.f32.mrf.mxu0
        %v824 = vadd.f32 0.0, %v823
        %825 = vdwg.mxu0
        %826 = vmatpush.bf16.msra.mxu0 %v781
        %827 = vmatpush.bf16.msra.mxu0 %v778
        %828 = vmatpush.bf16.msra.mxu0 %v775
        %829 = vmatpush.bf16.msra.mxu0 %v772
        %830 = vmatpush.bf16.msra.mxu0 %v769
        %831 = vmatpush.bf16.msra.mxu0 %v766
        %832 = vmatpush.bf16.msra.mxu0 %v763
        %833 = vmatpush.bf16.msra.mxu0 %v760
        %834 = vmatmul.bf16.gmra.mxu0 %v645
        %v835 = vpop.f32.mrf.mxu0
        %v836 = vadd.f32 0.0, %v835
        %v837 = vpop.f32.mrf.mxu0
        %v838 = vadd.f32 0.0, %v837
        %839 = vmatmul.bf16.gmra.mxu0 %v646
        %v840 = vpop.f32.mrf.mxu0
        %v841 = vadd.f32 0.0, %v840
        %v842 = vpop.f32.mrf.mxu0
        %v843 = vadd.f32 0.0, %v842
        %844 = vdwg.mxu0
        %845 = vmatpush.bf16.msra.mxu0 %v782
        %846 = vmatpush.bf16.msra.mxu0 %v779
        %847 = vmatpush.bf16.msra.mxu0 %v776
        %848 = vmatpush.bf16.msra.mxu0 %v773
        %849 = vmatpush.bf16.msra.mxu0 %v770
        %850 = vmatpush.bf16.msra.mxu0 %v767
        %851 = vmatpush.bf16.msra.mxu0 %v764
        %852 = vmatpush.bf16.msra.mxu0 %v761
        %853 = vmatmul.bf16.gmra.mxu0 %v645
        %v854 = vpop.f32.mrf.mxu0
        %v855 = vadd.f32 0.0, %v854
        %v856 = vpop.f32.mrf.mxu0
        %v857 = vadd.f32 0.0, %v856
        %858 = vmatmul.bf16.gmra.mxu0 %v646
        %v859 = vpop.f32.mrf.mxu0
        %v860 = vadd.f32 0.0, %v859
        %v861 = vpop.f32.mrf.mxu0
        %v862 = vadd.f32 0.0, %v861
        %863 = vdwg.mxu0
        %v864 = vld [vmem:[%s2] sm:$0x1]
        %v865 = vld [vmem:[#allocation7] sm:$0x1]
        %v866 = vld [vmem:[#allocation8] sm:$0x1]
        %v867 = vld [vmem:[%s5] sm:$0x1]
        %870 = vrot.lane.b32.xlu0 %v817, 112
        %v871 = vpop.permute.xlu0 %870
        %872 = vrot.lane.b32.xlu0 %v819, 112
        %v873 = vpop.permute.xlu0 %872
        %876 = vrot.lane.b32.xlu0 %v817, 96
        %v877 = vpop.permute.xlu0 %876
        %878 = vrot.lane.b32.xlu0 %v819, 96
        %v879 = vpop.permute.xlu0 %878
        %882 = vrot.lane.b32.xlu0 %v817, 80
        %v883 = vpop.permute.xlu0 %882
        %884 = vrot.lane.b32.xlu0 %v819, 80
        %v885 = vpop.permute.xlu0 %884
        %888 = vrot.lane.b32.xlu0 %v817, 64
        %v889 = vpop.permute.xlu0 %888
        %890 = vrot.lane.b32.xlu0 %v819, 64
        %v891 = vpop.permute.xlu0 %890
        %894 = vrot.lane.b32.xlu0 %v817, 48
        %v895 = vpop.permute.xlu0 %894
        %896 = vrot.lane.b32.xlu0 %v819, 48
        %v897 = vpop.permute.xlu0 %896
        %900 = vrot.lane.b32.xlu0 %v817, 32
        %v901 = vpop.permute.xlu0 %900
        %902 = vrot.lane.b32.xlu0 %v819, 32
        %v903 = vpop.permute.xlu0 %902
        %906 = vrot.lane.b32.xlu0 %v817, 16
        %v907 = vpop.permute.xlu0 %906
        %908 = vrot.lane.b32.xlu0 %v819, 16
        %v909 = vpop.permute.xlu0 %908
        %v912 = vrot.slane %v877, 4
        %vm913 = vcmask 1047556
        %v914 = vsel %vm913, %v912, %v817
        %v915 = vrot.slane %v817, 4
        %v916 = vsel %vm913, %v877, %v915
        %v918 = vunpack.c.l.s4 1983009808
        %v919 = vunpack.c.0.s8 %v918
        %v920 = vperm.slane %v914, %v919
        %v922 = vunpack.c.l.s4 1983009808
        %v923 = vunpack.c.0.s8 %v922
        %v924 = vperm.slane %v916, %v923
        %v925 = vrot.slane %v883, 4
        %v926 = vsel %vm913, %v925, %v871
        %v927 = vrot.slane %v871, 4
        %v928 = vsel %vm913, %v883, %v927
        %v930 = vunpack.c.l.s4 1983009808
        %v931 = vunpack.c.0.s8 %v930
        %v932 = vperm.slane %v926, %v931
        %v934 = vunpack.c.l.s4 1983009808
        %v935 = vunpack.c.0.s8 %v934
        %v936 = vperm.slane %v928, %v935
        %v937 = vrot.slane %v901, 4
        %v938 = vsel %vm913, %v937, %v889
        %v939 = vrot.slane %v889, 4
        %v940 = vsel %vm913, %v901, %v939
        %v942 = vunpack.c.l.s4 1983009808
        %v943 = vunpack.c.0.s8 %v942
        %v944 = vperm.slane %v938, %v943
        %v946 = vunpack.c.l.s4 1983009808
        %v947 = vunpack.c.0.s8 %v946
        %v948 = vperm.slane %v940, %v947
        %v949 = vrot.slane %v907, 4
        %v950 = vsel %vm913, %v949, %v895
        %v951 = vrot.slane %v895, 4
        %v952 = vsel %vm913, %v907, %v951
        %v954 = vunpack.c.l.s4 1983009808
        %v955 = vunpack.c.0.s8 %v954
        %v956 = vperm.slane %v950, %v955
        %v958 = vunpack.c.l.s4 1983009808
        %v959 = vunpack.c.0.s8 %v958
        %v960 = vperm.slane %v952, %v959
        %v961 = vrot.slane %v932, 4
        %v962 = vsel %vm913, %v961, %v920
        %v963 = vrot.slane %v920, 4
        %v964 = vsel %vm913, %v932, %v963
        %v966 = vunpack.c.l.s4 1934713408
        %v967 = vunpack.c.0.s8 %v966
        %v968 = vperm.slane %v962, %v967
        %v970 = vunpack.c.l.s4 1934713408
        %v971 = vunpack.c.0.s8 %v970
        %v972 = vperm.slane %v964, %v971
        %v973 = vrot.slane %v936, 4
        %v974 = vsel %vm913, %v973, %v924
        %v975 = vrot.slane %v924, 4
        %v976 = vsel %vm913, %v936, %v975
        %v978 = vunpack.c.l.s4 1934713408
        %v979 = vunpack.c.0.s8 %v978
        %v980 = vperm.slane %v974, %v979
        %v982 = vunpack.c.l.s4 1934713408
        %v983 = vunpack.c.0.s8 %v982
        %v984 = vperm.slane %v976, %v983
        %v985 = vrot.slane %v956, 4
        %v986 = vsel %vm913, %v985, %v944
        %v987 = vrot.slane %v944, 4
        %v988 = vsel %vm913, %v956, %v987
        %v990 = vunpack.c.l.s4 1934713408
        %v991 = vunpack.c.0.s8 %v990
        %v992 = vperm.slane %v986, %v991
        %v994 = vunpack.c.l.s4 1934713408
        %v995 = vunpack.c.0.s8 %v994
        %v996 = vperm.slane %v988, %v995
        %v997 = vrot.slane %v960, 4
        %v998 = vsel %vm913, %v997, %v948
        %v999 = vrot.slane %v948, 4
        %v1000 = vsel %vm913, %v960, %v999
        %v1002 = vunpack.c.l.s4 1934713408
        %v1003 = vunpack.c.0.s8 %v1002
        %v1004 = vperm.slane %v998, %v1003
        %v1006 = vunpack.c.l.s4 1934713408
        %v1007 = vunpack.c.0.s8 %v1006
        %v1008 = vperm.slane %v1000, %v1007
        %v1009 = vrot.slane %v992, 4
        %v1010 = vsel %vm913, %v1009, %v968
        %v1011 = vrot.slane %v968, 4
        %v1012 = vsel %vm913, %v992, %v1011
        %v1013 = vrot.slane %v996, 4
        %v1014 = vsel %vm913, %v1013, %v972
        %v1015 = vrot.slane %v972, 4
        %v1016 = vsel %vm913, %v996, %v1015
        %v1017 = vrot.slane %v1004, 4
        %v1018 = vsel %vm913, %v1017, %v980
        %v1019 = vrot.slane %v980, 4
        %v1020 = vsel %vm913, %v1004, %v1019
        %v1021 = vrot.slane %v1008, 4
        %v1022 = vsel %vm913, %v1021, %v984
        %v1023 = vrot.slane %v984, 4
        %v1024 = vsel %vm913, %v1008, %v1023
        %v1025 = vrot.slane %v879, 4
        %v1026 = vsel %vm913, %v1025, %v819
        %v1027 = vrot.slane %v819, 4
        %v1028 = vsel %vm913, %v879, %v1027
        %v1030 = vunpack.c.l.s4 1983009808
        %v1031 = vunpack.c.0.s8 %v1030
        %v1032 = vperm.slane %v1026, %v1031
        %v1034 = vunpack.c.l.s4 1983009808
        %v1035 = vunpack.c.0.s8 %v1034
        %v1036 = vperm.slane %v1028, %v1035
        %v1037 = vrot.slane %v885, 4
        %v1038 = vsel %vm913, %v1037, %v873
        %v1039 = vrot.slane %v873, 4
        %v1040 = vsel %vm913, %v885, %v1039
        %v1042 = vunpack.c.l.s4 1983009808
        %v1043 = vunpack.c.0.s8 %v1042
        %v1044 = vperm.slane %v1038, %v1043
        %v1046 = vunpack.c.l.s4 1983009808
        %v1047 = vunpack.c.0.s8 %v1046
        %v1048 = vperm.slane %v1040, %v1047
        %v1049 = vrot.slane %v903, 4
        %v1050 = vsel %vm913, %v1049, %v891
        %v1051 = vrot.slane %v891, 4
        %v1052 = vsel %vm913, %v903, %v1051
        %v1054 = vunpack.c.l.s4 1983009808
        %v1055 = vunpack.c.0.s8 %v1054
        %v1056 = vperm.slane %v1050, %v1055
        %v1058 = vunpack.c.l.s4 1983009808
        %v1059 = vunpack.c.0.s8 %v1058
        %v1060 = vperm.slane %v1052, %v1059
        %v1061 = vrot.slane %v909, 4
        %v1062 = vsel %vm913, %v1061, %v897
        %v1063 = vrot.slane %v897, 4
        %v1064 = vsel %vm913, %v909, %v1063
        %v1066 = vunpack.c.l.s4 1983009808
        %v1067 = vunpack.c.0.s8 %v1066
        %v1068 = vperm.slane %v1062, %v1067
        %v1070 = vunpack.c.l.s4 1983009808
        %v1071 = vunpack.c.0.s8 %v1070
        %v1072 = vperm.slane %v1064, %v1071
        %v1073 = vrot.slane %v1044, 4
        %v1074 = vsel %vm913, %v1073, %v1032
        %v1075 = vrot.slane %v1032, 4
        %v1076 = vsel %vm913, %v1044, %v1075
        %v1078 = vunpack.c.l.s4 1934713408
        %v1079 = vunpack.c.0.s8 %v1078
        %v1080 = vperm.slane %v1074, %v1079
        %v1082 = vunpack.c.l.s4 1934713408
        %v1083 = vunpack.c.0.s8 %v1082
        %v1084 = vperm.slane %v1076, %v1083
        %v1085 = vrot.slane %v1048, 4
        %v1086 = vsel %vm913, %v1085, %v1036
        %v1087 = vrot.slane %v1036, 4
        %v1088 = vsel %vm913, %v1048, %v1087
        %v1090 = vunpack.c.l.s4 1934713408
        %v1091 = vunpack.c.0.s8 %v1090
        %v1092 = vperm.slane %v1086, %v1091
        %v1094 = vunpack.c.l.s4 1934713408
        %v1095 = vunpack.c.0.s8 %v1094
        %v1096 = vperm.slane %v1088, %v1095
        %v1097 = vrot.slane %v1068, 4
        %v1098 = vsel %vm913, %v1097, %v1056
        %v1099 = vrot.slane %v1056, 4
        %v1100 = vsel %vm913, %v1068, %v1099
        %v1102 = vunpack.c.l.s4 1934713408
        %v1103 = vunpack.c.0.s8 %v1102
        %v1104 = vperm.slane %v1098, %v1103
        %v1106 = vunpack.c.l.s4 1934713408
        %v1107 = vunpack.c.0.s8 %v1106
        %v1108 = vperm.slane %v1100, %v1107
        %v1109 = vrot.slane %v1072, 4
        %v1110 = vsel %vm913, %v1109, %v1060
        %v1111 = vrot.slane %v1060, 4
        %v1112 = vsel %vm913, %v1072, %v1111
        %v1114 = vunpack.c.l.s4 1934713408
        %v1115 = vunpack.c.0.s8 %v1114
        %v1116 = vperm.slane %v1110, %v1115
        %v1118 = vunpack.c.l.s4 1934713408
        %v1119 = vunpack.c.0.s8 %v1118
        %v1120 = vperm.slane %v1112, %v1119
        %v1121 = vrot.slane %v1104, 4
        %v1122 = vsel %vm913, %v1121, %v1080
        %v1123 = vrot.slane %v1080, 4
        %v1124 = vsel %vm913, %v1104, %v1123
        %v1125 = vrot.slane %v1108, 4
        %v1126 = vsel %vm913, %v1125, %v1084
        %v1127 = vrot.slane %v1084, 4
        %v1128 = vsel %vm913, %v1108, %v1127
        %v1129 = vrot.slane %v1116, 4
        %v1130 = vsel %vm913, %v1129, %v1092
        %v1131 = vrot.slane %v1092, 4
        %v1132 = vsel %vm913, %v1116, %v1131
        %v1133 = vrot.slane %v1120, 4
        %v1134 = vsel %vm913, %v1133, %v1096
        %v1135 = vrot.slane %v1096, 4
        %v1136 = vsel %vm913, %v1120, %v1135
        %v1137 = vrot.slane %v1014, 4
        %v1138 = vsel %vm913, %v1137, %v1010
        %v1139 = vrot.slane %v1010, 4
        %v1140 = vsel %vm913, %v1014, %v1139
        %v1142 = vunpack.c.l.s4 1983009808
        %v1143 = vunpack.c.0.s8 %v1142
        %v1144 = vperm.slane %v1138, %v1143
        %v1146 = vunpack.c.l.s4 1983009808
        %v1147 = vunpack.c.0.s8 %v1146
        %v1148 = vperm.slane %v1140, %v1147
        %v1149 = vrot.slane %v1016, 4
        %v1150 = vsel %vm913, %v1149, %v1012
        %v1151 = vrot.slane %v1012, 4
        %v1152 = vsel %vm913, %v1016, %v1151
        %v1154 = vunpack.c.l.s4 1983009808
        %v1155 = vunpack.c.0.s8 %v1154
        %v1156 = vperm.slane %v1150, %v1155
        %v1158 = vunpack.c.l.s4 1983009808
        %v1159 = vunpack.c.0.s8 %v1158
        %v1160 = vperm.slane %v1152, %v1159
        %v1161 = vrot.slane %v1022, 4
        %v1162 = vsel %vm913, %v1161, %v1018
        %v1163 = vrot.slane %v1018, 4
        %v1164 = vsel %vm913, %v1022, %v1163
        %v1166 = vunpack.c.l.s4 1983009808
        %v1167 = vunpack.c.0.s8 %v1166
        %v1168 = vperm.slane %v1162, %v1167
        %v1170 = vunpack.c.l.s4 1983009808
        %v1171 = vunpack.c.0.s8 %v1170
        %v1172 = vperm.slane %v1164, %v1171
        %v1173 = vrot.slane %v1024, 4
        %v1174 = vsel %vm913, %v1173, %v1020
        %v1175 = vrot.slane %v1020, 4
        %v1176 = vsel %vm913, %v1024, %v1175
        %v1178 = vunpack.c.l.s4 1983009808
        %v1179 = vunpack.c.0.s8 %v1178
        %v1180 = vperm.slane %v1174, %v1179
        %v1182 = vunpack.c.l.s4 1983009808
        %v1183 = vunpack.c.0.s8 %v1182
        %v1184 = vperm.slane %v1176, %v1183
        %v1185 = vrot.slane %v1156, 4
        %v1186 = vsel %vm913, %v1185, %v1144
        %v1187 = vrot.slane %v1144, 4
        %v1188 = vsel %vm913, %v1156, %v1187
        %v1190 = vunpack.c.l.s4 1934713408
        %v1191 = vunpack.c.0.s8 %v1190
        %v1192 = vperm.slane %v1186, %v1191
        %v1194 = vunpack.c.l.s4 1934713408
        %v1195 = vunpack.c.0.s8 %v1194
        %v1196 = vperm.slane %v1188, %v1195
        %v1197 = vrot.slane %v1160, 4
        %v1198 = vsel %vm913, %v1197, %v1148
        %v1199 = vrot.slane %v1148, 4
        %v1200 = vsel %vm913, %v1160, %v1199
        %v1202 = vunpack.c.l.s4 1934713408
        %v1203 = vunpack.c.0.s8 %v1202
        %v1204 = vperm.slane %v1198, %v1203
        %v1206 = vunpack.c.l.s4 1934713408
        %v1207 = vunpack.c.0.s8 %v1206
        %v1208 = vperm.slane %v1200, %v1207
        %v1209 = vrot.slane %v1180, 4
        %v1210 = vsel %vm913, %v1209, %v1168
        %v1211 = vrot.slane %v1168, 4
        %v1212 = vsel %vm913, %v1180, %v1211
        %v1214 = vunpack.c.l.s4 1934713408
        %v1215 = vunpack.c.0.s8 %v1214
        %v1216 = vperm.slane %v1210, %v1215
        %v1218 = vunpack.c.l.s4 1934713408
        %v1219 = vunpack.c.0.s8 %v1218
        %v1220 = vperm.slane %v1212, %v1219
        %v1221 = vrot.slane %v1184, 4
        %v1222 = vsel %vm913, %v1221, %v1172
        %v1223 = vrot.slane %v1172, 4
        %v1224 = vsel %vm913, %v1184, %v1223
        %v1226 = vunpack.c.l.s4 1934713408
        %v1227 = vunpack.c.0.s8 %v1226
        %v1228 = vperm.slane %v1222, %v1227
        %v1230 = vunpack.c.l.s4 1934713408
        %v1231 = vunpack.c.0.s8 %v1230
        %v1232 = vperm.slane %v1224, %v1231
        %v1233 = vrot.slane %v1216, 4
        %v1234 = vsel %vm913, %v1233, %v1192
        %v1235 = vrot.slane %v1192, 4
        %v1236 = vsel %vm913, %v1216, %v1235
        %v1237 = vrot.slane %v1220, 4
        %v1238 = vsel %vm913, %v1237, %v1196
        %v1239 = vrot.slane %v1196, 4
        %v1240 = vsel %vm913, %v1220, %v1239
        %v1241 = vrot.slane %v1228, 4
        %v1242 = vsel %vm913, %v1241, %v1204
        %v1243 = vrot.slane %v1204, 4
        %v1244 = vsel %vm913, %v1228, %v1243
        %v1245 = vrot.slane %v1232, 4
        %v1246 = vsel %vm913, %v1245, %v1208
        %v1247 = vrot.slane %v1208, 4
        %v1248 = vsel %vm913, %v1232, %v1247
        %v1249 = vrot.slane %v1126, 4
        %v1250 = vsel %vm913, %v1249, %v1122
        %v1251 = vrot.slane %v1122, 4
        %v1252 = vsel %vm913, %v1126, %v1251
        %v1254 = vunpack.c.l.s4 1983009808
        %v1255 = vunpack.c.0.s8 %v1254
        %v1256 = vperm.slane %v1250, %v1255
        %v1258 = vunpack.c.l.s4 1983009808
        %v1259 = vunpack.c.0.s8 %v1258
        %v1260 = vperm.slane %v1252, %v1259
        %v1261 = vrot.slane %v1128, 4
        %v1262 = vsel %vm913, %v1261, %v1124
        %v1263 = vrot.slane %v1124, 4
        %v1264 = vsel %vm913, %v1128, %v1263
        %v1266 = vunpack.c.l.s4 1983009808
        %v1267 = vunpack.c.0.s8 %v1266
        %v1268 = vperm.slane %v1262, %v1267
        %v1270 = vunpack.c.l.s4 1983009808
        %v1271 = vunpack.c.0.s8 %v1270
        %v1272 = vperm.slane %v1264, %v1271
        %v1273 = vrot.slane %v1134, 4
        %v1274 = vsel %vm913, %v1273, %v1130
        %v1275 = vrot.slane %v1130, 4
        %v1276 = vsel %vm913, %v1134, %v1275
        %v1278 = vunpack.c.l.s4 1983009808
        %v1279 = vunpack.c.0.s8 %v1278
        %v1280 = vperm.slane %v1274, %v1279
        %v1282 = vunpack.c.l.s4 1983009808
        %v1283 = vunpack.c.0.s8 %v1282
        %v1284 = vperm.slane %v1276, %v1283
        %v1285 = vrot.slane %v1136, 4
        %v1286 = vsel %vm913, %v1285, %v1132
        %v1287 = vrot.slane %v1132, 4
        %v1288 = vsel %vm913, %v1136, %v1287
        %v1290 = vunpack.c.l.s4 1983009808
        %v1291 = vunpack.c.0.s8 %v1290
        %v1292 = vperm.slane %v1286, %v1291
        %v1294 = vunpack.c.l.s4 1983009808
        %v1295 = vunpack.c.0.s8 %v1294
        %v1296 = vperm.slane %v1288, %v1295
        %v1297 = vrot.slane %v1268, 4
        %v1298 = vsel %vm913, %v1297, %v1256
        %v1299 = vrot.slane %v1256, 4
        %v1300 = vsel %vm913, %v1268, %v1299
        %v1302 = vunpack.c.l.s4 1934713408
        %v1303 = vunpack.c.0.s8 %v1302
        %v1304 = vperm.slane %v1298, %v1303
        %v1306 = vunpack.c.l.s4 1934713408
        %v1307 = vunpack.c.0.s8 %v1306
        %v1308 = vperm.slane %v1300, %v1307
        %v1309 = vrot.slane %v1272, 4
        %v1310 = vsel %vm913, %v1309, %v1260
        %v1311 = vrot.slane %v1260, 4
        %v1312 = vsel %vm913, %v1272, %v1311
        %v1314 = vunpack.c.l.s4 1934713408
        %v1315 = vunpack.c.0.s8 %v1314
        %v1316 = vperm.slane %v1310, %v1315
        %v1318 = vunpack.c.l.s4 1934713408
        %v1319 = vunpack.c.0.s8 %v1318
        %v1320 = vperm.slane %v1312, %v1319
        %v1321 = vrot.slane %v1292, 4
        %v1322 = vsel %vm913, %v1321, %v1280
        %v1323 = vrot.slane %v1280, 4
        %v1324 = vsel %vm913, %v1292, %v1323
        %v1326 = vunpack.c.l.s4 1934713408
        %v1327 = vunpack.c.0.s8 %v1326
        %v1328 = vperm.slane %v1322, %v1327
        %v1330 = vunpack.c.l.s4 1934713408
        %v1331 = vunpack.c.0.s8 %v1330
        %v1332 = vperm.slane %v1324, %v1331
        %v1333 = vrot.slane %v1296, 4
        %v1334 = vsel %vm913, %v1333, %v1284
        %v1335 = vrot.slane %v1284, 4
        %v1336 = vsel %vm913, %v1296, %v1335
        %v1338 = vunpack.c.l.s4 1934713408
        %v1339 = vunpack.c.0.s8 %v1338
        %v1340 = vperm.slane %v1334, %v1339
        %v1342 = vunpack.c.l.s4 1934713408
        %v1343 = vunpack.c.0.s8 %v1342
        %v1344 = vperm.slane %v1336, %v1343
        %v1345 = vrot.slane %v1328, 4
        %v1346 = vsel %vm913, %v1345, %v1304
        %v1347 = vrot.slane %v1304, 4
        %v1348 = vsel %vm913, %v1328, %v1347
        %v1349 = vrot.slane %v1332, 4
        %v1350 = vsel %vm913, %v1349, %v1308
        %v1351 = vrot.slane %v1308, 4
        %v1352 = vsel %vm913, %v1332, %v1351
        %v1353 = vrot.slane %v1340, 4
        %v1354 = vsel %vm913, %v1353, %v1316
        %v1355 = vrot.slane %v1316, 4
        %v1356 = vsel %vm913, %v1340, %v1355
        %v1357 = vrot.slane %v1344, 4
        %v1358 = vsel %vm913, %v1357, %v1320
        %v1359 = vrot.slane %v1320, 4
        %v1360 = vsel %vm913, %v1344, %v1359
        %1363 = vrot.lane.b32.xlu0 %v836, 112
        %v1364 = vpop.permute.xlu0 %1363
        %1365 = vrot.lane.b32.xlu0 %v838, 112
        %v1366 = vpop.permute.xlu0 %1365
        %1369 = vrot.lane.b32.xlu0 %v836, 96
        %v1370 = vpop.permute.xlu0 %1369
        %1371 = vrot.lane.b32.xlu0 %v838, 96
        %v1372 = vpop.permute.xlu0 %1371
        %1375 = vrot.lane.b32.xlu0 %v836, 80
        %v1376 = vpop.permute.xlu0 %1375
        %1377 = vrot.lane.b32.xlu0 %v838, 80
        %v1378 = vpop.permute.xlu0 %1377
        %1381 = vrot.lane.b32.xlu0 %v836, 64
        %v1382 = vpop.permute.xlu0 %1381
        %1383 = vrot.lane.b32.xlu0 %v838, 64
        %v1384 = vpop.permute.xlu0 %1383
        %1387 = vrot.lane.b32.xlu0 %v836, 48
        %v1388 = vpop.permute.xlu0 %1387
        %1389 = vrot.lane.b32.xlu0 %v838, 48
        %v1390 = vpop.permute.xlu0 %1389
        %1393 = vrot.lane.b32.xlu0 %v836, 32
        %v1394 = vpop.permute.xlu0 %1393
        %1395 = vrot.lane.b32.xlu0 %v838, 32
        %v1396 = vpop.permute.xlu0 %1395
        %1399 = vrot.lane.b32.xlu0 %v836, 16
        %v1400 = vpop.permute.xlu0 %1399
        %1401 = vrot.lane.b32.xlu0 %v838, 16
        %v1402 = vpop.permute.xlu0 %1401
        %v1405 = vrot.slane %v1370, 4
        %v1406 = vsel %vm913, %v1405, %v836
        %v1407 = vrot.slane %v836, 4
        %v1408 = vsel %vm913, %v1370, %v1407
        %v1410 = vunpack.c.l.s4 1983009808
        %v1411 = vunpack.c.0.s8 %v1410
        %v1412 = vperm.slane %v1406, %v1411
        %v1414 = vunpack.c.l.s4 1983009808
        %v1415 = vunpack.c.0.s8 %v1414
        %v1416 = vperm.slane %v1408, %v1415
        %v1417 = vrot.slane %v1376, 4
        %v1418 = vsel %vm913, %v1417, %v1364
        %v1419 = vrot.slane %v1364, 4
        %v1420 = vsel %vm913, %v1376, %v1419
        %v1422 = vunpack.c.l.s4 1983009808
        %v1423 = vunpack.c.0.s8 %v1422
        %v1424 = vperm.slane %v1418, %v1423
        %v1426 = vunpack.c.l.s4 1983009808
        %v1427 = vunpack.c.0.s8 %v1426
        %v1428 = vperm.slane %v1420, %v1427
        %v1429 = vrot.slane %v1394, 4
        %v1430 = vsel %vm913, %v1429, %v1382
        %v1431 = vrot.slane %v1382, 4
        %v1432 = vsel %vm913, %v1394, %v1431
        %v1434 = vunpack.c.l.s4 1983009808
        %v1435 = vunpack.c.0.s8 %v1434
        %v1436 = vperm.slane %v1430, %v1435
        %v1438 = vunpack.c.l.s4 1983009808
        %v1439 = vunpack.c.0.s8 %v1438
        %v1440 = vperm.slane %v1432, %v1439
        %v1441 = vrot.slane %v1400, 4
        %v1442 = vsel %vm913, %v1441, %v1388
        %v1443 = vrot.slane %v1388, 4
        %v1444 = vsel %vm913, %v1400, %v1443
        %v1446 = vunpack.c.l.s4 1983009808
        %v1447 = vunpack.c.0.s8 %v1446
        %v1448 = vperm.slane %v1442, %v1447
        %v1450 = vunpack.c.l.s4 1983009808
        %v1451 = vunpack.c.0.s8 %v1450
        %v1452 = vperm.slane %v1444, %v1451
        %v1453 = vrot.slane %v1424, 4
        %v1454 = vsel %vm913, %v1453, %v1412
        %v1455 = vrot.slane %v1412, 4
        %v1456 = vsel %vm913, %v1424, %v1455
        %v1458 = vunpack.c.l.s4 1934713408
        %v1459 = vunpack.c.0.s8 %v1458
        %v1460 = vperm.slane %v1454, %v1459
        %v1462 = vunpack.c.l.s4 1934713408
        %v1463 = vunpack.c.0.s8 %v1462
        %v1464 = vperm.slane %v1456, %v1463
        %v1465 = vrot.slane %v1428, 4
        %v1466 = vsel %vm913, %v1465, %v1416
        %v1467 = vrot.slane %v1416, 4
        %v1468 = vsel %vm913, %v1428, %v1467
        %v1470 = vunpack.c.l.s4 1934713408
        %v1471 = vunpack.c.0.s8 %v1470
        %v1472 = vperm.slane %v1466, %v1471
        %v1474 = vunpack.c.l.s4 1934713408
        %v1475 = vunpack.c.0.s8 %v1474
        %v1476 = vperm.slane %v1468, %v1475
        %v1477 = vrot.slane %v1448, 4
        %v1478 = vsel %vm913, %v1477, %v1436
        %v1479 = vrot.slane %v1436, 4
        %v1480 = vsel %vm913, %v1448, %v1479
        %v1482 = vunpack.c.l.s4 1934713408
        %v1483 = vunpack.c.0.s8 %v1482
        %v1484 = vperm.slane %v1478, %v1483
        %v1486 = vunpack.c.l.s4 1934713408
        %v1487 = vunpack.c.0.s8 %v1486
        %v1488 = vperm.slane %v1480, %v1487
        %v1489 = vrot.slane %v1452, 4
        %v1490 = vsel %vm913, %v1489, %v1440
        %v1491 = vrot.slane %v1440, 4
        %v1492 = vsel %vm913, %v1452, %v1491
        %v1494 = vunpack.c.l.s4 1934713408
        %v1495 = vunpack.c.0.s8 %v1494
        %v1496 = vperm.slane %v1490, %v1495
        %v1498 = vunpack.c.l.s4 1934713408
        %v1499 = vunpack.c.0.s8 %v1498
        %v1500 = vperm.slane %v1492, %v1499
        %v1501 = vrot.slane %v1484, 4
        %v1502 = vsel %vm913, %v1501, %v1460
        %v1503 = vrot.slane %v1460, 4
        %v1504 = vsel %vm913, %v1484, %v1503
        %v1505 = vrot.slane %v1488, 4
        %v1506 = vsel %vm913, %v1505, %v1464
        %v1507 = vrot.slane %v1464, 4
        %v1508 = vsel %vm913, %v1488, %v1507
        %v1509 = vrot.slane %v1496, 4
        %v1510 = vsel %vm913, %v1509, %v1472
        %v1511 = vrot.slane %v1472, 4
        %v1512 = vsel %vm913, %v1496, %v1511
        %v1513 = vrot.slane %v1500, 4
        %v1514 = vsel %vm913, %v1513, %v1476
        %v1515 = vrot.slane %v1476, 4
        %v1516 = vsel %vm913, %v1500, %v1515
        %v1517 = vrot.slane %v1372, 4
        %v1518 = vsel %vm913, %v1517, %v838
        %v1519 = vrot.slane %v838, 4
        %v1520 = vsel %vm913, %v1372, %v1519
        %v1522 = vunpack.c.l.s4 1983009808
        %v1523 = vunpack.c.0.s8 %v1522
        %v1524 = vperm.slane %v1518, %v1523
        %v1526 = vunpack.c.l.s4 1983009808
        %v1527 = vunpack.c.0.s8 %v1526
        %v1528 = vperm.slane %v1520, %v1527
        %v1529 = vrot.slane %v1378, 4
        %v1530 = vsel %vm913, %v1529, %v1366
        %v1531 = vrot.slane %v1366, 4
        %v1532 = vsel %vm913, %v1378, %v1531
        %v1534 = vunpack.c.l.s4 1983009808
        %v1535 = vunpack.c.0.s8 %v1534
        %v1536 = vperm.slane %v1530, %v1535
        %v1538 = vunpack.c.l.s4 1983009808
        %v1539 = vunpack.c.0.s8 %v1538
        %v1540 = vperm.slane %v1532, %v1539
        %v1541 = vrot.slane %v1396, 4
        %v1542 = vsel %vm913, %v1541, %v1384
        %v1543 = vrot.slane %v1384, 4
        %v1544 = vsel %vm913, %v1396, %v1543
        %v1546 = vunpack.c.l.s4 1983009808
        %v1547 = vunpack.c.0.s8 %v1546
        %v1548 = vperm.slane %v1542, %v1547
        %v1550 = vunpack.c.l.s4 1983009808
        %v1551 = vunpack.c.0.s8 %v1550
        %v1552 = vperm.slane %v1544, %v1551
        %v1553 = vrot.slane %v1402, 4
        %v1554 = vsel %vm913, %v1553, %v1390
        %v1555 = vrot.slane %v1390, 4
        %v1556 = vsel %vm913, %v1402, %v1555
        %v1558 = vunpack.c.l.s4 1983009808
        %v1559 = vunpack.c.0.s8 %v1558
        %v1560 = vperm.slane %v1554, %v1559
        %v1562 = vunpack.c.l.s4 1983009808
        %v1563 = vunpack.c.0.s8 %v1562
        %v1564 = vperm.slane %v1556, %v1563
        %v1565 = vrot.slane %v1536, 4
        %v1566 = vsel %vm913, %v1565, %v1524
        %v1567 = vrot.slane %v1524, 4
        %v1568 = vsel %vm913, %v1536, %v1567
        %v1570 = vunpack.c.l.s4 1934713408
        %v1571 = vunpack.c.0.s8 %v1570
        %v1572 = vperm.slane %v1566, %v1571
        %v1574 = vunpack.c.l.s4 1934713408
        %v1575 = vunpack.c.0.s8 %v1574
        %v1576 = vperm.slane %v1568, %v1575
        %v1577 = vrot.slane %v1540, 4
        %v1578 = vsel %vm913, %v1577, %v1528
        %v1579 = vrot.slane %v1528, 4
        %v1580 = vsel %vm913, %v1540, %v1579
        %v1582 = vunpack.c.l.s4 1934713408
        %v1583 = vunpack.c.0.s8 %v1582
        %v1584 = vperm.slane %v1578, %v1583
        %v1586 = vunpack.c.l.s4 1934713408
        %v1587 = vunpack.c.0.s8 %v1586
        %v1588 = vperm.slane %v1580, %v1587
        %v1589 = vrot.slane %v1560, 4
        %v1590 = vsel %vm913, %v1589, %v1548
        %v1591 = vrot.slane %v1548, 4
        %v1592 = vsel %vm913, %v1560, %v1591
        %v1594 = vunpack.c.l.s4 1934713408
        %v1595 = vunpack.c.0.s8 %v1594
        %v1596 = vperm.slane %v1590, %v1595
        %v1598 = vunpack.c.l.s4 1934713408
        %v1599 = vunpack.c.0.s8 %v1598
        %v1600 = vperm.slane %v1592, %v1599
        %v1601 = vrot.slane %v1564, 4
        %v1602 = vsel %vm913, %v1601, %v1552
        %v1603 = vrot.slane %v1552, 4
        %v1604 = vsel %vm913, %v1564, %v1603
        %v1606 = vunpack.c.l.s4 1934713408
        %v1607 = vunpack.c.0.s8 %v1606
        %v1608 = vperm.slane %v1602, %v1607
        %v1610 = vunpack.c.l.s4 1934713408
        %v1611 = vunpack.c.0.s8 %v1610
        %v1612 = vperm.slane %v1604, %v1611
        %v1613 = vrot.slane %v1596, 4
        %v1614 = vsel %vm913, %v1613, %v1572
        %v1615 = vrot.slane %v1572, 4
        %v1616 = vsel %vm913, %v1596, %v1615
        %v1617 = vrot.slane %v1600, 4
        %v1618 = vsel %vm913, %v1617, %v1576
        %v1619 = vrot.slane %v1576, 4
        %v1620 = vsel %vm913, %v1600, %v1619
        %v1621 = vrot.slane %v1608, 4
        %v1622 = vsel %vm913, %v1621, %v1584
        %v1623 = vrot.slane %v1584, 4
        %v1624 = vsel %vm913, %v1608, %v1623
        %v1625 = vrot.slane %v1612, 4
        %v1626 = vsel %vm913, %v1625, %v1588
        %v1627 = vrot.slane %v1588, 4
        %v1628 = vsel %vm913, %v1612, %v1627
        %v1629 = vrot.slane %v1506, 4
        %v1630 = vsel %vm913, %v1629, %v1502
        %v1631 = vrot.slane %v1502, 4
        %v1632 = vsel %vm913, %v1506, %v1631
        %v1634 = vunpack.c.l.s4 1983009808
        %v1635 = vunpack.c.0.s8 %v1634
        %v1636 = vperm.slane %v1630, %v1635
        %v1638 = vunpack.c.l.s4 1983009808
        %v1639 = vunpack.c.0.s8 %v1638
        %v1640 = vperm.slane %v1632, %v1639
        %v1641 = vrot.slane %v1508, 4
        %v1642 = vsel %vm913, %v1641, %v1504
        %v1643 = vrot.slane %v1504, 4
        %v1644 = vsel %vm913, %v1508, %v1643
        %v1646 = vunpack.c.l.s4 1983009808
        %v1647 = vunpack.c.0.s8 %v1646
        %v1648 = vperm.slane %v1642, %v1647
        %v1650 = vunpack.c.l.s4 1983009808
        %v1651 = vunpack.c.0.s8 %v1650
        %v1652 = vperm.slane %v1644, %v1651
        %v1653 = vrot.slane %v1514, 4
        %v1654 = vsel %vm913, %v1653, %v1510
        %v1655 = vrot.slane %v1510, 4
        %v1656 = vsel %vm913, %v1514, %v1655
        %v1658 = vunpack.c.l.s4 1983009808
        %v1659 = vunpack.c.0.s8 %v1658
        %v1660 = vperm.slane %v1654, %v1659
        %v1662 = vunpack.c.l.s4 1983009808
        %v1663 = vunpack.c.0.s8 %v1662
        %v1664 = vperm.slane %v1656, %v1663
        %v1665 = vrot.slane %v1516, 4
        %v1666 = vsel %vm913, %v1665, %v1512
        %v1667 = vrot.slane %v1512, 4
        %v1668 = vsel %vm913, %v1516, %v1667
        %v1670 = vunpack.c.l.s4 1983009808
        %v1671 = vunpack.c.0.s8 %v1670
        %v1672 = vperm.slane %v1666, %v1671
        %v1674 = vunpack.c.l.s4 1983009808
        %v1675 = vunpack.c.0.s8 %v1674
        %v1676 = vperm.slane %v1668, %v1675
        %v1677 = vrot.slane %v1648, 4
        %v1678 = vsel %vm913, %v1677, %v1636
        %v1679 = vrot.slane %v1636, 4
        %v1680 = vsel %vm913, %v1648, %v1679
        %v1682 = vunpack.c.l.s4 1934713408
        %v1683 = vunpack.c.0.s8 %v1682
        %v1684 = vperm.slane %v1678, %v1683
        %v1686 = vunpack.c.l.s4 1934713408
        %v1687 = vunpack.c.0.s8 %v1686
        %v1688 = vperm.slane %v1680, %v1687
        %v1689 = vrot.slane %v1652, 4
        %v1690 = vsel %vm913, %v1689, %v1640
        %v1691 = vrot.slane %v1640, 4
        %v1692 = vsel %vm913, %v1652, %v1691
        %v1694 = vunpack.c.l.s4 1934713408
        %v1695 = vunpack.c.0.s8 %v1694
        %v1696 = vperm.slane %v1690, %v1695
        %v1698 = vunpack.c.l.s4 1934713408
        %v1699 = vunpack.c.0.s8 %v1698
        %v1700 = vperm.slane %v1692, %v1699
        %v1701 = vrot.slane %v1672, 4
        %v1702 = vsel %vm913, %v1701, %v1660
        %v1703 = vrot.slane %v1660, 4
        %v1704 = vsel %vm913, %v1672, %v1703
        %v1706 = vunpack.c.l.s4 1934713408
        %v1707 = vunpack.c.0.s8 %v1706
        %v1708 = vperm.slane %v1702, %v1707
        %v1710 = vunpack.c.l.s4 1934713408
        %v1711 = vunpack.c.0.s8 %v1710
        %v1712 = vperm.slane %v1704, %v1711
        %v1713 = vrot.slane %v1676, 4
        %v1714 = vsel %vm913, %v1713, %v1664
        %v1715 = vrot.slane %v1664, 4
        %v1716 = vsel %vm913, %v1676, %v1715
        %v1718 = vunpack.c.l.s4 1934713408
        %v1719 = vunpack.c.0.s8 %v1718
        %v1720 = vperm.slane %v1714, %v1719
        %v1722 = vunpack.c.l.s4 1934713408
        %v1723 = vunpack.c.0.s8 %v1722
        %v1724 = vperm.slane %v1716, %v1723
        %v1725 = vrot.slane %v1708, 4
        %v1726 = vsel %vm913, %v1725, %v1684
        %v1727 = vrot.slane %v1684, 4
        %v1728 = vsel %vm913, %v1708, %v1727
        %v1729 = vrot.slane %v1712, 4
        %v1730 = vsel %vm913, %v1729, %v1688
        %v1731 = vrot.slane %v1688, 4
        %v1732 = vsel %vm913, %v1712, %v1731
        %v1733 = vrot.slane %v1720, 4
        %v1734 = vsel %vm913, %v1733, %v1696
        %v1735 = vrot.slane %v1696, 4
        %v1736 = vsel %vm913, %v1720, %v1735
        %v1737 = vrot.slane %v1724, 4
        %v1738 = vsel %vm913, %v1737, %v1700
        %v1739 = vrot.slane %v1700, 4
        %v1740 = vsel %vm913, %v1724, %v1739
        %v1741 = vrot.slane %v1618, 4
        %v1742 = vsel %vm913, %v1741, %v1614
        %v1743 = vrot.slane %v1614, 4
        %v1744 = vsel %vm913, %v1618, %v1743
        %v1746 = vunpack.c.l.s4 1983009808
        %v1747 = vunpack.c.0.s8 %v1746
        %v1748 = vperm.slane %v1742, %v1747
        %v1750 = vunpack.c.l.s4 1983009808
        %v1751 = vunpack.c.0.s8 %v1750
        %v1752 = vperm.slane %v1744, %v1751
        %v1753 = vrot.slane %v1620, 4
        %v1754 = vsel %vm913, %v1753, %v1616
        %v1755 = vrot.slane %v1616, 4
        %v1756 = vsel %vm913, %v1620, %v1755
        %v1758 = vunpack.c.l.s4 1983009808
        %v1759 = vunpack.c.0.s8 %v1758
        %v1760 = vperm.slane %v1754, %v1759
        %v1762 = vunpack.c.l.s4 1983009808
        %v1763 = vunpack.c.0.s8 %v1762
        %v1764 = vperm.slane %v1756, %v1763
        %v1765 = vrot.slane %v1626, 4
        %v1766 = vsel %vm913, %v1765, %v1622
        %v1767 = vrot.slane %v1622, 4
        %v1768 = vsel %vm913, %v1626, %v1767
        %v1770 = vunpack.c.l.s4 1983009808
        %v1771 = vunpack.c.0.s8 %v1770
        %v1772 = vperm.slane %v1766, %v1771
        %v1774 = vunpack.c.l.s4 1983009808
        %v1775 = vunpack.c.0.s8 %v1774
        %v1776 = vperm.slane %v1768, %v1775
        %v1777 = vrot.slane %v1628, 4
        %v1778 = vsel %vm913, %v1777, %v1624
        %v1779 = vrot.slane %v1624, 4
        %v1780 = vsel %vm913, %v1628, %v1779
        %v1782 = vunpack.c.l.s4 1983009808
        %v1783 = vunpack.c.0.s8 %v1782
        %v1784 = vperm.slane %v1778, %v1783
        %v1786 = vunpack.c.l.s4 1983009808
        %v1787 = vunpack.c.0.s8 %v1786
        %v1788 = vperm.slane %v1780, %v1787
        %v1789 = vrot.slane %v1760, 4
        %v1790 = vsel %vm913, %v1789, %v1748
        %v1791 = vrot.slane %v1748, 4
        %v1792 = vsel %vm913, %v1760, %v1791
        %v1794 = vunpack.c.l.s4 1934713408
        %v1795 = vunpack.c.0.s8 %v1794
        %v1796 = vperm.slane %v1790, %v1795
        %v1798 = vunpack.c.l.s4 1934713408
        %v1799 = vunpack.c.0.s8 %v1798
        %v1800 = vperm.slane %v1792, %v1799
        %v1801 = vrot.slane %v1764, 4
        %v1802 = vsel %vm913, %v1801, %v1752
        %v1803 = vrot.slane %v1752, 4
        %v1804 = vsel %vm913, %v1764, %v1803
        %v1806 = vunpack.c.l.s4 1934713408
        %v1807 = vunpack.c.0.s8 %v1806
        %v1808 = vperm.slane %v1802, %v1807
        %v1810 = vunpack.c.l.s4 1934713408
        %v1811 = vunpack.c.0.s8 %v1810
        %v1812 = vperm.slane %v1804, %v1811
        %v1813 = vrot.slane %v1784, 4
        %v1814 = vsel %vm913, %v1813, %v1772
        %v1815 = vrot.slane %v1772, 4
        %v1816 = vsel %vm913, %v1784, %v1815
        %v1818 = vunpack.c.l.s4 1934713408
        %v1819 = vunpack.c.0.s8 %v1818
        %v1820 = vperm.slane %v1814, %v1819
        %v1822 = vunpack.c.l.s4 1934713408
        %v1823 = vunpack.c.0.s8 %v1822
        %v1824 = vperm.slane %v1816, %v1823
        %v1825 = vrot.slane %v1788, 4
        %v1826 = vsel %vm913, %v1825, %v1776
        %v1827 = vrot.slane %v1776, 4
        %v1828 = vsel %vm913, %v1788, %v1827
        %v1830 = vunpack.c.l.s4 1934713408
        %v1831 = vunpack.c.0.s8 %v1830
        %v1832 = vperm.slane %v1826, %v1831
        %v1834 = vunpack.c.l.s4 1934713408
        %v1835 = vunpack.c.0.s8 %v1834
        %v1836 = vperm.slane %v1828, %v1835
        %v1837 = vrot.slane %v1820, 4
        %v1838 = vsel %vm913, %v1837, %v1796
        %v1839 = vrot.slane %v1796, 4
        %v1840 = vsel %vm913, %v1820, %v1839
        %v1841 = vrot.slane %v1824, 4
        %v1842 = vsel %vm913, %v1841, %v1800
        %v1843 = vrot.slane %v1800, 4
        %v1844 = vsel %vm913, %v1824, %v1843
        %v1845 = vrot.slane %v1832, 4
        %v1846 = vsel %vm913, %v1845, %v1808
        %v1847 = vrot.slane %v1808, 4
        %v1848 = vsel %vm913, %v1832, %v1847
        %v1849 = vrot.slane %v1836, 4
        %v1850 = vsel %vm913, %v1849, %v1812
        %v1851 = vrot.slane %v1812, 4
        %v1852 = vsel %vm913, %v1836, %v1851
        %1855 = vrot.lane.b32.xlu0 %v855, 112
        %v1856 = vpop.permute.xlu0 %1855
        %1857 = vrot.lane.b32.xlu0 %v857, 112
        %v1858 = vpop.permute.xlu0 %1857
        %1861 = vrot.lane.b32.xlu0 %v855, 96
        %v1862 = vpop.permute.xlu0 %1861
        %1863 = vrot.lane.b32.xlu0 %v857, 96
        %v1864 = vpop.permute.xlu0 %1863
        %1867 = vrot.lane.b32.xlu0 %v855, 80
        %v1868 = vpop.permute.xlu0 %1867
        %1869 = vrot.lane.b32.xlu0 %v857, 80
        %v1870 = vpop.permute.xlu0 %1869
        %1873 = vrot.lane.b32.xlu0 %v855, 64
        %v1874 = vpop.permute.xlu0 %1873
        %1875 = vrot.lane.b32.xlu0 %v857, 64
        %v1876 = vpop.permute.xlu0 %1875
        %1879 = vrot.lane.b32.xlu0 %v855, 48
        %v1880 = vpop.permute.xlu0 %1879
        %1881 = vrot.lane.b32.xlu0 %v857, 48
        %v1882 = vpop.permute.xlu0 %1881
        %1885 = vrot.lane.b32.xlu0 %v855, 32
        %v1886 = vpop.permute.xlu0 %1885
        %1887 = vrot.lane.b32.xlu0 %v857, 32
        %v1888 = vpop.permute.xlu0 %1887
        %1891 = vrot.lane.b32.xlu0 %v855, 16
        %v1892 = vpop.permute.xlu0 %1891
        %1893 = vrot.lane.b32.xlu0 %v857, 16
        %v1894 = vpop.permute.xlu0 %1893
        %v1897 = vrot.slane %v1862, 4
        %v1898 = vsel %vm913, %v1897, %v855
        %v1899 = vrot.slane %v855, 4
        %v1900 = vsel %vm913, %v1862, %v1899
        %v1902 = vunpack.c.l.s4 1983009808
        %v1903 = vunpack.c.0.s8 %v1902
        %v1904 = vperm.slane %v1898, %v1903
        %v1906 = vunpack.c.l.s4 1983009808
        %v1907 = vunpack.c.0.s8 %v1906
        %v1908 = vperm.slane %v1900, %v1907
        %v1909 = vrot.slane %v1868, 4
        %v1910 = vsel %vm913, %v1909, %v1856
        %v1911 = vrot.slane %v1856, 4
        %v1912 = vsel %vm913, %v1868, %v1911
        %v1914 = vunpack.c.l.s4 1983009808
        %v1915 = vunpack.c.0.s8 %v1914
        %v1916 = vperm.slane %v1910, %v1915
        %v1918 = vunpack.c.l.s4 1983009808
        %v1919 = vunpack.c.0.s8 %v1918
        %v1920 = vperm.slane %v1912, %v1919
        %v1921 = vrot.slane %v1886, 4
        %v1922 = vsel %vm913, %v1921, %v1874
        %v1923 = vrot.slane %v1874, 4
        %v1924 = vsel %vm913, %v1886, %v1923
        %v1926 = vunpack.c.l.s4 1983009808
        %v1927 = vunpack.c.0.s8 %v1926
        %v1928 = vperm.slane %v1922, %v1927
        %v1930 = vunpack.c.l.s4 1983009808
        %v1931 = vunpack.c.0.s8 %v1930
        %v1932 = vperm.slane %v1924, %v1931
        %v1933 = vrot.slane %v1892, 4
        %v1934 = vsel %vm913, %v1933, %v1880
        %v1935 = vrot.slane %v1880, 4
        %v1936 = vsel %vm913, %v1892, %v1935
        %v1938 = vunpack.c.l.s4 1983009808
        %v1939 = vunpack.c.0.s8 %v1938
        %v1940 = vperm.slane %v1934, %v1939
        %v1942 = vunpack.c.l.s4 1983009808
        %v1943 = vunpack.c.0.s8 %v1942
        %v1944 = vperm.slane %v1936, %v1943
        %v1945 = vrot.slane %v1916, 4
        %v1946 = vsel %vm913, %v1945, %v1904
        %v1947 = vrot.slane %v1904, 4
        %v1948 = vsel %vm913, %v1916, %v1947
        %v1950 = vunpack.c.l.s4 1934713408
        %v1951 = vunpack.c.0.s8 %v1950
        %v1952 = vperm.slane %v1946, %v1951
        %v1954 = vunpack.c.l.s4 1934713408
        %v1955 = vunpack.c.0.s8 %v1954
        %v1956 = vperm.slane %v1948, %v1955
        %v1957 = vrot.slane %v1920, 4
        %v1958 = vsel %vm913, %v1957, %v1908
        %v1959 = vrot.slane %v1908, 4
        %v1960 = vsel %vm913, %v1920, %v1959
        %v1962 = vunpack.c.l.s4 1934713408
        %v1963 = vunpack.c.0.s8 %v1962
        %v1964 = vperm.slane %v1958, %v1963
        %v1966 = vunpack.c.l.s4 1934713408
        %v1967 = vunpack.c.0.s8 %v1966
        %v1968 = vperm.slane %v1960, %v1967
        %v1969 = vrot.slane %v1940, 4
        %v1970 = vsel %vm913, %v1969, %v1928
        %v1971 = vrot.slane %v1928, 4
        %v1972 = vsel %vm913, %v1940, %v1971
        %v1974 = vunpack.c.l.s4 1934713408
        %v1975 = vunpack.c.0.s8 %v1974
        %v1976 = vperm.slane %v1970, %v1975
        %v1978 = vunpack.c.l.s4 1934713408
        %v1979 = vunpack.c.0.s8 %v1978
        %v1980 = vperm.slane %v1972, %v1979
        %v1981 = vrot.slane %v1944, 4
        %v1982 = vsel %vm913, %v1981, %v1932
        %v1983 = vrot.slane %v1932, 4
        %v1984 = vsel %vm913, %v1944, %v1983
        %v1986 = vunpack.c.l.s4 1934713408
        %v1987 = vunpack.c.0.s8 %v1986
        %v1988 = vperm.slane %v1982, %v1987
        %v1990 = vunpack.c.l.s4 1934713408
        %v1991 = vunpack.c.0.s8 %v1990
        %v1992 = vperm.slane %v1984, %v1991
        %v1993 = vrot.slane %v1976, 4
        %v1994 = vsel %vm913, %v1993, %v1952
        %v1995 = vrot.slane %v1952, 4
        %v1996 = vsel %vm913, %v1976, %v1995
        %v1997 = vrot.slane %v1980, 4
        %v1998 = vsel %vm913, %v1997, %v1956
        %v1999 = vrot.slane %v1956, 4
        %v2000 = vsel %vm913, %v1980, %v1999
        %v2001 = vrot.slane %v1988, 4
        %v2002 = vsel %vm913, %v2001, %v1964
        %v2003 = vrot.slane %v1964, 4
        %v2004 = vsel %vm913, %v1988, %v2003
        %v2005 = vrot.slane %v1992, 4
        %v2006 = vsel %vm913, %v2005, %v1968
        %v2007 = vrot.slane %v1968, 4
        %v2008 = vsel %vm913, %v1992, %v2007
        %v2009 = vrot.slane %v1864, 4
        %v2010 = vsel %vm913, %v2009, %v857
        %v2011 = vrot.slane %v857, 4
        %v2012 = vsel %vm913, %v1864, %v2011
        %v2014 = vunpack.c.l.s4 1983009808
        %v2015 = vunpack.c.0.s8 %v2014
        %v2016 = vperm.slane %v2010, %v2015
        %v2018 = vunpack.c.l.s4 1983009808
        %v2019 = vunpack.c.0.s8 %v2018
        %v2020 = vperm.slane %v2012, %v2019
        %v2021 = vrot.slane %v1870, 4
        %v2022 = vsel %vm913, %v2021, %v1858
        %v2023 = vrot.slane %v1858, 4
        %v2024 = vsel %vm913, %v1870, %v2023
        %v2026 = vunpack.c.l.s4 1983009808
        %v2027 = vunpack.c.0.s8 %v2026
        %v2028 = vperm.slane %v2022, %v2027
        %v2030 = vunpack.c.l.s4 1983009808
        %v2031 = vunpack.c.0.s8 %v2030
        %v2032 = vperm.slane %v2024, %v2031
        %v2033 = vrot.slane %v1888, 4
        %v2034 = vsel %vm913, %v2033, %v1876
        %v2035 = vrot.slane %v1876, 4
        %v2036 = vsel %vm913, %v1888, %v2035
        %v2038 = vunpack.c.l.s4 1983009808
        %v2039 = vunpack.c.0.s8 %v2038
        %v2040 = vperm.slane %v2034, %v2039
        %v2042 = vunpack.c.l.s4 1983009808
        %v2043 = vunpack.c.0.s8 %v2042
        %v2044 = vperm.slane %v2036, %v2043
        %v2045 = vrot.slane %v1894, 4
        %v2046 = vsel %vm913, %v2045, %v1882
        %v2047 = vrot.slane %v1882, 4
        %v2048 = vsel %vm913, %v1894, %v2047
        %v2050 = vunpack.c.l.s4 1983009808
        %v2051 = vunpack.c.0.s8 %v2050
        %v2052 = vperm.slane %v2046, %v2051
        %v2054 = vunpack.c.l.s4 1983009808
        %v2055 = vunpack.c.0.s8 %v2054
        %v2056 = vperm.slane %v2048, %v2055
        %v2057 = vrot.slane %v2028, 4
        %v2058 = vsel %vm913, %v2057, %v2016
        %v2059 = vrot.slane %v2016, 4
        %v2060 = vsel %vm913, %v2028, %v2059
        %v2062 = vunpack.c.l.s4 1934713408
        %v2063 = vunpack.c.0.s8 %v2062
        %v2064 = vperm.slane %v2058, %v2063
        %v2066 = vunpack.c.l.s4 1934713408
        %v2067 = vunpack.c.0.s8 %v2066
        %v2068 = vperm.slane %v2060, %v2067
        %v2069 = vrot.slane %v2032, 4
        %v2070 = vsel %vm913, %v2069, %v2020
        %v2071 = vrot.slane %v2020, 4
        %v2072 = vsel %vm913, %v2032, %v2071
        %v2074 = vunpack.c.l.s4 1934713408
        %v2075 = vunpack.c.0.s8 %v2074
        %v2076 = vperm.slane %v2070, %v2075
        %v2078 = vunpack.c.l.s4 1934713408
        %v2079 = vunpack.c.0.s8 %v2078
        %v2080 = vperm.slane %v2072, %v2079
        %v2081 = vrot.slane %v2052, 4
        %v2082 = vsel %vm913, %v2081, %v2040
        %v2083 = vrot.slane %v2040, 4
        %v2084 = vsel %vm913, %v2052, %v2083
        %v2086 = vunpack.c.l.s4 1934713408
        %v2087 = vunpack.c.0.s8 %v2086
        %v2088 = vperm.slane %v2082, %v2087
        %v2090 = vunpack.c.l.s4 1934713408
        %v2091 = vunpack.c.0.s8 %v2090
        %v2092 = vperm.slane %v2084, %v2091
        %v2093 = vrot.slane %v2056, 4
        %v2094 = vsel %vm913, %v2093, %v2044
        %v2095 = vrot.slane %v2044, 4
        %v2096 = vsel %vm913, %v2056, %v2095
        %v2098 = vunpack.c.l.s4 1934713408
        %v2099 = vunpack.c.0.s8 %v2098
        %v2100 = vperm.slane %v2094, %v2099
        %v2102 = vunpack.c.l.s4 1934713408
        %v2103 = vunpack.c.0.s8 %v2102
        %v2104 = vperm.slane %v2096, %v2103
        %v2105 = vrot.slane %v2088, 4
        %v2106 = vsel %vm913, %v2105, %v2064
        %v2107 = vrot.slane %v2064, 4
        %v2108 = vsel %vm913, %v2088, %v2107
        %v2109 = vrot.slane %v2092, 4
        %v2110 = vsel %vm913, %v2109, %v2068
        %v2111 = vrot.slane %v2068, 4
        %v2112 = vsel %vm913, %v2092, %v2111
        %v2113 = vrot.slane %v2100, 4
        %v2114 = vsel %vm913, %v2113, %v2076
        %v2115 = vrot.slane %v2076, 4
        %v2116 = vsel %vm913, %v2100, %v2115
        %v2117 = vrot.slane %v2104, 4
        %v2118 = vsel %vm913, %v2117, %v2080
        %v2119 = vrot.slane %v2080, 4
        %v2120 = vsel %vm913, %v2104, %v2119
        %v2121 = vrot.slane %v1998, 4
        %v2122 = vsel %vm913, %v2121, %v1994
        %v2123 = vrot.slane %v1994, 4
        %v2124 = vsel %vm913, %v1998, %v2123
        %v2126 = vunpack.c.l.s4 1983009808
        %v2127 = vunpack.c.0.s8 %v2126
        %v2128 = vperm.slane %v2122, %v2127
        %v2130 = vunpack.c.l.s4 1983009808
        %v2131 = vunpack.c.0.s8 %v2130
        %v2132 = vperm.slane %v2124, %v2131
        %v2133 = vrot.slane %v2000, 4
        %v2134 = vsel %vm913, %v2133, %v1996
        %v2135 = vrot.slane %v1996, 4
        %v2136 = vsel %vm913, %v2000, %v2135
        %v2138 = vunpack.c.l.s4 1983009808
        %v2139 = vunpack.c.0.s8 %v2138
        %v2140 = vperm.slane %v2134, %v2139
        %v2142 = vunpack.c.l.s4 1983009808
        %v2143 = vunpack.c.0.s8 %v2142
        %v2144 = vperm.slane %v2136, %v2143
        %v2145 = vrot.slane %v2006, 4
        %v2146 = vsel %vm913, %v2145, %v2002
        %v2147 = vrot.slane %v2002, 4
        %v2148 = vsel %vm913, %v2006, %v2147
        %v2150 = vunpack.c.l.s4 1983009808
        %v2151 = vunpack.c.0.s8 %v2150
        %v2152 = vperm.slane %v2146, %v2151
        %v2154 = vunpack.c.l.s4 1983009808
        %v2155 = vunpack.c.0.s8 %v2154
        %v2156 = vperm.slane %v2148, %v2155
        %v2157 = vrot.slane %v2008, 4
        %v2158 = vsel %vm913, %v2157, %v2004
        %v2159 = vrot.slane %v2004, 4
        %v2160 = vsel %vm913, %v2008, %v2159
        %v2162 = vunpack.c.l.s4 1983009808
        %v2163 = vunpack.c.0.s8 %v2162
        %v2164 = vperm.slane %v2158, %v2163
        %v2166 = vunpack.c.l.s4 1983009808
        %v2167 = vunpack.c.0.s8 %v2166
        %v2168 = vperm.slane %v2160, %v2167
        %v2169 = vrot.slane %v2140, 4
        %v2170 = vsel %vm913, %v2169, %v2128
        %v2171 = vrot.slane %v2128, 4
        %v2172 = vsel %vm913, %v2140, %v2171
        %v2174 = vunpack.c.l.s4 1934713408
        %v2175 = vunpack.c.0.s8 %v2174
        %v2176 = vperm.slane %v2170, %v2175
        %v2178 = vunpack.c.l.s4 1934713408
        %v2179 = vunpack.c.0.s8 %v2178
        %v2180 = vperm.slane %v2172, %v2179
        %v2181 = vrot.slane %v2144, 4
        %v2182 = vsel %vm913, %v2181, %v2132
        %v2183 = vrot.slane %v2132, 4
        %v2184 = vsel %vm913, %v2144, %v2183
        %v2186 = vunpack.c.l.s4 1934713408
        %v2187 = vunpack.c.0.s8 %v2186
        %v2188 = vperm.slane %v2182, %v2187
        %v2190 = vunpack.c.l.s4 1934713408
        %v2191 = vunpack.c.0.s8 %v2190
        %v2192 = vperm.slane %v2184, %v2191
        %v2193 = vrot.slane %v2164, 4
        %v2194 = vsel %vm913, %v2193, %v2152
        %v2195 = vrot.slane %v2152, 4
        %v2196 = vsel %vm913, %v2164, %v2195
        %v2198 = vunpack.c.l.s4 1934713408
        %v2199 = vunpack.c.0.s8 %v2198
        %v2200 = vperm.slane %v2194, %v2199
        %v2202 = vunpack.c.l.s4 1934713408
        %v2203 = vunpack.c.0.s8 %v2202
        %v2204 = vperm.slane %v2196, %v2203
        %v2205 = vrot.slane %v2168, 4
        %v2206 = vsel %vm913, %v2205, %v2156
        %v2207 = vrot.slane %v2156, 4
        %v2208 = vsel %vm913, %v2168, %v2207
        %v2210 = vunpack.c.l.s4 1934713408
        %v2211 = vunpack.c.0.s8 %v2210
        %v2212 = vperm.slane %v2206, %v2211
        %v2214 = vunpack.c.l.s4 1934713408
        %v2215 = vunpack.c.0.s8 %v2214
        %v2216 = vperm.slane %v2208, %v2215
        %v2217 = vrot.slane %v2200, 4
        %v2218 = vsel %vm913, %v2217, %v2176
        %v2219 = vrot.slane %v2176, 4
        %v2220 = vsel %vm913, %v2200, %v2219
        %v2221 = vrot.slane %v2204, 4
        %v2222 = vsel %vm913, %v2221, %v2180
        %v2223 = vrot.slane %v2180, 4
        %v2224 = vsel %vm913, %v2204, %v2223
        %v2225 = vrot.slane %v2212, 4
        %v2226 = vsel %vm913, %v2225, %v2188
        %v2227 = vrot.slane %v2188, 4
        %v2228 = vsel %vm913, %v2212, %v2227
        %v2229 = vrot.slane %v2216, 4
        %v2230 = vsel %vm913, %v2229, %v2192
        %v2231 = vrot.slane %v2192, 4
        %v2232 = vsel %vm913, %v2216, %v2231
        %v2233 = vrot.slane %v2110, 4
        %v2234 = vsel %vm913, %v2233, %v2106
        %v2235 = vrot.slane %v2106, 4
        %v2236 = vsel %vm913, %v2110, %v2235
        %v2238 = vunpack.c.l.s4 1983009808
        %v2239 = vunpack.c.0.s8 %v2238
        %v2240 = vperm.slane %v2234, %v2239
        %v2242 = vunpack.c.l.s4 1983009808
        %v2243 = vunpack.c.0.s8 %v2242
        %v2244 = vperm.slane %v2236, %v2243
        %v2245 = vrot.slane %v2112, 4
        %v2246 = vsel %vm913, %v2245, %v2108
        %v2247 = vrot.slane %v2108, 4
        %v2248 = vsel %vm913, %v2112, %v2247
        %v2250 = vunpack.c.l.s4 1983009808
        %v2251 = vunpack.c.0.s8 %v2250
        %v2252 = vperm.slane %v2246, %v2251
        %v2254 = vunpack.c.l.s4 1983009808
        %v2255 = vunpack.c.0.s8 %v2254
        %v2256 = vperm.slane %v2248, %v2255
        %v2257 = vrot.slane %v2118, 4
        %v2258 = vsel %vm913, %v2257, %v2114
        %v2259 = vrot.slane %v2114, 4
        %v2260 = vsel %vm913, %v2118, %v2259
        %v2262 = vunpack.c.l.s4 1983009808
        %v2263 = vunpack.c.0.s8 %v2262
        %v2264 = vperm.slane %v2258, %v2263
        %v2266 = vunpack.c.l.s4 1983009808
        %v2267 = vunpack.c.0.s8 %v2266
        %v2268 = vperm.slane %v2260, %v2267
        %v2269 = vrot.slane %v2120, 4
        %v2270 = vsel %vm913, %v2269, %v2116
        %v2271 = vrot.slane %v2116, 4
        %v2272 = vsel %vm913, %v2120, %v2271
        %v2274 = vunpack.c.l.s4 1983009808
        %v2275 = vunpack.c.0.s8 %v2274
        %v2276 = vperm.slane %v2270, %v2275
        %v2278 = vunpack.c.l.s4 1983009808
        %v2279 = vunpack.c.0.s8 %v2278
        %v2280 = vperm.slane %v2272, %v2279
        %v2281 = vrot.slane %v2252, 4
        %v2282 = vsel %vm913, %v2281, %v2240
        %v2283 = vrot.slane %v2240, 4
        %v2284 = vsel %vm913, %v2252, %v2283
        %v2286 = vunpack.c.l.s4 1934713408
        %v2287 = vunpack.c.0.s8 %v2286
        %v2288 = vperm.slane %v2282, %v2287
        %v2290 = vunpack.c.l.s4 1934713408
        %v2291 = vunpack.c.0.s8 %v2290
        %v2292 = vperm.slane %v2284, %v2291
        %v2293 = vrot.slane %v2256, 4
        %v2294 = vsel %vm913, %v2293, %v2244
        %v2295 = vrot.slane %v2244, 4
        %v2296 = vsel %vm913, %v2256, %v2295
        %v2298 = vunpack.c.l.s4 1934713408
        %v2299 = vunpack.c.0.s8 %v2298
        %v2300 = vperm.slane %v2294, %v2299
        %v2302 = vunpack.c.l.s4 1934713408
        %v2303 = vunpack.c.0.s8 %v2302
        %v2304 = vperm.slane %v2296, %v2303
        %v2305 = vrot.slane %v2276, 4
        %v2306 = vsel %vm913, %v2305, %v2264
        %v2307 = vrot.slane %v2264, 4
        %v2308 = vsel %vm913, %v2276, %v2307
        %v2310 = vunpack.c.l.s4 1934713408
        %v2311 = vunpack.c.0.s8 %v2310
        %v2312 = vperm.slane %v2306, %v2311
        %v2314 = vunpack.c.l.s4 1934713408
        %v2315 = vunpack.c.0.s8 %v2314
        %v2316 = vperm.slane %v2308, %v2315
        %v2317 = vrot.slane %v2280, 4
        %v2318 = vsel %vm913, %v2317, %v2268
        %v2319 = vrot.slane %v2268, 4
        %v2320 = vsel %vm913, %v2280, %v2319
        %v2322 = vunpack.c.l.s4 1934713408
        %v2323 = vunpack.c.0.s8 %v2322
        %v2324 = vperm.slane %v2318, %v2323
        %v2326 = vunpack.c.l.s4 1934713408
        %v2327 = vunpack.c.0.s8 %v2326
        %v2328 = vperm.slane %v2320, %v2327
        %v2329 = vrot.slane %v2312, 4
        %v2330 = vsel %vm913, %v2329, %v2288
        %v2331 = vrot.slane %v2288, 4
        %v2332 = vsel %vm913, %v2312, %v2331
        %v2333 = vrot.slane %v2316, 4
        %v2334 = vsel %vm913, %v2333, %v2292
        %v2335 = vrot.slane %v2292, 4
        %v2336 = vsel %vm913, %v2316, %v2335
        %v2337 = vrot.slane %v2324, 4
        %v2338 = vsel %vm913, %v2337, %v2300
        %v2339 = vrot.slane %v2300, 4
        %v2340 = vsel %vm913, %v2324, %v2339
        %v2341 = vrot.slane %v2328, 4
        %v2342 = vsel %vm913, %v2341, %v2304
        %v2343 = vrot.slane %v2304, 4
        %v2344 = vsel %vm913, %v2328, %v2343
        %vm2345 = vcmask 130048
        %v2346 = vsel %vm2345, %v1234, 0.0
        %2347 = vadd.xlane.f32.xlu0 %v2346
        %v2348 = vpop.xlane.xlu0 %2347
        %v2349 = vsel %vm2345, %v1346, 0.0
        %2350 = vadd.xlane.f32.xlu0 %v2349
        %v2351 = vpop.xlane.xlu0 %2350
        %v2352 = vsel %vm2345, %v1236, 0.0
        %2353 = vadd.xlane.f32.xlu0 %v2352
        %v2354 = vpop.xlane.xlu0 %2353
        %v2355 = vsel %vm2345, %v1348, 0.0
        %2356 = vadd.xlane.f32.xlu0 %v2355
        %v2357 = vpop.xlane.xlu0 %2356
        %v2358 = vsel %vm2345, %v1238, 0.0
        %2359 = vadd.xlane.f32.xlu0 %v2358
        %v2360 = vpop.xlane.xlu0 %2359
        %v2361 = vsel %vm2345, %v1350, 0.0
        %2362 = vadd.xlane.f32.xlu0 %v2361
        %v2363 = vpop.xlane.xlu0 %2362
        %v2364 = vsel %vm2345, %v1240, 0.0
        %2365 = vadd.xlane.f32.xlu0 %v2364
        %v2366 = vpop.xlane.xlu0 %2365
        %v2367 = vsel %vm2345, %v1352, 0.0
        %2368 = vadd.xlane.f32.xlu0 %v2367
        %v2369 = vpop.xlane.xlu0 %2368
        %v2370 = vsel %vm2345, %v1242, 0.0
        %2371 = vadd.xlane.f32.xlu0 %v2370
        %v2372 = vpop.xlane.xlu0 %2371
        %v2373 = vsel %vm2345, %v1354, 0.0
        %2374 = vadd.xlane.f32.xlu0 %v2373
        %v2375 = vpop.xlane.xlu0 %2374
        %v2376 = vsel %vm2345, %v1244, 0.0
        %2377 = vadd.xlane.f32.xlu0 %v2376
        %v2378 = vpop.xlane.xlu0 %2377
        %v2379 = vsel %vm2345, %v1356, 0.0
        %2380 = vadd.xlane.f32.xlu0 %v2379
        %v2381 = vpop.xlane.xlu0 %2380
        %v2382 = vsel %vm2345, %v1246, 0.0
        %2383 = vadd.xlane.f32.xlu0 %v2382
        %v2384 = vpop.xlane.xlu0 %2383
        %v2385 = vsel %vm2345, %v1358, 0.0
        %2386 = vadd.xlane.f32.xlu0 %v2385
        %v2387 = vpop.xlane.xlu0 %2386
        %v2388 = vsel %vm2345, %v1248, 0.0
        %2389 = vadd.xlane.f32.xlu0 %v2388
        %v2390 = vpop.xlane.xlu0 %2389
        %v2391 = vsel %vm2345, %v1360, 0.0
        %2392 = vadd.xlane.f32.xlu0 %v2391
        %v2393 = vpop.xlane.xlu0 %2392
        %v2394 = vrcp.pop 16.0
        %v2395 = vmul.f32 16.0, %v2394
        %v2396 = vsub.f32 1.0, %v2395
        %v2397 = vmul.f32 %v2394, %v2396
        %v2398 = vadd.f32 %v2394, %v2397
        %vm2399 = vweird.f32 %v2394
        %v2400 = vsel %vm2399, %v2394, %v2398
        %v2401 = vmul.f32 %v2348, %v2400
        %v2402 = vmul.f32 %v2351, %v2400
        %v2403 = vmul.f32 %v2354, %v2400
        %v2404 = vmul.f32 %v2357, %v2400
        %v2405 = vmul.f32 %v2360, %v2400
        %v2406 = vmul.f32 %v2363, %v2400
        %v2407 = vmul.f32 %v2366, %v2400
        %v2408 = vmul.f32 %v2369, %v2400
        %v2409 = vmul.f32 %v2372, %v2400
        %v2410 = vmul.f32 %v2375, %v2400
        %v2411 = vmul.f32 %v2378, %v2400
        %v2412 = vmul.f32 %v2381, %v2400
        %v2413 = vmul.f32 %v2384, %v2400
        %v2414 = vmul.f32 %v2387, %v2400
        %v2415 = vmul.f32 %v2390, %v2400
        %v2416 = vmul.f32 %v2393, %v2400
        %v2417 = vsub.f32 %v1234, %v2401
        %v2418 = vsub.f32 %v1346, %v2402
        %v2419 = vsub.f32 %v1236, %v2403
        %v2420 = vsub.f32 %v1348, %v2404
        %v2421 = vsub.f32 %v1238, %v2405
        %v2422 = vsub.f32 %v1350, %v2406
        %v2423 = vsub.f32 %v1240, %v2407
        %v2424 = vsub.f32 %v1352, %v2408
        %v2425 = vsub.f32 %v1242, %v2409
        %v2426 = vsub.f32 %v1354, %v2410
        %v2427 = vsub.f32 %v1244, %v2411
        %v2428 = vsub.f32 %v1356, %v2412
        %v2429 = vsub.f32 %v1246, %v2413
        %v2430 = vsub.f32 %v1358, %v2414
        %v2431 = vsub.f32 %v1248, %v2415
        %v2432 = vsub.f32 %v1360, %v2416
        %v2433 = vmul.f32 %v2417, %v2417
        %v2434 = vmul.f32 %v2418, %v2418
        %v2435 = vmul.f32 %v2419, %v2419
        %v2436 = vmul.f32 %v2420, %v2420
        %v2437 = vmul.f32 %v2421, %v2421
        %v2438 = vmul.f32 %v2422, %v2422
        %v2439 = vmul.f32 %v2423, %v2423
        %v2440 = vmul.f32 %v2424, %v2424
        %v2441 = vmul.f32 %v2425, %v2425
        %v2442 = vmul.f32 %v2426, %v2426
        %v2443 = vmul.f32 %v2427, %v2427
        %v2444 = vmul.f32 %v2428, %v2428
        %v2445 = vmul.f32 %v2429, %v2429
        %v2446 = vmul.f32 %v2430, %v2430
        %v2447 = vmul.f32 %v2431, %v2431
        %v2448 = vmul.f32 %v2432, %v2432
        %v2449 = vsel %vm2345, %v2433, 0.0
        %2450 = vadd.xlane.f32.xlu0 %v2449
        %v2451 = vpop.xlane.xlu0 %2450
        %v2452 = vsel %vm2345, %v2434, 0.0
        %2453 = vadd.xlane.f32.xlu0 %v2452
        %v2454 = vpop.xlane.xlu0 %2453
        %v2455 = vsel %vm2345, %v2435, 0.0
        %2456 = vadd.xlane.f32.xlu0 %v2455
        %v2457 = vpop.xlane.xlu0 %2456
        %v2458 = vsel %vm2345, %v2436, 0.0
        %2459 = vadd.xlane.f32.xlu0 %v2458
        %v2460 = vpop.xlane.xlu0 %2459
        %v2461 = vsel %vm2345, %v2437, 0.0
        %2462 = vadd.xlane.f32.xlu0 %v2461
        %v2463 = vpop.xlane.xlu0 %2462
        %v2464 = vsel %vm2345, %v2438, 0.0
        %2465 = vadd.xlane.f32.xlu0 %v2464
        %v2466 = vpop.xlane.xlu0 %2465
        %v2467 = vsel %vm2345, %v2439, 0.0
        %2468 = vadd.xlane.f32.xlu0 %v2467
        %v2469 = vpop.xlane.xlu0 %2468
        %v2470 = vsel %vm2345, %v2440, 0.0
        %2471 = vadd.xlane.f32.xlu0 %v2470
        %v2472 = vpop.xlane.xlu0 %2471
        %v2473 = vsel %vm2345, %v2441, 0.0
        %2474 = vadd.xlane.f32.xlu0 %v2473
        %v2475 = vpop.xlane.xlu0 %2474
        %v2476 = vsel %vm2345, %v2442, 0.0
        %2477 = vadd.xlane.f32.xlu0 %v2476
        %v2478 = vpop.xlane.xlu0 %2477
        %v2479 = vsel %vm2345, %v2443, 0.0
        %2480 = vadd.xlane.f32.xlu0 %v2479
        %v2481 = vpop.xlane.xlu0 %2480
        %v2482 = vsel %vm2345, %v2444, 0.0
        %2483 = vadd.xlane.f32.xlu0 %v2482
        %v2484 = vpop.xlane.xlu0 %2483
        %v2485 = vsel %vm2345, %v2445, 0.0
        %2486 = vadd.xlane.f32.xlu0 %v2485
        %v2487 = vpop.xlane.xlu0 %2486
        %v2488 = vsel %vm2345, %v2446, 0.0
        %2489 = vadd.xlane.f32.xlu0 %v2488
        %v2490 = vpop.xlane.xlu0 %2489
        %v2491 = vsel %vm2345, %v2447, 0.0
        %2492 = vadd.xlane.f32.xlu0 %v2491
        %v2493 = vpop.xlane.xlu0 %2492
        %v2494 = vsel %vm2345, %v2448, 0.0
        %2495 = vadd.xlane.f32.xlu0 %v2494
        %v2496 = vpop.xlane.xlu0 %2495
        %v2497 = vmul.f32 %v2451, %v2400
        %v2498 = vmul.f32 %v2454, %v2400
        %v2499 = vmul.f32 %v2457, %v2400
        %v2500 = vmul.f32 %v2460, %v2400
        %v2501 = vmul.f32 %v2463, %v2400
        %v2502 = vmul.f32 %v2466, %v2400
        %v2503 = vmul.f32 %v2469, %v2400
        %v2504 = vmul.f32 %v2472, %v2400
        %v2505 = vmul.f32 %v2475, %v2400
        %v2506 = vmul.f32 %v2478, %v2400
        %v2507 = vmul.f32 %v2481, %v2400
        %v2508 = vmul.f32 %v2484, %v2400
        %v2509 = vmul.f32 %v2487, %v2400
        %v2510 = vmul.f32 %v2490, %v2400
        %v2511 = vmul.f32 %v2493, %v2400
        %v2512 = vmul.f32 %v2496, %v2400
        %v2513 = vadd.f32 %v2497, 1e-05
        %v2514 = vadd.f32 %v2498, 1e-05
        %v2515 = vadd.f32 %v2499, 1e-05
        %v2516 = vadd.f32 %v2500, 1e-05
        %v2517 = vadd.f32 %v2501, 1e-05
        %v2518 = vadd.f32 %v2502, 1e-05
        %v2519 = vadd.f32 %v2503, 1e-05
        %v2520 = vadd.f32 %v2504, 1e-05
        %v2521 = vadd.f32 %v2505, 1e-05
        %v2522 = vadd.f32 %v2506, 1e-05
        %v2523 = vadd.f32 %v2507, 1e-05
        %v2524 = vadd.f32 %v2508, 1e-05
        %v2525 = vadd.f32 %v2509, 1e-05
        %v2526 = vadd.f32 %v2510, 1e-05
        %v2527 = vadd.f32 %v2511, 1e-05
        %v2528 = vadd.f32 %v2512, 1e-05
        %v2529 = vrsqrt.pop %v2513
        %v2530 = vmul.f32 %v2529, %v2513
        %v2531 = vmul.f32 %v2530, %v2529
        %v2532 = vmul.f32 0.5, %v2531
        %v2533 = vsub.f32 1.5, %v2532
        %v2534 = vmul.f32 %v2529, %v2533
        %vm2535 = vweird.f32 %v2513
        %vm2536 = vweird.f32 %v2529
        %vm2537 = vmor %vm2535, %vm2536
        %v2538 = vsel %vm2537, %v2529, %v2534
        %v2539 = vrsqrt.pop %v2514
        %v2540 = vmul.f32 %v2539, %v2514
        %v2541 = vmul.f32 %v2540, %v2539
        %v2542 = vmul.f32 0.5, %v2541
        %v2543 = vsub.f32 1.5, %v2542
        %v2544 = vmul.f32 %v2539, %v2543
        %vm2545 = vweird.f32 %v2514
        %vm2546 = vweird.f32 %v2539
        %vm2547 = vmor %vm2545, %vm2546
        %v2548 = vsel %vm2547, %v2539, %v2544
        %v2549 = vrsqrt.pop %v2515
        %v2550 = vmul.f32 %v2549, %v2515
        %v2551 = vmul.f32 %v2550, %v2549
        %v2552 = vmul.f32 0.5, %v2551
        %v2553 = vsub.f32 1.5, %v2552
        %v2554 = vmul.f32 %v2549, %v2553
        %vm2555 = vweird.f32 %v2515
        %vm2556 = vweird.f32 %v2549
        %vm2557 = vmor %vm2555, %vm2556
        %v2558 = vsel %vm2557, %v2549, %v2554
        %v2559 = vrsqrt.pop %v2516
        %v2560 = vmul.f32 %v2559, %v2516
        %v2561 = vmul.f32 %v2560, %v2559
        %v2562 = vmul.f32 0.5, %v2561
        %v2563 = vsub.f32 1.5, %v2562
        %v2564 = vmul.f32 %v2559, %v2563
        %vm2565 = vweird.f32 %v2516
        %vm2566 = vweird.f32 %v2559
        %vm2567 = vmor %vm2565, %vm2566
        %v2568 = vsel %vm2567, %v2559, %v2564
        %v2569 = vrsqrt.pop %v2517
        %v2570 = vmul.f32 %v2569, %v2517
        %v2571 = vmul.f32 %v2570, %v2569
        %v2572 = vmul.f32 0.5, %v2571
        %v2573 = vsub.f32 1.5, %v2572
        %v2574 = vmul.f32 %v2569, %v2573
        %vm2575 = vweird.f32 %v2517
        %vm2576 = vweird.f32 %v2569
        %vm2577 = vmor %vm2575, %vm2576
        %v2578 = vsel %vm2577, %v2569, %v2574
        %v2579 = vrsqrt.pop %v2518
        %v2580 = vmul.f32 %v2579, %v2518
        %v2581 = vmul.f32 %v2580, %v2579
        %v2582 = vmul.f32 0.5, %v2581
        %v2583 = vsub.f32 1.5, %v2582
        %v2584 = vmul.f32 %v2579, %v2583
        %vm2585 = vweird.f32 %v2518
        %vm2586 = vweird.f32 %v2579
        %vm2587 = vmor %vm2585, %vm2586
        %v2588 = vsel %vm2587, %v2579, %v2584
        %v2589 = vrsqrt.pop %v2519
        %v2590 = vmul.f32 %v2589, %v2519
        %v2591 = vmul.f32 %v2590, %v2589
        %v2592 = vmul.f32 0.5, %v2591
        %v2593 = vsub.f32 1.5, %v2592
        %v2594 = vmul.f32 %v2589, %v2593
        %vm2595 = vweird.f32 %v2519
        %vm2596 = vweird.f32 %v2589
        %vm2597 = vmor %vm2595, %vm2596
        %v2598 = vsel %vm2597, %v2589, %v2594
        %v2599 = vrsqrt.pop %v2520
        %v2600 = vmul.f32 %v2599, %v2520
        %v2601 = vmul.f32 %v2600, %v2599
        %v2602 = vmul.f32 0.5, %v2601
        %v2603 = vsub.f32 1.5, %v2602
        %v2604 = vmul.f32 %v2599, %v2603
        %vm2605 = vweird.f32 %v2520
        %vm2606 = vweird.f32 %v2599
        %vm2607 = vmor %vm2605, %vm2606
        %v2608 = vsel %vm2607, %v2599, %v2604
        %v2609 = vrsqrt.pop %v2521
        %v2610 = vmul.f32 %v2609, %v2521
        %v2611 = vmul.f32 %v2610, %v2609
        %v2612 = vmul.f32 0.5, %v2611
        %v2613 = vsub.f32 1.5, %v2612
        %v2614 = vmul.f32 %v2609, %v2613
        %vm2615 = vweird.f32 %v2521
        %vm2616 = vweird.f32 %v2609
        %vm2617 = vmor %vm2615, %vm2616
        %v2618 = vsel %vm2617, %v2609, %v2614
        %v2619 = vrsqrt.pop %v2522
        %v2620 = vmul.f32 %v2619, %v2522
        %v2621 = vmul.f32 %v2620, %v2619
        %v2622 = vmul.f32 0.5, %v2621
        %v2623 = vsub.f32 1.5, %v2622
        %v2624 = vmul.f32 %v2619, %v2623
        %vm2625 = vweird.f32 %v2522
        %vm2626 = vweird.f32 %v2619
        %vm2627 = vmor %vm2625, %vm2626
        %v2628 = vsel %vm2627, %v2619, %v2624
        %v2629 = vrsqrt.pop %v2523
        %v2630 = vmul.f32 %v2629, %v2523
        %v2631 = vmul.f32 %v2630, %v2629
        %v2632 = vmul.f32 0.5, %v2631
        %v2633 = vsub.f32 1.5, %v2632
        %v2634 = vmul.f32 %v2629, %v2633
        %vm2635 = vweird.f32 %v2523
        %vm2636 = vweird.f32 %v2629
        %vm2637 = vmor %vm2635, %vm2636
        %v2638 = vsel %vm2637, %v2629, %v2634
        %v2639 = vrsqrt.pop %v2524
        %v2640 = vmul.f32 %v2639, %v2524
        %v2641 = vmul.f32 %v2640, %v2639
        %v2642 = vmul.f32 0.5, %v2641
        %v2643 = vsub.f32 1.5, %v2642
        %v2644 = vmul.f32 %v2639, %v2643
        %vm2645 = vweird.f32 %v2524
        %vm2646 = vweird.f32 %v2639
        %vm2647 = vmor %vm2645, %vm2646
        %v2648 = vsel %vm2647, %v2639, %v2644
        %v2649 = vrsqrt.pop %v2525
        %v2650 = vmul.f32 %v2649, %v2525
        %v2651 = vmul.f32 %v2650, %v2649
        %v2652 = vmul.f32 0.5, %v2651
        %v2653 = vsub.f32 1.5, %v2652
        %v2654 = vmul.f32 %v2649, %v2653
        %vm2655 = vweird.f32 %v2525
        %vm2656 = vweird.f32 %v2649
        %vm2657 = vmor %vm2655, %vm2656
        %v2658 = vsel %vm2657, %v2649, %v2654
        %v2659 = vrsqrt.pop %v2526
        %v2660 = vmul.f32 %v2659, %v2526
        %v2661 = vmul.f32 %v2660, %v2659
        %v2662 = vmul.f32 0.5, %v2661
        %v2663 = vsub.f32 1.5, %v2662
        %v2664 = vmul.f32 %v2659, %v2663
        %vm2665 = vweird.f32 %v2526
        %vm2666 = vweird.f32 %v2659
        %vm2667 = vmor %vm2665, %vm2666
        %v2668 = vsel %vm2667, %v2659, %v2664
        %v2669 = vrsqrt.pop %v2527
        %v2670 = vmul.f32 %v2669, %v2527
        %v2671 = vmul.f32 %v2670, %v2669
        %v2672 = vmul.f32 0.5, %v2671
        %v2673 = vsub.f32 1.5, %v2672
        %v2674 = vmul.f32 %v2669, %v2673
        %vm2675 = vweird.f32 %v2527
        %vm2676 = vweird.f32 %v2669
        %vm2677 = vmor %vm2675, %vm2676
        %v2678 = vsel %vm2677, %v2669, %v2674
        %v2679 = vrsqrt.pop %v2528
        %v2680 = vmul.f32 %v2679, %v2528
        %v2681 = vmul.f32 %v2680, %v2679
        %v2682 = vmul.f32 0.5, %v2681
        %v2683 = vsub.f32 1.5, %v2682
        %v2684 = vmul.f32 %v2679, %v2683
        %vm2685 = vweird.f32 %v2528
        %vm2686 = vweird.f32 %v2679
        %vm2687 = vmor %vm2685, %vm2686
        %v2688 = vsel %vm2687, %v2679, %v2684
        %v2689 = vmul.f32 %v2417, %v2538
        %v2690 = vmul.f32 %v2418, %v2548
        %v2691 = vmul.f32 %v2419, %v2558
        %v2692 = vmul.f32 %v2420, %v2568
        %v2693 = vmul.f32 %v2421, %v2578
        %v2694 = vmul.f32 %v2422, %v2588
        %v2695 = vmul.f32 %v2423, %v2598
        %v2696 = vmul.f32 %v2424, %v2608
        %v2697 = vmul.f32 %v2425, %v2618
        %v2698 = vmul.f32 %v2426, %v2628
        %v2699 = vmul.f32 %v2427, %v2638
        %v2700 = vmul.f32 %v2428, %v2648
        %v2701 = vmul.f32 %v2429, %v2658
        %v2702 = vmul.f32 %v2430, %v2668
        %v2703 = vmul.f32 %v2431, %v2678
        %v2704 = vmul.f32 %v2432, %v2688
        %v2706 = vperm.slane %v864, 0
        %v2708 = vmul.f32 %v2689, %v2706
        %v2709 = vmul.f32 %v2690, %v2706
        %v2710 = vmul.f32 %v2691, %v2706
        %v2711 = vmul.f32 %v2692, %v2706
        %v2712 = vmul.f32 %v2693, %v2706
        %v2713 = vmul.f32 %v2694, %v2706
        %v2714 = vmul.f32 %v2695, %v2706
        %v2715 = vmul.f32 %v2696, %v2706
        %v2716 = vmul.f32 %v2697, %v2706
        %v2717 = vmul.f32 %v2698, %v2706
        %v2718 = vmul.f32 %v2699, %v2706
        %v2719 = vmul.f32 %v2700, %v2706
        %v2720 = vmul.f32 %v2701, %v2706
        %v2721 = vmul.f32 %v2702, %v2706
        %v2722 = vmul.f32 %v2703, %v2706
        %v2723 = vmul.f32 %v2704, %v2706
        %v2725 = vperm.slane %v865, 0
        %v2727 = vadd.f32 %v2708, %v2725
        %v2728 = vadd.f32 %v2709, %v2725
        %v2729 = vadd.f32 %v2710, %v2725
        %v2730 = vadd.f32 %v2711, %v2725
        %v2731 = vadd.f32 %v2712, %v2725
        %v2732 = vadd.f32 %v2713, %v2725
        %v2733 = vadd.f32 %v2714, %v2725
        %v2734 = vadd.f32 %v2715, %v2725
        %v2735 = vadd.f32 %v2716, %v2725
        %v2736 = vadd.f32 %v2717, %v2725
        %v2737 = vadd.f32 %v2718, %v2725
        %v2738 = vadd.f32 %v2719, %v2725
        %v2739 = vadd.f32 %v2720, %v2725
        %v2740 = vadd.f32 %v2721, %v2725
        %v2741 = vadd.f32 %v2722, %v2725
        %v2742 = vadd.f32 %v2723, %v2725
        %v2743 = vsel %vm2345, %v1726, 0.0
        %2744 = vadd.xlane.f32.xlu0 %v2743
        %v2745 = vpop.xlane.xlu0 %2744
        %v2746 = vsel %vm2345, %v1838, 0.0
        %2747 = vadd.xlane.f32.xlu0 %v2746
        %v2748 = vpop.xlane.xlu0 %2747
        %v2749 = vsel %vm2345, %v1728, 0.0
        %2750 = vadd.xlane.f32.xlu0 %v2749
        %v2751 = vpop.xlane.xlu0 %2750
        %v2752 = vsel %vm2345, %v1840, 0.0
        %2753 = vadd.xlane.f32.xlu0 %v2752
        %v2754 = vpop.xlane.xlu0 %2753
        %v2755 = vsel %vm2345, %v1730, 0.0
        %2756 = vadd.xlane.f32.xlu0 %v2755
        %v2757 = vpop.xlane.xlu0 %2756
        %v2758 = vsel %vm2345, %v1842, 0.0
        %2759 = vadd.xlane.f32.xlu0 %v2758
        %v2760 = vpop.xlane.xlu0 %2759
        %v2761 = vsel %vm2345, %v1732, 0.0
        %2762 = vadd.xlane.f32.xlu0 %v2761
        %v2763 = vpop.xlane.xlu0 %2762
        %v2764 = vsel %vm2345, %v1844, 0.0
        %2765 = vadd.xlane.f32.xlu0 %v2764
        %v2766 = vpop.xlane.xlu0 %2765
        %v2767 = vsel %vm2345, %v1734, 0.0
        %2768 = vadd.xlane.f32.xlu0 %v2767
        %v2769 = vpop.xlane.xlu0 %2768
        %v2770 = vsel %vm2345, %v1846, 0.0
        %2771 = vadd.xlane.f32.xlu0 %v2770
        %v2772 = vpop.xlane.xlu0 %2771
        %v2773 = vsel %vm2345, %v1736, 0.0
        %2774 = vadd.xlane.f32.xlu0 %v2773
        %v2775 = vpop.xlane.xlu0 %2774
        %v2776 = vsel %vm2345, %v1848, 0.0
        %2777 = vadd.xlane.f32.xlu0 %v2776
        %v2778 = vpop.xlane.xlu0 %2777
        %v2779 = vsel %vm2345, %v1738, 0.0
        %2780 = vadd.xlane.f32.xlu0 %v2779
        %v2781 = vpop.xlane.xlu0 %2780
        %v2782 = vsel %vm2345, %v1850, 0.0
        %2783 = vadd.xlane.f32.xlu0 %v2782
        %v2784 = vpop.xlane.xlu0 %2783
        %v2785 = vsel %vm2345, %v1740, 0.0
        %2786 = vadd.xlane.f32.xlu0 %v2785
        %v2787 = vpop.xlane.xlu0 %2786
        %v2788 = vsel %vm2345, %v1852, 0.0
        %2789 = vadd.xlane.f32.xlu0 %v2788
        %v2790 = vpop.xlane.xlu0 %2789
        %v2791 = vmul.f32 %v2745, %v2400
        %v2792 = vmul.f32 %v2748, %v2400
        %v2793 = vmul.f32 %v2751, %v2400
        %v2794 = vmul.f32 %v2754, %v2400
        %v2795 = vmul.f32 %v2757, %v2400
        %v2796 = vmul.f32 %v2760, %v2400
        %v2797 = vmul.f32 %v2763, %v2400
        %v2798 = vmul.f32 %v2766, %v2400
        %v2799 = vmul.f32 %v2769, %v2400
        %v2800 = vmul.f32 %v2772, %v2400
        %v2801 = vmul.f32 %v2775, %v2400
        %v2802 = vmul.f32 %v2778, %v2400
        %v2803 = vmul.f32 %v2781, %v2400
        %v2804 = vmul.f32 %v2784, %v2400
        %v2805 = vmul.f32 %v2787, %v2400
        %v2806 = vmul.f32 %v2790, %v2400
        %v2807 = vsub.f32 %v1726, %v2791
        %v2808 = vsub.f32 %v1838, %v2792
        %v2809 = vsub.f32 %v1728, %v2793
        %v2810 = vsub.f32 %v1840, %v2794
        %v2811 = vsub.f32 %v1730, %v2795
        %v2812 = vsub.f32 %v1842, %v2796
        %v2813 = vsub.f32 %v1732, %v2797
        %v2814 = vsub.f32 %v1844, %v2798
        %v2815 = vsub.f32 %v1734, %v2799
        %v2816 = vsub.f32 %v1846, %v2800
        %v2817 = vsub.f32 %v1736, %v2801
        %v2818 = vsub.f32 %v1848, %v2802
        %v2819 = vsub.f32 %v1738, %v2803
        %v2820 = vsub.f32 %v1850, %v2804
        %v2821 = vsub.f32 %v1740, %v2805
        %v2822 = vsub.f32 %v1852, %v2806
        %v2823 = vmul.f32 %v2807, %v2807
        %v2824 = vmul.f32 %v2808, %v2808
        %v2825 = vmul.f32 %v2809, %v2809
        %v2826 = vmul.f32 %v2810, %v2810
        %v2827 = vmul.f32 %v2811, %v2811
        %v2828 = vmul.f32 %v2812, %v2812
        %v2829 = vmul.f32 %v2813, %v2813
        %v2830 = vmul.f32 %v2814, %v2814
        %v2831 = vmul.f32 %v2815, %v2815
        %v2832 = vmul.f32 %v2816, %v2816
        %v2833 = vmul.f32 %v2817, %v2817
        %v2834 = vmul.f32 %v2818, %v2818
        %v2835 = vmul.f32 %v2819, %v2819
        %v2836 = vmul.f32 %v2820, %v2820
        %v2837 = vmul.f32 %v2821, %v2821
        %v2838 = vmul.f32 %v2822, %v2822
        %v2839 = vsel %vm2345, %v2823, 0.0
        %2840 = vadd.xlane.f32.xlu0 %v2839
        %v2841 = vpop.xlane.xlu0 %2840
        %v2842 = vsel %vm2345, %v2824, 0.0
        %2843 = vadd.xlane.f32.xlu0 %v2842
        %v2844 = vpop.xlane.xlu0 %2843
        %v2845 = vsel %vm2345, %v2825, 0.0
        %2846 = vadd.xlane.f32.xlu0 %v2845
        %v2847 = vpop.xlane.xlu0 %2846
        %v2848 = vsel %vm2345, %v2826, 0.0
        %2849 = vadd.xlane.f32.xlu0 %v2848
        %v2850 = vpop.xlane.xlu0 %2849
        %v2851 = vsel %vm2345, %v2827, 0.0
        %2852 = vadd.xlane.f32.xlu0 %v2851
        %v2853 = vpop.xlane.xlu0 %2852
        %v2854 = vsel %vm2345, %v2828, 0.0
        %2855 = vadd.xlane.f32.xlu0 %v2854
        %v2856 = vpop.xlane.xlu0 %2855
        %v2857 = vsel %vm2345, %v2829, 0.0
        %2858 = vadd.xlane.f32.xlu0 %v2857
        %v2859 = vpop.xlane.xlu0 %2858
        %v2860 = vsel %vm2345, %v2830, 0.0
        %2861 = vadd.xlane.f32.xlu0 %v2860
        %v2862 = vpop.xlane.xlu0 %2861
        %v2863 = vsel %vm2345, %v2831, 0.0
        %2864 = vadd.xlane.f32.xlu0 %v2863
        %v2865 = vpop.xlane.xlu0 %2864
        %v2866 = vsel %vm2345, %v2832, 0.0
        %2867 = vadd.xlane.f32.xlu0 %v2866
        %v2868 = vpop.xlane.xlu0 %2867
        %v2869 = vsel %vm2345, %v2833, 0.0
        %2870 = vadd.xlane.f32.xlu0 %v2869
        %v2871 = vpop.xlane.xlu0 %2870
        %v2872 = vsel %vm2345, %v2834, 0.0
        %2873 = vadd.xlane.f32.xlu0 %v2872
        %v2874 = vpop.xlane.xlu0 %2873
        %v2875 = vsel %vm2345, %v2835, 0.0
        %2876 = vadd.xlane.f32.xlu0 %v2875
        %v2877 = vpop.xlane.xlu0 %2876
        %v2878 = vsel %vm2345, %v2836, 0.0
        %2879 = vadd.xlane.f32.xlu0 %v2878
        %v2880 = vpop.xlane.xlu0 %2879
        %v2881 = vsel %vm2345, %v2837, 0.0
        %2882 = vadd.xlane.f32.xlu0 %v2881
        %v2883 = vpop.xlane.xlu0 %2882
        %v2884 = vsel %vm2345, %v2838, 0.0
        %2885 = vadd.xlane.f32.xlu0 %v2884
        %v2886 = vpop.xlane.xlu0 %2885
        %v2887 = vmul.f32 %v2841, %v2400
        %v2888 = vmul.f32 %v2844, %v2400
        %v2889 = vmul.f32 %v2847, %v2400
        %v2890 = vmul.f32 %v2850, %v2400
        %v2891 = vmul.f32 %v2853, %v2400
        %v2892 = vmul.f32 %v2856, %v2400
        %v2893 = vmul.f32 %v2859, %v2400
        %v2894 = vmul.f32 %v2862, %v2400
        %v2895 = vmul.f32 %v2865, %v2400
        %v2896 = vmul.f32 %v2868, %v2400
        %v2897 = vmul.f32 %v2871, %v2400
        %v2898 = vmul.f32 %v2874, %v2400
        %v2899 = vmul.f32 %v2877, %v2400
        %v2900 = vmul.f32 %v2880, %v2400
        %v2901 = vmul.f32 %v2883, %v2400
        %v2902 = vmul.f32 %v2886, %v2400
        %v2903 = vadd.f32 %v2887, 1e-05
        %v2904 = vadd.f32 %v2888, 1e-05
        %v2905 = vadd.f32 %v2889, 1e-05
        %v2906 = vadd.f32 %v2890, 1e-05
        %v2907 = vadd.f32 %v2891, 1e-05
        %v2908 = vadd.f32 %v2892, 1e-05
        %v2909 = vadd.f32 %v2893, 1e-05
        %v2910 = vadd.f32 %v2894, 1e-05
        %v2911 = vadd.f32 %v2895, 1e-05
        %v2912 = vadd.f32 %v2896, 1e-05
        %v2913 = vadd.f32 %v2897, 1e-05
        %v2914 = vadd.f32 %v2898, 1e-05
        %v2915 = vadd.f32 %v2899, 1e-05
        %v2916 = vadd.f32 %v2900, 1e-05
        %v2917 = vadd.f32 %v2901, 1e-05
        %v2918 = vadd.f32 %v2902, 1e-05
        %v2919 = vrsqrt.pop %v2903
        %v2920 = vmul.f32 %v2919, %v2903
        %v2921 = vmul.f32 %v2920, %v2919
        %v2922 = vmul.f32 0.5, %v2921
        %v2923 = vsub.f32 1.5, %v2922
        %v2924 = vmul.f32 %v2919, %v2923
        %vm2925 = vweird.f32 %v2903
        %vm2926 = vweird.f32 %v2919
        %vm2927 = vmor %vm2925, %vm2926
        %v2928 = vsel %vm2927, %v2919, %v2924
        %v2929 = vrsqrt.pop %v2904
        %v2930 = vmul.f32 %v2929, %v2904
        %v2931 = vmul.f32 %v2930, %v2929
        %v2932 = vmul.f32 0.5, %v2931
        %v2933 = vsub.f32 1.5, %v2932
        %v2934 = vmul.f32 %v2929, %v2933
        %vm2935 = vweird.f32 %v2904
        %vm2936 = vweird.f32 %v2929
        %vm2937 = vmor %vm2935, %vm2936
        %v2938 = vsel %vm2937, %v2929, %v2934
        %v2939 = vrsqrt.pop %v2905
        %v2940 = vmul.f32 %v2939, %v2905
        %v2941 = vmul.f32 %v2940, %v2939
        %v2942 = vmul.f32 0.5, %v2941
        %v2943 = vsub.f32 1.5, %v2942
        %v2944 = vmul.f32 %v2939, %v2943
        %vm2945 = vweird.f32 %v2905
        %vm2946 = vweird.f32 %v2939
        %vm2947 = vmor %vm2945, %vm2946
        %v2948 = vsel %vm2947, %v2939, %v2944
        %v2949 = vrsqrt.pop %v2906
        %v2950 = vmul.f32 %v2949, %v2906
        %v2951 = vmul.f32 %v2950, %v2949
        %v2952 = vmul.f32 0.5, %v2951
        %v2953 = vsub.f32 1.5, %v2952
        %v2954 = vmul.f32 %v2949, %v2953
        %vm2955 = vweird.f32 %v2906
        %vm2956 = vweird.f32 %v2949
        %vm2957 = vmor %vm2955, %vm2956
        %v2958 = vsel %vm2957, %v2949, %v2954
        %v2959 = vrsqrt.pop %v2907
        %v2960 = vmul.f32 %v2959, %v2907
        %v2961 = vmul.f32 %v2960, %v2959
        %v2962 = vmul.f32 0.5, %v2961
        %v2963 = vsub.f32 1.5, %v2962
        %v2964 = vmul.f32 %v2959, %v2963
        %vm2965 = vweird.f32 %v2907
        %vm2966 = vweird.f32 %v2959
        %vm2967 = vmor %vm2965, %vm2966
        %v2968 = vsel %vm2967, %v2959, %v2964
        %v2969 = vrsqrt.pop %v2908
        %v2970 = vmul.f32 %v2969, %v2908
        %v2971 = vmul.f32 %v2970, %v2969
        %v2972 = vmul.f32 0.5, %v2971
        %v2973 = vsub.f32 1.5, %v2972
        %v2974 = vmul.f32 %v2969, %v2973
        %vm2975 = vweird.f32 %v2908
        %vm2976 = vweird.f32 %v2969
        %vm2977 = vmor %vm2975, %vm2976
        %v2978 = vsel %vm2977, %v2969, %v2974
        %v2979 = vrsqrt.pop %v2909
        %v2980 = vmul.f32 %v2979, %v2909
        %v2981 = vmul.f32 %v2980, %v2979
        %v2982 = vmul.f32 0.5, %v2981
        %v2983 = vsub.f32 1.5, %v2982
        %v2984 = vmul.f32 %v2979, %v2983
        %vm2985 = vweird.f32 %v2909
        %vm2986 = vweird.f32 %v2979
        %vm2987 = vmor %vm2985, %vm2986
        %v2988 = vsel %vm2987, %v2979, %v2984
        %v2989 = vrsqrt.pop %v2910
        %v2990 = vmul.f32 %v2989, %v2910
        %v2991 = vmul.f32 %v2990, %v2989
        %v2992 = vmul.f32 0.5, %v2991
        %v2993 = vsub.f32 1.5, %v2992
        %v2994 = vmul.f32 %v2989, %v2993
        %vm2995 = vweird.f32 %v2910
        %vm2996 = vweird.f32 %v2989
        %vm2997 = vmor %vm2995, %vm2996
        %v2998 = vsel %vm2997, %v2989, %v2994
        %v2999 = vrsqrt.pop %v2911
        %v3000 = vmul.f32 %v2999, %v2911
        %v3001 = vmul.f32 %v3000, %v2999
        %v3002 = vmul.f32 0.5, %v3001
        %v3003 = vsub.f32 1.5, %v3002
        %v3004 = vmul.f32 %v2999, %v3003
        %vm3005 = vweird.f32 %v2911
        %vm3006 = vweird.f32 %v2999
        %vm3007 = vmor %vm3005, %vm3006
        %v3008 = vsel %vm3007, %v2999, %v3004
        %v3009 = vrsqrt.pop %v2912
        %v3010 = vmul.f32 %v3009, %v2912
        %v3011 = vmul.f32 %v3010, %v3009
        %v3012 = vmul.f32 0.5, %v3011
        %v3013 = vsub.f32 1.5, %v3012
        %v3014 = vmul.f32 %v3009, %v3013
        %vm3015 = vweird.f32 %v2912
        %vm3016 = vweird.f32 %v3009
        %vm3017 = vmor %vm3015, %vm3016
        %v3018 = vsel %vm3017, %v3009, %v3014
        %v3019 = vrsqrt.pop %v2913
        %v3020 = vmul.f32 %v3019, %v2913
        %v3021 = vmul.f32 %v3020, %v3019
        %v3022 = vmul.f32 0.5, %v3021
        %v3023 = vsub.f32 1.5, %v3022
        %v3024 = vmul.f32 %v3019, %v3023
        %vm3025 = vweird.f32 %v2913
        %vm3026 = vweird.f32 %v3019
        %vm3027 = vmor %vm3025, %vm3026
        %v3028 = vsel %vm3027, %v3019, %v3024
        %v3029 = vrsqrt.pop %v2914
        %v3030 = vmul.f32 %v3029, %v2914
        %v3031 = vmul.f32 %v3030, %v3029
        %v3032 = vmul.f32 0.5, %v3031
        %v3033 = vsub.f32 1.5, %v3032
        %v3034 = vmul.f32 %v3029, %v3033
        %vm3035 = vweird.f32 %v2914
        %vm3036 = vweird.f32 %v3029
        %vm3037 = vmor %vm3035, %vm3036
        %v3038 = vsel %vm3037, %v3029, %v3034
        %v3039 = vrsqrt.pop %v2915
        %v3040 = vmul.f32 %v3039, %v2915
        %v3041 = vmul.f32 %v3040, %v3039
        %v3042 = vmul.f32 0.5, %v3041
        %v3043 = vsub.f32 1.5, %v3042
        %v3044 = vmul.f32 %v3039, %v3043
        %vm3045 = vweird.f32 %v2915
        %vm3046 = vweird.f32 %v3039
        %vm3047 = vmor %vm3045, %vm3046
        %v3048 = vsel %vm3047, %v3039, %v3044
        %v3049 = vrsqrt.pop %v2916
        %v3050 = vmul.f32 %v3049, %v2916
        %v3051 = vmul.f32 %v3050, %v3049
        %v3052 = vmul.f32 0.5, %v3051
        %v3053 = vsub.f32 1.5, %v3052
        %v3054 = vmul.f32 %v3049, %v3053
        %vm3055 = vweird.f32 %v2916
        %vm3056 = vweird.f32 %v3049
        %vm3057 = vmor %vm3055, %vm3056
        %v3058 = vsel %vm3057, %v3049, %v3054
        %v3059 = vrsqrt.pop %v2917
        %v3060 = vmul.f32 %v3059, %v2917
        %v3061 = vmul.f32 %v3060, %v3059
        %v3062 = vmul.f32 0.5, %v3061
        %v3063 = vsub.f32 1.5, %v3062
        %v3064 = vmul.f32 %v3059, %v3063
        %vm3065 = vweird.f32 %v2917
        %vm3066 = vweird.f32 %v3059
        %vm3067 = vmor %vm3065, %vm3066
        %v3068 = vsel %vm3067, %v3059, %v3064
        %v3069 = vrsqrt.pop %v2918
        %v3070 = vmul.f32 %v3069, %v2918
        %v3071 = vmul.f32 %v3070, %v3069
        %v3072 = vmul.f32 0.5, %v3071
        %v3073 = vsub.f32 1.5, %v3072
        %v3074 = vmul.f32 %v3069, %v3073
        %vm3075 = vweird.f32 %v2918
        %vm3076 = vweird.f32 %v3069
        %vm3077 = vmor %vm3075, %vm3076
        %v3078 = vsel %vm3077, %v3069, %v3074
        %v3079 = vmul.f32 %v2807, %v2928
        %v3080 = vmul.f32 %v2808, %v2938
        %v3081 = vmul.f32 %v2809, %v2948
        %v3082 = vmul.f32 %v2810, %v2958
        %v3083 = vmul.f32 %v2811, %v2968
        %v3084 = vmul.f32 %v2812, %v2978
        %v3085 = vmul.f32 %v2813, %v2988
        %v3086 = vmul.f32 %v2814, %v2998
        %v3087 = vmul.f32 %v2815, %v3008
        %v3088 = vmul.f32 %v2816, %v3018
        %v3089 = vmul.f32 %v2817, %v3028
        %v3090 = vmul.f32 %v2818, %v3038
        %v3091 = vmul.f32 %v2819, %v3048
        %v3092 = vmul.f32 %v2820, %v3058
        %v3093 = vmul.f32 %v2821, %v3068
        %v3094 = vmul.f32 %v2822, %v3078
        %v3096 = vperm.slane %v866, 0
        %v3098 = vmul.f32 %v3079, %v3096
        %v3099 = vmul.f32 %v3080, %v3096
        %v3100 = vmul.f32 %v3081, %v3096
        %v3101 = vmul.f32 %v3082, %v3096
        %v3102 = vmul.f32 %v3083, %v3096
        %v3103 = vmul.f32 %v3084, %v3096
        %v3104 = vmul.f32 %v3085, %v3096
        %v3105 = vmul.f32 %v3086, %v3096
        %v3106 = vmul.f32 %v3087, %v3096
        %v3107 = vmul.f32 %v3088, %v3096
        %v3108 = vmul.f32 %v3089, %v3096
        %v3109 = vmul.f32 %v3090, %v3096
        %v3110 = vmul.f32 %v3091, %v3096
        %v3111 = vmul.f32 %v3092, %v3096
        %v3112 = vmul.f32 %v3093, %v3096
        %v3113 = vmul.f32 %v3094, %v3096
        %v3115 = vperm.slane %v867, 0
        %v3117 = vadd.f32 %v3098, %v3115
        %v3118 = vadd.f32 %v3099, %v3115
        %v3119 = vadd.f32 %v3100, %v3115
        %v3120 = vadd.f32 %v3101, %v3115
        %v3121 = vadd.f32 %v3102, %v3115
        %v3122 = vadd.f32 %v3103, %v3115
        %v3123 = vadd.f32 %v3104, %v3115
        %v3124 = vadd.f32 %v3105, %v3115
        %v3125 = vadd.f32 %v3106, %v3115
        %v3126 = vadd.f32 %v3107, %v3115
        %v3127 = vadd.f32 %v3108, %v3115
        %v3128 = vadd.f32 %v3109, %v3115
        %v3129 = vadd.f32 %v3110, %v3115
        %v3130 = vadd.f32 %v3111, %v3115
        %v3131 = vadd.f32 %v3112, %v3115
        %v3132 = vadd.f32 %v3113, %v3115
        %v3133 = vpack.c.bf16 %v2727, %v2727
        %v3134 = vpack.c.bf16 %v2728, %v2728
        %v3135 = vpack.c.bf16 %v2729, %v2729
        %v3136 = vpack.c.bf16 %v2730, %v2730
        %v3137 = vpack.c.bf16 %v2731, %v2731
        %v3138 = vpack.c.bf16 %v2732, %v2732
        %v3139 = vpack.c.bf16 %v2733, %v2733
        %v3140 = vpack.c.bf16 %v2734, %v2734
        %v3141 = vpack.c.bf16 %v2735, %v2735
        %v3142 = vpack.c.bf16 %v2736, %v2736
        %v3143 = vpack.c.bf16 %v2737, %v2737
        %v3144 = vpack.c.bf16 %v2738, %v2738
        %v3145 = vpack.c.bf16 %v2739, %v2739
        %v3146 = vpack.c.bf16 %v2740, %v2740
        %v3147 = vpack.c.bf16 %v2741, %v2741
        %v3148 = vpack.c.bf16 %v2742, %v2742
        %v3149 = vpack.c.bf16 %v3117, %v3117
        %v3150 = vpack.c.bf16 %v3118, %v3118
        %v3151 = vpack.c.bf16 %v3119, %v3119
        %v3152 = vpack.c.bf16 %v3120, %v3120
        %v3153 = vpack.c.bf16 %v3121, %v3121
        %v3154 = vpack.c.bf16 %v3122, %v3122
        %v3155 = vpack.c.bf16 %v3123, %v3123
        %v3156 = vpack.c.bf16 %v3124, %v3124
        %v3157 = vpack.c.bf16 %v3125, %v3125
        %v3158 = vpack.c.bf16 %v3126, %v3126
        %v3159 = vpack.c.bf16 %v3127, %v3127
        %v3160 = vpack.c.bf16 %v3128, %v3128
        %v3161 = vpack.c.bf16 %v3129, %v3129
        %v3162 = vpack.c.bf16 %v3130, %v3130
        %v3163 = vpack.c.bf16 %v3131, %v3131
        %v3164 = vpack.c.bf16 %v3132, %v3132
        %v3167 = vunpack.c.l.b16 %v3133
        %v3168 = vunpack.c.l.b16 %v3134
        %v3169 = vpack.c.b16 %v3168, %v3167
        %v3172 = vunpack.c.l.b16 %v3149
        %v3173 = vunpack.c.l.b16 %v3150
        %v3174 = vpack.c.b16 %v3173, %v3172
        %v3176 = vsel %vm2345, %v3169, 0
        %v3179 = vsel %vm2345, %v3174, 0
        %3181 = vmatpush.bf16.xpose.msra.mxu0 0
        %3182 = vmatpush.bf16.xpose.msra.mxu0 0
        %3183 = vmatpush.bf16.xpose.msra.mxu0 0
        %3184 = vmatpush.bf16.xpose.msra.mxu0 0
        %3185 = vmatpush.bf16.xpose.msra.mxu0 0
        %3186 = vmatpush.bf16.xpose.msra.mxu0 0
        %3187 = vmatpush.bf16.xpose.msra.mxu0 0
        %3188 = vmatpush.bf16.xpose.msra.mxu0 %v3179
        %3189 = vmatmul.bf16.gmra.mxu0 %v3176
        %v3190 = vpop.f32.mrf.mxu0
        %v3191 = vadd.f32 0.0, %v3190
        %v3192 = vpop.f32.mrf.mxu0
        %v3193 = vadd.f32 0.0, %v3192
        %3194 = vdwg.mxu0
        %v3197 = vunpack.c.l.b16 %v3135
        %v3198 = vunpack.c.l.b16 %v3136
        %v3199 = vpack.c.b16 %v3198, %v3197
        %v3202 = vunpack.c.l.b16 %v3151
        %v3203 = vunpack.c.l.b16 %v3152
        %v3204 = vpack.c.b16 %v3203, %v3202
        %v3206 = vsel %vm2345, %v3199, 0
        %v3209 = vsel %vm2345, %v3204, 0
        %3211 = vmatpush.bf16.xpose.msra.mxu0 0
        %3212 = vmatpush.bf16.xpose.msra.mxu0 0
        %3213 = vmatpush.bf16.xpose.msra.mxu0 0
        %3214 = vmatpush.bf16.xpose.msra.mxu0 0
        %3215 = vmatpush.bf16.xpose.msra.mxu0 0
        %3216 = vmatpush.bf16.xpose.msra.mxu0 0
        %3217 = vmatpush.bf16.xpose.msra.mxu0 0
        %3218 = vmatpush.bf16.xpose.msra.mxu0 %v3209
        %3219 = vmatmul.bf16.gmra.mxu0 %v3206
        %v3220 = vpop.f32.mrf.mxu0
        %v3221 = vadd.f32 0.0, %v3220
        %v3222 = vpop.f32.mrf.mxu0
        %v3223 = vadd.f32 0.0, %v3222
        %3224 = vdwg.mxu0
        %v3227 = vunpack.c.l.b16 %v3137
        %v3228 = vunpack.c.l.b16 %v3138
        %v3229 = vpack.c.b16 %v3228, %v3227
        %v3232 = vunpack.c.l.b16 %v3153
        %v3233 = vunpack.c.l.b16 %v3154
        %v3234 = vpack.c.b16 %v3233, %v3232
        %v3236 = vsel %vm2345, %v3229, 0
        %v3239 = vsel %vm2345, %v3234, 0
        %3241 = vmatpush.bf16.xpose.msra.mxu0 0
        %3242 = vmatpush.bf16.xpose.msra.mxu0 0
        %3243 = vmatpush.bf16.xpose.msra.mxu0 0
        %3244 = vmatpush.bf16.xpose.msra.mxu0 0
        %3245 = vmatpush.bf16.xpose.msra.mxu0 0
        %3246 = vmatpush.bf16.xpose.msra.mxu0 0
        %3247 = vmatpush.bf16.xpose.msra.mxu0 0
        %3248 = vmatpush.bf16.xpose.msra.mxu0 %v3239
        %3249 = vmatmul.bf16.gmra.mxu0 %v3236
        %v3250 = vpop.f32.mrf.mxu0
        %v3251 = vadd.f32 0.0, %v3250
        %v3252 = vpop.f32.mrf.mxu0
        %v3253 = vadd.f32 0.0, %v3252
        %3254 = vdwg.mxu0
        %v3257 = vunpack.c.l.b16 %v3139
        %v3258 = vunpack.c.l.b16 %v3140
        %v3259 = vpack.c.b16 %v3258, %v3257
        %v3262 = vunpack.c.l.b16 %v3155
        %v3263 = vunpack.c.l.b16 %v3156
        %v3264 = vpack.c.b16 %v3263, %v3262
        %v3266 = vsel %vm2345, %v3259, 0
        %v3269 = vsel %vm2345, %v3264, 0
        %3271 = vmatpush.bf16.xpose.msra.mxu0 0
        %3272 = vmatpush.bf16.xpose.msra.mxu0 0
        %3273 = vmatpush.bf16.xpose.msra.mxu0 0
        %3274 = vmatpush.bf16.xpose.msra.mxu0 0
        %3275 = vmatpush.bf16.xpose.msra.mxu0 0
        %3276 = vmatpush.bf16.xpose.msra.mxu0 0
        %3277 = vmatpush.bf16.xpose.msra.mxu0 0
        %3278 = vmatpush.bf16.xpose.msra.mxu0 %v3269
        %3279 = vmatmul.bf16.gmra.mxu0 %v3266
        %v3280 = vpop.f32.mrf.mxu0
        %v3281 = vadd.f32 0.0, %v3280
        %v3282 = vpop.f32.mrf.mxu0
        %v3283 = vadd.f32 0.0, %v3282
        %3284 = vdwg.mxu0
        %v3287 = vunpack.c.l.b16 %v3141
        %v3288 = vunpack.c.l.b16 %v3142
        %v3289 = vpack.c.b16 %v3288, %v3287
        %v3292 = vunpack.c.l.b16 %v3157
        %v3293 = vunpack.c.l.b16 %v3158
        %v3294 = vpack.c.b16 %v3293, %v3292
        %v3296 = vsel %vm2345, %v3289, 0
        %v3299 = vsel %vm2345, %v3294, 0
        %3301 = vmatpush.bf16.xpose.msra.mxu0 0
        %3302 = vmatpush.bf16.xpose.msra.mxu0 0
        %3303 = vmatpush.bf16.xpose.msra.mxu0 0
        %3304 = vmatpush.bf16.xpose.msra.mxu0 0
        %3305 = vmatpush.bf16.xpose.msra.mxu0 0
        %3306 = vmatpush.bf16.xpose.msra.mxu0 0
        %3307 = vmatpush.bf16.xpose.msra.mxu0 0
        %3308 = vmatpush.bf16.xpose.msra.mxu0 %v3299
        %3309 = vmatmul.bf16.gmra.mxu0 %v3296
        %v3310 = vpop.f32.mrf.mxu0
        %v3311 = vadd.f32 0.0, %v3310
        %v3312 = vpop.f32.mrf.mxu0
        %v3313 = vadd.f32 0.0, %v3312
        %3314 = vdwg.mxu0
        %v3317 = vunpack.c.l.b16 %v3143
        %v3318 = vunpack.c.l.b16 %v3144
        %v3319 = vpack.c.b16 %v3318, %v3317
        %v3322 = vunpack.c.l.b16 %v3159
        %v3323 = vunpack.c.l.b16 %v3160
        %v3324 = vpack.c.b16 %v3323, %v3322
        %v3326 = vsel %vm2345, %v3319, 0
        %v3329 = vsel %vm2345, %v3324, 0
        %3331 = vmatpush.bf16.xpose.msra.mxu0 0
        %3332 = vmatpush.bf16.xpose.msra.mxu0 0
        %3333 = vmatpush.bf16.xpose.msra.mxu0 0
        %3334 = vmatpush.bf16.xpose.msra.mxu0 0
        %3335 = vmatpush.bf16.xpose.msra.mxu0 0
        %3336 = vmatpush.bf16.xpose.msra.mxu0 0
        %3337 = vmatpush.bf16.xpose.msra.mxu0 0
        %3338 = vmatpush.bf16.xpose.msra.mxu0 %v3329
        %3339 = vmatmul.bf16.gmra.mxu0 %v3326
        %v3340 = vpop.f32.mrf.mxu0
        %v3341 = vadd.f32 0.0, %v3340
        %v3342 = vpop.f32.mrf.mxu0
        %v3343 = vadd.f32 0.0, %v3342
        %3344 = vdwg.mxu0
        %v3347 = vunpack.c.l.b16 %v3145
        %v3348 = vunpack.c.l.b16 %v3146
        %v3349 = vpack.c.b16 %v3348, %v3347
        %v3352 = vunpack.c.l.b16 %v3161
        %v3353 = vunpack.c.l.b16 %v3162
        %v3354 = vpack.c.b16 %v3353, %v3352
        %v3356 = vsel %vm2345, %v3349, 0
        %v3359 = vsel %vm2345, %v3354, 0
        %3361 = vmatpush.bf16.xpose.msra.mxu0 0
        %3362 = vmatpush.bf16.xpose.msra.mxu0 0
        %3363 = vmatpush.bf16.xpose.msra.mxu0 0
        %3364 = vmatpush.bf16.xpose.msra.mxu0 0
        %3365 = vmatpush.bf16.xpose.msra.mxu0 0
        %3366 = vmatpush.bf16.xpose.msra.mxu0 0
        %3367 = vmatpush.bf16.xpose.msra.mxu0 0
        %3368 = vmatpush.bf16.xpose.msra.mxu0 %v3359
        %3369 = vmatmul.bf16.gmra.mxu0 %v3356
        %v3370 = vpop.f32.mrf.mxu0
        %v3371 = vadd.f32 0.0, %v3370
        %v3372 = vpop.f32.mrf.mxu0
        %v3373 = vadd.f32 0.0, %v3372
        %3374 = vdwg.mxu0
        %v3377 = vunpack.c.l.b16 %v3147
        %v3378 = vunpack.c.l.b16 %v3148
        %v3379 = vpack.c.b16 %v3378, %v3377
        %v3382 = vunpack.c.l.b16 %v3163
        %v3383 = vunpack.c.l.b16 %v3164
        %v3384 = vpack.c.b16 %v3383, %v3382
        %v3386 = vsel %vm2345, %v3379, 0
        %v3389 = vsel %vm2345, %v3384, 0
        %3391 = vmatpush.bf16.xpose.msra.mxu0 0
        %3392 = vmatpush.bf16.xpose.msra.mxu0 0
        %3393 = vmatpush.bf16.xpose.msra.mxu0 0
        %3394 = vmatpush.bf16.xpose.msra.mxu0 0
        %3395 = vmatpush.bf16.xpose.msra.mxu0 0
        %3396 = vmatpush.bf16.xpose.msra.mxu0 0
        %3397 = vmatpush.bf16.xpose.msra.mxu0 0
        %3398 = vmatpush.bf16.xpose.msra.mxu0 %v3389
        %3399 = vmatmul.bf16.gmra.mxu0 %v3386
        %v3400 = vpop.f32.mrf.mxu0
        %v3401 = vadd.f32 0.0, %v3400
        %v3402 = vpop.f32.mrf.mxu0
        %v3403 = vadd.f32 0.0, %v3402
        %3404 = vdwg.mxu0
        %v3405 = vmul.f32 %v3191, 0.25
        %v3406 = vmul.f32 %v3193, 0.25
        %v3407 = vmul.f32 %v3221, 0.25
        %v3408 = vmul.f32 %v3223, 0.25
        %v3409 = vmul.f32 %v3251, 0.25
        %v3410 = vmul.f32 %v3253, 0.25
        %v3411 = vmul.f32 %v3281, 0.25
        %v3412 = vmul.f32 %v3283, 0.25
        %v3413 = vmul.f32 %v3311, 0.25
        %v3414 = vmul.f32 %v3313, 0.25
        %v3415 = vmul.f32 %v3341, 0.25
        %v3416 = vmul.f32 %v3343, 0.25
        %v3417 = vmul.f32 %v3371, 0.25
        %v3418 = vmul.f32 %v3373, 0.25
        %v3419 = vmul.f32 %v3401, 0.25
        %v3420 = vmul.f32 %v3403, 0.25
        %v3421 = vsel %vm2345, %v3405, -inf
        %3422 = vmax.xlane.f32.xlu0 %v3421
        %v3423 = vpop.xlane.xlu0 %3422
        %v3424 = vsel %vm2345, %v3406, -inf
        %3425 = vmax.xlane.f32.xlu0 %v3424
        %v3426 = vpop.xlane.xlu0 %3425
        %v3427 = vsel %vm2345, %v3407, -inf
        %3428 = vmax.xlane.f32.xlu0 %v3427
        %v3429 = vpop.xlane.xlu0 %3428
        %v3430 = vsel %vm2345, %v3408, -inf
        %3431 = vmax.xlane.f32.xlu0 %v3430
        %v3432 = vpop.xlane.xlu0 %3431
        %v3433 = vsel %vm2345, %v3409, -inf
        %3434 = vmax.xlane.f32.xlu0 %v3433
        %v3435 = vpop.xlane.xlu0 %3434
        %v3436 = vsel %vm2345, %v3410, -inf
        %3437 = vmax.xlane.f32.xlu0 %v3436
        %v3438 = vpop.xlane.xlu0 %3437
        %v3439 = vsel %vm2345, %v3411, -inf
        %3440 = vmax.xlane.f32.xlu0 %v3439
        %v3441 = vpop.xlane.xlu0 %3440
        %v3442 = vsel %vm2345, %v3412, -inf
        %3443 = vmax.xlane.f32.xlu0 %v3442
        %v3444 = vpop.xlane.xlu0 %3443
        %v3445 = vsel %vm2345, %v3413, -inf
        %3446 = vmax.xlane.f32.xlu0 %v3445
        %v3447 = vpop.xlane.xlu0 %3446
        %v3448 = vsel %vm2345, %v3414, -inf
        %3449 = vmax.xlane.f32.xlu0 %v3448
        %v3450 = vpop.xlane.xlu0 %3449
        %v3451 = vsel %vm2345, %v3415, -inf
        %3452 = vmax.xlane.f32.xlu0 %v3451
        %v3453 = vpop.xlane.xlu0 %3452
        %v3454 = vsel %vm2345, %v3416, -inf
        %3455 = vmax.xlane.f32.xlu0 %v3454
        %v3456 = vpop.xlane.xlu0 %3455
        %v3457 = vsel %vm2345, %v3417, -inf
        %3458 = vmax.xlane.f32.xlu0 %v3457
        %v3459 = vpop.xlane.xlu0 %3458
        %v3460 = vsel %vm2345, %v3418, -inf
        %3461 = vmax.xlane.f32.xlu0 %v3460
        %v3462 = vpop.xlane.xlu0 %3461
        %v3463 = vsel %vm2345, %v3419, -inf
        %3464 = vmax.xlane.f32.xlu0 %v3463
        %v3465 = vpop.xlane.xlu0 %3464
        %v3466 = vsel %vm2345, %v3420, -inf
        %3467 = vmax.xlane.f32.xlu0 %v3466
        %v3468 = vpop.xlane.xlu0 %3467
        %v3469 = vsub.f32 %v3405, %v3423
        %v3470 = vsub.f32 %v3406, %v3426
        %v3471 = vsub.f32 %v3407, %v3429
        %v3472 = vsub.f32 %v3408, %v3432
        %v3473 = vsub.f32 %v3409, %v3435
        %v3474 = vsub.f32 %v3410, %v3438
        %v3475 = vsub.f32 %v3411, %v3441
        %v3476 = vsub.f32 %v3412, %v3444
        %v3477 = vsub.f32 %v3413, %v3447
        %v3478 = vsub.f32 %v3414, %v3450
        %v3479 = vsub.f32 %v3415, %v3453
        %v3480 = vsub.f32 %v3416, %v3456
        %v3481 = vsub.f32 %v3417, %v3459
        %v3482 = vsub.f32 %v3418, %v3462
        %v3483 = vsub.f32 %v3419, %v3465
        %v3484 = vsub.f32 %v3420, %v3468
        %v3485 = vmul.f32 %v3469, 1.442695
        %v3486 = vpow.pop %v3485
        %v3487 = vmul.f32 %v3470, 1.442695
        %v3488 = vpow.pop %v3487
        %v3489 = vmul.f32 %v3471, 1.442695
        %v3490 = vpow.pop %v3489
        %v3491 = vmul.f32 %v3472, 1.442695
        %v3492 = vpow.pop %v3491
        %v3493 = vmul.f32 %v3473, 1.442695
        %v3494 = vpow.pop %v3493
        %v3495 = vmul.f32 %v3474, 1.442695
        %v3496 = vpow.pop %v3495
        %v3497 = vmul.f32 %v3475, 1.442695
        %v3498 = vpow.pop %v3497
        %v3499 = vmul.f32 %v3476, 1.442695
        %v3500 = vpow.pop %v3499
        %v3501 = vmul.f32 %v3477, 1.442695
        %v3502 = vpow.pop %v3501
        %v3503 = vmul.f32 %v3478, 1.442695
        %v3504 = vpow.pop %v3503
        %v3505 = vmul.f32 %v3479, 1.442695
        %v3506 = vpow.pop %v3505
        %v3507 = vmul.f32 %v3480, 1.442695
        %v3508 = vpow.pop %v3507
        %v3509 = vmul.f32 %v3481, 1.442695
        %v3510 = vpow.pop %v3509
        %v3511 = vmul.f32 %v3482, 1.442695
        %v3512 = vpow.pop %v3511
        %v3513 = vmul.f32 %v3483, 1.442695
        %v3514 = vpow.pop %v3513
        %v3515 = vmul.f32 %v3484, 1.442695
        %v3516 = vpow.pop %v3515
        %v3517 = vsel %vm2345, %v3486, 0.0
        %3518 = vadd.xlane.f32.xlu0 %v3517
        %v3519 = vpop.xlane.xlu0 %3518
        %v3520 = vsel %vm2345, %v3488, 0.0
        %3521 = vadd.xlane.f32.xlu0 %v3520
        %v3522 = vpop.xlane.xlu0 %3521
        %v3523 = vsel %vm2345, %v3490, 0.0
        %3524 = vadd.xlane.f32.xlu0 %v3523
        %v3525 = vpop.xlane.xlu0 %3524
        %v3526 = vsel %vm2345, %v3492, 0.0
        %3527 = vadd.xlane.f32.xlu0 %v3526
        %v3528 = vpop.xlane.xlu0 %3527
        %v3529 = vsel %vm2345, %v3494, 0.0
        %3530 = vadd.xlane.f32.xlu0 %v3529
        %v3531 = vpop.xlane.xlu0 %3530
        %v3532 = vsel %vm2345, %v3496, 0.0
        %3533 = vadd.xlane.f32.xlu0 %v3532
        %v3534 = vpop.xlane.xlu0 %3533
        %v3535 = vsel %vm2345, %v3498, 0.0
        %3536 = vadd.xlane.f32.xlu0 %v3535
        %v3537 = vpop.xlane.xlu0 %3536
        %v3538 = vsel %vm2345, %v3500, 0.0
        %3539 = vadd.xlane.f32.xlu0 %v3538
        %v3540 = vpop.xlane.xlu0 %3539
        %v3541 = vsel %vm2345, %v3502, 0.0
        %3542 = vadd.xlane.f32.xlu0 %v3541
        %v3543 = vpop.xlane.xlu0 %3542
        %v3544 = vsel %vm2345, %v3504, 0.0
        %3545 = vadd.xlane.f32.xlu0 %v3544
        %v3546 = vpop.xlane.xlu0 %3545
        %v3547 = vsel %vm2345, %v3506, 0.0
        %3548 = vadd.xlane.f32.xlu0 %v3547
        %v3549 = vpop.xlane.xlu0 %3548
        %v3550 = vsel %vm2345, %v3508, 0.0
        %3551 = vadd.xlane.f32.xlu0 %v3550
        %v3552 = vpop.xlane.xlu0 %3551
        %v3553 = vsel %vm2345, %v3510, 0.0
        %3554 = vadd.xlane.f32.xlu0 %v3553
        %v3555 = vpop.xlane.xlu0 %3554
        %v3556 = vsel %vm2345, %v3512, 0.0
        %3557 = vadd.xlane.f32.xlu0 %v3556
        %v3558 = vpop.xlane.xlu0 %3557
        %v3559 = vsel %vm2345, %v3514, 0.0
        %3560 = vadd.xlane.f32.xlu0 %v3559
        %v3561 = vpop.xlane.xlu0 %3560
        %v3562 = vsel %vm2345, %v3516, 0.0
        %3563 = vadd.xlane.f32.xlu0 %v3562
        %v3564 = vpop.xlane.xlu0 %3563
        %v3565 = vrcp.pop %v3519
        %v3566 = vrcp.pop %v3522
        %v3567 = vrcp.pop %v3525
        %v3568 = vrcp.pop %v3528
        %v3569 = vrcp.pop %v3531
        %v3570 = vrcp.pop %v3534
        %v3571 = vrcp.pop %v3537
        %v3572 = vrcp.pop %v3540
        %v3573 = vrcp.pop %v3543
        %v3574 = vrcp.pop %v3546
        %v3575 = vrcp.pop %v3549
        %v3576 = vrcp.pop %v3552
        %v3577 = vrcp.pop %v3555
        %v3578 = vrcp.pop %v3558
        %v3579 = vrcp.pop %v3561
        %v3580 = vrcp.pop %v3564
        %v3581 = vmul.f32 %v3486, %v3565
        %v3582 = vmul.f32 %v3488, %v3566
        %v3583 = vmul.f32 %v3490, %v3567
        %v3584 = vmul.f32 %v3492, %v3568
        %v3585 = vmul.f32 %v3494, %v3569
        %v3586 = vmul.f32 %v3496, %v3570
        %v3587 = vmul.f32 %v3498, %v3571
        %v3588 = vmul.f32 %v3500, %v3572
        %v3589 = vmul.f32 %v3502, %v3573
        %v3590 = vmul.f32 %v3504, %v3574
        %v3591 = vmul.f32 %v3506, %v3575
        %v3592 = vmul.f32 %v3508, %v3576
        %v3593 = vmul.f32 %v3510, %v3577
        %v3594 = vmul.f32 %v3512, %v3578
        %v3595 = vmul.f32 %v3514, %v3579
        %v3596 = vmul.f32 %v3516, %v3580
        %v3597 = vpack.c.bf16 %v3581, %v3581
        %v3598 = vpack.c.bf16 %v3582, %v3582
        %v3599 = vpack.c.bf16 %v3583, %v3583
        %v3600 = vpack.c.bf16 %v3584, %v3584
        %v3601 = vpack.c.bf16 %v3585, %v3585
        %v3602 = vpack.c.bf16 %v3586, %v3586
        %v3603 = vpack.c.bf16 %v3587, %v3587
        %v3604 = vpack.c.bf16 %v3588, %v3588
        %v3605 = vpack.c.bf16 %v3589, %v3589
        %v3606 = vpack.c.bf16 %v3590, %v3590
        %v3607 = vpack.c.bf16 %v3591, %v3591
        %v3608 = vpack.c.bf16 %v3592, %v3592
        %v3609 = vpack.c.bf16 %v3593, %v3593
        %v3610 = vpack.c.bf16 %v3594, %v3594
        %v3611 = vpack.c.bf16 %v3595, %v3595
        %v3612 = vpack.c.bf16 %v3596, %v3596
        %v3613 = vpack.c.bf16 %v2218, %v2218
        %v3614 = vpack.c.bf16 %v2330, %v2330
        %v3615 = vpack.c.bf16 %v2220, %v2220
        %v3616 = vpack.c.bf16 %v2332, %v2332
        %v3617 = vpack.c.bf16 %v2222, %v2222
        %v3618 = vpack.c.bf16 %v2334, %v2334
        %v3619 = vpack.c.bf16 %v2224, %v2224
        %v3620 = vpack.c.bf16 %v2336, %v2336
        %v3621 = vpack.c.bf16 %v2226, %v2226
        %v3622 = vpack.c.bf16 %v2338, %v2338
        %v3623 = vpack.c.bf16 %v2228, %v2228
        %v3624 = vpack.c.bf16 %v2340, %v2340
        %v3625 = vpack.c.bf16 %v2230, %v2230
        %v3626 = vpack.c.bf16 %v2342, %v2342
        %v3627 = vpack.c.bf16 %v2232, %v2232
        %v3628 = vpack.c.bf16 %v2344, %v2344
        %v3631 = vunpack.c.l.b16 %v3597
        %v3632 = vunpack.c.l.b16 %v3598
        %v3633 = vpack.c.b16 %v3632, %v3631
        %v3636 = vunpack.c.l.b16 %v3613
        %v3637 = vunpack.c.l.b16 %v3614
        %v3638 = vpack.c.b16 %v3637, %v3636
        %v3641 = vsel %vm2345, %v3633, 0
        %3643 = vmatpush.bf16.msra.mxu0 0
        %3644 = vmatpush.bf16.msra.mxu0 0
        %3645 = vmatpush.bf16.msra.mxu0 0
        %3646 = vmatpush.bf16.msra.mxu0 0
        %3647 = vmatpush.bf16.msra.mxu0 0
        %3648 = vmatpush.bf16.msra.mxu0 0
        %3649 = vmatpush.bf16.msra.mxu0 0
        %3650 = vmatpush.bf16.msra.mxu0 %v3638
        %3651 = vmatmul.bf16.gmra.mxu0 %v3641
        %v3652 = vpop.f32.mrf.mxu0
        %v3653 = vadd.f32 0.0, %v3652
        %v3654 = vpop.f32.mrf.mxu0
        %v3655 = vadd.f32 0.0, %v3654
        %3656 = vdwg.mxu0
        %v3659 = vunpack.c.l.b16 %v3599
        %v3660 = vunpack.c.l.b16 %v3600
        %v3661 = vpack.c.b16 %v3660, %v3659
        %v3664 = vunpack.c.l.b16 %v3615
        %v3665 = vunpack.c.l.b16 %v3616
        %v3666 = vpack.c.b16 %v3665, %v3664
        %v3669 = vsel %vm2345, %v3661, 0
        %3671 = vmatpush.bf16.msra.mxu0 0
        %3672 = vmatpush.bf16.msra.mxu0 0
        %3673 = vmatpush.bf16.msra.mxu0 0
        %3674 = vmatpush.bf16.msra.mxu0 0
        %3675 = vmatpush.bf16.msra.mxu0 0
        %3676 = vmatpush.bf16.msra.mxu0 0
        %3677 = vmatpush.bf16.msra.mxu0 0
        %3678 = vmatpush.bf16.msra.mxu0 %v3666
        %3679 = vmatmul.bf16.gmra.mxu0 %v3669
        %v3680 = vpop.f32.mrf.mxu0
        %v3681 = vadd.f32 0.0, %v3680
        %v3682 = vpop.f32.mrf.mxu0
        %v3683 = vadd.f32 0.0, %v3682
        %3684 = vdwg.mxu0
        %v3687 = vunpack.c.l.b16 %v3601
        %v3688 = vunpack.c.l.b16 %v3602
        %v3689 = vpack.c.b16 %v3688, %v3687
        %v3692 = vunpack.c.l.b16 %v3617
        %v3693 = vunpack.c.l.b16 %v3618
        %v3694 = vpack.c.b16 %v3693, %v3692
        %v3697 = vsel %vm2345, %v3689, 0
        %3699 = vmatpush.bf16.msra.mxu0 0
        %3700 = vmatpush.bf16.msra.mxu0 0
        %3701 = vmatpush.bf16.msra.mxu0 0
        %3702 = vmatpush.bf16.msra.mxu0 0
        %3703 = vmatpush.bf16.msra.mxu0 0
        %3704 = vmatpush.bf16.msra.mxu0 0
        %3705 = vmatpush.bf16.msra.mxu0 0
        %3706 = vmatpush.bf16.msra.mxu0 %v3694
        %3707 = vmatmul.bf16.gmra.mxu0 %v3697
        %v3708 = vpop.f32.mrf.mxu0
        %v3709 = vadd.f32 0.0, %v3708
        %v3710 = vpop.f32.mrf.mxu0
        %v3711 = vadd.f32 0.0, %v3710
        %3712 = vdwg.mxu0
        %v3715 = vunpack.c.l.b16 %v3603
        %v3716 = vunpack.c.l.b16 %v3604
        %v3717 = vpack.c.b16 %v3716, %v3715
        %v3720 = vunpack.c.l.b16 %v3619
        %v3721 = vunpack.c.l.b16 %v3620
        %v3722 = vpack.c.b16 %v3721, %v3720
        %v3725 = vsel %vm2345, %v3717, 0
        %3727 = vmatpush.bf16.msra.mxu0 0
        %3728 = vmatpush.bf16.msra.mxu0 0
        %3729 = vmatpush.bf16.msra.mxu0 0
        %3730 = vmatpush.bf16.msra.mxu0 0
        %3731 = vmatpush.bf16.msra.mxu0 0
        %3732 = vmatpush.bf16.msra.mxu0 0
        %3733 = vmatpush.bf16.msra.mxu0 0
        %3734 = vmatpush.bf16.msra.mxu0 %v3722
        %3735 = vmatmul.bf16.gmra.mxu0 %v3725
        %v3736 = vpop.f32.mrf.mxu0
        %v3737 = vadd.f32 0.0, %v3736
        %v3738 = vpop.f32.mrf.mxu0
        %v3739 = vadd.f32 0.0, %v3738
        %3740 = vdwg.mxu0
        %v3743 = vunpack.c.l.b16 %v3605
        %v3744 = vunpack.c.l.b16 %v3606
        %v3745 = vpack.c.b16 %v3744, %v3743
        %v3748 = vunpack.c.l.b16 %v3621
        %v3749 = vunpack.c.l.b16 %v3622
        %v3750 = vpack.c.b16 %v3749, %v3748
        %v3753 = vsel %vm2345, %v3745, 0
        %3755 = vmatpush.bf16.msra.mxu0 0
        %3756 = vmatpush.bf16.msra.mxu0 0
        %3757 = vmatpush.bf16.msra.mxu0 0
        %3758 = vmatpush.bf16.msra.mxu0 0
        %3759 = vmatpush.bf16.msra.mxu0 0
        %3760 = vmatpush.bf16.msra.mxu0 0
        %3761 = vmatpush.bf16.msra.mxu0 0
        %3762 = vmatpush.bf16.msra.mxu0 %v3750
        %3763 = vmatmul.bf16.gmra.mxu0 %v3753
        %v3764 = vpop.f32.mrf.mxu0
        %v3765 = vadd.f32 0.0, %v3764
        %v3766 = vpop.f32.mrf.mxu0
        %v3767 = vadd.f32 0.0, %v3766
        %3768 = vdwg.mxu0
        %v3771 = vunpack.c.l.b16 %v3607
        %v3772 = vunpack.c.l.b16 %v3608
        %v3773 = vpack.c.b16 %v3772, %v3771
        %v3776 = vunpack.c.l.b16 %v3623
        %v3777 = vunpack.c.l.b16 %v3624
        %v3778 = vpack.c.b16 %v3777, %v3776
        %v3781 = vsel %vm2345, %v3773, 0
        %3783 = vmatpush.bf16.msra.mxu0 0
        %3784 = vmatpush.bf16.msra.mxu0 0
        %3785 = vmatpush.bf16.msra.mxu0 0
        %3786 = vmatpush.bf16.msra.mxu0 0
        %3787 = vmatpush.bf16.msra.mxu0 0
        %3788 = vmatpush.bf16.msra.mxu0 0
        %3789 = vmatpush.bf16.msra.mxu0 0
        %3790 = vmatpush.bf16.msra.mxu0 %v3778
        %3791 = vmatmul.bf16.gmra.mxu0 %v3781
        %v3792 = vpop.f32.mrf.mxu0
        %v3793 = vadd.f32 0.0, %v3792
        %v3794 = vpop.f32.mrf.mxu0
        %v3795 = vadd.f32 0.0, %v3794
        %3796 = vdwg.mxu0
        %v3799 = vunpack.c.l.b16 %v3609
        %v3800 = vunpack.c.l.b16 %v3610
        %v3801 = vpack.c.b16 %v3800, %v3799
        %v3804 = vunpack.c.l.b16 %v3625
        %v3805 = vunpack.c.l.b16 %v3626
        %v3806 = vpack.c.b16 %v3805, %v3804
        %v3809 = vsel %vm2345, %v3801, 0
        %3811 = vmatpush.bf16.msra.mxu0 0
        %3812 = vmatpush.bf16.msra.mxu0 0
        %3813 = vmatpush.bf16.msra.mxu0 0
        %3814 = vmatpush.bf16.msra.mxu0 0
        %3815 = vmatpush.bf16.msra.mxu0 0
        %3816 = vmatpush.bf16.msra.mxu0 0
        %3817 = vmatpush.bf16.msra.mxu0 0
        %3818 = vmatpush.bf16.msra.mxu0 %v3806
        %3819 = vmatmul.bf16.gmra.mxu0 %v3809
        %v3820 = vpop.f32.mrf.mxu0
        %v3821 = vadd.f32 0.0, %v3820
        %v3822 = vpop.f32.mrf.mxu0
        %v3823 = vadd.f32 0.0, %v3822
        %3824 = vdwg.mxu0
        %v3827 = vunpack.c.l.b16 %v3611
        %v3828 = vunpack.c.l.b16 %v3612
        %v3829 = vpack.c.b16 %v3828, %v3827
        %v3832 = vunpack.c.l.b16 %v3627
        %v3833 = vunpack.c.l.b16 %v3628
        %v3834 = vpack.c.b16 %v3833, %v3832
        %v3837 = vsel %vm2345, %v3829, 0
        %3839 = vmatpush.bf16.msra.mxu0 0
        %3840 = vmatpush.bf16.msra.mxu0 0
        %3841 = vmatpush.bf16.msra.mxu0 0
        %3842 = vmatpush.bf16.msra.mxu0 0
        %3843 = vmatpush.bf16.msra.mxu0 0
        %3844 = vmatpush.bf16.msra.mxu0 0
        %3845 = vmatpush.bf16.msra.mxu0 0
        %3846 = vmatpush.bf16.msra.mxu0 %v3834
        %3847 = vmatmul.bf16.gmra.mxu0 %v3837
        %v3848 = vpop.f32.mrf.mxu0
        %v3849 = vadd.f32 0.0, %v3848
        %v3850 = vpop.f32.mrf.mxu0
        %v3851 = vadd.f32 0.0, %v3850
        %3852 = vdwg.mxu0
        %v3853 = vrot.slane %v3709, 4
        %v3854 = vsel %vm913, %v3853, %v3653
        %v3855 = vrot.slane %v3653, 4
        %v3856 = vsel %vm913, %v3709, %v3855
        %v3858 = vunpack.c.l.s4 1983009808
        %v3859 = vunpack.c.0.s8 %v3858
        %v3860 = vperm.slane %v3854, %v3859
        %v3862 = vunpack.c.l.s4 1983009808
        %v3863 = vunpack.c.0.s8 %v3862
        %v3864 = vperm.slane %v3856, %v3863
        %v3865 = vrot.slane %v3737, 4
        %v3866 = vsel %vm913, %v3865, %v3681
        %v3867 = vrot.slane %v3681, 4
        %v3868 = vsel %vm913, %v3737, %v3867
        %v3870 = vunpack.c.l.s4 1983009808
        %v3871 = vunpack.c.0.s8 %v3870
        %v3872 = vperm.slane %v3866, %v3871
        %v3874 = vunpack.c.l.s4 1983009808
        %v3875 = vunpack.c.0.s8 %v3874
        %v3876 = vperm.slane %v3868, %v3875
        %v3877 = vrot.slane %v3821, 4
        %v3878 = vsel %vm913, %v3877, %v3765
        %v3879 = vrot.slane %v3765, 4
        %v3880 = vsel %vm913, %v3821, %v3879
        %v3882 = vunpack.c.l.s4 1983009808
        %v3883 = vunpack.c.0.s8 %v3882
        %v3884 = vperm.slane %v3878, %v3883
        %v3886 = vunpack.c.l.s4 1983009808
        %v3887 = vunpack.c.0.s8 %v3886
        %v3888 = vperm.slane %v3880, %v3887
        %v3889 = vrot.slane %v3849, 4
        %v3890 = vsel %vm913, %v3889, %v3793
        %v3891 = vrot.slane %v3793, 4
        %v3892 = vsel %vm913, %v3849, %v3891
        %v3894 = vunpack.c.l.s4 1983009808
        %v3895 = vunpack.c.0.s8 %v3894
        %v3896 = vperm.slane %v3890, %v3895
        %v3898 = vunpack.c.l.s4 1983009808
        %v3899 = vunpack.c.0.s8 %v3898
        %v3900 = vperm.slane %v3892, %v3899
        %v3901 = vrot.slane %v3872, 4
        %v3902 = vsel %vm913, %v3901, %v3860
        %v3903 = vrot.slane %v3860, 4
        %v3904 = vsel %vm913, %v3872, %v3903
        %v3906 = vunpack.c.l.s4 1934713408
        %v3907 = vunpack.c.0.s8 %v3906
        %v3908 = vperm.slane %v3902, %v3907
        %v3910 = vunpack.c.l.s4 1934713408
        %v3911 = vunpack.c.0.s8 %v3910
        %v3912 = vperm.slane %v3904, %v3911
        %v3913 = vrot.slane %v3876, 4
        %v3914 = vsel %vm913, %v3913, %v3864
        %v3915 = vrot.slane %v3864, 4
        %v3916 = vsel %vm913, %v3876, %v3915
        %v3918 = vunpack.c.l.s4 1934713408
        %v3919 = vunpack.c.0.s8 %v3918
        %v3920 = vperm.slane %v3914, %v3919
        %v3922 = vunpack.c.l.s4 1934713408
        %v3923 = vunpack.c.0.s8 %v3922
        %v3924 = vperm.slane %v3916, %v3923
        %v3925 = vrot.slane %v3896, 4
        %v3926 = vsel %vm913, %v3925, %v3884
        %v3927 = vrot.slane %v3884, 4
        %v3928 = vsel %vm913, %v3896, %v3927
        %v3930 = vunpack.c.l.s4 1934713408
        %v3931 = vunpack.c.0.s8 %v3930
        %v3932 = vperm.slane %v3926, %v3931
        %v3934 = vunpack.c.l.s4 1934713408
        %v3935 = vunpack.c.0.s8 %v3934
        %v3936 = vperm.slane %v3928, %v3935
        %v3937 = vrot.slane %v3900, 4
        %v3938 = vsel %vm913, %v3937, %v3888
        %v3939 = vrot.slane %v3888, 4
        %v3940 = vsel %vm913, %v3900, %v3939
        %v3942 = vunpack.c.l.s4 1934713408
        %v3943 = vunpack.c.0.s8 %v3942
        %v3944 = vperm.slane %v3938, %v3943
        %v3946 = vunpack.c.l.s4 1934713408
        %v3947 = vunpack.c.0.s8 %v3946
        %v3948 = vperm.slane %v3940, %v3947
        %v3949 = vrot.slane %v3932, 4
        %v3950 = vsel %vm913, %v3949, %v3908
        %v3951 = vrot.slane %v3908, 4
        %v3952 = vsel %vm913, %v3932, %v3951
        %v3953 = vrot.slane %v3936, 4
        %v3954 = vsel %vm913, %v3953, %v3912
        %v3955 = vrot.slane %v3912, 4
        %v3956 = vsel %vm913, %v3936, %v3955
        %v3957 = vrot.slane %v3944, 4
        %v3958 = vsel %vm913, %v3957, %v3920
        %v3959 = vrot.slane %v3920, 4
        %v3960 = vsel %vm913, %v3944, %v3959
        %v3961 = vrot.slane %v3948, 4
        %v3962 = vsel %vm913, %v3961, %v3924
        %v3963 = vrot.slane %v3924, 4
        %v3964 = vsel %vm913, %v3948, %v3963
        %v3965 = vrot.slane %v3711, 4
        %v3966 = vsel %vm913, %v3965, %v3655
        %v3967 = vrot.slane %v3655, 4
        %v3968 = vsel %vm913, %v3711, %v3967
        %v3970 = vunpack.c.l.s4 1983009808
        %v3971 = vunpack.c.0.s8 %v3970
        %v3972 = vperm.slane %v3966, %v3971
        %v3974 = vunpack.c.l.s4 1983009808
        %v3975 = vunpack.c.0.s8 %v3974
        %v3976 = vperm.slane %v3968, %v3975
        %v3977 = vrot.slane %v3739, 4
        %v3978 = vsel %vm913, %v3977, %v3683
        %v3979 = vrot.slane %v3683, 4
        %v3980 = vsel %vm913, %v3739, %v3979
        %v3982 = vunpack.c.l.s4 1983009808
        %v3983 = vunpack.c.0.s8 %v3982
        %v3984 = vperm.slane %v3978, %v3983
        %v3986 = vunpack.c.l.s4 1983009808
        %v3987 = vunpack.c.0.s8 %v3986
        %v3988 = vperm.slane %v3980, %v3987
        %v3989 = vrot.slane %v3823, 4
        %v3990 = vsel %vm913, %v3989, %v3767
        %v3991 = vrot.slane %v3767, 4
        %v3992 = vsel %vm913, %v3823, %v3991
        %v3994 = vunpack.c.l.s4 1983009808
        %v3995 = vunpack.c.0.s8 %v3994
        %v3996 = vperm.slane %v3990, %v3995
        %v3998 = vunpack.c.l.s4 1983009808
        %v3999 = vunpack.c.0.s8 %v3998
        %v4000 = vperm.slane %v3992, %v3999
        %v4001 = vrot.slane %v3851, 4
        %v4002 = vsel %vm913, %v4001, %v3795
        %v4003 = vrot.slane %v3795, 4
        %v4004 = vsel %vm913, %v3851, %v4003
        %v4006 = vunpack.c.l.s4 1983009808
        %v4007 = vunpack.c.0.s8 %v4006
        %v4008 = vperm.slane %v4002, %v4007
        %v4010 = vunpack.c.l.s4 1983009808
        %v4011 = vunpack.c.0.s8 %v4010
        %v4012 = vperm.slane %v4004, %v4011
        %v4013 = vrot.slane %v3984, 4
        %v4014 = vsel %vm913, %v4013, %v3972
        %v4015 = vrot.slane %v3972, 4
        %v4016 = vsel %vm913, %v3984, %v4015
        %v4018 = vunpack.c.l.s4 1934713408
        %v4019 = vunpack.c.0.s8 %v4018
        %v4020 = vperm.slane %v4014, %v4019
        %v4022 = vunpack.c.l.s4 1934713408
        %v4023 = vunpack.c.0.s8 %v4022
        %v4024 = vperm.slane %v4016, %v4023
        %v4025 = vrot.slane %v3988, 4
        %v4026 = vsel %vm913, %v4025, %v3976
        %v4027 = vrot.slane %v3976, 4
        %v4028 = vsel %vm913, %v3988, %v4027
        %v4030 = vunpack.c.l.s4 1934713408
        %v4031 = vunpack.c.0.s8 %v4030
        %v4032 = vperm.slane %v4026, %v4031
        %v4034 = vunpack.c.l.s4 1934713408
        %v4035 = vunpack.c.0.s8 %v4034
        %v4036 = vperm.slane %v4028, %v4035
        %v4037 = vrot.slane %v4008, 4
        %v4038 = vsel %vm913, %v4037, %v3996
        %v4039 = vrot.slane %v3996, 4
        %v4040 = vsel %vm913, %v4008, %v4039
        %v4042 = vunpack.c.l.s4 1934713408
        %v4043 = vunpack.c.0.s8 %v4042
        %v4044 = vperm.slane %v4038, %v4043
        %v4046 = vunpack.c.l.s4 1934713408
        %v4047 = vunpack.c.0.s8 %v4046
        %v4048 = vperm.slane %v4040, %v4047
        %v4049 = vrot.slane %v4012, 4
        %v4050 = vsel %vm913, %v4049, %v4000
        %v4051 = vrot.slane %v4000, 4
        %v4052 = vsel %vm913, %v4012, %v4051
        %v4054 = vunpack.c.l.s4 1934713408
        %v4055 = vunpack.c.0.s8 %v4054
        %v4056 = vperm.slane %v4050, %v4055
        %v4058 = vunpack.c.l.s4 1934713408
        %v4059 = vunpack.c.0.s8 %v4058
        %v4060 = vperm.slane %v4052, %v4059
        %v4061 = vrot.slane %v4044, 4
        %v4062 = vsel %vm913, %v4061, %v4020
        %v4063 = vrot.slane %v4020, 4
        %v4064 = vsel %vm913, %v4044, %v4063
        %v4065 = vrot.slane %v4048, 4
        %v4066 = vsel %vm913, %v4065, %v4024
        %v4067 = vrot.slane %v4024, 4
        %v4068 = vsel %vm913, %v4048, %v4067
        %v4069 = vrot.slane %v4056, 4
        %v4070 = vsel %vm913, %v4069, %v4032
        %v4071 = vrot.slane %v4032, 4
        %v4072 = vsel %vm913, %v4056, %v4071
        %v4073 = vrot.slane %v4060, 4
        %v4074 = vsel %vm913, %v4073, %v4036
        %v4075 = vrot.slane %v4036, 4
        %v4076 = vsel %vm913, %v4060, %v4075
        %v4077 = vrot.slane %v3954, 4
        %v4078 = vsel %vm913, %v4077, %v3950
        %v4079 = vrot.slane %v3950, 4
        %v4080 = vsel %vm913, %v3954, %v4079
        %v4082 = vunpack.c.l.s4 1983009808
        %v4083 = vunpack.c.0.s8 %v4082
        %v4084 = vperm.slane %v4078, %v4083
        %v4086 = vunpack.c.l.s4 1983009808
        %v4087 = vunpack.c.0.s8 %v4086
        %v4088 = vperm.slane %v4080, %v4087
        %v4089 = vrot.slane %v3956, 4
        %v4090 = vsel %vm913, %v4089, %v3952
        %v4091 = vrot.slane %v3952, 4
        %v4092 = vsel %vm913, %v3956, %v4091
        %v4094 = vunpack.c.l.s4 1983009808
        %v4095 = vunpack.c.0.s8 %v4094
        %v4096 = vperm.slane %v4090, %v4095
        %v4098 = vunpack.c.l.s4 1983009808
        %v4099 = vunpack.c.0.s8 %v4098
        %v4100 = vperm.slane %v4092, %v4099
        %v4101 = vrot.slane %v3962, 4
        %v4102 = vsel %vm913, %v4101, %v3958
        %v4103 = vrot.slane %v3958, 4
        %v4104 = vsel %vm913, %v3962, %v4103
        %v4106 = vunpack.c.l.s4 1983009808
        %v4107 = vunpack.c.0.s8 %v4106
        %v4108 = vperm.slane %v4102, %v4107
        %v4110 = vunpack.c.l.s4 1983009808
        %v4111 = vunpack.c.0.s8 %v4110
        %v4112 = vperm.slane %v4104, %v4111
        %v4113 = vrot.slane %v3964, 4
        %v4114 = vsel %vm913, %v4113, %v3960
        %v4115 = vrot.slane %v3960, 4
        %v4116 = vsel %vm913, %v3964, %v4115
        %v4118 = vunpack.c.l.s4 1983009808
        %v4119 = vunpack.c.0.s8 %v4118
        %v4120 = vperm.slane %v4114, %v4119
        %v4122 = vunpack.c.l.s4 1983009808
        %v4123 = vunpack.c.0.s8 %v4122
        %v4124 = vperm.slane %v4116, %v4123
        %v4125 = vrot.slane %v4096, 4
        %v4126 = vsel %vm913, %v4125, %v4084
        %v4127 = vrot.slane %v4084, 4
        %v4128 = vsel %vm913, %v4096, %v4127
        %v4130 = vunpack.c.l.s4 1934713408
        %v4131 = vunpack.c.0.s8 %v4130
        %v4132 = vperm.slane %v4126, %v4131
        %v4134 = vunpack.c.l.s4 1934713408
        %v4135 = vunpack.c.0.s8 %v4134
        %v4136 = vperm.slane %v4128, %v4135
        %v4137 = vrot.slane %v4100, 4
        %v4138 = vsel %vm913, %v4137, %v4088
        %v4139 = vrot.slane %v4088, 4
        %v4140 = vsel %vm913, %v4100, %v4139
        %v4142 = vunpack.c.l.s4 1934713408
        %v4143 = vunpack.c.0.s8 %v4142
        %v4144 = vperm.slane %v4138, %v4143
        %v4146 = vunpack.c.l.s4 1934713408
        %v4147 = vunpack.c.0.s8 %v4146
        %v4148 = vperm.slane %v4140, %v4147
        %v4149 = vrot.slane %v4120, 4
        %v4150 = vsel %vm913, %v4149, %v4108
        %v4151 = vrot.slane %v4108, 4
        %v4152 = vsel %vm913, %v4120, %v4151
        %v4154 = vunpack.c.l.s4 1934713408
        %v4155 = vunpack.c.0.s8 %v4154
        %v4156 = vperm.slane %v4150, %v4155
        %v4158 = vunpack.c.l.s4 1934713408
        %v4159 = vunpack.c.0.s8 %v4158
        %v4160 = vperm.slane %v4152, %v4159
        %v4161 = vrot.slane %v4124, 4
        %v4162 = vsel %vm913, %v4161, %v4112
        %v4163 = vrot.slane %v4112, 4
        %v4164 = vsel %vm913, %v4124, %v4163
        %v4166 = vunpack.c.l.s4 1934713408
        %v4167 = vunpack.c.0.s8 %v4166
        %v4168 = vperm.slane %v4162, %v4167
        %v4170 = vunpack.c.l.s4 1934713408
        %v4171 = vunpack.c.0.s8 %v4170
        %v4172 = vperm.slane %v4164, %v4171
        %v4173 = vrot.slane %v4156, 4
        %v4174 = vsel %vm913, %v4173, %v4132
        %v4175 = vrot.slane %v4132, 4
        %v4176 = vsel %vm913, %v4156, %v4175
        %v4177 = vrot.slane %v4160, 4
        %v4178 = vsel %vm913, %v4177, %v4136
        %v4179 = vrot.slane %v4136, 4
        %v4180 = vsel %vm913, %v4160, %v4179
        %v4181 = vrot.slane %v4168, 4
        %v4182 = vsel %vm913, %v4181, %v4144
        %v4183 = vrot.slane %v4144, 4
        %v4184 = vsel %vm913, %v4168, %v4183
        %v4185 = vrot.slane %v4172, 4
        %v4186 = vsel %vm913, %v4185, %v4148
        %v4187 = vrot.slane %v4148, 4
        %v4188 = vsel %vm913, %v4172, %v4187
        %v4189 = vrot.slane %v4066, 4
        %v4190 = vsel %vm913, %v4189, %v4062
        %v4191 = vrot.slane %v4062, 4
        %v4192 = vsel %vm913, %v4066, %v4191
        %v4194 = vunpack.c.l.s4 1983009808
        %v4195 = vunpack.c.0.s8 %v4194
        %v4196 = vperm.slane %v4190, %v4195
        %v4198 = vunpack.c.l.s4 1983009808
        %v4199 = vunpack.c.0.s8 %v4198
        %v4200 = vperm.slane %v4192, %v4199
        %v4201 = vrot.slane %v4068, 4
        %v4202 = vsel %vm913, %v4201, %v4064
        %v4203 = vrot.slane %v4064, 4
        %v4204 = vsel %vm913, %v4068, %v4203
        %v4206 = vunpack.c.l.s4 1983009808
        %v4207 = vunpack.c.0.s8 %v4206
        %v4208 = vperm.slane %v4202, %v4207
        %v4210 = vunpack.c.l.s4 1983009808
        %v4211 = vunpack.c.0.s8 %v4210
        %v4212 = vperm.slane %v4204, %v4211
        %v4213 = vrot.slane %v4074, 4
        %v4214 = vsel %vm913, %v4213, %v4070
        %v4215 = vrot.slane %v4070, 4
        %v4216 = vsel %vm913, %v4074, %v4215
        %v4218 = vunpack.c.l.s4 1983009808
        %v4219 = vunpack.c.0.s8 %v4218
        %v4220 = vperm.slane %v4214, %v4219
        %v4222 = vunpack.c.l.s4 1983009808
        %v4223 = vunpack.c.0.s8 %v4222
        %v4224 = vperm.slane %v4216, %v4223
        %v4225 = vrot.slane %v4076, 4
        %v4226 = vsel %vm913, %v4225, %v4072
        %v4227 = vrot.slane %v4072, 4
        %v4228 = vsel %vm913, %v4076, %v4227
        %v4230 = vunpack.c.l.s4 1983009808
        %v4231 = vunpack.c.0.s8 %v4230
        %v4232 = vperm.slane %v4226, %v4231
        %v4234 = vunpack.c.l.s4 1983009808
        %v4235 = vunpack.c.0.s8 %v4234
        %v4236 = vperm.slane %v4228, %v4235
        %v4237 = vrot.slane %v4208, 4
        %v4238 = vsel %vm913, %v4237, %v4196
        %v4239 = vrot.slane %v4196, 4
        %v4240 = vsel %vm913, %v4208, %v4239
        %v4242 = vunpack.c.l.s4 1934713408
        %v4243 = vunpack.c.0.s8 %v4242
        %v4244 = vperm.slane %v4238, %v4243
        %v4246 = vunpack.c.l.s4 1934713408
        %v4247 = vunpack.c.0.s8 %v4246
        %v4248 = vperm.slane %v4240, %v4247
        %v4249 = vrot.slane %v4212, 4
        %v4250 = vsel %vm913, %v4249, %v4200
        %v4251 = vrot.slane %v4200, 4
        %v4252 = vsel %vm913, %v4212, %v4251
        %v4254 = vunpack.c.l.s4 1934713408
        %v4255 = vunpack.c.0.s8 %v4254
        %v4256 = vperm.slane %v4250, %v4255
        %v4258 = vunpack.c.l.s4 1934713408
        %v4259 = vunpack.c.0.s8 %v4258
        %v4260 = vperm.slane %v4252, %v4259
        %v4261 = vrot.slane %v4232, 4
        %v4262 = vsel %vm913, %v4261, %v4220
        %v4263 = vrot.slane %v4220, 4
        %v4264 = vsel %vm913, %v4232, %v4263
        %v4266 = vunpack.c.l.s4 1934713408
        %v4267 = vunpack.c.0.s8 %v4266
        %v4268 = vperm.slane %v4262, %v4267
        %v4270 = vunpack.c.l.s4 1934713408
        %v4271 = vunpack.c.0.s8 %v4270
        %v4272 = vperm.slane %v4264, %v4271
        %v4273 = vrot.slane %v4236, 4
        %v4274 = vsel %vm913, %v4273, %v4224
        %v4275 = vrot.slane %v4224, 4
        %v4276 = vsel %vm913, %v4236, %v4275
        %v4278 = vunpack.c.l.s4 1934713408
        %v4279 = vunpack.c.0.s8 %v4278
        %v4280 = vperm.slane %v4274, %v4279
        %v4282 = vunpack.c.l.s4 1934713408
        %v4283 = vunpack.c.0.s8 %v4282
        %v4284 = vperm.slane %v4276, %v4283
        %v4285 = vrot.slane %v4268, 4
        %v4286 = vsel %vm913, %v4285, %v4244
        %v4287 = vrot.slane %v4244, 4
        %v4288 = vsel %vm913, %v4268, %v4287
        %v4289 = vrot.slane %v4272, 4
        %v4290 = vsel %vm913, %v4289, %v4248
        %v4291 = vrot.slane %v4248, 4
        %v4292 = vsel %vm913, %v4272, %v4291
        %v4293 = vrot.slane %v4280, 4
        %v4294 = vsel %vm913, %v4293, %v4256
        %v4295 = vrot.slane %v4256, 4
        %v4296 = vsel %vm913, %v4280, %v4295
        %v4297 = vrot.slane %v4284, 4
        %v4298 = vsel %vm913, %v4297, %v4260
        %v4299 = vrot.slane %v4260, 4
        %v4300 = vsel %vm913, %v4284, %v4299
        %4303 = vrot.lane.b32.xlu0 %v4176, 16
        %v4304 = vpop.permute.xlu0 %4303
        %4305 = vrot.lane.b32.xlu0 %v4288, 16
        %v4306 = vpop.permute.xlu0 %4305
        %4311 = vrot.lane.b32.xlu0 %v4178, 32
        %v4312 = vpop.permute.xlu0 %4311
        %4313 = vrot.lane.b32.xlu0 %v4290, 32
        %v4314 = vpop.permute.xlu0 %4313
        %4319 = vrot.lane.b32.xlu0 %v4180, 48
        %v4320 = vpop.permute.xlu0 %4319
        %4321 = vrot.lane.b32.xlu0 %v4292, 48
        %v4322 = vpop.permute.xlu0 %4321
        %4327 = vrot.lane.b32.xlu0 %v4182, 64
        %v4328 = vpop.permute.xlu0 %4327
        %4329 = vrot.lane.b32.xlu0 %v4294, 64
        %v4330 = vpop.permute.xlu0 %4329
        %4335 = vrot.lane.b32.xlu0 %v4184, 80
        %v4336 = vpop.permute.xlu0 %4335
        %4337 = vrot.lane.b32.xlu0 %v4296, 80
        %v4338 = vpop.permute.xlu0 %4337
        %4343 = vrot.lane.b32.xlu0 %v4186, 96
        %v4344 = vpop.permute.xlu0 %4343
        %4345 = vrot.lane.b32.xlu0 %v4298, 96
        %v4346 = vpop.permute.xlu0 %4345
        %4351 = vrot.lane.b32.xlu0 %v4188, 112
        %v4352 = vpop.permute.xlu0 %4351
        %4353 = vrot.lane.b32.xlu0 %v4300, 112
        %v4354 = vpop.permute.xlu0 %4353
        %v4357 = vsel %vm2345, %v4174, %v4304
        %v4358 = vsel %vm2345, %v4286, %v4306
        %vm4359 = vcmask 261120
        %v4360 = vsel %vm4359, %v4357, %v4312
        %v4361 = vsel %vm4359, %v4358, %v4314
        %vm4362 = vcmask 392192
        %v4363 = vsel %vm4362, %v4360, %v4320
        %v4364 = vsel %vm4362, %v4361, %v4322
        %vm4365 = vcmask 523264
        %v4366 = vsel %vm4365, %v4363, %v4328
        %v4367 = vsel %vm4365, %v4364, %v4330
        %vm4368 = vcmask 654336
        %v4369 = vsel %vm4368, %v4366, %v4336
        %v4370 = vsel %vm4368, %v4367, %v4338
        %vm4371 = vcmask 785408
        %v4372 = vsel %vm4371, %v4369, %v4344
        %v4373 = vsel %vm4371, %v4370, %v4346
        %vm4374 = vcmask 916480
        %v4375 = vsel %vm4374, %v4372, %v4352
        %v4376 = vsel %vm4374, %v4373, %v4354
        %4379 = vrot.lane.b32.xlu0 %v822, 112
        %v4380 = vpop.permute.xlu0 %4379
        %4381 = vrot.lane.b32.xlu0 %v824, 112
        %v4382 = vpop.permute.xlu0 %4381
        %4385 = vrot.lane.b32.xlu0 %v822, 96
        %v4386 = vpop.permute.xlu0 %4385
        %4387 = vrot.lane.b32.xlu0 %v824, 96
        %v4388 = vpop.permute.xlu0 %4387
        %4391 = vrot.lane.b32.xlu0 %v822, 80
        %v4392 = vpop.permute.xlu0 %4391
        %4393 = vrot.lane.b32.xlu0 %v824, 80
        %v4394 = vpop.permute.xlu0 %4393
        %4397 = vrot.lane.b32.xlu0 %v822, 64
        %v4398 = vpop.permute.xlu0 %4397
        %4399 = vrot.lane.b32.xlu0 %v824, 64
        %v4400 = vpop.permute.xlu0 %4399
        %4403 = vrot.lane.b32.xlu0 %v822, 48
        %v4404 = vpop.permute.xlu0 %4403
        %4405 = vrot.lane.b32.xlu0 %v824, 48
        %v4406 = vpop.permute.xlu0 %4405
        %4409 = vrot.lane.b32.xlu0 %v822, 32
        %v4410 = vpop.permute.xlu0 %4409
        %4411 = vrot.lane.b32.xlu0 %v824, 32
        %v4412 = vpop.permute.xlu0 %4411
        %4415 = vrot.lane.b32.xlu0 %v822, 16
        %v4416 = vpop.permute.xlu0 %4415
        %4417 = vrot.lane.b32.xlu0 %v824, 16
        %v4418 = vpop.permute.xlu0 %4417
        %v4421 = vrot.slane %v4386, 4
        %v4422 = vsel %vm913, %v4421, %v822
        %v4423 = vrot.slane %v822, 4
        %v4424 = vsel %vm913, %v4386, %v4423
        %v4426 = vunpack.c.l.s4 1983009808
        %v4427 = vunpack.c.0.s8 %v4426
        %v4428 = vperm.slane %v4422, %v4427
        %v4430 = vunpack.c.l.s4 1983009808
        %v4431 = vunpack.c.0.s8 %v4430
        %v4432 = vperm.slane %v4424, %v4431
        %v4433 = vrot.slane %v4392, 4
        %v4434 = vsel %vm913, %v4433, %v4380
        %v4435 = vrot.slane %v4380, 4
        %v4436 = vsel %vm913, %v4392, %v4435
        %v4438 = vunpack.c.l.s4 1983009808
        %v4439 = vunpack.c.0.s8 %v4438
        %v4440 = vperm.slane %v4434, %v4439
        %v4442 = vunpack.c.l.s4 1983009808
        %v4443 = vunpack.c.0.s8 %v4442
        %v4444 = vperm.slane %v4436, %v4443
        %v4445 = vrot.slane %v4410, 4
        %v4446 = vsel %vm913, %v4445, %v4398
        %v4447 = vrot.slane %v4398, 4
        %v4448 = vsel %vm913, %v4410, %v4447
        %v4450 = vunpack.c.l.s4 1983009808
        %v4451 = vunpack.c.0.s8 %v4450
        %v4452 = vperm.slane %v4446, %v4451
        %v4454 = vunpack.c.l.s4 1983009808
        %v4455 = vunpack.c.0.s8 %v4454
        %v4456 = vperm.slane %v4448, %v4455
        %v4457 = vrot.slane %v4416, 4
        %v4458 = vsel %vm913, %v4457, %v4404
        %v4459 = vrot.slane %v4404, 4
        %v4460 = vsel %vm913, %v4416, %v4459
        %v4462 = vunpack.c.l.s4 1983009808
        %v4463 = vunpack.c.0.s8 %v4462
        %v4464 = vperm.slane %v4458, %v4463
        %v4466 = vunpack.c.l.s4 1983009808
        %v4467 = vunpack.c.0.s8 %v4466
        %v4468 = vperm.slane %v4460, %v4467
        %v4469 = vrot.slane %v4440, 4
        %v4470 = vsel %vm913, %v4469, %v4428
        %v4471 = vrot.slane %v4428, 4
        %v4472 = vsel %vm913, %v4440, %v4471
        %v4474 = vunpack.c.l.s4 1934713408
        %v4475 = vunpack.c.0.s8 %v4474
        %v4476 = vperm.slane %v4470, %v4475
        %v4478 = vunpack.c.l.s4 1934713408
        %v4479 = vunpack.c.0.s8 %v4478
        %v4480 = vperm.slane %v4472, %v4479
        %v4481 = vrot.slane %v4444, 4
        %v4482 = vsel %vm913, %v4481, %v4432
        %v4483 = vrot.slane %v4432, 4
        %v4484 = vsel %vm913, %v4444, %v4483
        %v4486 = vunpack.c.l.s4 1934713408
        %v4487 = vunpack.c.0.s8 %v4486
        %v4488 = vperm.slane %v4482, %v4487
        %v4490 = vunpack.c.l.s4 1934713408
        %v4491 = vunpack.c.0.s8 %v4490
        %v4492 = vperm.slane %v4484, %v4491
        %v4493 = vrot.slane %v4464, 4
        %v4494 = vsel %vm913, %v4493, %v4452
        %v4495 = vrot.slane %v4452, 4
        %v4496 = vsel %vm913, %v4464, %v4495
        %v4498 = vunpack.c.l.s4 1934713408
        %v4499 = vunpack.c.0.s8 %v4498
        %v4500 = vperm.slane %v4494, %v4499
        %v4502 = vunpack.c.l.s4 1934713408
        %v4503 = vunpack.c.0.s8 %v4502
        %v4504 = vperm.slane %v4496, %v4503
        %v4505 = vrot.slane %v4468, 4
        %v4506 = vsel %vm913, %v4505, %v4456
        %v4507 = vrot.slane %v4456, 4
        %v4508 = vsel %vm913, %v4468, %v4507
        %v4510 = vunpack.c.l.s4 1934713408
        %v4511 = vunpack.c.0.s8 %v4510
        %v4512 = vperm.slane %v4506, %v4511
        %v4514 = vunpack.c.l.s4 1934713408
        %v4515 = vunpack.c.0.s8 %v4514
        %v4516 = vperm.slane %v4508, %v4515
        %v4517 = vrot.slane %v4500, 4
        %v4518 = vsel %vm913, %v4517, %v4476
        %v4519 = vrot.slane %v4476, 4
        %v4520 = vsel %vm913, %v4500, %v4519
        %v4521 = vrot.slane %v4504, 4
        %v4522 = vsel %vm913, %v4521, %v4480
        %v4523 = vrot.slane %v4480, 4
        %v4524 = vsel %vm913, %v4504, %v4523
        %v4525 = vrot.slane %v4512, 4
        %v4526 = vsel %vm913, %v4525, %v4488
        %v4527 = vrot.slane %v4488, 4
        %v4528 = vsel %vm913, %v4512, %v4527
        %v4529 = vrot.slane %v4516, 4
        %v4530 = vsel %vm913, %v4529, %v4492
        %v4531 = vrot.slane %v4492, 4
        %v4532 = vsel %vm913, %v4516, %v4531
        %v4533 = vrot.slane %v4388, 4
        %v4534 = vsel %vm913, %v4533, %v824
        %v4535 = vrot.slane %v824, 4
        %v4536 = vsel %vm913, %v4388, %v4535
        %v4538 = vunpack.c.l.s4 1983009808
        %v4539 = vunpack.c.0.s8 %v4538
        %v4540 = vperm.slane %v4534, %v4539
        %v4542 = vunpack.c.l.s4 1983009808
        %v4543 = vunpack.c.0.s8 %v4542
        %v4544 = vperm.slane %v4536, %v4543
        %v4545 = vrot.slane %v4394, 4
        %v4546 = vsel %vm913, %v4545, %v4382
        %v4547 = vrot.slane %v4382, 4
        %v4548 = vsel %vm913, %v4394, %v4547
        %v4550 = vunpack.c.l.s4 1983009808
        %v4551 = vunpack.c.0.s8 %v4550
        %v4552 = vperm.slane %v4546, %v4551
        %v4554 = vunpack.c.l.s4 1983009808
        %v4555 = vunpack.c.0.s8 %v4554
        %v4556 = vperm.slane %v4548, %v4555
        %v4557 = vrot.slane %v4412, 4
        %v4558 = vsel %vm913, %v4557, %v4400
        %v4559 = vrot.slane %v4400, 4
        %v4560 = vsel %vm913, %v4412, %v4559
        %v4562 = vunpack.c.l.s4 1983009808
        %v4563 = vunpack.c.0.s8 %v4562
        %v4564 = vperm.slane %v4558, %v4563
        %v4566 = vunpack.c.l.s4 1983009808
        %v4567 = vunpack.c.0.s8 %v4566
        %v4568 = vperm.slane %v4560, %v4567
        %v4569 = vrot.slane %v4418, 4
        %v4570 = vsel %vm913, %v4569, %v4406
        %v4571 = vrot.slane %v4406, 4
        %v4572 = vsel %vm913, %v4418, %v4571
        %v4574 = vunpack.c.l.s4 1983009808
        %v4575 = vunpack.c.0.s8 %v4574
        %v4576 = vperm.slane %v4570, %v4575
        %v4578 = vunpack.c.l.s4 1983009808
        %v4579 = vunpack.c.0.s8 %v4578
        %v4580 = vperm.slane %v4572, %v4579
        %v4581 = vrot.slane %v4552, 4
        %v4582 = vsel %vm913, %v4581, %v4540
        %v4583 = vrot.slane %v4540, 4
        %v4584 = vsel %vm913, %v4552, %v4583
        %v4586 = vunpack.c.l.s4 1934713408
        %v4587 = vunpack.c.0.s8 %v4586
        %v4588 = vperm.slane %v4582, %v4587
        %v4590 = vunpack.c.l.s4 1934713408
        %v4591 = vunpack.c.0.s8 %v4590
        %v4592 = vperm.slane %v4584, %v4591
        %v4593 = vrot.slane %v4556, 4
        %v4594 = vsel %vm913, %v4593, %v4544
        %v4595 = vrot.slane %v4544, 4
        %v4596 = vsel %vm913, %v4556, %v4595
        %v4598 = vunpack.c.l.s4 1934713408
        %v4599 = vunpack.c.0.s8 %v4598
        %v4600 = vperm.slane %v4594, %v4599
        %v4602 = vunpack.c.l.s4 1934713408
        %v4603 = vunpack.c.0.s8 %v4602
        %v4604 = vperm.slane %v4596, %v4603
        %v4605 = vrot.slane %v4576, 4
        %v4606 = vsel %vm913, %v4605, %v4564
        %v4607 = vrot.slane %v4564, 4
        %v4608 = vsel %vm913, %v4576, %v4607
        %v4610 = vunpack.c.l.s4 1934713408
        %v4611 = vunpack.c.0.s8 %v4610
        %v4612 = vperm.slane %v4606, %v4611
        %v4614 = vunpack.c.l.s4 1934713408
        %v4615 = vunpack.c.0.s8 %v4614
        %v4616 = vperm.slane %v4608, %v4615
        %v4617 = vrot.slane %v4580, 4
        %v4618 = vsel %vm913, %v4617, %v4568
        %v4619 = vrot.slane %v4568, 4
        %v4620 = vsel %vm913, %v4580, %v4619
        %v4622 = vunpack.c.l.s4 1934713408
        %v4623 = vunpack.c.0.s8 %v4622
        %v4624 = vperm.slane %v4618, %v4623
        %v4626 = vunpack.c.l.s4 1934713408
        %v4627 = vunpack.c.0.s8 %v4626
        %v4628 = vperm.slane %v4620, %v4627
        %v4629 = vrot.slane %v4612, 4
        %v4630 = vsel %vm913, %v4629, %v4588
        %v4631 = vrot.slane %v4588, 4
        %v4632 = vsel %vm913, %v4612, %v4631
        %v4633 = vrot.slane %v4616, 4
        %v4634 = vsel %vm913, %v4633, %v4592
        %v4635 = vrot.slane %v4592, 4
        %v4636 = vsel %vm913, %v4616, %v4635
        %v4637 = vrot.slane %v4624, 4
        %v4638 = vsel %vm913, %v4637, %v4600
        %v4639 = vrot.slane %v4600, 4
        %v4640 = vsel %vm913, %v4624, %v4639
        %v4641 = vrot.slane %v4628, 4
        %v4642 = vsel %vm913, %v4641, %v4604
        %v4643 = vrot.slane %v4604, 4
        %v4644 = vsel %vm913, %v4628, %v4643
        %v4645 = vrot.slane %v4522, 4
        %v4646 = vsel %vm913, %v4645, %v4518
        %v4647 = vrot.slane %v4518, 4
        %v4648 = vsel %vm913, %v4522, %v4647
        %v4650 = vunpack.c.l.s4 1983009808
        %v4651 = vunpack.c.0.s8 %v4650
        %v4652 = vperm.slane %v4646, %v4651
        %v4654 = vunpack.c.l.s4 1983009808
        %v4655 = vunpack.c.0.s8 %v4654
        %v4656 = vperm.slane %v4648, %v4655
        %v4657 = vrot.slane %v4524, 4
        %v4658 = vsel %vm913, %v4657, %v4520
        %v4659 = vrot.slane %v4520, 4
        %v4660 = vsel %vm913, %v4524, %v4659
        %v4662 = vunpack.c.l.s4 1983009808
        %v4663 = vunpack.c.0.s8 %v4662
        %v4664 = vperm.slane %v4658, %v4663
        %v4666 = vunpack.c.l.s4 1983009808
        %v4667 = vunpack.c.0.s8 %v4666
        %v4668 = vperm.slane %v4660, %v4667
        %v4669 = vrot.slane %v4530, 4
        %v4670 = vsel %vm913, %v4669, %v4526
        %v4671 = vrot.slane %v4526, 4
        %v4672 = vsel %vm913, %v4530, %v4671
        %v4674 = vunpack.c.l.s4 1983009808
        %v4675 = vunpack.c.0.s8 %v4674
        %v4676 = vperm.slane %v4670, %v4675
        %v4678 = vunpack.c.l.s4 1983009808
        %v4679 = vunpack.c.0.s8 %v4678
        %v4680 = vperm.slane %v4672, %v4679
        %v4681 = vrot.slane %v4532, 4
        %v4682 = vsel %vm913, %v4681, %v4528
        %v4683 = vrot.slane %v4528, 4
        %v4684 = vsel %vm913, %v4532, %v4683
        %v4686 = vunpack.c.l.s4 1983009808
        %v4687 = vunpack.c.0.s8 %v4686
        %v4688 = vperm.slane %v4682, %v4687
        %v4690 = vunpack.c.l.s4 1983009808
        %v4691 = vunpack.c.0.s8 %v4690
        %v4692 = vperm.slane %v4684, %v4691
        %v4693 = vrot.slane %v4664, 4
        %v4694 = vsel %vm913, %v4693, %v4652
        %v4695 = vrot.slane %v4652, 4
        %v4696 = vsel %vm913, %v4664, %v4695
        %v4698 = vunpack.c.l.s4 1934713408
        %v4699 = vunpack.c.0.s8 %v4698
        %v4700 = vperm.slane %v4694, %v4699
        %v4702 = vunpack.c.l.s4 1934713408
        %v4703 = vunpack.c.0.s8 %v4702
        %v4704 = vperm.slane %v4696, %v4703
        %v4705 = vrot.slane %v4668, 4
        %v4706 = vsel %vm913, %v4705, %v4656
        %v4707 = vrot.slane %v4656, 4
        %v4708 = vsel %vm913, %v4668, %v4707
        %v4710 = vunpack.c.l.s4 1934713408
        %v4711 = vunpack.c.0.s8 %v4710
        %v4712 = vperm.slane %v4706, %v4711
        %v4714 = vunpack.c.l.s4 1934713408
        %v4715 = vunpack.c.0.s8 %v4714
        %v4716 = vperm.slane %v4708, %v4715
        %v4717 = vrot.slane %v4688, 4
        %v4718 = vsel %vm913, %v4717, %v4676
        %v4719 = vrot.slane %v4676, 4
        %v4720 = vsel %vm913, %v4688, %v4719
        %v4722 = vunpack.c.l.s4 1934713408
        %v4723 = vunpack.c.0.s8 %v4722
        %v4724 = vperm.slane %v4718, %v4723
        %v4726 = vunpack.c.l.s4 1934713408
        %v4727 = vunpack.c.0.s8 %v4726
        %v4728 = vperm.slane %v4720, %v4727
        %v4729 = vrot.slane %v4692, 4
        %v4730 = vsel %vm913, %v4729, %v4680
        %v4731 = vrot.slane %v4680, 4
        %v4732 = vsel %vm913, %v4692, %v4731
        %v4734 = vunpack.c.l.s4 1934713408
        %v4735 = vunpack.c.0.s8 %v4734
        %v4736 = vperm.slane %v4730, %v4735
        %v4738 = vunpack.c.l.s4 1934713408
        %v4739 = vunpack.c.0.s8 %v4738
        %v4740 = vperm.slane %v4732, %v4739
        %v4741 = vrot.slane %v4724, 4
        %v4742 = vsel %vm913, %v4741, %v4700
        %v4743 = vrot.slane %v4700, 4
        %v4744 = vsel %vm913, %v4724, %v4743
        %v4745 = vrot.slane %v4728, 4
        %v4746 = vsel %vm913, %v4745, %v4704
        %v4747 = vrot.slane %v4704, 4
        %v4748 = vsel %vm913, %v4728, %v4747
        %v4749 = vrot.slane %v4736, 4
        %v4750 = vsel %vm913, %v4749, %v4712
        %v4751 = vrot.slane %v4712, 4
        %v4752 = vsel %vm913, %v4736, %v4751
        %v4753 = vrot.slane %v4740, 4
        %v4754 = vsel %vm913, %v4753, %v4716
        %v4755 = vrot.slane %v4716, 4
        %v4756 = vsel %vm913, %v4740, %v4755
        %v4757 = vrot.slane %v4634, 4
        %v4758 = vsel %vm913, %v4757, %v4630
        %v4759 = vrot.slane %v4630, 4
        %v4760 = vsel %vm913, %v4634, %v4759
        %v4762 = vunpack.c.l.s4 1983009808
        %v4763 = vunpack.c.0.s8 %v4762
        %v4764 = vperm.slane %v4758, %v4763
        %v4766 = vunpack.c.l.s4 1983009808
        %v4767 = vunpack.c.0.s8 %v4766
        %v4768 = vperm.slane %v4760, %v4767
        %v4769 = vrot.slane %v4636, 4
        %v4770 = vsel %vm913, %v4769, %v4632
        %v4771 = vrot.slane %v4632, 4
        %v4772 = vsel %vm913, %v4636, %v4771
        %v4774 = vunpack.c.l.s4 1983009808
        %v4775 = vunpack.c.0.s8 %v4774
        %v4776 = vperm.slane %v4770, %v4775
        %v4778 = vunpack.c.l.s4 1983009808
        %v4779 = vunpack.c.0.s8 %v4778
        %v4780 = vperm.slane %v4772, %v4779
        %v4781 = vrot.slane %v4642, 4
        %v4782 = vsel %vm913, %v4781, %v4638
        %v4783 = vrot.slane %v4638, 4
        %v4784 = vsel %vm913, %v4642, %v4783
        %v4786 = vunpack.c.l.s4 1983009808
        %v4787 = vunpack.c.0.s8 %v4786
        %v4788 = vperm.slane %v4782, %v4787
        %v4790 = vunpack.c.l.s4 1983009808
        %v4791 = vunpack.c.0.s8 %v4790
        %v4792 = vperm.slane %v4784, %v4791
        %v4793 = vrot.slane %v4644, 4
        %v4794 = vsel %vm913, %v4793, %v4640
        %v4795 = vrot.slane %v4640, 4
        %v4796 = vsel %vm913, %v4644, %v4795
        %v4798 = vunpack.c.l.s4 1983009808
        %v4799 = vunpack.c.0.s8 %v4798
        %v4800 = vperm.slane %v4794, %v4799
        %v4802 = vunpack.c.l.s4 1983009808
        %v4803 = vunpack.c.0.s8 %v4802
        %v4804 = vperm.slane %v4796, %v4803
        %v4805 = vrot.slane %v4776, 4
        %v4806 = vsel %vm913, %v4805, %v4764
        %v4807 = vrot.slane %v4764, 4
        %v4808 = vsel %vm913, %v4776, %v4807
        %v4810 = vunpack.c.l.s4 1934713408
        %v4811 = vunpack.c.0.s8 %v4810
        %v4812 = vperm.slane %v4806, %v4811
        %v4814 = vunpack.c.l.s4 1934713408
        %v4815 = vunpack.c.0.s8 %v4814
        %v4816 = vperm.slane %v4808, %v4815
        %v4817 = vrot.slane %v4780, 4
        %v4818 = vsel %vm913, %v4817, %v4768
        %v4819 = vrot.slane %v4768, 4
        %v4820 = vsel %vm913, %v4780, %v4819
        %v4822 = vunpack.c.l.s4 1934713408
        %v4823 = vunpack.c.0.s8 %v4822
        %v4824 = vperm.slane %v4818, %v4823
        %v4826 = vunpack.c.l.s4 1934713408
        %v4827 = vunpack.c.0.s8 %v4826
        %v4828 = vperm.slane %v4820, %v4827
        %v4829 = vrot.slane %v4800, 4
        %v4830 = vsel %vm913, %v4829, %v4788
        %v4831 = vrot.slane %v4788, 4
        %v4832 = vsel %vm913, %v4800, %v4831
        %v4834 = vunpack.c.l.s4 1934713408
        %v4835 = vunpack.c.0.s8 %v4834
        %v4836 = vperm.slane %v4830, %v4835
        %v4838 = vunpack.c.l.s4 1934713408
        %v4839 = vunpack.c.0.s8 %v4838
        %v4840 = vperm.slane %v4832, %v4839
        %v4841 = vrot.slane %v4804, 4
        %v4842 = vsel %vm913, %v4841, %v4792
        %v4843 = vrot.slane %v4792, 4
        %v4844 = vsel %vm913, %v4804, %v4843
        %v4846 = vunpack.c.l.s4 1934713408
        %v4847 = vunpack.c.0.s8 %v4846
        %v4848 = vperm.slane %v4842, %v4847
        %v4850 = vunpack.c.l.s4 1934713408
        %v4851 = vunpack.c.0.s8 %v4850
        %v4852 = vperm.slane %v4844, %v4851
        %v4853 = vrot.slane %v4836, 4
        %v4854 = vsel %vm913, %v4853, %v4812
        %v4855 = vrot.slane %v4812, 4
        %v4856 = vsel %vm913, %v4836, %v4855
        %v4857 = vrot.slane %v4840, 4
        %v4858 = vsel %vm913, %v4857, %v4816
        %v4859 = vrot.slane %v4816, 4
        %v4860 = vsel %vm913, %v4840, %v4859
        %v4861 = vrot.slane %v4848, 4
        %v4862 = vsel %vm913, %v4861, %v4824
        %v4863 = vrot.slane %v4824, 4
        %v4864 = vsel %vm913, %v4848, %v4863
        %v4865 = vrot.slane %v4852, 4
        %v4866 = vsel %vm913, %v4865, %v4828
        %v4867 = vrot.slane %v4828, 4
        %v4868 = vsel %vm913, %v4852, %v4867
        %4871 = vrot.lane.b32.xlu0 %v841, 112
        %v4872 = vpop.permute.xlu0 %4871
        %4873 = vrot.lane.b32.xlu0 %v843, 112
        %v4874 = vpop.permute.xlu0 %4873
        %4877 = vrot.lane.b32.xlu0 %v841, 96
        %v4878 = vpop.permute.xlu0 %4877
        %4879 = vrot.lane.b32.xlu0 %v843, 96
        %v4880 = vpop.permute.xlu0 %4879
        %4883 = vrot.lane.b32.xlu0 %v841, 80
        %v4884 = vpop.permute.xlu0 %4883
        %4885 = vrot.lane.b32.xlu0 %v843, 80
        %v4886 = vpop.permute.xlu0 %4885
        %4889 = vrot.lane.b32.xlu0 %v841, 64
        %v4890 = vpop.permute.xlu0 %4889
        %4891 = vrot.lane.b32.xlu0 %v843, 64
        %v4892 = vpop.permute.xlu0 %4891
        %4895 = vrot.lane.b32.xlu0 %v841, 48
        %v4896 = vpop.permute.xlu0 %4895
        %4897 = vrot.lane.b32.xlu0 %v843, 48
        %v4898 = vpop.permute.xlu0 %4897
        %4901 = vrot.lane.b32.xlu0 %v841, 32
        %v4902 = vpop.permute.xlu0 %4901
        %4903 = vrot.lane.b32.xlu0 %v843, 32
        %v4904 = vpop.permute.xlu0 %4903
        %4907 = vrot.lane.b32.xlu0 %v841, 16
        %v4908 = vpop.permute.xlu0 %4907
        %4909 = vrot.lane.b32.xlu0 %v843, 16
        %v4910 = vpop.permute.xlu0 %4909
        %v4913 = vrot.slane %v4878, 4
        %v4914 = vsel %vm913, %v4913, %v841
        %v4915 = vrot.slane %v841, 4
        %v4916 = vsel %vm913, %v4878, %v4915
        %v4918 = vunpack.c.l.s4 1983009808
        %v4919 = vunpack.c.0.s8 %v4918
        %v4920 = vperm.slane %v4914, %v4919
        %v4922 = vunpack.c.l.s4 1983009808
        %v4923 = vunpack.c.0.s8 %v4922
        %v4924 = vperm.slane %v4916, %v4923
        %v4925 = vrot.slane %v4884, 4
        %v4926 = vsel %vm913, %v4925, %v4872
        %v4927 = vrot.slane %v4872, 4
        %v4928 = vsel %vm913, %v4884, %v4927
        %v4930 = vunpack.c.l.s4 1983009808
        %v4931 = vunpack.c.0.s8 %v4930
        %v4932 = vperm.slane %v4926, %v4931
        %v4934 = vunpack.c.l.s4 1983009808
        %v4935 = vunpack.c.0.s8 %v4934
        %v4936 = vperm.slane %v4928, %v4935
        %v4937 = vrot.slane %v4902, 4
        %v4938 = vsel %vm913, %v4937, %v4890
        %v4939 = vrot.slane %v4890, 4
        %v4940 = vsel %vm913, %v4902, %v4939
        %v4942 = vunpack.c.l.s4 1983009808
        %v4943 = vunpack.c.0.s8 %v4942
        %v4944 = vperm.slane %v4938, %v4943
        %v4946 = vunpack.c.l.s4 1983009808
        %v4947 = vunpack.c.0.s8 %v4946
        %v4948 = vperm.slane %v4940, %v4947
        %v4949 = vrot.slane %v4908, 4
        %v4950 = vsel %vm913, %v4949, %v4896
        %v4951 = vrot.slane %v4896, 4
        %v4952 = vsel %vm913, %v4908, %v4951
        %v4954 = vunpack.c.l.s4 1983009808
        %v4955 = vunpack.c.0.s8 %v4954
        %v4956 = vperm.slane %v4950, %v4955
        %v4958 = vunpack.c.l.s4 1983009808
        %v4959 = vunpack.c.0.s8 %v4958
        %v4960 = vperm.slane %v4952, %v4959
        %v4961 = vrot.slane %v4932, 4
        %v4962 = vsel %vm913, %v4961, %v4920
        %v4963 = vrot.slane %v4920, 4
        %v4964 = vsel %vm913, %v4932, %v4963
        %v4966 = vunpack.c.l.s4 1934713408
        %v4967 = vunpack.c.0.s8 %v4966
        %v4968 = vperm.slane %v4962, %v4967
        %v4970 = vunpack.c.l.s4 1934713408
        %v4971 = vunpack.c.0.s8 %v4970
        %v4972 = vperm.slane %v4964, %v4971
        %v4973 = vrot.slane %v4936, 4
        %v4974 = vsel %vm913, %v4973, %v4924
        %v4975 = vrot.slane %v4924, 4
        %v4976 = vsel %vm913, %v4936, %v4975
        %v4978 = vunpack.c.l.s4 1934713408
        %v4979 = vunpack.c.0.s8 %v4978
        %v4980 = vperm.slane %v4974, %v4979
        %v4982 = vunpack.c.l.s4 1934713408
        %v4983 = vunpack.c.0.s8 %v4982
        %v4984 = vperm.slane %v4976, %v4983
        %v4985 = vrot.slane %v4956, 4
        %v4986 = vsel %vm913, %v4985, %v4944
        %v4987 = vrot.slane %v4944, 4
        %v4988 = vsel %vm913, %v4956, %v4987
        %v4990 = vunpack.c.l.s4 1934713408
        %v4991 = vunpack.c.0.s8 %v4990
        %v4992 = vperm.slane %v4986, %v4991
        %v4994 = vunpack.c.l.s4 1934713408
        %v4995 = vunpack.c.0.s8 %v4994
        %v4996 = vperm.slane %v4988, %v4995
        %v4997 = vrot.slane %v4960, 4
        %v4998 = vsel %vm913, %v4997, %v4948
        %v4999 = vrot.slane %v4948, 4
        %v5000 = vsel %vm913, %v4960, %v4999
        %v5002 = vunpack.c.l.s4 1934713408
        %v5003 = vunpack.c.0.s8 %v5002
        %v5004 = vperm.slane %v4998, %v5003
        %v5006 = vunpack.c.l.s4 1934713408
        %v5007 = vunpack.c.0.s8 %v5006
        %v5008 = vperm.slane %v5000, %v5007
        %v5009 = vrot.slane %v4992, 4
        %v5010 = vsel %vm913, %v5009, %v4968
        %v5011 = vrot.slane %v4968, 4
        %v5012 = vsel %vm913, %v4992, %v5011
        %v5013 = vrot.slane %v4996, 4
        %v5014 = vsel %vm913, %v5013, %v4972
        %v5015 = vrot.slane %v4972, 4
        %v5016 = vsel %vm913, %v4996, %v5015
        %v5017 = vrot.slane %v5004, 4
        %v5018 = vsel %vm913, %v5017, %v4980
        %v5019 = vrot.slane %v4980, 4
        %v5020 = vsel %vm913, %v5004, %v5019
        %v5021 = vrot.slane %v5008, 4
        %v5022 = vsel %vm913, %v5021, %v4984
        %v5023 = vrot.slane %v4984, 4
        %v5024 = vsel %vm913, %v5008, %v5023
        %v5025 = vrot.slane %v4880, 4
        %v5026 = vsel %vm913, %v5025, %v843
        %v5027 = vrot.slane %v843, 4
        %v5028 = vsel %vm913, %v4880, %v5027
        %v5030 = vunpack.c.l.s4 1983009808
        %v5031 = vunpack.c.0.s8 %v5030
        %v5032 = vperm.slane %v5026, %v5031
        %v5034 = vunpack.c.l.s4 1983009808
        %v5035 = vunpack.c.0.s8 %v5034
        %v5036 = vperm.slane %v5028, %v5035
        %v5037 = vrot.slane %v4886, 4
        %v5038 = vsel %vm913, %v5037, %v4874
        %v5039 = vrot.slane %v4874, 4
        %v5040 = vsel %vm913, %v4886, %v5039
        %v5042 = vunpack.c.l.s4 1983009808
        %v5043 = vunpack.c.0.s8 %v5042
        %v5044 = vperm.slane %v5038, %v5043
        %v5046 = vunpack.c.l.s4 1983009808
        %v5047 = vunpack.c.0.s8 %v5046
        %v5048 = vperm.slane %v5040, %v5047
        %v5049 = vrot.slane %v4904, 4
        %v5050 = vsel %vm913, %v5049, %v4892
        %v5051 = vrot.slane %v4892, 4
        %v5052 = vsel %vm913, %v4904, %v5051
        %v5054 = vunpack.c.l.s4 1983009808
        %v5055 = vunpack.c.0.s8 %v5054
        %v5056 = vperm.slane %v5050, %v5055
        %v5058 = vunpack.c.l.s4 1983009808
        %v5059 = vunpack.c.0.s8 %v5058
        %v5060 = vperm.slane %v5052, %v5059
        %v5061 = vrot.slane %v4910, 4
        %v5062 = vsel %vm913, %v5061, %v4898
        %v5063 = vrot.slane %v4898, 4
        %v5064 = vsel %vm913, %v4910, %v5063
        %v5066 = vunpack.c.l.s4 1983009808
        %v5067 = vunpack.c.0.s8 %v5066
        %v5068 = vperm.slane %v5062, %v5067
        %v5070 = vunpack.c.l.s4 1983009808
        %v5071 = vunpack.c.0.s8 %v5070
        %v5072 = vperm.slane %v5064, %v5071
        %v5073 = vrot.slane %v5044, 4
        %v5074 = vsel %vm913, %v5073, %v5032
        %v5075 = vrot.slane %v5032, 4
        %v5076 = vsel %vm913, %v5044, %v5075
        %v5078 = vunpack.c.l.s4 1934713408
        %v5079 = vunpack.c.0.s8 %v5078
        %v5080 = vperm.slane %v5074, %v5079
        %v5082 = vunpack.c.l.s4 1934713408
        %v5083 = vunpack.c.0.s8 %v5082
        %v5084 = vperm.slane %v5076, %v5083
        %v5085 = vrot.slane %v5048, 4
        %v5086 = vsel %vm913, %v5085, %v5036
        %v5087 = vrot.slane %v5036, 4
        %v5088 = vsel %vm913, %v5048, %v5087
        %v5090 = vunpack.c.l.s4 1934713408
        %v5091 = vunpack.c.0.s8 %v5090
        %v5092 = vperm.slane %v5086, %v5091
        %v5094 = vunpack.c.l.s4 1934713408
        %v5095 = vunpack.c.0.s8 %v5094
        %v5096 = vperm.slane %v5088, %v5095
        %v5097 = vrot.slane %v5068, 4
        %v5098 = vsel %vm913, %v5097, %v5056
        %v5099 = vrot.slane %v5056, 4
        %v5100 = vsel %vm913, %v5068, %v5099
        %v5102 = vunpack.c.l.s4 1934713408
        %v5103 = vunpack.c.0.s8 %v5102
        %v5104 = vperm.slane %v5098, %v5103
        %v5106 = vunpack.c.l.s4 1934713408
        %v5107 = vunpack.c.0.s8 %v5106
        %v5108 = vperm.slane %v5100, %v5107
        %v5109 = vrot.slane %v5072, 4
        %v5110 = vsel %vm913, %v5109, %v5060
        %v5111 = vrot.slane %v5060, 4
        %v5112 = vsel %vm913, %v5072, %v5111
        %v5114 = vunpack.c.l.s4 1934713408
        %v5115 = vunpack.c.0.s8 %v5114
        %v5116 = vperm.slane %v5110, %v5115
        %v5118 = vunpack.c.l.s4 1934713408
        %v5119 = vunpack.c.0.s8 %v5118
        %v5120 = vperm.slane %v5112, %v5119
        %v5121 = vrot.slane %v5104, 4
        %v5122 = vsel %vm913, %v5121, %v5080
        %v5123 = vrot.slane %v5080, 4
        %v5124 = vsel %vm913, %v5104, %v5123
        %v5125 = vrot.slane %v5108, 4
        %v5126 = vsel %vm913, %v5125, %v5084
        %v5127 = vrot.slane %v5084, 4
        %v5128 = vsel %vm913, %v5108, %v5127
        %v5129 = vrot.slane %v5116, 4
        %v5130 = vsel %vm913, %v5129, %v5092
        %v5131 = vrot.slane %v5092, 4
        %v5132 = vsel %vm913, %v5116, %v5131
        %v5133 = vrot.slane %v5120, 4
        %v5134 = vsel %vm913, %v5133, %v5096
        %v5135 = vrot.slane %v5096, 4
        %v5136 = vsel %vm913, %v5120, %v5135
        %v5137 = vrot.slane %v5014, 4
        %v5138 = vsel %vm913, %v5137, %v5010
        %v5139 = vrot.slane %v5010, 4
        %v5140 = vsel %vm913, %v5014, %v5139
        %v5142 = vunpack.c.l.s4 1983009808
        %v5143 = vunpack.c.0.s8 %v5142
        %v5144 = vperm.slane %v5138, %v5143
        %v5146 = vunpack.c.l.s4 1983009808
        %v5147 = vunpack.c.0.s8 %v5146
        %v5148 = vperm.slane %v5140, %v5147
        %v5149 = vrot.slane %v5016, 4
        %v5150 = vsel %vm913, %v5149, %v5012
        %v5151 = vrot.slane %v5012, 4
        %v5152 = vsel %vm913, %v5016, %v5151
        %v5154 = vunpack.c.l.s4 1983009808
        %v5155 = vunpack.c.0.s8 %v5154
        %v5156 = vperm.slane %v5150, %v5155
        %v5158 = vunpack.c.l.s4 1983009808
        %v5159 = vunpack.c.0.s8 %v5158
        %v5160 = vperm.slane %v5152, %v5159
        %v5161 = vrot.slane %v5022, 4
        %v5162 = vsel %vm913, %v5161, %v5018
        %v5163 = vrot.slane %v5018, 4
        %v5164 = vsel %vm913, %v5022, %v5163
        %v5166 = vunpack.c.l.s4 1983009808
        %v5167 = vunpack.c.0.s8 %v5166
        %v5168 = vperm.slane %v5162, %v5167
        %v5170 = vunpack.c.l.s4 1983009808
        %v5171 = vunpack.c.0.s8 %v5170
        %v5172 = vperm.slane %v5164, %v5171
        %v5173 = vrot.slane %v5024, 4
        %v5174 = vsel %vm913, %v5173, %v5020
        %v5175 = vrot.slane %v5020, 4
        %v5176 = vsel %vm913, %v5024, %v5175
        %v5178 = vunpack.c.l.s4 1983009808
        %v5179 = vunpack.c.0.s8 %v5178
        %v5180 = vperm.slane %v5174, %v5179
        %v5182 = vunpack.c.l.s4 1983009808
        %v5183 = vunpack.c.0.s8 %v5182
        %v5184 = vperm.slane %v5176, %v5183
        %v5185 = vrot.slane %v5156, 4
        %v5186 = vsel %vm913, %v5185, %v5144
        %v5187 = vrot.slane %v5144, 4
        %v5188 = vsel %vm913, %v5156, %v5187
        %v5190 = vunpack.c.l.s4 1934713408
        %v5191 = vunpack.c.0.s8 %v5190
        %v5192 = vperm.slane %v5186, %v5191
        %v5194 = vunpack.c.l.s4 1934713408
        %v5195 = vunpack.c.0.s8 %v5194
        %v5196 = vperm.slane %v5188, %v5195
        %v5197 = vrot.slane %v5160, 4
        %v5198 = vsel %vm913, %v5197, %v5148
        %v5199 = vrot.slane %v5148, 4
        %v5200 = vsel %vm913, %v5160, %v5199
        %v5202 = vunpack.c.l.s4 1934713408
        %v5203 = vunpack.c.0.s8 %v5202
        %v5204 = vperm.slane %v5198, %v5203
        %v5206 = vunpack.c.l.s4 1934713408
        %v5207 = vunpack.c.0.s8 %v5206
        %v5208 = vperm.slane %v5200, %v5207
        %v5209 = vrot.slane %v5180, 4
        %v5210 = vsel %vm913, %v5209, %v5168
        %v5211 = vrot.slane %v5168, 4
        %v5212 = vsel %vm913, %v5180, %v5211
        %v5214 = vunpack.c.l.s4 1934713408
        %v5215 = vunpack.c.0.s8 %v5214
        %v5216 = vperm.slane %v5210, %v5215
        %v5218 = vunpack.c.l.s4 1934713408
        %v5219 = vunpack.c.0.s8 %v5218
        %v5220 = vperm.slane %v5212, %v5219
        %v5221 = vrot.slane %v5184, 4
        %v5222 = vsel %vm913, %v5221, %v5172
        %v5223 = vrot.slane %v5172, 4
        %v5224 = vsel %vm913, %v5184, %v5223
        %v5226 = vunpack.c.l.s4 1934713408
        %v5227 = vunpack.c.0.s8 %v5226
        %v5228 = vperm.slane %v5222, %v5227
        %v5230 = vunpack.c.l.s4 1934713408
        %v5231 = vunpack.c.0.s8 %v5230
        %v5232 = vperm.slane %v5224, %v5231
        %v5233 = vrot.slane %v5216, 4
        %v5234 = vsel %vm913, %v5233, %v5192
        %v5235 = vrot.slane %v5192, 4
        %v5236 = vsel %vm913, %v5216, %v5235
        %v5237 = vrot.slane %v5220, 4
        %v5238 = vsel %vm913, %v5237, %v5196
        %v5239 = vrot.slane %v5196, 4
        %v5240 = vsel %vm913, %v5220, %v5239
        %v5241 = vrot.slane %v5228, 4
        %v5242 = vsel %vm913, %v5241, %v5204
        %v5243 = vrot.slane %v5204, 4
        %v5244 = vsel %vm913, %v5228, %v5243
        %v5245 = vrot.slane %v5232, 4
        %v5246 = vsel %vm913, %v5245, %v5208
        %v5247 = vrot.slane %v5208, 4
        %v5248 = vsel %vm913, %v5232, %v5247
        %v5249 = vrot.slane %v5126, 4
        %v5250 = vsel %vm913, %v5249, %v5122
        %v5251 = vrot.slane %v5122, 4
        %v5252 = vsel %vm913, %v5126, %v5251
        %v5254 = vunpack.c.l.s4 1983009808
        %v5255 = vunpack.c.0.s8 %v5254
        %v5256 = vperm.slane %v5250, %v5255
        %v5258 = vunpack.c.l.s4 1983009808
        %v5259 = vunpack.c.0.s8 %v5258
        %v5260 = vperm.slane %v5252, %v5259
        %v5261 = vrot.slane %v5128, 4
        %v5262 = vsel %vm913, %v5261, %v5124
        %v5263 = vrot.slane %v5124, 4
        %v5264 = vsel %vm913, %v5128, %v5263
        %v5266 = vunpack.c.l.s4 1983009808
        %v5267 = vunpack.c.0.s8 %v5266
        %v5268 = vperm.slane %v5262, %v5267
        %v5270 = vunpack.c.l.s4 1983009808
        %v5271 = vunpack.c.0.s8 %v5270
        %v5272 = vperm.slane %v5264, %v5271
        %v5273 = vrot.slane %v5134, 4
        %v5274 = vsel %vm913, %v5273, %v5130
        %v5275 = vrot.slane %v5130, 4
        %v5276 = vsel %vm913, %v5134, %v5275
        %v5278 = vunpack.c.l.s4 1983009808
        %v5279 = vunpack.c.0.s8 %v5278
        %v5280 = vperm.slane %v5274, %v5279
        %v5282 = vunpack.c.l.s4 1983009808
        %v5283 = vunpack.c.0.s8 %v5282
        %v5284 = vperm.slane %v5276, %v5283
        %v5285 = vrot.slane %v5136, 4
        %v5286 = vsel %vm913, %v5285, %v5132
        %v5287 = vrot.slane %v5132, 4
        %v5288 = vsel %vm913, %v5136, %v5287
        %v5290 = vunpack.c.l.s4 1983009808
        %v5291 = vunpack.c.0.s8 %v5290
        %v5292 = vperm.slane %v5286, %v5291
        %v5294 = vunpack.c.l.s4 1983009808
        %v5295 = vunpack.c.0.s8 %v5294
        %v5296 = vperm.slane %v5288, %v5295
        %v5297 = vrot.slane %v5268, 4
        %v5298 = vsel %vm913, %v5297, %v5256
        %v5299 = vrot.slane %v5256, 4
        %v5300 = vsel %vm913, %v5268, %v5299
        %v5302 = vunpack.c.l.s4 1934713408
        %v5303 = vunpack.c.0.s8 %v5302
        %v5304 = vperm.slane %v5298, %v5303
        %v5306 = vunpack.c.l.s4 1934713408
        %v5307 = vunpack.c.0.s8 %v5306
        %v5308 = vperm.slane %v5300, %v5307
        %v5309 = vrot.slane %v5272, 4
        %v5310 = vsel %vm913, %v5309, %v5260
        %v5311 = vrot.slane %v5260, 4
        %v5312 = vsel %vm913, %v5272, %v5311
        %v5314 = vunpack.c.l.s4 1934713408
        %v5315 = vunpack.c.0.s8 %v5314
        %v5316 = vperm.slane %v5310, %v5315
        %v5318 = vunpack.c.l.s4 1934713408
        %v5319 = vunpack.c.0.s8 %v5318
        %v5320 = vperm.slane %v5312, %v5319
        %v5321 = vrot.slane %v5292, 4
        %v5322 = vsel %vm913, %v5321, %v5280
        %v5323 = vrot.slane %v5280, 4
        %v5324 = vsel %vm913, %v5292, %v5323
        %v5326 = vunpack.c.l.s4 1934713408
        %v5327 = vunpack.c.0.s8 %v5326
        %v5328 = vperm.slane %v5322, %v5327
        %v5330 = vunpack.c.l.s4 1934713408
        %v5331 = vunpack.c.0.s8 %v5330
        %v5332 = vperm.slane %v5324, %v5331
        %v5333 = vrot.slane %v5296, 4
        %v5334 = vsel %vm913, %v5333, %v5284
        %v5335 = vrot.slane %v5284, 4
        %v5336 = vsel %vm913, %v5296, %v5335
        %v5338 = vunpack.c.l.s4 1934713408
        %v5339 = vunpack.c.0.s8 %v5338
        %v5340 = vperm.slane %v5334, %v5339
        %v5342 = vunpack.c.l.s4 1934713408
        %v5343 = vunpack.c.0.s8 %v5342
        %v5344 = vperm.slane %v5336, %v5343
        %v5345 = vrot.slane %v5328, 4
        %v5346 = vsel %vm913, %v5345, %v5304
        %v5347 = vrot.slane %v5304, 4
        %v5348 = vsel %vm913, %v5328, %v5347
        %v5349 = vrot.slane %v5332, 4
        %v5350 = vsel %vm913, %v5349, %v5308
        %v5351 = vrot.slane %v5308, 4
        %v5352 = vsel %vm913, %v5332, %v5351
        %v5353 = vrot.slane %v5340, 4
        %v5354 = vsel %vm913, %v5353, %v5316
        %v5355 = vrot.slane %v5316, 4
        %v5356 = vsel %vm913, %v5340, %v5355
        %v5357 = vrot.slane %v5344, 4
        %v5358 = vsel %vm913, %v5357, %v5320
        %v5359 = vrot.slane %v5320, 4
        %v5360 = vsel %vm913, %v5344, %v5359
        %5363 = vrot.lane.b32.xlu0 %v860, 112
        %v5364 = vpop.permute.xlu0 %5363
        %5365 = vrot.lane.b32.xlu0 %v862, 112
        %v5366 = vpop.permute.xlu0 %5365
        %5369 = vrot.lane.b32.xlu0 %v860, 96
        %v5370 = vpop.permute.xlu0 %5369
        %5371 = vrot.lane.b32.xlu0 %v862, 96
        %v5372 = vpop.permute.xlu0 %5371
        %5375 = vrot.lane.b32.xlu0 %v860, 80
        %v5376 = vpop.permute.xlu0 %5375
        %5377 = vrot.lane.b32.xlu0 %v862, 80
        %v5378 = vpop.permute.xlu0 %5377
        %5381 = vrot.lane.b32.xlu0 %v860, 64
        %v5382 = vpop.permute.xlu0 %5381
        %5383 = vrot.lane.b32.xlu0 %v862, 64
        %v5384 = vpop.permute.xlu0 %5383
        %5387 = vrot.lane.b32.xlu0 %v860, 48
        %v5388 = vpop.permute.xlu0 %5387
        %5389 = vrot.lane.b32.xlu0 %v862, 48
        %v5390 = vpop.permute.xlu0 %5389
        %5393 = vrot.lane.b32.xlu0 %v860, 32
        %v5394 = vpop.permute.xlu0 %5393
        %5395 = vrot.lane.b32.xlu0 %v862, 32
        %v5396 = vpop.permute.xlu0 %5395
        %5399 = vrot.lane.b32.xlu0 %v860, 16
        %v5400 = vpop.permute.xlu0 %5399
        %5401 = vrot.lane.b32.xlu0 %v862, 16
        %v5402 = vpop.permute.xlu0 %5401
        %v5405 = vrot.slane %v5370, 4
        %v5406 = vsel %vm913, %v5405, %v860
        %v5407 = vrot.slane %v860, 4
        %v5408 = vsel %vm913, %v5370, %v5407
        %v5410 = vunpack.c.l.s4 1983009808
        %v5411 = vunpack.c.0.s8 %v5410
        %v5412 = vperm.slane %v5406, %v5411
        %v5414 = vunpack.c.l.s4 1983009808
        %v5415 = vunpack.c.0.s8 %v5414
        %v5416 = vperm.slane %v5408, %v5415
        %v5417 = vrot.slane %v5376, 4
        %v5418 = vsel %vm913, %v5417, %v5364
        %v5419 = vrot.slane %v5364, 4
        %v5420 = vsel %vm913, %v5376, %v5419
        %v5422 = vunpack.c.l.s4 1983009808
        %v5423 = vunpack.c.0.s8 %v5422
        %v5424 = vperm.slane %v5418, %v5423
        %v5426 = vunpack.c.l.s4 1983009808
        %v5427 = vunpack.c.0.s8 %v5426
        %v5428 = vperm.slane %v5420, %v5427
        %v5429 = vrot.slane %v5394, 4
        %v5430 = vsel %vm913, %v5429, %v5382
        %v5431 = vrot.slane %v5382, 4
        %v5432 = vsel %vm913, %v5394, %v5431
        %v5434 = vunpack.c.l.s4 1983009808
        %v5435 = vunpack.c.0.s8 %v5434
        %v5436 = vperm.slane %v5430, %v5435
        %v5438 = vunpack.c.l.s4 1983009808
        %v5439 = vunpack.c.0.s8 %v5438
        %v5440 = vperm.slane %v5432, %v5439
        %v5441 = vrot.slane %v5400, 4
        %v5442 = vsel %vm913, %v5441, %v5388
        %v5443 = vrot.slane %v5388, 4
        %v5444 = vsel %vm913, %v5400, %v5443
        %v5446 = vunpack.c.l.s4 1983009808
        %v5447 = vunpack.c.0.s8 %v5446
        %v5448 = vperm.slane %v5442, %v5447
        %v5450 = vunpack.c.l.s4 1983009808
        %v5451 = vunpack.c.0.s8 %v5450
        %v5452 = vperm.slane %v5444, %v5451
        %v5453 = vrot.slane %v5424, 4
        %v5454 = vsel %vm913, %v5453, %v5412
        %v5455 = vrot.slane %v5412, 4
        %v5456 = vsel %vm913, %v5424, %v5455
        %v5458 = vunpack.c.l.s4 1934713408
        %v5459 = vunpack.c.0.s8 %v5458
        %v5460 = vperm.slane %v5454, %v5459
        %v5462 = vunpack.c.l.s4 1934713408
        %v5463 = vunpack.c.0.s8 %v5462
        %v5464 = vperm.slane %v5456, %v5463
        %v5465 = vrot.slane %v5428, 4
        %v5466 = vsel %vm913, %v5465, %v5416
        %v5467 = vrot.slane %v5416, 4
        %v5468 = vsel %vm913, %v5428, %v5467
        %v5470 = vunpack.c.l.s4 1934713408
        %v5471 = vunpack.c.0.s8 %v5470
        %v5472 = vperm.slane %v5466, %v5471
        %v5474 = vunpack.c.l.s4 1934713408
        %v5475 = vunpack.c.0.s8 %v5474
        %v5476 = vperm.slane %v5468, %v5475
        %v5477 = vrot.slane %v5448, 4
        %v5478 = vsel %vm913, %v5477, %v5436
        %v5479 = vrot.slane %v5436, 4
        %v5480 = vsel %vm913, %v5448, %v5479
        %v5482 = vunpack.c.l.s4 1934713408
        %v5483 = vunpack.c.0.s8 %v5482
        %v5484 = vperm.slane %v5478, %v5483
        %v5486 = vunpack.c.l.s4 1934713408
        %v5487 = vunpack.c.0.s8 %v5486
        %v5488 = vperm.slane %v5480, %v5487
        %v5489 = vrot.slane %v5452, 4
        %v5490 = vsel %vm913, %v5489, %v5440
        %v5491 = vrot.slane %v5440, 4
        %v5492 = vsel %vm913, %v5452, %v5491
        %v5494 = vunpack.c.l.s4 1934713408
        %v5495 = vunpack.c.0.s8 %v5494
        %v5496 = vperm.slane %v5490, %v5495
        %v5498 = vunpack.c.l.s4 1934713408
        %v5499 = vunpack.c.0.s8 %v5498
        %v5500 = vperm.slane %v5492, %v5499
        %v5501 = vrot.slane %v5484, 4
        %v5502 = vsel %vm913, %v5501, %v5460
        %v5503 = vrot.slane %v5460, 4
        %v5504 = vsel %vm913, %v5484, %v5503
        %v5505 = vrot.slane %v5488, 4
        %v5506 = vsel %vm913, %v5505, %v5464
        %v5507 = vrot.slane %v5464, 4
        %v5508 = vsel %vm913, %v5488, %v5507
        %v5509 = vrot.slane %v5496, 4
        %v5510 = vsel %vm913, %v5509, %v5472
        %v5511 = vrot.slane %v5472, 4
        %v5512 = vsel %vm913, %v5496, %v5511
        %v5513 = vrot.slane %v5500, 4
        %v5514 = vsel %vm913, %v5513, %v5476
        %v5515 = vrot.slane %v5476, 4
        %v5516 = vsel %vm913, %v5500, %v5515
        %v5517 = vrot.slane %v5372, 4
        %v5518 = vsel %vm913, %v5517, %v862
        %v5519 = vrot.slane %v862, 4
        %v5520 = vsel %vm913, %v5372, %v5519
        %v5522 = vunpack.c.l.s4 1983009808
        %v5523 = vunpack.c.0.s8 %v5522
        %v5524 = vperm.slane %v5518, %v5523
        %v5526 = vunpack.c.l.s4 1983009808
        %v5527 = vunpack.c.0.s8 %v5526
        %v5528 = vperm.slane %v5520, %v5527
        %v5529 = vrot.slane %v5378, 4
        %v5530 = vsel %vm913, %v5529, %v5366
        %v5531 = vrot.slane %v5366, 4
        %v5532 = vsel %vm913, %v5378, %v5531
        %v5534 = vunpack.c.l.s4 1983009808
        %v5535 = vunpack.c.0.s8 %v5534
        %v5536 = vperm.slane %v5530, %v5535
        %v5538 = vunpack.c.l.s4 1983009808
        %v5539 = vunpack.c.0.s8 %v5538
        %v5540 = vperm.slane %v5532, %v5539
        %v5541 = vrot.slane %v5396, 4
        %v5542 = vsel %vm913, %v5541, %v5384
        %v5543 = vrot.slane %v5384, 4
        %v5544 = vsel %vm913, %v5396, %v5543
        %v5546 = vunpack.c.l.s4 1983009808
        %v5547 = vunpack.c.0.s8 %v5546
        %v5548 = vperm.slane %v5542, %v5547
        %v5550 = vunpack.c.l.s4 1983009808
        %v5551 = vunpack.c.0.s8 %v5550
        %v5552 = vperm.slane %v5544, %v5551
        %v5553 = vrot.slane %v5402, 4
        %v5554 = vsel %vm913, %v5553, %v5390
        %v5555 = vrot.slane %v5390, 4
        %v5556 = vsel %vm913, %v5402, %v5555
        %v5558 = vunpack.c.l.s4 1983009808
        %v5559 = vunpack.c.0.s8 %v5558
        %v5560 = vperm.slane %v5554, %v5559
        %v5562 = vunpack.c.l.s4 1983009808
        %v5563 = vunpack.c.0.s8 %v5562
        %v5564 = vperm.slane %v5556, %v5563
        %v5565 = vrot.slane %v5536, 4
        %v5566 = vsel %vm913, %v5565, %v5524
        %v5567 = vrot.slane %v5524, 4
        %v5568 = vsel %vm913, %v5536, %v5567
        %v5570 = vunpack.c.l.s4 1934713408
        %v5571 = vunpack.c.0.s8 %v5570
        %v5572 = vperm.slane %v5566, %v5571
        %v5574 = vunpack.c.l.s4 1934713408
        %v5575 = vunpack.c.0.s8 %v5574
        %v5576 = vperm.slane %v5568, %v5575
        %v5577 = vrot.slane %v5540, 4
        %v5578 = vsel %vm913, %v5577, %v5528
        %v5579 = vrot.slane %v5528, 4
        %v5580 = vsel %vm913, %v5540, %v5579
        %v5582 = vunpack.c.l.s4 1934713408
        %v5583 = vunpack.c.0.s8 %v5582
        %v5584 = vperm.slane %v5578, %v5583
        %v5586 = vunpack.c.l.s4 1934713408
        %v5587 = vunpack.c.0.s8 %v5586
        %v5588 = vperm.slane %v5580, %v5587
        %v5589 = vrot.slane %v5560, 4
        %v5590 = vsel %vm913, %v5589, %v5548
        %v5591 = vrot.slane %v5548, 4
        %v5592 = vsel %vm913, %v5560, %v5591
        %v5594 = vunpack.c.l.s4 1934713408
        %v5595 = vunpack.c.0.s8 %v5594
        %v5596 = vperm.slane %v5590, %v5595
        %v5598 = vunpack.c.l.s4 1934713408
        %v5599 = vunpack.c.0.s8 %v5598
        %v5600 = vperm.slane %v5592, %v5599
        %v5601 = vrot.slane %v5564, 4
        %v5602 = vsel %vm913, %v5601, %v5552
        %v5603 = vrot.slane %v5552, 4
        %v5604 = vsel %vm913, %v5564, %v5603
        %v5606 = vunpack.c.l.s4 1934713408
        %v5607 = vunpack.c.0.s8 %v5606
        %v5608 = vperm.slane %v5602, %v5607
        %v5610 = vunpack.c.l.s4 1934713408
        %v5611 = vunpack.c.0.s8 %v5610
        %v5612 = vperm.slane %v5604, %v5611
        %v5613 = vrot.slane %v5596, 4
        %v5614 = vsel %vm913, %v5613, %v5572
        %v5615 = vrot.slane %v5572, 4
        %v5616 = vsel %vm913, %v5596, %v5615
        %v5617 = vrot.slane %v5600, 4
        %v5618 = vsel %vm913, %v5617, %v5576
        %v5619 = vrot.slane %v5576, 4
        %v5620 = vsel %vm913, %v5600, %v5619
        %v5621 = vrot.slane %v5608, 4
        %v5622 = vsel %vm913, %v5621, %v5584
        %v5623 = vrot.slane %v5584, 4
        %v5624 = vsel %vm913, %v5608, %v5623
        %v5625 = vrot.slane %v5612, 4
        %v5626 = vsel %vm913, %v5625, %v5588
        %v5627 = vrot.slane %v5588, 4
        %v5628 = vsel %vm913, %v5612, %v5627
        %v5629 = vrot.slane %v5506, 4
        %v5630 = vsel %vm913, %v5629, %v5502
        %v5631 = vrot.slane %v5502, 4
        %v5632 = vsel %vm913, %v5506, %v5631
        %v5634 = vunpack.c.l.s4 1983009808
        %v5635 = vunpack.c.0.s8 %v5634
        %v5636 = vperm.slane %v5630, %v5635
        %v5638 = vunpack.c.l.s4 1983009808
        %v5639 = vunpack.c.0.s8 %v5638
        %v5640 = vperm.slane %v5632, %v5639
        %v5641 = vrot.slane %v5508, 4
        %v5642 = vsel %vm913, %v5641, %v5504
        %v5643 = vrot.slane %v5504, 4
        %v5644 = vsel %vm913, %v5508, %v5643
        %v5646 = vunpack.c.l.s4 1983009808
        %v5647 = vunpack.c.0.s8 %v5646
        %v5648 = vperm.slane %v5642, %v5647
        %v5650 = vunpack.c.l.s4 1983009808
        %v5651 = vunpack.c.0.s8 %v5650
        %v5652 = vperm.slane %v5644, %v5651
        %v5653 = vrot.slane %v5514, 4
        %v5654 = vsel %vm913, %v5653, %v5510
        %v5655 = vrot.slane %v5510, 4
        %v5656 = vsel %vm913, %v5514, %v5655
        %v5658 = vunpack.c.l.s4 1983009808
        %v5659 = vunpack.c.0.s8 %v5658
        %v5660 = vperm.slane %v5654, %v5659
        %v5662 = vunpack.c.l.s4 1983009808
        %v5663 = vunpack.c.0.s8 %v5662
        %v5664 = vperm.slane %v5656, %v5663
        %v5665 = vrot.slane %v5516, 4
        %v5666 = vsel %vm913, %v5665, %v5512
        %v5667 = vrot.slane %v5512, 4
        %v5668 = vsel %vm913, %v5516, %v5667
        %v5670 = vunpack.c.l.s4 1983009808
        %v5671 = vunpack.c.0.s8 %v5670
        %v5672 = vperm.slane %v5666, %v5671
        %v5674 = vunpack.c.l.s4 1983009808
        %v5675 = vunpack.c.0.s8 %v5674
        %v5676 = vperm.slane %v5668, %v5675
        %v5677 = vrot.slane %v5648, 4
        %v5678 = vsel %vm913, %v5677, %v5636
        %v5679 = vrot.slane %v5636, 4
        %v5680 = vsel %vm913, %v5648, %v5679
        %v5682 = vunpack.c.l.s4 1934713408
        %v5683 = vunpack.c.0.s8 %v5682
        %v5684 = vperm.slane %v5678, %v5683
        %v5686 = vunpack.c.l.s4 1934713408
        %v5687 = vunpack.c.0.s8 %v5686
        %v5688 = vperm.slane %v5680, %v5687
        %v5689 = vrot.slane %v5652, 4
        %v5690 = vsel %vm913, %v5689, %v5640
        %v5691 = vrot.slane %v5640, 4
        %v5692 = vsel %vm913, %v5652, %v5691
        %v5694 = vunpack.c.l.s4 1934713408
        %v5695 = vunpack.c.0.s8 %v5694
        %v5696 = vperm.slane %v5690, %v5695
        %v5698 = vunpack.c.l.s4 1934713408
        %v5699 = vunpack.c.0.s8 %v5698
        %v5700 = vperm.slane %v5692, %v5699
        %v5701 = vrot.slane %v5672, 4
        %v5702 = vsel %vm913, %v5701, %v5660
        %v5703 = vrot.slane %v5660, 4
        %v5704 = vsel %vm913, %v5672, %v5703
        %v5706 = vunpack.c.l.s4 1934713408
        %v5707 = vunpack.c.0.s8 %v5706
        %v5708 = vperm.slane %v5702, %v5707
        %v5710 = vunpack.c.l.s4 1934713408
        %v5711 = vunpack.c.0.s8 %v5710
        %v5712 = vperm.slane %v5704, %v5711
        %v5713 = vrot.slane %v5676, 4
        %v5714 = vsel %vm913, %v5713, %v5664
        %v5715 = vrot.slane %v5664, 4
        %v5716 = vsel %vm913, %v5676, %v5715
        %v5718 = vunpack.c.l.s4 1934713408
        %v5719 = vunpack.c.0.s8 %v5718
        %v5720 = vperm.slane %v5714, %v5719
        %v5722 = vunpack.c.l.s4 1934713408
        %v5723 = vunpack.c.0.s8 %v5722
        %v5724 = vperm.slane %v5716, %v5723
        %v5725 = vrot.slane %v5708, 4
        %v5726 = vsel %vm913, %v5725, %v5684
        %v5727 = vrot.slane %v5684, 4
        %v5728 = vsel %vm913, %v5708, %v5727
        %v5729 = vrot.slane %v5712, 4
        %v5730 = vsel %vm913, %v5729, %v5688
        %v5731 = vrot.slane %v5688, 4
        %v5732 = vsel %vm913, %v5712, %v5731
        %v5733 = vrot.slane %v5720, 4
        %v5734 = vsel %vm913, %v5733, %v5696
        %v5735 = vrot.slane %v5696, 4
        %v5736 = vsel %vm913, %v5720, %v5735
        %v5737 = vrot.slane %v5724, 4
        %v5738 = vsel %vm913, %v5737, %v5700
        %v5739 = vrot.slane %v5700, 4
        %v5740 = vsel %vm913, %v5724, %v5739
        %v5741 = vrot.slane %v5618, 4
        %v5742 = vsel %vm913, %v5741, %v5614
        %v5743 = vrot.slane %v5614, 4
        %v5744 = vsel %vm913, %v5618, %v5743
        %v5746 = vunpack.c.l.s4 1983009808
        %v5747 = vunpack.c.0.s8 %v5746
        %v5748 = vperm.slane %v5742, %v5747
        %v5750 = vunpack.c.l.s4 1983009808
        %v5751 = vunpack.c.0.s8 %v5750
        %v5752 = vperm.slane %v5744, %v5751
        %v5753 = vrot.slane %v5620, 4
        %v5754 = vsel %vm913, %v5753, %v5616
        %v5755 = vrot.slane %v5616, 4
        %v5756 = vsel %vm913, %v5620, %v5755
        %v5758 = vunpack.c.l.s4 1983009808
        %v5759 = vunpack.c.0.s8 %v5758
        %v5760 = vperm.slane %v5754, %v5759
        %v5762 = vunpack.c.l.s4 1983009808
        %v5763 = vunpack.c.0.s8 %v5762
        %v5764 = vperm.slane %v5756, %v5763
        %v5765 = vrot.slane %v5626, 4
        %v5766 = vsel %vm913, %v5765, %v5622
        %v5767 = vrot.slane %v5622, 4
        %v5768 = vsel %vm913, %v5626, %v5767
        %v5770 = vunpack.c.l.s4 1983009808
        %v5771 = vunpack.c.0.s8 %v5770
        %v5772 = vperm.slane %v5766, %v5771
        %v5774 = vunpack.c.l.s4 1983009808
        %v5775 = vunpack.c.0.s8 %v5774
        %v5776 = vperm.slane %v5768, %v5775
        %v5777 = vrot.slane %v5628, 4
        %v5778 = vsel %vm913, %v5777, %v5624
        %v5779 = vrot.slane %v5624, 4
        %v5780 = vsel %vm913, %v5628, %v5779
        %v5782 = vunpack.c.l.s4 1983009808
        %v5783 = vunpack.c.0.s8 %v5782
        %v5784 = vperm.slane %v5778, %v5783
        %v5786 = vunpack.c.l.s4 1983009808
        %v5787 = vunpack.c.0.s8 %v5786
        %v5788 = vperm.slane %v5780, %v5787
        %v5789 = vrot.slane %v5760, 4
        %v5790 = vsel %vm913, %v5789, %v5748
        %v5791 = vrot.slane %v5748, 4
        %v5792 = vsel %vm913, %v5760, %v5791
        %v5794 = vunpack.c.l.s4 1934713408
        %v5795 = vunpack.c.0.s8 %v5794
        %v5796 = vperm.slane %v5790, %v5795
        %v5798 = vunpack.c.l.s4 1934713408
        %v5799 = vunpack.c.0.s8 %v5798
        %v5800 = vperm.slane %v5792, %v5799
        %v5801 = vrot.slane %v5764, 4
        %v5802 = vsel %vm913, %v5801, %v5752
        %v5803 = vrot.slane %v5752, 4
        %v5804 = vsel %vm913, %v5764, %v5803
        %v5806 = vunpack.c.l.s4 1934713408
        %v5807 = vunpack.c.0.s8 %v5806
        %v5808 = vperm.slane %v5802, %v5807
        %v5810 = vunpack.c.l.s4 1934713408
        %v5811 = vunpack.c.0.s8 %v5810
        %v5812 = vperm.slane %v5804, %v5811
        %v5813 = vrot.slane %v5784, 4
        %v5814 = vsel %vm913, %v5813, %v5772
        %v5815 = vrot.slane %v5772, 4
        %v5816 = vsel %vm913, %v5784, %v5815
        %v5818 = vunpack.c.l.s4 1934713408
        %v5819 = vunpack.c.0.s8 %v5818
        %v5820 = vperm.slane %v5814, %v5819
        %v5822 = vunpack.c.l.s4 1934713408
        %v5823 = vunpack.c.0.s8 %v5822
        %v5824 = vperm.slane %v5816, %v5823
        %v5825 = vrot.slane %v5788, 4
        %v5826 = vsel %vm913, %v5825, %v5776
        %v5827 = vrot.slane %v5776, 4
        %v5828 = vsel %vm913, %v5788, %v5827
        %v5830 = vunpack.c.l.s4 1934713408
        %v5831 = vunpack.c.0.s8 %v5830
        %v5832 = vperm.slane %v5826, %v5831
        %v5834 = vunpack.c.l.s4 1934713408
        %v5835 = vunpack.c.0.s8 %v5834
        %v5836 = vperm.slane %v5828, %v5835
        %v5837 = vrot.slane %v5820, 4
        %v5838 = vsel %vm913, %v5837, %v5796
        %v5839 = vrot.slane %v5796, 4
        %v5840 = vsel %vm913, %v5820, %v5839
        %v5841 = vrot.slane %v5824, 4
        %v5842 = vsel %vm913, %v5841, %v5800
        %v5843 = vrot.slane %v5800, 4
        %v5844 = vsel %vm913, %v5824, %v5843
        %v5845 = vrot.slane %v5832, 4
        %v5846 = vsel %vm913, %v5845, %v5808
        %v5847 = vrot.slane %v5808, 4
        %v5848 = vsel %vm913, %v5832, %v5847
        %v5849 = vrot.slane %v5836, 4
        %v5850 = vsel %vm913, %v5849, %v5812
        %v5851 = vrot.slane %v5812, 4
        %v5852 = vsel %vm913, %v5836, %v5851
        %v5853 = vsel %vm2345, %v4742, 0.0
        %5854 = vadd.xlane.f32.xlu0 %v5853
        %v5855 = vpop.xlane.xlu0 %5854
        %v5856 = vsel %vm2345, %v4854, 0.0
        %5857 = vadd.xlane.f32.xlu0 %v5856
        %v5858 = vpop.xlane.xlu0 %5857
        %v5859 = vsel %vm2345, %v4744, 0.0
        %5860 = vadd.xlane.f32.xlu0 %v5859
        %v5861 = vpop.xlane.xlu0 %5860
        %v5862 = vsel %vm2345, %v4856, 0.0
        %5863 = vadd.xlane.f32.xlu0 %v5862
        %v5864 = vpop.xlane.xlu0 %5863
        %v5865 = vsel %vm2345, %v4746, 0.0
        %5866 = vadd.xlane.f32.xlu0 %v5865
        %v5867 = vpop.xlane.xlu0 %5866
        %v5868 = vsel %vm2345, %v4858, 0.0
        %5869 = vadd.xlane.f32.xlu0 %v5868
        %v5870 = vpop.xlane.xlu0 %5869
        %v5871 = vsel %vm2345, %v4748, 0.0
        %5872 = vadd.xlane.f32.xlu0 %v5871
        %v5873 = vpop.xlane.xlu0 %5872
        %v5874 = vsel %vm2345, %v4860, 0.0
        %5875 = vadd.xlane.f32.xlu0 %v5874
        %v5876 = vpop.xlane.xlu0 %5875
        %v5877 = vsel %vm2345, %v4750, 0.0
        %5878 = vadd.xlane.f32.xlu0 %v5877
        %v5879 = vpop.xlane.xlu0 %5878
        %v5880 = vsel %vm2345, %v4862, 0.0
        %5881 = vadd.xlane.f32.xlu0 %v5880
        %v5882 = vpop.xlane.xlu0 %5881
        %v5883 = vsel %vm2345, %v4752, 0.0
        %5884 = vadd.xlane.f32.xlu0 %v5883
        %v5885 = vpop.xlane.xlu0 %5884
        %v5886 = vsel %vm2345, %v4864, 0.0
        %5887 = vadd.xlane.f32.xlu0 %v5886
        %v5888 = vpop.xlane.xlu0 %5887
        %v5889 = vsel %vm2345, %v4754, 0.0
        %5890 = vadd.xlane.f32.xlu0 %v5889
        %v5891 = vpop.xlane.xlu0 %5890
        %v5892 = vsel %vm2345, %v4866, 0.0
        %5893 = vadd.xlane.f32.xlu0 %v5892
        %v5894 = vpop.xlane.xlu0 %5893
        %v5895 = vsel %vm2345, %v4756, 0.0
        %5896 = vadd.xlane.f32.xlu0 %v5895
        %v5897 = vpop.xlane.xlu0 %5896
        %v5898 = vsel %vm2345, %v4868, 0.0
        %5899 = vadd.xlane.f32.xlu0 %v5898
        %v5900 = vpop.xlane.xlu0 %5899
        %v5901 = vmul.f32 %v5855, %v2400
        %v5902 = vmul.f32 %v5858, %v2400
        %v5903 = vmul.f32 %v5861, %v2400
        %v5904 = vmul.f32 %v5864, %v2400
        %v5905 = vmul.f32 %v5867, %v2400
        %v5906 = vmul.f32 %v5870, %v2400
        %v5907 = vmul.f32 %v5873, %v2400
        %v5908 = vmul.f32 %v5876, %v2400
        %v5909 = vmul.f32 %v5879, %v2400
        %v5910 = vmul.f32 %v5882, %v2400
        %v5911 = vmul.f32 %v5885, %v2400
        %v5912 = vmul.f32 %v5888, %v2400
        %v5913 = vmul.f32 %v5891, %v2400
        %v5914 = vmul.f32 %v5894, %v2400
        %v5915 = vmul.f32 %v5897, %v2400
        %v5916 = vmul.f32 %v5900, %v2400
        %v5917 = vsub.f32 %v4742, %v5901
        %v5918 = vsub.f32 %v4854, %v5902
        %v5919 = vsub.f32 %v4744, %v5903
        %v5920 = vsub.f32 %v4856, %v5904
        %v5921 = vsub.f32 %v4746, %v5905
        %v5922 = vsub.f32 %v4858, %v5906
        %v5923 = vsub.f32 %v4748, %v5907
        %v5924 = vsub.f32 %v4860, %v5908
        %v5925 = vsub.f32 %v4750, %v5909
        %v5926 = vsub.f32 %v4862, %v5910
        %v5927 = vsub.f32 %v4752, %v5911
        %v5928 = vsub.f32 %v4864, %v5912
        %v5929 = vsub.f32 %v4754, %v5913
        %v5930 = vsub.f32 %v4866, %v5914
        %v5931 = vsub.f32 %v4756, %v5915
        %v5932 = vsub.f32 %v4868, %v5916
        %v5933 = vmul.f32 %v5917, %v5917
        %v5934 = vmul.f32 %v5918, %v5918
        %v5935 = vmul.f32 %v5919, %v5919
        %v5936 = vmul.f32 %v5920, %v5920
        %v5937 = vmul.f32 %v5921, %v5921
        %v5938 = vmul.f32 %v5922, %v5922
        %v5939 = vmul.f32 %v5923, %v5923
        %v5940 = vmul.f32 %v5924, %v5924
        %v5941 = vmul.f32 %v5925, %v5925
        %v5942 = vmul.f32 %v5926, %v5926
        %v5943 = vmul.f32 %v5927, %v5927
        %v5944 = vmul.f32 %v5928, %v5928
        %v5945 = vmul.f32 %v5929, %v5929
        %v5946 = vmul.f32 %v5930, %v5930
        %v5947 = vmul.f32 %v5931, %v5931
        %v5948 = vmul.f32 %v5932, %v5932
        %v5949 = vsel %vm2345, %v5933, 0.0
        %5950 = vadd.xlane.f32.xlu0 %v5949
        %v5951 = vpop.xlane.xlu0 %5950
        %v5952 = vsel %vm2345, %v5934, 0.0
        %5953 = vadd.xlane.f32.xlu0 %v5952
        %v5954 = vpop.xlane.xlu0 %5953
        %v5955 = vsel %vm2345, %v5935, 0.0
        %5956 = vadd.xlane.f32.xlu0 %v5955
        %v5957 = vpop.xlane.xlu0 %5956
        %v5958 = vsel %vm2345, %v5936, 0.0
        %5959 = vadd.xlane.f32.xlu0 %v5958
        %v5960 = vpop.xlane.xlu0 %5959
        %v5961 = vsel %vm2345, %v5937, 0.0
        %5962 = vadd.xlane.f32.xlu0 %v5961
        %v5963 = vpop.xlane.xlu0 %5962
        %v5964 = vsel %vm2345, %v5938, 0.0
        %5965 = vadd.xlane.f32.xlu0 %v5964
        %v5966 = vpop.xlane.xlu0 %5965
        %v5967 = vsel %vm2345, %v5939, 0.0
        %5968 = vadd.xlane.f32.xlu0 %v5967
        %v5969 = vpop.xlane.xlu0 %5968
        %v5970 = vsel %vm2345, %v5940, 0.0
        %5971 = vadd.xlane.f32.xlu0 %v5970
        %v5972 = vpop.xlane.xlu0 %5971
        %v5973 = vsel %vm2345, %v5941, 0.0
        %5974 = vadd.xlane.f32.xlu0 %v5973
        %v5975 = vpop.xlane.xlu0 %5974
        %v5976 = vsel %vm2345, %v5942, 0.0
        %5977 = vadd.xlane.f32.xlu0 %v5976
        %v5978 = vpop.xlane.xlu0 %5977
        %v5979 = vsel %vm2345, %v5943, 0.0
        %5980 = vadd.xlane.f32.xlu0 %v5979
        %v5981 = vpop.xlane.xlu0 %5980
        %v5982 = vsel %vm2345, %v5944, 0.0
        %5983 = vadd.xlane.f32.xlu0 %v5982
        %v5984 = vpop.xlane.xlu0 %5983
        %v5985 = vsel %vm2345, %v5945, 0.0
        %5986 = vadd.xlane.f32.xlu0 %v5985
        %v5987 = vpop.xlane.xlu0 %5986
        %v5988 = vsel %vm2345, %v5946, 0.0
        %5989 = vadd.xlane.f32.xlu0 %v5988
        %v5990 = vpop.xlane.xlu0 %5989
        %v5991 = vsel %vm2345, %v5947, 0.0
        %5992 = vadd.xlane.f32.xlu0 %v5991
        %v5993 = vpop.xlane.xlu0 %5992
        %v5994 = vsel %vm2345, %v5948, 0.0
        %5995 = vadd.xlane.f32.xlu0 %v5994
        %v5996 = vpop.xlane.xlu0 %5995
        %v5997 = vmul.f32 %v5951, %v2400
        %v5998 = vmul.f32 %v5954, %v2400
        %v5999 = vmul.f32 %v5957, %v2400
        %v6000 = vmul.f32 %v5960, %v2400
        %v6001 = vmul.f32 %v5963, %v2400
        %v6002 = vmul.f32 %v5966, %v2400
        %v6003 = vmul.f32 %v5969, %v2400
        %v6004 = vmul.f32 %v5972, %v2400
        %v6005 = vmul.f32 %v5975, %v2400
        %v6006 = vmul.f32 %v5978, %v2400
        %v6007 = vmul.f32 %v5981, %v2400
        %v6008 = vmul.f32 %v5984, %v2400
        %v6009 = vmul.f32 %v5987, %v2400
        %v6010 = vmul.f32 %v5990, %v2400
        %v6011 = vmul.f32 %v5993, %v2400
        %v6012 = vmul.f32 %v5996, %v2400
        %v6013 = vadd.f32 %v5997, 1e-05
        %v6014 = vadd.f32 %v5998, 1e-05
        %v6015 = vadd.f32 %v5999, 1e-05
        %v6016 = vadd.f32 %v6000, 1e-05
        %v6017 = vadd.f32 %v6001, 1e-05
        %v6018 = vadd.f32 %v6002, 1e-05
        %v6019 = vadd.f32 %v6003, 1e-05
        %v6020 = vadd.f32 %v6004, 1e-05
        %v6021 = vadd.f32 %v6005, 1e-05
        %v6022 = vadd.f32 %v6006, 1e-05
        %v6023 = vadd.f32 %v6007, 1e-05
        %v6024 = vadd.f32 %v6008, 1e-05
        %v6025 = vadd.f32 %v6009, 1e-05
        %v6026 = vadd.f32 %v6010, 1e-05
        %v6027 = vadd.f32 %v6011, 1e-05
        %v6028 = vadd.f32 %v6012, 1e-05
        %v6029 = vrsqrt.pop %v6013
        %v6030 = vmul.f32 %v6029, %v6013
        %v6031 = vmul.f32 %v6030, %v6029
        %v6032 = vmul.f32 0.5, %v6031
        %v6033 = vsub.f32 1.5, %v6032
        %v6034 = vmul.f32 %v6029, %v6033
        %vm6035 = vweird.f32 %v6013
        %vm6036 = vweird.f32 %v6029
        %vm6037 = vmor %vm6035, %vm6036
        %v6038 = vsel %vm6037, %v6029, %v6034
        %v6039 = vrsqrt.pop %v6014
        %v6040 = vmul.f32 %v6039, %v6014
        %v6041 = vmul.f32 %v6040, %v6039
        %v6042 = vmul.f32 0.5, %v6041
        %v6043 = vsub.f32 1.5, %v6042
        %v6044 = vmul.f32 %v6039, %v6043
        %vm6045 = vweird.f32 %v6014
        %vm6046 = vweird.f32 %v6039
        %vm6047 = vmor %vm6045, %vm6046
        %v6048 = vsel %vm6047, %v6039, %v6044
        %v6049 = vrsqrt.pop %v6015
        %v6050 = vmul.f32 %v6049, %v6015
        %v6051 = vmul.f32 %v6050, %v6049
        %v6052 = vmul.f32 0.5, %v6051
        %v6053 = vsub.f32 1.5, %v6052
        %v6054 = vmul.f32 %v6049, %v6053
        %vm6055 = vweird.f32 %v6015
        %vm6056 = vweird.f32 %v6049
        %vm6057 = vmor %vm6055, %vm6056
        %v6058 = vsel %vm6057, %v6049, %v6054
        %v6059 = vrsqrt.pop %v6016
        %v6060 = vmul.f32 %v6059, %v6016
        %v6061 = vmul.f32 %v6060, %v6059
        %v6062 = vmul.f32 0.5, %v6061
        %v6063 = vsub.f32 1.5, %v6062
        %v6064 = vmul.f32 %v6059, %v6063
        %vm6065 = vweird.f32 %v6016
        %vm6066 = vweird.f32 %v6059
        %vm6067 = vmor %vm6065, %vm6066
        %v6068 = vsel %vm6067, %v6059, %v6064
        %v6069 = vrsqrt.pop %v6017
        %v6070 = vmul.f32 %v6069, %v6017
        %v6071 = vmul.f32 %v6070, %v6069
        %v6072 = vmul.f32 0.5, %v6071
        %v6073 = vsub.f32 1.5, %v6072
        %v6074 = vmul.f32 %v6069, %v6073
        %vm6075 = vweird.f32 %v6017
        %vm6076 = vweird.f32 %v6069
        %vm6077 = vmor %vm6075, %vm6076
        %v6078 = vsel %vm6077, %v6069, %v6074
        %v6079 = vrsqrt.pop %v6018
        %v6080 = vmul.f32 %v6079, %v6018
        %v6081 = vmul.f32 %v6080, %v6079
        %v6082 = vmul.f32 0.5, %v6081
        %v6083 = vsub.f32 1.5, %v6082
        %v6084 = vmul.f32 %v6079, %v6083
        %vm6085 = vweird.f32 %v6018
        %vm6086 = vweird.f32 %v6079
        %vm6087 = vmor %vm6085, %vm6086
        %v6088 = vsel %vm6087, %v6079, %v6084
        %v6089 = vrsqrt.pop %v6019
        %v6090 = vmul.f32 %v6089, %v6019
        %v6091 = vmul.f32 %v6090, %v6089
        %v6092 = vmul.f32 0.5, %v6091
        %v6093 = vsub.f32 1.5, %v6092
        %v6094 = vmul.f32 %v6089, %v6093
        %vm6095 = vweird.f32 %v6019
        %vm6096 = vweird.f32 %v6089
        %vm6097 = vmor %vm6095, %vm6096
        %v6098 = vsel %vm6097, %v6089, %v6094
        %v6099 = vrsqrt.pop %v6020
        %v6100 = vmul.f32 %v6099, %v6020
        %v6101 = vmul.f32 %v6100, %v6099
        %v6102 = vmul.f32 0.5, %v6101
        %v6103 = vsub.f32 1.5, %v6102
        %v6104 = vmul.f32 %v6099, %v6103
        %vm6105 = vweird.f32 %v6020
        %vm6106 = vweird.f32 %v6099
        %vm6107 = vmor %vm6105, %vm6106
        %v6108 = vsel %vm6107, %v6099, %v6104
        %v6109 = vrsqrt.pop %v6021
        %v6110 = vmul.f32 %v6109, %v6021
        %v6111 = vmul.f32 %v6110, %v6109
        %v6112 = vmul.f32 0.5, %v6111
        %v6113 = vsub.f32 1.5, %v6112
        %v6114 = vmul.f32 %v6109, %v6113
        %vm6115 = vweird.f32 %v6021
        %vm6116 = vweird.f32 %v6109
        %vm6117 = vmor %vm6115, %vm6116
        %v6118 = vsel %vm6117, %v6109, %v6114
        %v6119 = vrsqrt.pop %v6022
        %v6120 = vmul.f32 %v6119, %v6022
        %v6121 = vmul.f32 %v6120, %v6119
        %v6122 = vmul.f32 0.5, %v6121
        %v6123 = vsub.f32 1.5, %v6122
        %v6124 = vmul.f32 %v6119, %v6123
        %vm6125 = vweird.f32 %v6022
        %vm6126 = vweird.f32 %v6119
        %vm6127 = vmor %vm6125, %vm6126
        %v6128 = vsel %vm6127, %v6119, %v6124
        %v6129 = vrsqrt.pop %v6023
        %v6130 = vmul.f32 %v6129, %v6023
        %v6131 = vmul.f32 %v6130, %v6129
        %v6132 = vmul.f32 0.5, %v6131
        %v6133 = vsub.f32 1.5, %v6132
        %v6134 = vmul.f32 %v6129, %v6133
        %vm6135 = vweird.f32 %v6023
        %vm6136 = vweird.f32 %v6129
        %vm6137 = vmor %vm6135, %vm6136
        %v6138 = vsel %vm6137, %v6129, %v6134
        %v6139 = vrsqrt.pop %v6024
        %v6140 = vmul.f32 %v6139, %v6024
        %v6141 = vmul.f32 %v6140, %v6139
        %v6142 = vmul.f32 0.5, %v6141
        %v6143 = vsub.f32 1.5, %v6142
        %v6144 = vmul.f32 %v6139, %v6143
        %vm6145 = vweird.f32 %v6024
        %vm6146 = vweird.f32 %v6139
        %vm6147 = vmor %vm6145, %vm6146
        %v6148 = vsel %vm6147, %v6139, %v6144
        %v6149 = vrsqrt.pop %v6025
        %v6150 = vmul.f32 %v6149, %v6025
        %v6151 = vmul.f32 %v6150, %v6149
        %v6152 = vmul.f32 0.5, %v6151
        %v6153 = vsub.f32 1.5, %v6152
        %v6154 = vmul.f32 %v6149, %v6153
        %vm6155 = vweird.f32 %v6025
        %vm6156 = vweird.f32 %v6149
        %vm6157 = vmor %vm6155, %vm6156
        %v6158 = vsel %vm6157, %v6149, %v6154
        %v6159 = vrsqrt.pop %v6026
        %v6160 = vmul.f32 %v6159, %v6026
        %v6161 = vmul.f32 %v6160, %v6159
        %v6162 = vmul.f32 0.5, %v6161
        %v6163 = vsub.f32 1.5, %v6162
        %v6164 = vmul.f32 %v6159, %v6163
        %vm6165 = vweird.f32 %v6026
        %vm6166 = vweird.f32 %v6159
        %vm6167 = vmor %vm6165, %vm6166
        %v6168 = vsel %vm6167, %v6159, %v6164
        %v6169 = vrsqrt.pop %v6027
        %v6170 = vmul.f32 %v6169, %v6027
        %v6171 = vmul.f32 %v6170, %v6169
        %v6172 = vmul.f32 0.5, %v6171
        %v6173 = vsub.f32 1.5, %v6172
        %v6174 = vmul.f32 %v6169, %v6173
        %vm6175 = vweird.f32 %v6027
        %vm6176 = vweird.f32 %v6169
        %vm6177 = vmor %vm6175, %vm6176
        %v6178 = vsel %vm6177, %v6169, %v6174
        %v6179 = vrsqrt.pop %v6028
        %v6180 = vmul.f32 %v6179, %v6028
        %v6181 = vmul.f32 %v6180, %v6179
        %v6182 = vmul.f32 0.5, %v6181
        %v6183 = vsub.f32 1.5, %v6182
        %v6184 = vmul.f32 %v6179, %v6183
        %vm6185 = vweird.f32 %v6028
        %vm6186 = vweird.f32 %v6179
        %vm6187 = vmor %vm6185, %vm6186
        %v6188 = vsel %vm6187, %v6179, %v6184
        %v6189 = vmul.f32 %v5917, %v6038
        %v6190 = vmul.f32 %v5918, %v6048
        %v6191 = vmul.f32 %v5919, %v6058
        %v6192 = vmul.f32 %v5920, %v6068
        %v6193 = vmul.f32 %v5921, %v6078
        %v6194 = vmul.f32 %v5922, %v6088
        %v6195 = vmul.f32 %v5923, %v6098
        %v6196 = vmul.f32 %v5924, %v6108
        %v6197 = vmul.f32 %v5925, %v6118
        %v6198 = vmul.f32 %v5926, %v6128
        %v6199 = vmul.f32 %v5927, %v6138
        %v6200 = vmul.f32 %v5928, %v6148
        %v6201 = vmul.f32 %v5929, %v6158
        %v6202 = vmul.f32 %v5930, %v6168
        %v6203 = vmul.f32 %v5931, %v6178
        %v6204 = vmul.f32 %v5932, %v6188
        %v6205 = vmul.f32 %v6189, %v2706
        %v6206 = vmul.f32 %v6190, %v2706
        %v6207 = vmul.f32 %v6191, %v2706
        %v6208 = vmul.f32 %v6192, %v2706
        %v6209 = vmul.f32 %v6193, %v2706
        %v6210 = vmul.f32 %v6194, %v2706
        %v6211 = vmul.f32 %v6195, %v2706
        %v6212 = vmul.f32 %v6196, %v2706
        %v6213 = vmul.f32 %v6197, %v2706
        %v6214 = vmul.f32 %v6198, %v2706
        %v6215 = vmul.f32 %v6199, %v2706
        %v6216 = vmul.f32 %v6200, %v2706
        %v6217 = vmul.f32 %v6201, %v2706
        %v6218 = vmul.f32 %v6202, %v2706
        %v6219 = vmul.f32 %v6203, %v2706
        %v6220 = vmul.f32 %v6204, %v2706
        %v6221 = vadd.f32 %v6205, %v2725
        %v6222 = vadd.f32 %v6206, %v2725
        %v6223 = vadd.f32 %v6207, %v2725
        %v6224 = vadd.f32 %v6208, %v2725
        %v6225 = vadd.f32 %v6209, %v2725
        %v6226 = vadd.f32 %v6210, %v2725
        %v6227 = vadd.f32 %v6211, %v2725
        %v6228 = vadd.f32 %v6212, %v2725
        %v6229 = vadd.f32 %v6213, %v2725
        %v6230 = vadd.f32 %v6214, %v2725
        %v6231 = vadd.f32 %v6215, %v2725
        %v6232 = vadd.f32 %v6216, %v2725
        %v6233 = vadd.f32 %v6217, %v2725
        %v6234 = vadd.f32 %v6218, %v2725
        %v6235 = vadd.f32 %v6219, %v2725
        %v6236 = vadd.f32 %v6220, %v2725
        %v6237 = vsel %vm2345, %v5234, 0.0
        %6238 = vadd.xlane.f32.xlu0 %v6237
        %v6239 = vpop.xlane.xlu0 %6238
        %v6240 = vsel %vm2345, %v5346, 0.0
        %6241 = vadd.xlane.f32.xlu0 %v6240
        %v6242 = vpop.xlane.xlu0 %6241
        %v6243 = vsel %vm2345, %v5236, 0.0
        %6244 = vadd.xlane.f32.xlu0 %v6243
        %v6245 = vpop.xlane.xlu0 %6244
        %v6246 = vsel %vm2345, %v5348, 0.0
        %6247 = vadd.xlane.f32.xlu0 %v6246
        %v6248 = vpop.xlane.xlu0 %6247
        %v6249 = vsel %vm2345, %v5238, 0.0
        %6250 = vadd.xlane.f32.xlu0 %v6249
        %v6251 = vpop.xlane.xlu0 %6250
        %v6252 = vsel %vm2345, %v5350, 0.0
        %6253 = vadd.xlane.f32.xlu0 %v6252
        %v6254 = vpop.xlane.xlu0 %6253
        %v6255 = vsel %vm2345, %v5240, 0.0
        %6256 = vadd.xlane.f32.xlu0 %v6255
        %v6257 = vpop.xlane.xlu0 %6256
        %v6258 = vsel %vm2345, %v5352, 0.0
        %6259 = vadd.xlane.f32.xlu0 %v6258
        %v6260 = vpop.xlane.xlu0 %6259
        %v6261 = vsel %vm2345, %v5242, 0.0
        %6262 = vadd.xlane.f32.xlu0 %v6261
        %v6263 = vpop.xlane.xlu0 %6262
        %v6264 = vsel %vm2345, %v5354, 0.0
        %6265 = vadd.xlane.f32.xlu0 %v6264
        %v6266 = vpop.xlane.xlu0 %6265
        %v6267 = vsel %vm2345, %v5244, 0.0
        %6268 = vadd.xlane.f32.xlu0 %v6267
        %v6269 = vpop.xlane.xlu0 %6268
        %v6270 = vsel %vm2345, %v5356, 0.0
        %6271 = vadd.xlane.f32.xlu0 %v6270
        %v6272 = vpop.xlane.xlu0 %6271
        %v6273 = vsel %vm2345, %v5246, 0.0
        %6274 = vadd.xlane.f32.xlu0 %v6273
        %v6275 = vpop.xlane.xlu0 %6274
        %v6276 = vsel %vm2345, %v5358, 0.0
        %6277 = vadd.xlane.f32.xlu0 %v6276
        %v6278 = vpop.xlane.xlu0 %6277
        %v6279 = vsel %vm2345, %v5248, 0.0
        %6280 = vadd.xlane.f32.xlu0 %v6279
        %v6281 = vpop.xlane.xlu0 %6280
        %v6282 = vsel %vm2345, %v5360, 0.0
        %6283 = vadd.xlane.f32.xlu0 %v6282
        %v6284 = vpop.xlane.xlu0 %6283
        %v6285 = vmul.f32 %v6239, %v2400
        %v6286 = vmul.f32 %v6242, %v2400
        %v6287 = vmul.f32 %v6245, %v2400
        %v6288 = vmul.f32 %v6248, %v2400
        %v6289 = vmul.f32 %v6251, %v2400
        %v6290 = vmul.f32 %v6254, %v2400
        %v6291 = vmul.f32 %v6257, %v2400
        %v6292 = vmul.f32 %v6260, %v2400
        %v6293 = vmul.f32 %v6263, %v2400
        %v6294 = vmul.f32 %v6266, %v2400
        %v6295 = vmul.f32 %v6269, %v2400
        %v6296 = vmul.f32 %v6272, %v2400
        %v6297 = vmul.f32 %v6275, %v2400
        %v6298 = vmul.f32 %v6278, %v2400
        %v6299 = vmul.f32 %v6281, %v2400
        %v6300 = vmul.f32 %v6284, %v2400
        %v6301 = vsub.f32 %v5234, %v6285
        %v6302 = vsub.f32 %v5346, %v6286
        %v6303 = vsub.f32 %v5236, %v6287
        %v6304 = vsub.f32 %v5348, %v6288
        %v6305 = vsub.f32 %v5238, %v6289
        %v6306 = vsub.f32 %v5350, %v6290
        %v6307 = vsub.f32 %v5240, %v6291
        %v6308 = vsub.f32 %v5352, %v6292
        %v6309 = vsub.f32 %v5242, %v6293
        %v6310 = vsub.f32 %v5354, %v6294
        %v6311 = vsub.f32 %v5244, %v6295
        %v6312 = vsub.f32 %v5356, %v6296
        %v6313 = vsub.f32 %v5246, %v6297
        %v6314 = vsub.f32 %v5358, %v6298
        %v6315 = vsub.f32 %v5248, %v6299
        %v6316 = vsub.f32 %v5360, %v6300
        %v6317 = vmul.f32 %v6301, %v6301
        %v6318 = vmul.f32 %v6302, %v6302
        %v6319 = vmul.f32 %v6303, %v6303
        %v6320 = vmul.f32 %v6304, %v6304
        %v6321 = vmul.f32 %v6305, %v6305
        %v6322 = vmul.f32 %v6306, %v6306
        %v6323 = vmul.f32 %v6307, %v6307
        %v6324 = vmul.f32 %v6308, %v6308
        %v6325 = vmul.f32 %v6309, %v6309
        %v6326 = vmul.f32 %v6310, %v6310
        %v6327 = vmul.f32 %v6311, %v6311
        %v6328 = vmul.f32 %v6312, %v6312
        %v6329 = vmul.f32 %v6313, %v6313
        %v6330 = vmul.f32 %v6314, %v6314
        %v6331 = vmul.f32 %v6315, %v6315
        %v6332 = vmul.f32 %v6316, %v6316
        %v6333 = vsel %vm2345, %v6317, 0.0
        %6334 = vadd.xlane.f32.xlu0 %v6333
        %v6335 = vpop.xlane.xlu0 %6334
        %v6336 = vsel %vm2345, %v6318, 0.0
        %6337 = vadd.xlane.f32.xlu0 %v6336
        %v6338 = vpop.xlane.xlu0 %6337
        %v6339 = vsel %vm2345, %v6319, 0.0
        %6340 = vadd.xlane.f32.xlu0 %v6339
        %v6341 = vpop.xlane.xlu0 %6340
        %v6342 = vsel %vm2345, %v6320, 0.0
        %6343 = vadd.xlane.f32.xlu0 %v6342
        %v6344 = vpop.xlane.xlu0 %6343
        %v6345 = vsel %vm2345, %v6321, 0.0
        %6346 = vadd.xlane.f32.xlu0 %v6345
        %v6347 = vpop.xlane.xlu0 %6346
        %v6348 = vsel %vm2345, %v6322, 0.0
        %6349 = vadd.xlane.f32.xlu0 %v6348
        %v6350 = vpop.xlane.xlu0 %6349
        %v6351 = vsel %vm2345, %v6323, 0.0
        %6352 = vadd.xlane.f32.xlu0 %v6351
        %v6353 = vpop.xlane.xlu0 %6352
        %v6354 = vsel %vm2345, %v6324, 0.0
        %6355 = vadd.xlane.f32.xlu0 %v6354
        %v6356 = vpop.xlane.xlu0 %6355
        %v6357 = vsel %vm2345, %v6325, 0.0
        %6358 = vadd.xlane.f32.xlu0 %v6357
        %v6359 = vpop.xlane.xlu0 %6358
        %v6360 = vsel %vm2345, %v6326, 0.0
        %6361 = vadd.xlane.f32.xlu0 %v6360
        %v6362 = vpop.xlane.xlu0 %6361
        %v6363 = vsel %vm2345, %v6327, 0.0
        %6364 = vadd.xlane.f32.xlu0 %v6363
        %v6365 = vpop.xlane.xlu0 %6364
        %v6366 = vsel %vm2345, %v6328, 0.0
        %6367 = vadd.xlane.f32.xlu0 %v6366
        %v6368 = vpop.xlane.xlu0 %6367
        %v6369 = vsel %vm2345, %v6329, 0.0
        %6370 = vadd.xlane.f32.xlu0 %v6369
        %v6371 = vpop.xlane.xlu0 %6370
        %v6372 = vsel %vm2345, %v6330, 0.0
        %6373 = vadd.xlane.f32.xlu0 %v6372
        %v6374 = vpop.xlane.xlu0 %6373
        %v6375 = vsel %vm2345, %v6331, 0.0
        %6376 = vadd.xlane.f32.xlu0 %v6375
        %v6377 = vpop.xlane.xlu0 %6376
        %v6378 = vsel %vm2345, %v6332, 0.0
        %6379 = vadd.xlane.f32.xlu0 %v6378
        %v6380 = vpop.xlane.xlu0 %6379
        %v6381 = vmul.f32 %v6335, %v2400
        %v6382 = vmul.f32 %v6338, %v2400
        %v6383 = vmul.f32 %v6341, %v2400
        %v6384 = vmul.f32 %v6344, %v2400
        %v6385 = vmul.f32 %v6347, %v2400
        %v6386 = vmul.f32 %v6350, %v2400
        %v6387 = vmul.f32 %v6353, %v2400
        %v6388 = vmul.f32 %v6356, %v2400
        %v6389 = vmul.f32 %v6359, %v2400
        %v6390 = vmul.f32 %v6362, %v2400
        %v6391 = vmul.f32 %v6365, %v2400
        %v6392 = vmul.f32 %v6368, %v2400
        %v6393 = vmul.f32 %v6371, %v2400
        %v6394 = vmul.f32 %v6374, %v2400
        %v6395 = vmul.f32 %v6377, %v2400
        %v6396 = vmul.f32 %v6380, %v2400
        %v6397 = vadd.f32 %v6381, 1e-05
        %v6398 = vadd.f32 %v6382, 1e-05
        %v6399 = vadd.f32 %v6383, 1e-05
        %v6400 = vadd.f32 %v6384, 1e-05
        %v6401 = vadd.f32 %v6385, 1e-05
        %v6402 = vadd.f32 %v6386, 1e-05
        %v6403 = vadd.f32 %v6387, 1e-05
        %v6404 = vadd.f32 %v6388, 1e-05
        %v6405 = vadd.f32 %v6389, 1e-05
        %v6406 = vadd.f32 %v6390, 1e-05
        %v6407 = vadd.f32 %v6391, 1e-05
        %v6408 = vadd.f32 %v6392, 1e-05
        %v6409 = vadd.f32 %v6393, 1e-05
        %v6410 = vadd.f32 %v6394, 1e-05
        %v6411 = vadd.f32 %v6395, 1e-05
        %v6412 = vadd.f32 %v6396, 1e-05
        %v6413 = vrsqrt.pop %v6397
        %v6414 = vmul.f32 %v6413, %v6397
        %v6415 = vmul.f32 %v6414, %v6413
        %v6416 = vmul.f32 0.5, %v6415
        %v6417 = vsub.f32 1.5, %v6416
        %v6418 = vmul.f32 %v6413, %v6417
        %vm6419 = vweird.f32 %v6397
        %vm6420 = vweird.f32 %v6413
        %vm6421 = vmor %vm6419, %vm6420
        %v6422 = vsel %vm6421, %v6413, %v6418
        %v6423 = vrsqrt.pop %v6398
        %v6424 = vmul.f32 %v6423, %v6398
        %v6425 = vmul.f32 %v6424, %v6423
        %v6426 = vmul.f32 0.5, %v6425
        %v6427 = vsub.f32 1.5, %v6426
        %v6428 = vmul.f32 %v6423, %v6427
        %vm6429 = vweird.f32 %v6398
        %vm6430 = vweird.f32 %v6423
        %vm6431 = vmor %vm6429, %vm6430
        %v6432 = vsel %vm6431, %v6423, %v6428
        %v6433 = vrsqrt.pop %v6399
        %v6434 = vmul.f32 %v6433, %v6399
        %v6435 = vmul.f32 %v6434, %v6433
        %v6436 = vmul.f32 0.5, %v6435
        %v6437 = vsub.f32 1.5, %v6436
        %v6438 = vmul.f32 %v6433, %v6437
        %vm6439 = vweird.f32 %v6399
        %vm6440 = vweird.f32 %v6433
        %vm6441 = vmor %vm6439, %vm6440
        %v6442 = vsel %vm6441, %v6433, %v6438
        %v6443 = vrsqrt.pop %v6400
        %v6444 = vmul.f32 %v6443, %v6400
        %v6445 = vmul.f32 %v6444, %v6443
        %v6446 = vmul.f32 0.5, %v6445
        %v6447 = vsub.f32 1.5, %v6446
        %v6448 = vmul.f32 %v6443, %v6447
        %vm6449 = vweird.f32 %v6400
        %vm6450 = vweird.f32 %v6443
        %vm6451 = vmor %vm6449, %vm6450
        %v6452 = vsel %vm6451, %v6443, %v6448
        %v6453 = vrsqrt.pop %v6401
        %v6454 = vmul.f32 %v6453, %v6401
        %v6455 = vmul.f32 %v6454, %v6453
        %v6456 = vmul.f32 0.5, %v6455
        %v6457 = vsub.f32 1.5, %v6456
        %v6458 = vmul.f32 %v6453, %v6457
        %vm6459 = vweird.f32 %v6401
        %vm6460 = vweird.f32 %v6453
        %vm6461 = vmor %vm6459, %vm6460
        %v6462 = vsel %vm6461, %v6453, %v6458
        %v6463 = vrsqrt.pop %v6402
        %v6464 = vmul.f32 %v6463, %v6402
        %v6465 = vmul.f32 %v6464, %v6463
        %v6466 = vmul.f32 0.5, %v6465
        %v6467 = vsub.f32 1.5, %v6466
        %v6468 = vmul.f32 %v6463, %v6467
        %vm6469 = vweird.f32 %v6402
        %vm6470 = vweird.f32 %v6463
        %vm6471 = vmor %vm6469, %vm6470
        %v6472 = vsel %vm6471, %v6463, %v6468
        %v6473 = vrsqrt.pop %v6403
        %v6474 = vmul.f32 %v6473, %v6403
        %v6475 = vmul.f32 %v6474, %v6473
        %v6476 = vmul.f32 0.5, %v6475
        %v6477 = vsub.f32 1.5, %v6476
        %v6478 = vmul.f32 %v6473, %v6477
        %vm6479 = vweird.f32 %v6403
        %vm6480 = vweird.f32 %v6473
        %vm6481 = vmor %vm6479, %vm6480
        %v6482 = vsel %vm6481, %v6473, %v6478
        %v6483 = vrsqrt.pop %v6404
        %v6484 = vmul.f32 %v6483, %v6404
        %v6485 = vmul.f32 %v6484, %v6483
        %v6486 = vmul.f32 0.5, %v6485
        %v6487 = vsub.f32 1.5, %v6486
        %v6488 = vmul.f32 %v6483, %v6487
        %vm6489 = vweird.f32 %v6404
        %vm6490 = vweird.f32 %v6483
        %vm6491 = vmor %vm6489, %vm6490
        %v6492 = vsel %vm6491, %v6483, %v6488
        %v6493 = vrsqrt.pop %v6405
        %v6494 = vmul.f32 %v6493, %v6405
        %v6495 = vmul.f32 %v6494, %v6493
        %v6496 = vmul.f32 0.5, %v6495
        %v6497 = vsub.f32 1.5, %v6496
        %v6498 = vmul.f32 %v6493, %v6497
        %vm6499 = vweird.f32 %v6405
        %vm6500 = vweird.f32 %v6493
        %vm6501 = vmor %vm6499, %vm6500
        %v6502 = vsel %vm6501, %v6493, %v6498
        %v6503 = vrsqrt.pop %v6406
        %v6504 = vmul.f32 %v6503, %v6406
        %v6505 = vmul.f32 %v6504, %v6503
        %v6506 = vmul.f32 0.5, %v6505
        %v6507 = vsub.f32 1.5, %v6506
        %v6508 = vmul.f32 %v6503, %v6507
        %vm6509 = vweird.f32 %v6406
        %vm6510 = vweird.f32 %v6503
        %vm6511 = vmor %vm6509, %vm6510
        %v6512 = vsel %vm6511, %v6503, %v6508
        %v6513 = vrsqrt.pop %v6407
        %v6514 = vmul.f32 %v6513, %v6407
        %v6515 = vmul.f32 %v6514, %v6513
        %v6516 = vmul.f32 0.5, %v6515
        %v6517 = vsub.f32 1.5, %v6516
        %v6518 = vmul.f32 %v6513, %v6517
        %vm6519 = vweird.f32 %v6407
        %vm6520 = vweird.f32 %v6513
        %vm6521 = vmor %vm6519, %vm6520
        %v6522 = vsel %vm6521, %v6513, %v6518
        %v6523 = vrsqrt.pop %v6408
        %v6524 = vmul.f32 %v6523, %v6408
        %v6525 = vmul.f32 %v6524, %v6523
        %v6526 = vmul.f32 0.5, %v6525
        %v6527 = vsub.f32 1.5, %v6526
        %v6528 = vmul.f32 %v6523, %v6527
        %vm6529 = vweird.f32 %v6408
        %vm6530 = vweird.f32 %v6523
        %vm6531 = vmor %vm6529, %vm6530
        %v6532 = vsel %vm6531, %v6523, %v6528
        %v6533 = vrsqrt.pop %v6409
        %v6534 = vmul.f32 %v6533, %v6409
        %v6535 = vmul.f32 %v6534, %v6533
        %v6536 = vmul.f32 0.5, %v6535
        %v6537 = vsub.f32 1.5, %v6536
        %v6538 = vmul.f32 %v6533, %v6537
        %vm6539 = vweird.f32 %v6409
        %vm6540 = vweird.f32 %v6533
        %vm6541 = vmor %vm6539, %vm6540
        %v6542 = vsel %vm6541, %v6533, %v6538
        %v6543 = vrsqrt.pop %v6410
        %v6544 = vmul.f32 %v6543, %v6410
        %v6545 = vmul.f32 %v6544, %v6543
        %v6546 = vmul.f32 0.5, %v6545
        %v6547 = vsub.f32 1.5, %v6546
        %v6548 = vmul.f32 %v6543, %v6547
        %vm6549 = vweird.f32 %v6410
        %vm6550 = vweird.f32 %v6543
        %vm6551 = vmor %vm6549, %vm6550
        %v6552 = vsel %vm6551, %v6543, %v6548
        %v6553 = vrsqrt.pop %v6411
        %v6554 = vmul.f32 %v6553, %v6411
        %v6555 = vmul.f32 %v6554, %v6553
        %v6556 = vmul.f32 0.5, %v6555
        %v6557 = vsub.f32 1.5, %v6556
        %v6558 = vmul.f32 %v6553, %v6557
        %vm6559 = vweird.f32 %v6411
        %vm6560 = vweird.f32 %v6553
        %vm6561 = vmor %vm6559, %vm6560
        %v6562 = vsel %vm6561, %v6553, %v6558
        %v6563 = vrsqrt.pop %v6412
        %v6564 = vmul.f32 %v6563, %v6412
        %v6565 = vmul.f32 %v6564, %v6563
        %v6566 = vmul.f32 0.5, %v6565
        %v6567 = vsub.f32 1.5, %v6566
        %v6568 = vmul.f32 %v6563, %v6567
        %vm6569 = vweird.f32 %v6412
        %vm6570 = vweird.f32 %v6563
        %vm6571 = vmor %vm6569, %vm6570
        %v6572 = vsel %vm6571, %v6563, %v6568
        %v6573 = vmul.f32 %v6301, %v6422
        %v6574 = vmul.f32 %v6302, %v6432
        %v6575 = vmul.f32 %v6303, %v6442
        %v6576 = vmul.f32 %v6304, %v6452
        %v6577 = vmul.f32 %v6305, %v6462
        %v6578 = vmul.f32 %v6306, %v6472
        %v6579 = vmul.f32 %v6307, %v6482
        %v6580 = vmul.f32 %v6308, %v6492
        %v6581 = vmul.f32 %v6309, %v6502
        %v6582 = vmul.f32 %v6310, %v6512
        %v6583 = vmul.f32 %v6311, %v6522
        %v6584 = vmul.f32 %v6312, %v6532
        %v6585 = vmul.f32 %v6313, %v6542
        %v6586 = vmul.f32 %v6314, %v6552
        %v6587 = vmul.f32 %v6315, %v6562
        %v6588 = vmul.f32 %v6316, %v6572
        %v6589 = vmul.f32 %v6573, %v3096
        %v6590 = vmul.f32 %v6574, %v3096
        %v6591 = vmul.f32 %v6575, %v3096
        %v6592 = vmul.f32 %v6576, %v3096
        %v6593 = vmul.f32 %v6577, %v3096
        %v6594 = vmul.f32 %v6578, %v3096
        %v6595 = vmul.f32 %v6579, %v3096
        %v6596 = vmul.f32 %v6580, %v3096
        %v6597 = vmul.f32 %v6581, %v3096
        %v6598 = vmul.f32 %v6582, %v3096
        %v6599 = vmul.f32 %v6583, %v3096
        %v6600 = vmul.f32 %v6584, %v3096
        %v6601 = vmul.f32 %v6585, %v3096
        %v6602 = vmul.f32 %v6586, %v3096
        %v6603 = vmul.f32 %v6587, %v3096
        %v6604 = vmul.f32 %v6588, %v3096
        %v6605 = vadd.f32 %v6589, %v3115
        %v6606 = vadd.f32 %v6590, %v3115
        %v6607 = vadd.f32 %v6591, %v3115
        %v6608 = vadd.f32 %v6592, %v3115
        %v6609 = vadd.f32 %v6593, %v3115
        %v6610 = vadd.f32 %v6594, %v3115
        %v6611 = vadd.f32 %v6595, %v3115
        %v6612 = vadd.f32 %v6596, %v3115
        %v6613 = vadd.f32 %v6597, %v3115
        %v6614 = vadd.f32 %v6598, %v3115
        %v6615 = vadd.f32 %v6599, %v3115
        %v6616 = vadd.f32 %v6600, %v3115
        %v6617 = vadd.f32 %v6601, %v3115
        %v6618 = vadd.f32 %v6602, %v3115
        %v6619 = vadd.f32 %v6603, %v3115
        %v6620 = vadd.f32 %v6604, %v3115
        %v6621 = vpack.c.bf16 %v6221, %v6221
        %v6622 = vpack.c.bf16 %v6222, %v6222
        %v6623 = vpack.c.bf16 %v6223, %v6223
        %v6624 = vpack.c.bf16 %v6224, %v6224
        %v6625 = vpack.c.bf16 %v6225, %v6225
        %v6626 = vpack.c.bf16 %v6226, %v6226
        %v6627 = vpack.c.bf16 %v6227, %v6227
        %v6628 = vpack.c.bf16 %v6228, %v6228
        %v6629 = vpack.c.bf16 %v6229, %v6229
        %v6630 = vpack.c.bf16 %v6230, %v6230
        %v6631 = vpack.c.bf16 %v6231, %v6231
        %v6632 = vpack.c.bf16 %v6232, %v6232
        %v6633 = vpack.c.bf16 %v6233, %v6233
        %v6634 = vpack.c.bf16 %v6234, %v6234
        %v6635 = vpack.c.bf16 %v6235, %v6235
        %v6636 = vpack.c.bf16 %v6236, %v6236
        %v6637 = vpack.c.bf16 %v6605, %v6605
        %v6638 = vpack.c.bf16 %v6606, %v6606
        %v6639 = vpack.c.bf16 %v6607, %v6607
        %v6640 = vpack.c.bf16 %v6608, %v6608
        %v6641 = vpack.c.bf16 %v6609, %v6609
        %v6642 = vpack.c.bf16 %v6610, %v6610
        %v6643 = vpack.c.bf16 %v6611, %v6611
        %v6644 = vpack.c.bf16 %v6612, %v6612
        %v6645 = vpack.c.bf16 %v6613, %v6613
        %v6646 = vpack.c.bf16 %v6614, %v6614
        %v6647 = vpack.c.bf16 %v6615, %v6615
        %v6648 = vpack.c.bf16 %v6616, %v6616
        %v6649 = vpack.c.bf16 %v6617, %v6617
        %v6650 = vpack.c.bf16 %v6618, %v6618
        %v6651 = vpack.c.bf16 %v6619, %v6619
        %v6652 = vpack.c.bf16 %v6620, %v6620
        %v6655 = vunpack.c.l.b16 %v6621
        %v6656 = vunpack.c.l.b16 %v6622
        %v6657 = vpack.c.b16 %v6656, %v6655
        %v6660 = vunpack.c.l.b16 %v6637
        %v6661 = vunpack.c.l.b16 %v6638
        %v6662 = vpack.c.b16 %v6661, %v6660
        %v6664 = vsel %vm2345, %v6657, 0
        %v6667 = vsel %vm2345, %v6662, 0
        %6669 = vmatpush.bf16.xpose.msra.mxu0 0
        %6670 = vmatpush.bf16.xpose.msra.mxu0 0
        %6671 = vmatpush.bf16.xpose.msra.mxu0 0
        %6672 = vmatpush.bf16.xpose.msra.mxu0 0
        %6673 = vmatpush.bf16.xpose.msra.mxu0 0
        %6674 = vmatpush.bf16.xpose.msra.mxu0 0
        %6675 = vmatpush.bf16.xpose.msra.mxu0 0
        %6676 = vmatpush.bf16.xpose.msra.mxu0 %v6667
        %6677 = vmatmul.bf16.gmra.mxu0 %v6664
        %v6678 = vpop.f32.mrf.mxu0
        %v6679 = vadd.f32 0.0, %v6678
        %v6680 = vpop.f32.mrf.mxu0
        %v6681 = vadd.f32 0.0, %v6680
        %6682 = vdwg.mxu0
        %v6685 = vunpack.c.l.b16 %v6623
        %v6686 = vunpack.c.l.b16 %v6624
        %v6687 = vpack.c.b16 %v6686, %v6685
        %v6690 = vunpack.c.l.b16 %v6639
        %v6691 = vunpack.c.l.b16 %v6640
        %v6692 = vpack.c.b16 %v6691, %v6690
        %v6694 = vsel %vm2345, %v6687, 0
        %v6697 = vsel %vm2345, %v6692, 0
        %6699 = vmatpush.bf16.xpose.msra.mxu0 0
        %6700 = vmatpush.bf16.xpose.msra.mxu0 0
        %6701 = vmatpush.bf16.xpose.msra.mxu0 0
        %6702 = vmatpush.bf16.xpose.msra.mxu0 0
        %6703 = vmatpush.bf16.xpose.msra.mxu0 0
        %6704 = vmatpush.bf16.xpose.msra.mxu0 0
        %6705 = vmatpush.bf16.xpose.msra.mxu0 0
        %6706 = vmatpush.bf16.xpose.msra.mxu0 %v6697
        %6707 = vmatmul.bf16.gmra.mxu0 %v6694
        %v6708 = vpop.f32.mrf.mxu0
        %v6709 = vadd.f32 0.0, %v6708
        %v6710 = vpop.f32.mrf.mxu0
        %v6711 = vadd.f32 0.0, %v6710
        %6712 = vdwg.mxu0
        %v6715 = vunpack.c.l.b16 %v6625
        %v6716 = vunpack.c.l.b16 %v6626
        %v6717 = vpack.c.b16 %v6716, %v6715
        %v6720 = vunpack.c.l.b16 %v6641
        %v6721 = vunpack.c.l.b16 %v6642
        %v6722 = vpack.c.b16 %v6721, %v6720
        %v6724 = vsel %vm2345, %v6717, 0
        %v6727 = vsel %vm2345, %v6722, 0
        %6729 = vmatpush.bf16.xpose.msra.mxu0 0
        %6730 = vmatpush.bf16.xpose.msra.mxu0 0
        %6731 = vmatpush.bf16.xpose.msra.mxu0 0
        %6732 = vmatpush.bf16.xpose.msra.mxu0 0
        %6733 = vmatpush.bf16.xpose.msra.mxu0 0
        %6734 = vmatpush.bf16.xpose.msra.mxu0 0
        %6735 = vmatpush.bf16.xpose.msra.mxu0 0
        %6736 = vmatpush.bf16.xpose.msra.mxu0 %v6727
        %6737 = vmatmul.bf16.gmra.mxu0 %v6724
        %v6738 = vpop.f32.mrf.mxu0
        %v6739 = vadd.f32 0.0, %v6738
        %v6740 = vpop.f32.mrf.mxu0
        %v6741 = vadd.f32 0.0, %v6740
        %6742 = vdwg.mxu0
        %v6745 = vunpack.c.l.b16 %v6627
        %v6746 = vunpack.c.l.b16 %v6628
        %v6747 = vpack.c.b16 %v6746, %v6745
        %v6750 = vunpack.c.l.b16 %v6643
        %v6751 = vunpack.c.l.b16 %v6644
        %v6752 = vpack.c.b16 %v6751, %v6750
        %v6754 = vsel %vm2345, %v6747, 0
        %v6757 = vsel %vm2345, %v6752, 0
        %6759 = vmatpush.bf16.xpose.msra.mxu0 0
        %6760 = vmatpush.bf16.xpose.msra.mxu0 0
        %6761 = vmatpush.bf16.xpose.msra.mxu0 0
        %6762 = vmatpush.bf16.xpose.msra.mxu0 0
        %6763 = vmatpush.bf16.xpose.msra.mxu0 0
        %6764 = vmatpush.bf16.xpose.msra.mxu0 0
        %6765 = vmatpush.bf16.xpose.msra.mxu0 0
        %6766 = vmatpush.bf16.xpose.msra.mxu0 %v6757
        %6767 = vmatmul.bf16.gmra.mxu0 %v6754
        %v6768 = vpop.f32.mrf.mxu0
        %v6769 = vadd.f32 0.0, %v6768
        %v6770 = vpop.f32.mrf.mxu0
        %v6771 = vadd.f32 0.0, %v6770
        %6772 = vdwg.mxu0
        %v6775 = vunpack.c.l.b16 %v6629
        %v6776 = vunpack.c.l.b16 %v6630
        %v6777 = vpack.c.b16 %v6776, %v6775
        %v6780 = vunpack.c.l.b16 %v6645
        %v6781 = vunpack.c.l.b16 %v6646
        %v6782 = vpack.c.b16 %v6781, %v6780
        %v6784 = vsel %vm2345, %v6777, 0
        %v6787 = vsel %vm2345, %v6782, 0
        %6789 = vmatpush.bf16.xpose.msra.mxu0 0
        %6790 = vmatpush.bf16.xpose.msra.mxu0 0
        %6791 = vmatpush.bf16.xpose.msra.mxu0 0
        %6792 = vmatpush.bf16.xpose.msra.mxu0 0
        %6793 = vmatpush.bf16.xpose.msra.mxu0 0
        %6794 = vmatpush.bf16.xpose.msra.mxu0 0
        %6795 = vmatpush.bf16.xpose.msra.mxu0 0
        %6796 = vmatpush.bf16.xpose.msra.mxu0 %v6787
        %6797 = vmatmul.bf16.gmra.mxu0 %v6784
        %v6798 = vpop.f32.mrf.mxu0
        %v6799 = vadd.f32 0.0, %v6798
        %v6800 = vpop.f32.mrf.mxu0
        %v6801 = vadd.f32 0.0, %v6800
        %6802 = vdwg.mxu0
        %v6805 = vunpack.c.l.b16 %v6631
        %v6806 = vunpack.c.l.b16 %v6632
        %v6807 = vpack.c.b16 %v6806, %v6805
        %v6810 = vunpack.c.l.b16 %v6647
        %v6811 = vunpack.c.l.b16 %v6648
        %v6812 = vpack.c.b16 %v6811, %v6810
        %v6814 = vsel %vm2345, %v6807, 0
        %v6817 = vsel %vm2345, %v6812, 0
        %6819 = vmatpush.bf16.xpose.msra.mxu0 0
        %6820 = vmatpush.bf16.xpose.msra.mxu0 0
        %6821 = vmatpush.bf16.xpose.msra.mxu0 0
        %6822 = vmatpush.bf16.xpose.msra.mxu0 0
        %6823 = vmatpush.bf16.xpose.msra.mxu0 0
        %6824 = vmatpush.bf16.xpose.msra.mxu0 0
        %6825 = vmatpush.bf16.xpose.msra.mxu0 0
        %6826 = vmatpush.bf16.xpose.msra.mxu0 %v6817
        %6827 = vmatmul.bf16.gmra.mxu0 %v6814
        %v6828 = vpop.f32.mrf.mxu0
        %v6829 = vadd.f32 0.0, %v6828
        %v6830 = vpop.f32.mrf.mxu0
        %v6831 = vadd.f32 0.0, %v6830
        %6832 = vdwg.mxu0
        %v6835 = vunpack.c.l.b16 %v6633
        %v6836 = vunpack.c.l.b16 %v6634
        %v6837 = vpack.c.b16 %v6836, %v6835
        %v6840 = vunpack.c.l.b16 %v6649
        %v6841 = vunpack.c.l.b16 %v6650
        %v6842 = vpack.c.b16 %v6841, %v6840
        %v6844 = vsel %vm2345, %v6837, 0
        %v6847 = vsel %vm2345, %v6842, 0
        %6849 = vmatpush.bf16.xpose.msra.mxu0 0
        %6850 = vmatpush.bf16.xpose.msra.mxu0 0
        %6851 = vmatpush.bf16.xpose.msra.mxu0 0
        %6852 = vmatpush.bf16.xpose.msra.mxu0 0
        %6853 = vmatpush.bf16.xpose.msra.mxu0 0
        %6854 = vmatpush.bf16.xpose.msra.mxu0 0
        %6855 = vmatpush.bf16.xpose.msra.mxu0 0
        %6856 = vmatpush.bf16.xpose.msra.mxu0 %v6847
        %6857 = vmatmul.bf16.gmra.mxu0 %v6844
        %v6858 = vpop.f32.mrf.mxu0
        %v6859 = vadd.f32 0.0, %v6858
        %v6860 = vpop.f32.mrf.mxu0
        %v6861 = vadd.f32 0.0, %v6860
        %6862 = vdwg.mxu0
        %v6865 = vunpack.c.l.b16 %v6635
        %v6866 = vunpack.c.l.b16 %v6636
        %v6867 = vpack.c.b16 %v6866, %v6865
        %v6870 = vunpack.c.l.b16 %v6651
        %v6871 = vunpack.c.l.b16 %v6652
        %v6872 = vpack.c.b16 %v6871, %v6870
        %v6874 = vsel %vm2345, %v6867, 0
        %v6877 = vsel %vm2345, %v6872, 0
        %6879 = vmatpush.bf16.xpose.msra.mxu0 0
        %6880 = vmatpush.bf16.xpose.msra.mxu0 0
        %6881 = vmatpush.bf16.xpose.msra.mxu0 0
        %6882 = vmatpush.bf16.xpose.msra.mxu0 0
        %6883 = vmatpush.bf16.xpose.msra.mxu0 0
        %6884 = vmatpush.bf16.xpose.msra.mxu0 0
        %6885 = vmatpush.bf16.xpose.msra.mxu0 0
        %6886 = vmatpush.bf16.xpose.msra.mxu0 %v6877
        %6887 = vmatmul.bf16.gmra.mxu0 %v6874
        %v6888 = vpop.f32.mrf.mxu0
        %v6889 = vadd.f32 0.0, %v6888
        %v6890 = vpop.f32.mrf.mxu0
        %v6891 = vadd.f32 0.0, %v6890
        %6892 = vdwg.mxu0
        %v6893 = vmul.f32 %v6679, 0.25
        %v6894 = vmul.f32 %v6681, 0.25
        %v6895 = vmul.f32 %v6709, 0.25
        %v6896 = vmul.f32 %v6711, 0.25
        %v6897 = vmul.f32 %v6739, 0.25
        %v6898 = vmul.f32 %v6741, 0.25
        %v6899 = vmul.f32 %v6769, 0.25
        %v6900 = vmul.f32 %v6771, 0.25
        %v6901 = vmul.f32 %v6799, 0.25
        %v6902 = vmul.f32 %v6801, 0.25
        %v6903 = vmul.f32 %v6829, 0.25
        %v6904 = vmul.f32 %v6831, 0.25
        %v6905 = vmul.f32 %v6859, 0.25
        %v6906 = vmul.f32 %v6861, 0.25
        %v6907 = vmul.f32 %v6889, 0.25
        %v6908 = vmul.f32 %v6891, 0.25
        %v6909 = vsel %vm2345, %v6893, -inf
        %6910 = vmax.xlane.f32.xlu0 %v6909
        %v6911 = vpop.xlane.xlu0 %6910
        %v6912 = vsel %vm2345, %v6894, -inf
        %6913 = vmax.xlane.f32.xlu0 %v6912
        %v6914 = vpop.xlane.xlu0 %6913
        %v6915 = vsel %vm2345, %v6895, -inf
        %6916 = vmax.xlane.f32.xlu0 %v6915
        %v6917 = vpop.xlane.xlu0 %6916
        %v6918 = vsel %vm2345, %v6896, -inf
        %6919 = vmax.xlane.f32.xlu0 %v6918
        %v6920 = vpop.xlane.xlu0 %6919
        %v6921 = vsel %vm2345, %v6897, -inf
        %6922 = vmax.xlane.f32.xlu0 %v6921
        %v6923 = vpop.xlane.xlu0 %6922
        %v6924 = vsel %vm2345, %v6898, -inf
        %6925 = vmax.xlane.f32.xlu0 %v6924
        %v6926 = vpop.xlane.xlu0 %6925
        %v6927 = vsel %vm2345, %v6899, -inf
        %6928 = vmax.xlane.f32.xlu0 %v6927
        %v6929 = vpop.xlane.xlu0 %6928
        %v6930 = vsel %vm2345, %v6900, -inf
        %6931 = vmax.xlane.f32.xlu0 %v6930
        %v6932 = vpop.xlane.xlu0 %6931
        %v6933 = vsel %vm2345, %v6901, -inf
        %6934 = vmax.xlane.f32.xlu0 %v6933
        %v6935 = vpop.xlane.xlu0 %6934
        %v6936 = vsel %vm2345, %v6902, -inf
        %6937 = vmax.xlane.f32.xlu0 %v6936
        %v6938 = vpop.xlane.xlu0 %6937
        %v6939 = vsel %vm2345, %v6903, -inf
        %6940 = vmax.xlane.f32.xlu0 %v6939
        %v6941 = vpop.xlane.xlu0 %6940
        %v6942 = vsel %vm2345, %v6904, -inf
        %6943 = vmax.xlane.f32.xlu0 %v6942
        %v6944 = vpop.xlane.xlu0 %6943
        %v6945 = vsel %vm2345, %v6905, -inf
        %6946 = vmax.xlane.f32.xlu0 %v6945
        %v6947 = vpop.xlane.xlu0 %6946
        %v6948 = vsel %vm2345, %v6906, -inf
        %6949 = vmax.xlane.f32.xlu0 %v6948
        %v6950 = vpop.xlane.xlu0 %6949
        %v6951 = vsel %vm2345, %v6907, -inf
        %6952 = vmax.xlane.f32.xlu0 %v6951
        %v6953 = vpop.xlane.xlu0 %6952
        %v6954 = vsel %vm2345, %v6908, -inf
        %6955 = vmax.xlane.f32.xlu0 %v6954
        %v6956 = vpop.xlane.xlu0 %6955
        %v6957 = vsub.f32 %v6893, %v6911
        %v6958 = vsub.f32 %v6894, %v6914
        %v6959 = vsub.f32 %v6895, %v6917
        %v6960 = vsub.f32 %v6896, %v6920
        %v6961 = vsub.f32 %v6897, %v6923
        %v6962 = vsub.f32 %v6898, %v6926
        %v6963 = vsub.f32 %v6899, %v6929
        %v6964 = vsub.f32 %v6900, %v6932
        %v6965 = vsub.f32 %v6901, %v6935
        %v6966 = vsub.f32 %v6902, %v6938
        %v6967 = vsub.f32 %v6903, %v6941
        %v6968 = vsub.f32 %v6904, %v6944
        %v6969 = vsub.f32 %v6905, %v6947
        %v6970 = vsub.f32 %v6906, %v6950
        %v6971 = vsub.f32 %v6907, %v6953
        %v6972 = vsub.f32 %v6908, %v6956
        %v6973 = vmul.f32 %v6957, 1.442695
        %v6974 = vpow.pop %v6973
        %v6975 = vmul.f32 %v6958, 1.442695
        %v6976 = vpow.pop %v6975
        %v6977 = vmul.f32 %v6959, 1.442695
        %v6978 = vpow.pop %v6977
        %v6979 = vmul.f32 %v6960, 1.442695
        %v6980 = vpow.pop %v6979
        %v6981 = vmul.f32 %v6961, 1.442695
        %v6982 = vpow.pop %v6981
        %v6983 = vmul.f32 %v6962, 1.442695
        %v6984 = vpow.pop %v6983
        %v6985 = vmul.f32 %v6963, 1.442695
        %v6986 = vpow.pop %v6985
        %v6987 = vmul.f32 %v6964, 1.442695
        %v6988 = vpow.pop %v6987
        %v6989 = vmul.f32 %v6965, 1.442695
        %v6990 = vpow.pop %v6989
        %v6991 = vmul.f32 %v6966, 1.442695
        %v6992 = vpow.pop %v6991
        %v6993 = vmul.f32 %v6967, 1.442695
        %v6994 = vpow.pop %v6993
        %v6995 = vmul.f32 %v6968, 1.442695
        %v6996 = vpow.pop %v6995
        %v6997 = vmul.f32 %v6969, 1.442695
        %v6998 = vpow.pop %v6997
        %v6999 = vmul.f32 %v6970, 1.442695
        %v7000 = vpow.pop %v6999
        %v7001 = vmul.f32 %v6971, 1.442695
        %v7002 = vpow.pop %v7001
        %v7003 = vmul.f32 %v6972, 1.442695
        %v7004 = vpow.pop %v7003
        %v7005 = vsel %vm2345, %v6974, 0.0
        %7006 = vadd.xlane.f32.xlu0 %v7005
        %v7007 = vpop.xlane.xlu0 %7006
        %v7008 = vsel %vm2345, %v6976, 0.0
        %7009 = vadd.xlane.f32.xlu0 %v7008
        %v7010 = vpop.xlane.xlu0 %7009
        %v7011 = vsel %vm2345, %v6978, 0.0
        %7012 = vadd.xlane.f32.xlu0 %v7011
        %v7013 = vpop.xlane.xlu0 %7012
        %v7014 = vsel %vm2345, %v6980, 0.0
        %7015 = vadd.xlane.f32.xlu0 %v7014
        %v7016 = vpop.xlane.xlu0 %7015
        %v7017 = vsel %vm2345, %v6982, 0.0
        %7018 = vadd.xlane.f32.xlu0 %v7017
        %v7019 = vpop.xlane.xlu0 %7018
        %v7020 = vsel %vm2345, %v6984, 0.0
        %7021 = vadd.xlane.f32.xlu0 %v7020
        %v7022 = vpop.xlane.xlu0 %7021
        %v7023 = vsel %vm2345, %v6986, 0.0
        %7024 = vadd.xlane.f32.xlu0 %v7023
        %v7025 = vpop.xlane.xlu0 %7024
        %v7026 = vsel %vm2345, %v6988, 0.0
        %7027 = vadd.xlane.f32.xlu0 %v7026
        %v7028 = vpop.xlane.xlu0 %7027
        %v7029 = vsel %vm2345, %v6990, 0.0
        %7030 = vadd.xlane.f32.xlu0 %v7029
        %v7031 = vpop.xlane.xlu0 %7030
        %v7032 = vsel %vm2345, %v6992, 0.0
        %7033 = vadd.xlane.f32.xlu0 %v7032
        %v7034 = vpop.xlane.xlu0 %7033
        %v7035 = vsel %vm2345, %v6994, 0.0
        %7036 = vadd.xlane.f32.xlu0 %v7035
        %v7037 = vpop.xlane.xlu0 %7036
        %v7038 = vsel %vm2345, %v6996, 0.0
        %7039 = vadd.xlane.f32.xlu0 %v7038
        %v7040 = vpop.xlane.xlu0 %7039
        %v7041 = vsel %vm2345, %v6998, 0.0
        %7042 = vadd.xlane.f32.xlu0 %v7041
        %v7043 = vpop.xlane.xlu0 %7042
        %v7044 = vsel %vm2345, %v7000, 0.0
        %7045 = vadd.xlane.f32.xlu0 %v7044
        %v7046 = vpop.xlane.xlu0 %7045
        %v7047 = vsel %vm2345, %v7002, 0.0
        %7048 = vadd.xlane.f32.xlu0 %v7047
        %v7049 = vpop.xlane.xlu0 %7048
        %v7050 = vsel %vm2345, %v7004, 0.0
        %7051 = vadd.xlane.f32.xlu0 %v7050
        %v7052 = vpop.xlane.xlu0 %7051
        %v7053 = vrcp.pop %v7007
        %v7054 = vrcp.pop %v7010
        %v7055 = vrcp.pop %v7013
        %v7056 = vrcp.pop %v7016
        %v7057 = vrcp.pop %v7019
        %v7058 = vrcp.pop %v7022
        %v7059 = vrcp.pop %v7025
        %v7060 = vrcp.pop %v7028
        %v7061 = vrcp.pop %v7031
        %v7062 = vrcp.pop %v7034
        %v7063 = vrcp.pop %v7037
        %v7064 = vrcp.pop %v7040
        %v7065 = vrcp.pop %v7043
        %v7066 = vrcp.pop %v7046
        %v7067 = vrcp.pop %v7049
        %v7068 = vrcp.pop %v7052
        %v7069 = vmul.f32 %v6974, %v7053
        %v7070 = vmul.f32 %v6976, %v7054
        %v7071 = vmul.f32 %v6978, %v7055
        %v7072 = vmul.f32 %v6980, %v7056
        %v7073 = vmul.f32 %v6982, %v7057
        %v7074 = vmul.f32 %v6984, %v7058
        %v7075 = vmul.f32 %v6986, %v7059
        %v7076 = vmul.f32 %v6988, %v7060
        %v7077 = vmul.f32 %v6990, %v7061
        %v7078 = vmul.f32 %v6992, %v7062
        %v7079 = vmul.f32 %v6994, %v7063
        %v7080 = vmul.f32 %v6996, %v7064
        %v7081 = vmul.f32 %v6998, %v7065
        %v7082 = vmul.f32 %v7000, %v7066
        %v7083 = vmul.f32 %v7002, %v7067
        %v7084 = vmul.f32 %v7004, %v7068
        %v7085 = vpack.c.bf16 %v7069, %v7069
        %v7086 = vpack.c.bf16 %v7070, %v7070
        %v7087 = vpack.c.bf16 %v7071, %v7071
        %v7088 = vpack.c.bf16 %v7072, %v7072
        %v7089 = vpack.c.bf16 %v7073, %v7073
        %v7090 = vpack.c.bf16 %v7074, %v7074
        %v7091 = vpack.c.bf16 %v7075, %v7075
        %v7092 = vpack.c.bf16 %v7076, %v7076
        %v7093 = vpack.c.bf16 %v7077, %v7077
        %v7094 = vpack.c.bf16 %v7078, %v7078
        %v7095 = vpack.c.bf16 %v7079, %v7079
        %v7096 = vpack.c.bf16 %v7080, %v7080
        %v7097 = vpack.c.bf16 %v7081, %v7081
        %v7098 = vpack.c.bf16 %v7082, %v7082
        %v7099 = vpack.c.bf16 %v7083, %v7083
        %v7100 = vpack.c.bf16 %v7084, %v7084
        %v7101 = vpack.c.bf16 %v5726, %v5726
        %v7102 = vpack.c.bf16 %v5838, %v5838
        %v7103 = vpack.c.bf16 %v5728, %v5728
        %v7104 = vpack.c.bf16 %v5840, %v5840
        %v7105 = vpack.c.bf16 %v5730, %v5730
        %v7106 = vpack.c.bf16 %v5842, %v5842
        %v7107 = vpack.c.bf16 %v5732, %v5732
        %v7108 = vpack.c.bf16 %v5844, %v5844
        %v7109 = vpack.c.bf16 %v5734, %v5734
        %v7110 = vpack.c.bf16 %v5846, %v5846
        %v7111 = vpack.c.bf16 %v5736, %v5736
        %v7112 = vpack.c.bf16 %v5848, %v5848
        %v7113 = vpack.c.bf16 %v5738, %v5738
        %v7114 = vpack.c.bf16 %v5850, %v5850
        %v7115 = vpack.c.bf16 %v5740, %v5740
        %v7116 = vpack.c.bf16 %v5852, %v5852
        %v7119 = vunpack.c.l.b16 %v7085
        %v7120 = vunpack.c.l.b16 %v7086
        %v7121 = vpack.c.b16 %v7120, %v7119
        %v7124 = vunpack.c.l.b16 %v7101
        %v7125 = vunpack.c.l.b16 %v7102
        %v7126 = vpack.c.b16 %v7125, %v7124
        %v7129 = vsel %vm2345, %v7121, 0
        %7131 = vmatpush.bf16.msra.mxu0 0
        %7132 = vmatpush.bf16.msra.mxu0 0
        %7133 = vmatpush.bf16.msra.mxu0 0
        %7134 = vmatpush.bf16.msra.mxu0 0
        %7135 = vmatpush.bf16.msra.mxu0 0
        %7136 = vmatpush.bf16.msra.mxu0 0
        %7137 = vmatpush.bf16.msra.mxu0 0
        %7138 = vmatpush.bf16.msra.mxu0 %v7126
        %7139 = vmatmul.bf16.gmra.mxu0 %v7129
        %v7140 = vpop.f32.mrf.mxu0
        %v7141 = vadd.f32 0.0, %v7140
        %v7142 = vpop.f32.mrf.mxu0
        %v7143 = vadd.f32 0.0, %v7142
        %7144 = vdwg.mxu0
        %v7147 = vunpack.c.l.b16 %v7087
        %v7148 = vunpack.c.l.b16 %v7088
        %v7149 = vpack.c.b16 %v7148, %v7147
        %v7152 = vunpack.c.l.b16 %v7103
        %v7153 = vunpack.c.l.b16 %v7104
        %v7154 = vpack.c.b16 %v7153, %v7152
        %v7157 = vsel %vm2345, %v7149, 0
        %7159 = vmatpush.bf16.msra.mxu0 0
        %7160 = vmatpush.bf16.msra.mxu0 0
        %7161 = vmatpush.bf16.msra.mxu0 0
        %7162 = vmatpush.bf16.msra.mxu0 0
        %7163 = vmatpush.bf16.msra.mxu0 0
        %7164 = vmatpush.bf16.msra.mxu0 0
        %7165 = vmatpush.bf16.msra.mxu0 0
        %7166 = vmatpush.bf16.msra.mxu0 %v7154
        %7167 = vmatmul.bf16.gmra.mxu0 %v7157
        %v7168 = vpop.f32.mrf.mxu0
        %v7169 = vadd.f32 0.0, %v7168
        %v7170 = vpop.f32.mrf.mxu0
        %v7171 = vadd.f32 0.0, %v7170
        %7172 = vdwg.mxu0
        %v7175 = vunpack.c.l.b16 %v7089
        %v7176 = vunpack.c.l.b16 %v7090
        %v7177 = vpack.c.b16 %v7176, %v7175
        %v7180 = vunpack.c.l.b16 %v7105
        %v7181 = vunpack.c.l.b16 %v7106
        %v7182 = vpack.c.b16 %v7181, %v7180
        %v7185 = vsel %vm2345, %v7177, 0
        %7187 = vmatpush.bf16.msra.mxu0 0
        %7188 = vmatpush.bf16.msra.mxu0 0
        %7189 = vmatpush.bf16.msra.mxu0 0
        %7190 = vmatpush.bf16.msra.mxu0 0
        %7191 = vmatpush.bf16.msra.mxu0 0
        %7192 = vmatpush.bf16.msra.mxu0 0
        %7193 = vmatpush.bf16.msra.mxu0 0
        %7194 = vmatpush.bf16.msra.mxu0 %v7182
        %7195 = vmatmul.bf16.gmra.mxu0 %v7185
        %v7196 = vpop.f32.mrf.mxu0
        %v7197 = vadd.f32 0.0, %v7196
        %v7198 = vpop.f32.mrf.mxu0
        %v7199 = vadd.f32 0.0, %v7198
        %7200 = vdwg.mxu0
        %v7203 = vunpack.c.l.b16 %v7091
        %v7204 = vunpack.c.l.b16 %v7092
        %v7205 = vpack.c.b16 %v7204, %v7203
        %v7208 = vunpack.c.l.b16 %v7107
        %v7209 = vunpack.c.l.b16 %v7108
        %v7210 = vpack.c.b16 %v7209, %v7208
        %v7213 = vsel %vm2345, %v7205, 0
        %7215 = vmatpush.bf16.msra.mxu0 0
        %7216 = vmatpush.bf16.msra.mxu0 0
        %7217 = vmatpush.bf16.msra.mxu0 0
        %7218 = vmatpush.bf16.msra.mxu0 0
        %7219 = vmatpush.bf16.msra.mxu0 0
        %7220 = vmatpush.bf16.msra.mxu0 0
        %7221 = vmatpush.bf16.msra.mxu0 0
        %7222 = vmatpush.bf16.msra.mxu0 %v7210
        %7223 = vmatmul.bf16.gmra.mxu0 %v7213
        %v7224 = vpop.f32.mrf.mxu0
        %v7225 = vadd.f32 0.0, %v7224
        %v7226 = vpop.f32.mrf.mxu0
        %v7227 = vadd.f32 0.0, %v7226
        %7228 = vdwg.mxu0
        %v7231 = vunpack.c.l.b16 %v7093
        %v7232 = vunpack.c.l.b16 %v7094
        %v7233 = vpack.c.b16 %v7232, %v7231
        %v7236 = vunpack.c.l.b16 %v7109
        %v7237 = vunpack.c.l.b16 %v7110
        %v7238 = vpack.c.b16 %v7237, %v7236
        %v7241 = vsel %vm2345, %v7233, 0
        %7243 = vmatpush.bf16.msra.mxu0 0
        %7244 = vmatpush.bf16.msra.mxu0 0
        %7245 = vmatpush.bf16.msra.mxu0 0
        %7246 = vmatpush.bf16.msra.mxu0 0
        %7247 = vmatpush.bf16.msra.mxu0 0
        %7248 = vmatpush.bf16.msra.mxu0 0
        %7249 = vmatpush.bf16.msra.mxu0 0
        %7250 = vmatpush.bf16.msra.mxu0 %v7238
        %7251 = vmatmul.bf16.gmra.mxu0 %v7241
        %v7252 = vpop.f32.mrf.mxu0
        %v7253 = vadd.f32 0.0, %v7252
        %v7254 = vpop.f32.mrf.mxu0
        %v7255 = vadd.f32 0.0, %v7254
        %7256 = vdwg.mxu0
        %v7259 = vunpack.c.l.b16 %v7095
        %v7260 = vunpack.c.l.b16 %v7096
        %v7261 = vpack.c.b16 %v7260, %v7259
        %v7264 = vunpack.c.l.b16 %v7111
        %v7265 = vunpack.c.l.b16 %v7112
        %v7266 = vpack.c.b16 %v7265, %v7264
        %v7269 = vsel %vm2345, %v7261, 0
        %7271 = vmatpush.bf16.msra.mxu0 0
        %7272 = vmatpush.bf16.msra.mxu0 0
        %7273 = vmatpush.bf16.msra.mxu0 0
        %7274 = vmatpush.bf16.msra.mxu0 0
        %7275 = vmatpush.bf16.msra.mxu0 0
        %7276 = vmatpush.bf16.msra.mxu0 0
        %7277 = vmatpush.bf16.msra.mxu0 0
        %7278 = vmatpush.bf16.msra.mxu0 %v7266
        %7279 = vmatmul.bf16.gmra.mxu0 %v7269
        %v7280 = vpop.f32.mrf.mxu0
        %v7281 = vadd.f32 0.0, %v7280
        %v7282 = vpop.f32.mrf.mxu0
        %v7283 = vadd.f32 0.0, %v7282
        %7284 = vdwg.mxu0
        %v7287 = vunpack.c.l.b16 %v7097
        %v7288 = vunpack.c.l.b16 %v7098
        %v7289 = vpack.c.b16 %v7288, %v7287
        %v7292 = vunpack.c.l.b16 %v7113
        %v7293 = vunpack.c.l.b16 %v7114
        %v7294 = vpack.c.b16 %v7293, %v7292
        %v7297 = vsel %vm2345, %v7289, 0
        %7299 = vmatpush.bf16.msra.mxu0 0
        %7300 = vmatpush.bf16.msra.mxu0 0
        %7301 = vmatpush.bf16.msra.mxu0 0
        %7302 = vmatpush.bf16.msra.mxu0 0
        %7303 = vmatpush.bf16.msra.mxu0 0
        %7304 = vmatpush.bf16.msra.mxu0 0
        %7305 = vmatpush.bf16.msra.mxu0 0
        %7306 = vmatpush.bf16.msra.mxu0 %v7294
        %7307 = vmatmul.bf16.gmra.mxu0 %v7297
        %v7308 = vpop.f32.mrf.mxu0
        %v7309 = vadd.f32 0.0, %v7308
        %v7310 = vpop.f32.mrf.mxu0
        %v7311 = vadd.f32 0.0, %v7310
        %7312 = vdwg.mxu0
        %v7315 = vunpack.c.l.b16 %v7099
        %v7316 = vunpack.c.l.b16 %v7100
        %v7317 = vpack.c.b16 %v7316, %v7315
        %v7320 = vunpack.c.l.b16 %v7115
        %v7321 = vunpack.c.l.b16 %v7116
        %v7322 = vpack.c.b16 %v7321, %v7320
        %v7325 = vsel %vm2345, %v7317, 0
        %7327 = vmatpush.bf16.msra.mxu0 0
        %7328 = vmatpush.bf16.msra.mxu0 0
        %7329 = vmatpush.bf16.msra.mxu0 0
        %7330 = vmatpush.bf16.msra.mxu0 0
        %7331 = vmatpush.bf16.msra.mxu0 0
        %7332 = vmatpush.bf16.msra.mxu0 0
        %7333 = vmatpush.bf16.msra.mxu0 0
        %7334 = vmatpush.bf16.msra.mxu0 %v7322
        %7335 = vmatmul.bf16.gmra.mxu0 %v7325
        %v7336 = vpop.f32.mrf.mxu0
        %v7337 = vadd.f32 0.0, %v7336
        %v7338 = vpop.f32.mrf.mxu0
        %v7339 = vadd.f32 0.0, %v7338
        %7340 = vdwg.mxu0
        %v7341 = vrot.slane %v7197, 4
        %v7342 = vsel %vm913, %v7341, %v7141
        %v7343 = vrot.slane %v7141, 4
        %v7344 = vsel %vm913, %v7197, %v7343
        %v7346 = vunpack.c.l.s4 1983009808
        %v7347 = vunpack.c.0.s8 %v7346
        %v7348 = vperm.slane %v7342, %v7347
        %v7350 = vunpack.c.l.s4 1983009808
        %v7351 = vunpack.c.0.s8 %v7350
        %v7352 = vperm.slane %v7344, %v7351
        %v7353 = vrot.slane %v7225, 4
        %v7354 = vsel %vm913, %v7353, %v7169
        %v7355 = vrot.slane %v7169, 4
        %v7356 = vsel %vm913, %v7225, %v7355
        %v7358 = vunpack.c.l.s4 1983009808
        %v7359 = vunpack.c.0.s8 %v7358
        %v7360 = vperm.slane %v7354, %v7359
        %v7362 = vunpack.c.l.s4 1983009808
        %v7363 = vunpack.c.0.s8 %v7362
        %v7364 = vperm.slane %v7356, %v7363
        %v7365 = vrot.slane %v7309, 4
        %v7366 = vsel %vm913, %v7365, %v7253
        %v7367 = vrot.slane %v7253, 4
        %v7368 = vsel %vm913, %v7309, %v7367
        %v7370 = vunpack.c.l.s4 1983009808
        %v7371 = vunpack.c.0.s8 %v7370
        %v7372 = vperm.slane %v7366, %v7371
        %v7374 = vunpack.c.l.s4 1983009808
        %v7375 = vunpack.c.0.s8 %v7374
        %v7376 = vperm.slane %v7368, %v7375
        %v7377 = vrot.slane %v7337, 4
        %v7378 = vsel %vm913, %v7377, %v7281
        %v7379 = vrot.slane %v7281, 4
        %v7380 = vsel %vm913, %v7337, %v7379
        %v7382 = vunpack.c.l.s4 1983009808
        %v7383 = vunpack.c.0.s8 %v7382
        %v7384 = vperm.slane %v7378, %v7383
        %v7386 = vunpack.c.l.s4 1983009808
        %v7387 = vunpack.c.0.s8 %v7386
        %v7388 = vperm.slane %v7380, %v7387
        %v7389 = vrot.slane %v7360, 4
        %v7390 = vsel %vm913, %v7389, %v7348
        %v7391 = vrot.slane %v7348, 4
        %v7392 = vsel %vm913, %v7360, %v7391
        %v7394 = vunpack.c.l.s4 1934713408
        %v7395 = vunpack.c.0.s8 %v7394
        %v7396 = vperm.slane %v7390, %v7395
        %v7398 = vunpack.c.l.s4 1934713408
        %v7399 = vunpack.c.0.s8 %v7398
        %v7400 = vperm.slane %v7392, %v7399
        %v7401 = vrot.slane %v7364, 4
        %v7402 = vsel %vm913, %v7401, %v7352
        %v7403 = vrot.slane %v7352, 4
        %v7404 = vsel %vm913, %v7364, %v7403
        %v7406 = vunpack.c.l.s4 1934713408
        %v7407 = vunpack.c.0.s8 %v7406
        %v7408 = vperm.slane %v7402, %v7407
        %v7410 = vunpack.c.l.s4 1934713408
        %v7411 = vunpack.c.0.s8 %v7410
        %v7412 = vperm.slane %v7404, %v7411
        %v7413 = vrot.slane %v7384, 4
        %v7414 = vsel %vm913, %v7413, %v7372
        %v7415 = vrot.slane %v7372, 4
        %v7416 = vsel %vm913, %v7384, %v7415
        %v7418 = vunpack.c.l.s4 1934713408
        %v7419 = vunpack.c.0.s8 %v7418
        %v7420 = vperm.slane %v7414, %v7419
        %v7422 = vunpack.c.l.s4 1934713408
        %v7423 = vunpack.c.0.s8 %v7422
        %v7424 = vperm.slane %v7416, %v7423
        %v7425 = vrot.slane %v7388, 4
        %v7426 = vsel %vm913, %v7425, %v7376
        %v7427 = vrot.slane %v7376, 4
        %v7428 = vsel %vm913, %v7388, %v7427
        %v7430 = vunpack.c.l.s4 1934713408
        %v7431 = vunpack.c.0.s8 %v7430
        %v7432 = vperm.slane %v7426, %v7431
        %v7434 = vunpack.c.l.s4 1934713408
        %v7435 = vunpack.c.0.s8 %v7434
        %v7436 = vperm.slane %v7428, %v7435
        %v7437 = vrot.slane %v7420, 4
        %v7438 = vsel %vm913, %v7437, %v7396
        %v7439 = vrot.slane %v7396, 4
        %v7440 = vsel %vm913, %v7420, %v7439
        %v7441 = vrot.slane %v7424, 4
        %v7442 = vsel %vm913, %v7441, %v7400
        %v7443 = vrot.slane %v7400, 4
        %v7444 = vsel %vm913, %v7424, %v7443
        %v7445 = vrot.slane %v7432, 4
        %v7446 = vsel %vm913, %v7445, %v7408
        %v7447 = vrot.slane %v7408, 4
        %v7448 = vsel %vm913, %v7432, %v7447
        %v7449 = vrot.slane %v7436, 4
        %v7450 = vsel %vm913, %v7449, %v7412
        %v7451 = vrot.slane %v7412, 4
        %v7452 = vsel %vm913, %v7436, %v7451
        %v7453 = vrot.slane %v7199, 4
        %v7454 = vsel %vm913, %v7453, %v7143
        %v7455 = vrot.slane %v7143, 4
        %v7456 = vsel %vm913, %v7199, %v7455
        %v7458 = vunpack.c.l.s4 1983009808
        %v7459 = vunpack.c.0.s8 %v7458
        %v7460 = vperm.slane %v7454, %v7459
        %v7462 = vunpack.c.l.s4 1983009808
        %v7463 = vunpack.c.0.s8 %v7462
        %v7464 = vperm.slane %v7456, %v7463
        %v7465 = vrot.slane %v7227, 4
        %v7466 = vsel %vm913, %v7465, %v7171
        %v7467 = vrot.slane %v7171, 4
        %v7468 = vsel %vm913, %v7227, %v7467
        %v7470 = vunpack.c.l.s4 1983009808
        %v7471 = vunpack.c.0.s8 %v7470
        %v7472 = vperm.slane %v7466, %v7471
        %v7474 = vunpack.c.l.s4 1983009808
        %v7475 = vunpack.c.0.s8 %v7474
        %v7476 = vperm.slane %v7468, %v7475
        %v7477 = vrot.slane %v7311, 4
        %v7478 = vsel %vm913, %v7477, %v7255
        %v7479 = vrot.slane %v7255, 4
        %v7480 = vsel %vm913, %v7311, %v7479
        %v7482 = vunpack.c.l.s4 1983009808
        %v7483 = vunpack.c.0.s8 %v7482
        %v7484 = vperm.slane %v7478, %v7483
        %v7486 = vunpack.c.l.s4 1983009808
        %v7487 = vunpack.c.0.s8 %v7486
        %v7488 = vperm.slane %v7480, %v7487
        %v7489 = vrot.slane %v7339, 4
        %v7490 = vsel %vm913, %v7489, %v7283
        %v7491 = vrot.slane %v7283, 4
        %v7492 = vsel %vm913, %v7339, %v7491
        %v7494 = vunpack.c.l.s4 1983009808
        %v7495 = vunpack.c.0.s8 %v7494
        %v7496 = vperm.slane %v7490, %v7495
        %v7498 = vunpack.c.l.s4 1983009808
        %v7499 = vunpack.c.0.s8 %v7498
        %v7500 = vperm.slane %v7492, %v7499
        %v7501 = vrot.slane %v7472, 4
        %v7502 = vsel %vm913, %v7501, %v7460
        %v7503 = vrot.slane %v7460, 4
        %v7504 = vsel %vm913, %v7472, %v7503
        %v7506 = vunpack.c.l.s4 1934713408
        %v7507 = vunpack.c.0.s8 %v7506
        %v7508 = vperm.slane %v7502, %v7507
        %v7510 = vunpack.c.l.s4 1934713408
        %v7511 = vunpack.c.0.s8 %v7510
        %v7512 = vperm.slane %v7504, %v7511
        %v7513 = vrot.slane %v7476, 4
        %v7514 = vsel %vm913, %v7513, %v7464
        %v7515 = vrot.slane %v7464, 4
        %v7516 = vsel %vm913, %v7476, %v7515
        %v7518 = vunpack.c.l.s4 1934713408
        %v7519 = vunpack.c.0.s8 %v7518
        %v7520 = vperm.slane %v7514, %v7519
        %v7522 = vunpack.c.l.s4 1934713408
        %v7523 = vunpack.c.0.s8 %v7522
        %v7524 = vperm.slane %v7516, %v7523
        %v7525 = vrot.slane %v7496, 4
        %v7526 = vsel %vm913, %v7525, %v7484
        %v7527 = vrot.slane %v7484, 4
        %v7528 = vsel %vm913, %v7496, %v7527
        %v7530 = vunpack.c.l.s4 1934713408
        %v7531 = vunpack.c.0.s8 %v7530
        %v7532 = vperm.slane %v7526, %v7531
        %v7534 = vunpack.c.l.s4 1934713408
        %v7535 = vunpack.c.0.s8 %v7534
        %v7536 = vperm.slane %v7528, %v7535
        %v7537 = vrot.slane %v7500, 4
        %v7538 = vsel %vm913, %v7537, %v7488
        %v7539 = vrot.slane %v7488, 4
        %v7540 = vsel %vm913, %v7500, %v7539
        %v7542 = vunpack.c.l.s4 1934713408
        %v7543 = vunpack.c.0.s8 %v7542
        %v7544 = vperm.slane %v7538, %v7543
        %v7546 = vunpack.c.l.s4 1934713408
        %v7547 = vunpack.c.0.s8 %v7546
        %v7548 = vperm.slane %v7540, %v7547
        %v7549 = vrot.slane %v7532, 4
        %v7550 = vsel %vm913, %v7549, %v7508
        %v7551 = vrot.slane %v7508, 4
        %v7552 = vsel %vm913, %v7532, %v7551
        %v7553 = vrot.slane %v7536, 4
        %v7554 = vsel %vm913, %v7553, %v7512
        %v7555 = vrot.slane %v7512, 4
        %v7556 = vsel %vm913, %v7536, %v7555
        %v7557 = vrot.slane %v7544, 4
        %v7558 = vsel %vm913, %v7557, %v7520
        %v7559 = vrot.slane %v7520, 4
        %v7560 = vsel %vm913, %v7544, %v7559
        %v7561 = vrot.slane %v7548, 4
        %v7562 = vsel %vm913, %v7561, %v7524
        %v7563 = vrot.slane %v7524, 4
        %v7564 = vsel %vm913, %v7548, %v7563
        %v7565 = vrot.slane %v7442, 4
        %v7566 = vsel %vm913, %v7565, %v7438
        %v7567 = vrot.slane %v7438, 4
        %v7568 = vsel %vm913, %v7442, %v7567
        %v7570 = vunpack.c.l.s4 1983009808
        %v7571 = vunpack.c.0.s8 %v7570
        %v7572 = vperm.slane %v7566, %v7571
        %v7574 = vunpack.c.l.s4 1983009808
        %v7575 = vunpack.c.0.s8 %v7574
        %v7576 = vperm.slane %v7568, %v7575
        %v7577 = vrot.slane %v7444, 4
        %v7578 = vsel %vm913, %v7577, %v7440
        %v7579 = vrot.slane %v7440, 4
        %v7580 = vsel %vm913, %v7444, %v7579
        %v7582 = vunpack.c.l.s4 1983009808
        %v7583 = vunpack.c.0.s8 %v7582
        %v7584 = vperm.slane %v7578, %v7583
        %v7586 = vunpack.c.l.s4 1983009808
        %v7587 = vunpack.c.0.s8 %v7586
        %v7588 = vperm.slane %v7580, %v7587
        %v7589 = vrot.slane %v7450, 4
        %v7590 = vsel %vm913, %v7589, %v7446
        %v7591 = vrot.slane %v7446, 4
        %v7592 = vsel %vm913, %v7450, %v7591
        %v7594 = vunpack.c.l.s4 1983009808
        %v7595 = vunpack.c.0.s8 %v7594
        %v7596 = vperm.slane %v7590, %v7595
        %v7598 = vunpack.c.l.s4 1983009808
        %v7599 = vunpack.c.0.s8 %v7598
        %v7600 = vperm.slane %v7592, %v7599
        %v7601 = vrot.slane %v7452, 4
        %v7602 = vsel %vm913, %v7601, %v7448
        %v7603 = vrot.slane %v7448, 4
        %v7604 = vsel %vm913, %v7452, %v7603
        %v7606 = vunpack.c.l.s4 1983009808
        %v7607 = vunpack.c.0.s8 %v7606
        %v7608 = vperm.slane %v7602, %v7607
        %v7610 = vunpack.c.l.s4 1983009808
        %v7611 = vunpack.c.0.s8 %v7610
        %v7612 = vperm.slane %v7604, %v7611
        %v7613 = vrot.slane %v7584, 4
        %v7614 = vsel %vm913, %v7613, %v7572
        %v7615 = vrot.slane %v7572, 4
        %v7616 = vsel %vm913, %v7584, %v7615
        %v7618 = vunpack.c.l.s4 1934713408
        %v7619 = vunpack.c.0.s8 %v7618
        %v7620 = vperm.slane %v7614, %v7619
        %v7622 = vunpack.c.l.s4 1934713408
        %v7623 = vunpack.c.0.s8 %v7622
        %v7624 = vperm.slane %v7616, %v7623
        %v7625 = vrot.slane %v7588, 4
        %v7626 = vsel %vm913, %v7625, %v7576
        %v7627 = vrot.slane %v7576, 4
        %v7628 = vsel %vm913, %v7588, %v7627
        %v7630 = vunpack.c.l.s4 1934713408
        %v7631 = vunpack.c.0.s8 %v7630
        %v7632 = vperm.slane %v7626, %v7631
        %v7634 = vunpack.c.l.s4 1934713408
        %v7635 = vunpack.c.0.s8 %v7634
        %v7636 = vperm.slane %v7628, %v7635
        %v7637 = vrot.slane %v7608, 4
        %v7638 = vsel %vm913, %v7637, %v7596
        %v7639 = vrot.slane %v7596, 4
        %v7640 = vsel %vm913, %v7608, %v7639
        %v7642 = vunpack.c.l.s4 1934713408
        %v7643 = vunpack.c.0.s8 %v7642
        %v7644 = vperm.slane %v7638, %v7643
        %v7646 = vunpack.c.l.s4 1934713408
        %v7647 = vunpack.c.0.s8 %v7646
        %v7648 = vperm.slane %v7640, %v7647
        %v7649 = vrot.slane %v7612, 4
        %v7650 = vsel %vm913, %v7649, %v7600
        %v7651 = vrot.slane %v7600, 4
        %v7652 = vsel %vm913, %v7612, %v7651
        %v7654 = vunpack.c.l.s4 1934713408
        %v7655 = vunpack.c.0.s8 %v7654
        %v7656 = vperm.slane %v7650, %v7655
        %v7658 = vunpack.c.l.s4 1934713408
        %v7659 = vunpack.c.0.s8 %v7658
        %v7660 = vperm.slane %v7652, %v7659
        %v7661 = vrot.slane %v7644, 4
        %v7662 = vsel %vm913, %v7661, %v7620
        %v7663 = vrot.slane %v7620, 4
        %v7664 = vsel %vm913, %v7644, %v7663
        %v7665 = vrot.slane %v7648, 4
        %v7666 = vsel %vm913, %v7665, %v7624
        %v7667 = vrot.slane %v7624, 4
        %v7668 = vsel %vm913, %v7648, %v7667
        %v7669 = vrot.slane %v7656, 4
        %v7670 = vsel %vm913, %v7669, %v7632
        %v7671 = vrot.slane %v7632, 4
        %v7672 = vsel %vm913, %v7656, %v7671
        %v7673 = vrot.slane %v7660, 4
        %v7674 = vsel %vm913, %v7673, %v7636
        %v7675 = vrot.slane %v7636, 4
        %v7676 = vsel %vm913, %v7660, %v7675
        %v7677 = vrot.slane %v7554, 4
        %v7678 = vsel %vm913, %v7677, %v7550
        %v7679 = vrot.slane %v7550, 4
        %v7680 = vsel %vm913, %v7554, %v7679
        %v7682 = vunpack.c.l.s4 1983009808
        %v7683 = vunpack.c.0.s8 %v7682
        %v7684 = vperm.slane %v7678, %v7683
        %v7686 = vunpack.c.l.s4 1983009808
        %v7687 = vunpack.c.0.s8 %v7686
        %v7688 = vperm.slane %v7680, %v7687
        %v7689 = vrot.slane %v7556, 4
        %v7690 = vsel %vm913, %v7689, %v7552
        %v7691 = vrot.slane %v7552, 4
        %v7692 = vsel %vm913, %v7556, %v7691
        %v7694 = vunpack.c.l.s4 1983009808
        %v7695 = vunpack.c.0.s8 %v7694
        %v7696 = vperm.slane %v7690, %v7695
        %v7698 = vunpack.c.l.s4 1983009808
        %v7699 = vunpack.c.0.s8 %v7698
        %v7700 = vperm.slane %v7692, %v7699
        %v7701 = vrot.slane %v7562, 4
        %v7702 = vsel %vm913, %v7701, %v7558
        %v7703 = vrot.slane %v7558, 4
        %v7704 = vsel %vm913, %v7562, %v7703
        %v7706 = vunpack.c.l.s4 1983009808
        %v7707 = vunpack.c.0.s8 %v7706
        %v7708 = vperm.slane %v7702, %v7707
        %v7710 = vunpack.c.l.s4 1983009808
        %v7711 = vunpack.c.0.s8 %v7710
        %v7712 = vperm.slane %v7704, %v7711
        %v7713 = vrot.slane %v7564, 4
        %v7714 = vsel %vm913, %v7713, %v7560
        %v7715 = vrot.slane %v7560, 4
        %v7716 = vsel %vm913, %v7564, %v7715
        %v7718 = vunpack.c.l.s4 1983009808
        %v7719 = vunpack.c.0.s8 %v7718
        %v7720 = vperm.slane %v7714, %v7719
        %v7722 = vunpack.c.l.s4 1983009808
        %v7723 = vunpack.c.0.s8 %v7722
        %v7724 = vperm.slane %v7716, %v7723
        %v7725 = vrot.slane %v7696, 4
        %v7726 = vsel %vm913, %v7725, %v7684
        %v7727 = vrot.slane %v7684, 4
        %v7728 = vsel %vm913, %v7696, %v7727
        %v7730 = vunpack.c.l.s4 1934713408
        %v7731 = vunpack.c.0.s8 %v7730
        %v7732 = vperm.slane %v7726, %v7731
        %v7734 = vunpack.c.l.s4 1934713408
        %v7735 = vunpack.c.0.s8 %v7734
        %v7736 = vperm.slane %v7728, %v7735
        %v7737 = vrot.slane %v7700, 4
        %v7738 = vsel %vm913, %v7737, %v7688
        %v7739 = vrot.slane %v7688, 4
        %v7740 = vsel %vm913, %v7700, %v7739
        %v7742 = vunpack.c.l.s4 1934713408
        %v7743 = vunpack.c.0.s8 %v7742
        %v7744 = vperm.slane %v7738, %v7743
        %v7746 = vunpack.c.l.s4 1934713408
        %v7747 = vunpack.c.0.s8 %v7746
        %v7748 = vperm.slane %v7740, %v7747
        %v7749 = vrot.slane %v7720, 4
        %v7750 = vsel %vm913, %v7749, %v7708
        %v7751 = vrot.slane %v7708, 4
        %v7752 = vsel %vm913, %v7720, %v7751
        %v7754 = vunpack.c.l.s4 1934713408
        %v7755 = vunpack.c.0.s8 %v7754
        %v7756 = vperm.slane %v7750, %v7755
        %v7758 = vunpack.c.l.s4 1934713408
        %v7759 = vunpack.c.0.s8 %v7758
        %v7760 = vperm.slane %v7752, %v7759
        %v7761 = vrot.slane %v7724, 4
        %v7762 = vsel %vm913, %v7761, %v7712
        %v7763 = vrot.slane %v7712, 4
        %v7764 = vsel %vm913, %v7724, %v7763
        %v7766 = vunpack.c.l.s4 1934713408
        %v7767 = vunpack.c.0.s8 %v7766
        %v7768 = vperm.slane %v7762, %v7767
        %v7770 = vunpack.c.l.s4 1934713408
        %v7771 = vunpack.c.0.s8 %v7770
        %v7772 = vperm.slane %v7764, %v7771
        %v7773 = vrot.slane %v7756, 4
        %v7774 = vsel %vm913, %v7773, %v7732
        %v7775 = vrot.slane %v7732, 4
        %v7776 = vsel %vm913, %v7756, %v7775
        %v7777 = vrot.slane %v7760, 4
        %v7778 = vsel %vm913, %v7777, %v7736
        %v7779 = vrot.slane %v7736, 4
        %v7780 = vsel %vm913, %v7760, %v7779
        %v7781 = vrot.slane %v7768, 4
        %v7782 = vsel %vm913, %v7781, %v7744
        %v7783 = vrot.slane %v7744, 4
        %v7784 = vsel %vm913, %v7768, %v7783
        %v7785 = vrot.slane %v7772, 4
        %v7786 = vsel %vm913, %v7785, %v7748
        %v7787 = vrot.slane %v7748, 4
        %v7788 = vsel %vm913, %v7772, %v7787
        %7791 = vrot.lane.b32.xlu0 %v7664, 16
        %v7792 = vpop.permute.xlu0 %7791
        %7793 = vrot.lane.b32.xlu0 %v7776, 16
        %v7794 = vpop.permute.xlu0 %7793
        %7799 = vrot.lane.b32.xlu0 %v7666, 32
        %v7800 = vpop.permute.xlu0 %7799
        %7801 = vrot.lane.b32.xlu0 %v7778, 32
        %v7802 = vpop.permute.xlu0 %7801
        %7807 = vrot.lane.b32.xlu0 %v7668, 48
        %v7808 = vpop.permute.xlu0 %7807
        %7809 = vrot.lane.b32.xlu0 %v7780, 48
        %v7810 = vpop.permute.xlu0 %7809
        %7815 = vrot.lane.b32.xlu0 %v7670, 64
        %v7816 = vpop.permute.xlu0 %7815
        %7817 = vrot.lane.b32.xlu0 %v7782, 64
        %v7818 = vpop.permute.xlu0 %7817
        %7823 = vrot.lane.b32.xlu0 %v7672, 80
        %v7824 = vpop.permute.xlu0 %7823
        %7825 = vrot.lane.b32.xlu0 %v7784, 80
        %v7826 = vpop.permute.xlu0 %7825
        %7831 = vrot.lane.b32.xlu0 %v7674, 96
        %v7832 = vpop.permute.xlu0 %7831
        %7833 = vrot.lane.b32.xlu0 %v7786, 96
        %v7834 = vpop.permute.xlu0 %7833
        %7839 = vrot.lane.b32.xlu0 %v7676, 112
        %v7840 = vpop.permute.xlu0 %7839
        %7841 = vrot.lane.b32.xlu0 %v7788, 112
        %v7842 = vpop.permute.xlu0 %7841
        %v7845 = vsel %vm2345, %v7662, %v7792
        %v7846 = vsel %vm2345, %v7774, %v7794
        %v7847 = vsel %vm4359, %v7845, %v7800
        %v7848 = vsel %vm4359, %v7846, %v7802
        %v7849 = vsel %vm4362, %v7847, %v7808
        %v7850 = vsel %vm4362, %v7848, %v7810
        %v7851 = vsel %vm4365, %v7849, %v7816
        %v7852 = vsel %vm4365, %v7850, %v7818
        %v7853 = vsel %vm4368, %v7851, %v7824
        %v7854 = vsel %vm4368, %v7852, %v7826
        %v7855 = vsel %vm4371, %v7853, %v7832
        %v7856 = vsel %vm4371, %v7854, %v7834
        %v7857 = vsel %vm4374, %v7855, %v7840
        %v7858 = vsel %vm4374, %v7856, %v7842
        %v7859 = vpack.c.bf16 %v4376, %v4375
        %v7860 = vpack.c.bf16 %v7858, %v7857
        %v7861 = vld [vmem:[#allocation10] sm:$0xf]
        %v7862 = vld [vmem:[#allocation10 + $0x4] sm:$0xf]
        %v7863 = vld [vmem:[#allocation10 + $0x8] sm:$0xf]
        %v7864 = vld [vmem:[#allocation10 + $0xc] sm:$0xf]
        %v7865 = vld [vmem:[#allocation10 + $0x10] sm:$0xf]
        %v7866 = vld [vmem:[#allocation10 + $0x14] sm:$0xf]
        %v7867 = vld [vmem:[#allocation10 + $0x18] sm:$0xf]
        %v7868 = vld [vmem:[#allocation10 + $0x1c] sm:$0xf]
        %v7869 = vld [vmem:[#allocation10 + $0x20] sm:$0xf]
        %v7870 = vld [vmem:[#allocation10 + $0x24] sm:$0xf]
        %v7871 = vld [vmem:[#allocation10 + $0x28] sm:$0xf]
        %v7872 = vld [vmem:[#allocation10 + $0x2c] sm:$0xf]
        %v7873 = vld [vmem:[#allocation10 + $0x30] sm:$0xf]
        %v7874 = vld [vmem:[#allocation10 + $0x34] sm:$0xf]
        %v7875 = vld [vmem:[#allocation10 + $0x38] sm:$0xf]
        %v7876 = vld [vmem:[#allocation10 + $0x3c] sm:$0xf]
        %v7877 = vld [vmem:[%s7] sm:$0x1]
        %v7879 = vperm.slane %v7877, 0
        %v7897 = vunpack.c.l.b16 %v7861
        %v7898 = vunpack.c.l.b16 %v7862
        %v7899 = vunpack.c.l.b16 %v7863
        %v7900 = vunpack.c.l.b16 %v7864
        %v7901 = vunpack.c.l.b16 %v7865
        %v7902 = vunpack.c.l.b16 %v7866
        %v7903 = vunpack.c.l.b16 %v7867
        %v7904 = vunpack.c.l.b16 %v7868
        %v7905 = vunpack.c.l.b16 %v7869
        %v7906 = vunpack.c.l.b16 %v7870
        %v7907 = vunpack.c.l.b16 %v7871
        %v7908 = vunpack.c.l.b16 %v7872
        %v7909 = vunpack.c.l.b16 %v7873
        %v7910 = vunpack.c.l.b16 %v7874
        %v7911 = vunpack.c.l.b16 %v7875
        %v7912 = vunpack.c.l.b16 %v7876
        %v7913 = vpack.c.b16 %v7898, %v7897
        %v7914 = vpack.c.b16 %v7900, %v7899
        %v7915 = vpack.c.b16 %v7902, %v7901
        %v7916 = vpack.c.b16 %v7904, %v7903
        %v7917 = vpack.c.b16 %v7906, %v7905
        %v7918 = vpack.c.b16 %v7908, %v7907
        %v7919 = vpack.c.b16 %v7910, %v7909
        %v7920 = vpack.c.b16 %v7912, %v7911
        %7929 = vmatpush.bf16.msra.mxu0 %v7920
        %7930 = vmatpush.bf16.msra.mxu0 %v7919
        %7931 = vmatpush.bf16.msra.mxu0 %v7918
        %7932 = vmatpush.bf16.msra.mxu0 %v7917
        %7933 = vmatpush.bf16.msra.mxu0 %v7916
        %7934 = vmatpush.bf16.msra.mxu0 %v7915
        %7935 = vmatpush.bf16.msra.mxu0 %v7914
        %7936 = vmatpush.bf16.msra.mxu0 %v7913
        %7937 = vmatmul.bf16.gmra.mxu0 %v7859
        %v7938 = vpop.f32.mrf.mxu0
        %v7939 = vadd.f32 %v7879, %v7938
        %v7940 = vpop.f32.mrf.mxu0
        %v7941 = vadd.f32 %v7879, %v7940
        %7942 = vmatmul.bf16.gmra.mxu0 %v7860
        %v7943 = vpop.f32.mrf.mxu0
        %v7944 = vadd.f32 %v7879, %v7943
        %v7945 = vpop.f32.mrf.mxu0
        %v7946 = vadd.f32 %v7879, %v7945
        %7947 = vdwg.mxu0
        %v7948 = vadd.f32 %v641, %v7939
        %v7949 = vadd.f32 %v642, %v7941
        %v7950 = vadd.f32 %v643, %v7944
        %v7951 = vadd.f32 %v644, %v7946
        %v7952 = vld [vmem:[%s12] sm:$0x1]
        %v7953 = vld [vmem:[%s13] sm:$0x1]
        %7954 = vadd.xlane.f32.xlu0 %v7948
        %v7955 = vpop.xlane.xlu0 %7954
        %7956 = vadd.xlane.f32.xlu0 %v7949
        %v7957 = vpop.xlane.xlu0 %7956
        %7958 = vadd.xlane.f32.xlu0 %v7950
        %v7959 = vpop.xlane.xlu0 %7958
        %7960 = vadd.xlane.f32.xlu0 %v7951
        %v7961 = vpop.xlane.xlu0 %7960
        %v7962 = vrcp.pop 128.0
        %v7963 = vmul.f32 128.0, %v7962
        %v7964 = vsub.f32 1.0, %v7963
        %v7965 = vmul.f32 %v7962, %v7964
        %v7966 = vadd.f32 %v7962, %v7965
        %vm7967 = vweird.f32 %v7962
        %v7968 = vsel %vm7967, %v7962, %v7966
        %v7969 = vmul.f32 %v7955, %v7968
        %v7970 = vmul.f32 %v7957, %v7968
        %v7971 = vmul.f32 %v7959, %v7968
        %v7972 = vmul.f32 %v7961, %v7968
        %v7973 = vsub.f32 %v7948, %v7969
        %v7974 = vsub.f32 %v7949, %v7970
        %v7975 = vsub.f32 %v7950, %v7971
        %v7976 = vsub.f32 %v7951, %v7972
        %v7977 = vmul.f32 %v7973, %v7973
        %v7978 = vmul.f32 %v7974, %v7974
        %v7979 = vmul.f32 %v7975, %v7975
        %v7980 = vmul.f32 %v7976, %v7976
        %7981 = vadd.xlane.f32.xlu0 %v7977
        %v7982 = vpop.xlane.xlu0 %7981
        %7983 = vadd.xlane.f32.xlu0 %v7978
        %v7984 = vpop.xlane.xlu0 %7983
        %7985 = vadd.xlane.f32.xlu0 %v7979
        %v7986 = vpop.xlane.xlu0 %7985
        %7987 = vadd.xlane.f32.xlu0 %v7980
        %v7988 = vpop.xlane.xlu0 %7987
        %v7989 = vmul.f32 %v7982, %v7968
        %v7990 = vmul.f32 %v7984, %v7968
        %v7991 = vmul.f32 %v7986, %v7968
        %v7992 = vmul.f32 %v7988, %v7968
        %v7993 = vadd.f32 %v7989, 1e-05
        %v7994 = vadd.f32 %v7990, 1e-05
        %v7995 = vadd.f32 %v7991, 1e-05
        %v7996 = vadd.f32 %v7992, 1e-05
        %v7997 = vrsqrt.pop %v7993
        %v7998 = vmul.f32 %v7997, %v7993
        %v7999 = vmul.f32 %v7998, %v7997
        %v8000 = vmul.f32 0.5, %v7999
        %v8001 = vsub.f32 1.5, %v8000
        %v8002 = vmul.f32 %v7997, %v8001
        %vm8003 = vweird.f32 %v7993
        %vm8004 = vweird.f32 %v7997
        %vm8005 = vmor %vm8003, %vm8004
        %v8006 = vsel %vm8005, %v7997, %v8002
        %v8007 = vrsqrt.pop %v7994
        %v8008 = vmul.f32 %v8007, %v7994
        %v8009 = vmul.f32 %v8008, %v8007
        %v8010 = vmul.f32 0.5, %v8009
        %v8011 = vsub.f32 1.5, %v8010
        %v8012 = vmul.f32 %v8007, %v8011
        %vm8013 = vweird.f32 %v7994
        %vm8014 = vweird.f32 %v8007
        %vm8015 = vmor %vm8013, %vm8014
        %v8016 = vsel %vm8015, %v8007, %v8012
        %v8017 = vrsqrt.pop %v7995
        %v8018 = vmul.f32 %v8017, %v7995
        %v8019 = vmul.f32 %v8018, %v8017
        %v8020 = vmul.f32 0.5, %v8019
        %v8021 = vsub.f32 1.5, %v8020
        %v8022 = vmul.f32 %v8017, %v8021
        %vm8023 = vweird.f32 %v7995
        %vm8024 = vweird.f32 %v8017
        %vm8025 = vmor %vm8023, %vm8024
        %v8026 = vsel %vm8025, %v8017, %v8022
        %v8027 = vrsqrt.pop %v7996
        %v8028 = vmul.f32 %v8027, %v7996
        %v8029 = vmul.f32 %v8028, %v8027
        %v8030 = vmul.f32 0.5, %v8029
        %v8031 = vsub.f32 1.5, %v8030
        %v8032 = vmul.f32 %v8027, %v8031
        %vm8033 = vweird.f32 %v7996
        %vm8034 = vweird.f32 %v8027
        %vm8035 = vmor %vm8033, %vm8034
        %v8036 = vsel %vm8035, %v8027, %v8032
        %v8037 = vmul.f32 %v7973, %v8006
        %v8038 = vmul.f32 %v7974, %v8016
        %v8039 = vmul.f32 %v7975, %v8026
        %v8040 = vmul.f32 %v7976, %v8036
        %v8042 = vperm.slane %v7952, 0
        %v8044 = vmul.f32 %v8037, %v8042
        %v8045 = vmul.f32 %v8038, %v8042
        %v8046 = vmul.f32 %v8039, %v8042
        %v8047 = vmul.f32 %v8040, %v8042
        %v8049 = vperm.slane %v7953, 0
        %v8051 = vadd.f32 %v8044, %v8049
        %v8052 = vadd.f32 %v8045, %v8049
        %v8053 = vadd.f32 %v8046, %v8049
        %v8054 = vadd.f32 %v8047, %v8049
        %v8055 = vpack.c.bf16 %v8052, %v8051
        %v8056 = vpack.c.bf16 %v8054, %v8053
        %v8057 = vld [vmem:[#allocation11] sm:$0xf]
        %v8058 = vld [vmem:[#allocation11 + $0x8] sm:$0xf]
        %v8059 = vld [vmem:[#allocation11 + $0x10] sm:$0xf]
        %v8060 = vld [vmem:[#allocation11 + $0x18] sm:$0xf]
        %v8061 = vld [vmem:[#allocation11 + $0x20] sm:$0xf]
        %v8062 = vld [vmem:[#allocation11 + $0x28] sm:$0xf]
        %v8063 = vld [vmem:[#allocation11 + $0x30] sm:$0xf]
        %v8064 = vld [vmem:[#allocation11 + $0x38] sm:$0xf]
        %v8065 = vld [vmem:[#allocation11 + $0x40] sm:$0xf]
        %v8066 = vld [vmem:[#allocation11 + $0x48] sm:$0xf]
        %v8067 = vld [vmem:[#allocation11 + $0x50] sm:$0xf]
        %v8068 = vld [vmem:[#allocation11 + $0x58] sm:$0xf]
        %v8069 = vld [vmem:[#allocation11 + $0x60] sm:$0xf]
        %v8070 = vld [vmem:[#allocation11 + $0x68] sm:$0xf]
        %v8071 = vld [vmem:[#allocation11 + $0x70] sm:$0xf]
        %v8072 = vld [vmem:[#allocation11 + $0x78] sm:$0xf]
        %v8073 = vld [vmem:[%s9] sm:$0x1]
        %v8075 = vperm.slane %v8073, 0
        %v8093 = vunpack.c.l.b16 %v8057
        %v8094 = vunpack.c.l.b16 %v8058
        %v8095 = vunpack.c.l.b16 %v8059
        %v8096 = vunpack.c.l.b16 %v8060
        %v8097 = vunpack.c.l.b16 %v8061
        %v8098 = vunpack.c.l.b16 %v8062
        %v8099 = vunpack.c.l.b16 %v8063
        %v8100 = vunpack.c.l.b16 %v8064
        %v8101 = vunpack.c.l.b16 %v8065
        %v8102 = vunpack.c.l.b16 %v8066
        %v8103 = vunpack.c.l.b16 %v8067
        %v8104 = vunpack.c.l.b16 %v8068
        %v8105 = vunpack.c.l.b16 %v8069
        %v8106 = vunpack.c.l.b16 %v8070
        %v8107 = vunpack.c.l.b16 %v8071
        %v8108 = vunpack.c.l.b16 %v8072
        %v8109 = vpack.c.b16 %v8094, %v8093
        %v8110 = vpack.c.b16 %v8096, %v8095
        %v8111 = vpack.c.b16 %v8098, %v8097
        %v8112 = vpack.c.b16 %v8100, %v8099
        %v8113 = vpack.c.b16 %v8102, %v8101
        %v8114 = vpack.c.b16 %v8104, %v8103
        %v8115 = vpack.c.b16 %v8106, %v8105
        %v8116 = vpack.c.b16 %v8108, %v8107
        %8125 = vmatpush.bf16.msra.mxu0 %v8116
        %8126 = vmatpush.bf16.msra.mxu0 %v8115
        %8127 = vmatpush.bf16.msra.mxu0 %v8114
        %8128 = vmatpush.bf16.msra.mxu0 %v8113
        %8129 = vmatpush.bf16.msra.mxu0 %v8112
        %8130 = vmatpush.bf16.msra.mxu0 %v8111
        %8131 = vmatpush.bf16.msra.mxu0 %v8110
        %8132 = vmatpush.bf16.msra.mxu0 %v8109
        %8133 = vmatmul.bf16.gmra.mxu0 %v8055
        %v8134 = vpop.f32.mrf.mxu0
        %v8135 = vadd.f32 %v8075, %v8134
        %v8136 = vpop.f32.mrf.mxu0
        %v8137 = vadd.f32 %v8075, %v8136
        %8138 = vmatmul.bf16.gmra.mxu0 %v8056
        %v8139 = vpop.f32.mrf.mxu0
        %v8140 = vadd.f32 %v8075, %v8139
        %v8141 = vpop.f32.mrf.mxu0
        %v8142 = vadd.f32 %v8075, %v8141
        %8143 = vdwg.mxu0
        %v8144 = vmax.f32 %v8135, 0.0
        %v8145 = vmax.f32 %v8137, 0.0
        %v8146 = vmax.f32 %v8140, 0.0
        %v8147 = vmax.f32 %v8142, 0.0
        %v8148 = vpack.c.bf16 %v8145, %v8144
        %v8149 = vpack.c.bf16 %v8147, %v8146
        %v8150 = vld [vmem:[#allocation13] sm:$0xf]
        %v8151 = vld [vmem:[#allocation13 + $0x4] sm:$0xf]
        %v8152 = vld [vmem:[#allocation13 + $0x8] sm:$0xf]
        %v8153 = vld [vmem:[#allocation13 + $0xc] sm:$0xf]
        %v8154 = vld [vmem:[#allocation13 + $0x10] sm:$0xf]
        %v8155 = vld [vmem:[#allocation13 + $0x14] sm:$0xf]
        %v8156 = vld [vmem:[#allocation13 + $0x18] sm:$0xf]
        %v8157 = vld [vmem:[#allocation13 + $0x1c] sm:$0xf]
        %v8158 = vld [vmem:[#allocation13 + $0x20] sm:$0xf]
        %v8159 = vld [vmem:[#allocation13 + $0x24] sm:$0xf]
        %v8160 = vld [vmem:[#allocation13 + $0x28] sm:$0xf]
        %v8161 = vld [vmem:[#allocation13 + $0x2c] sm:$0xf]
        %v8162 = vld [vmem:[#allocation13 + $0x30] sm:$0xf]
        %v8163 = vld [vmem:[#allocation13 + $0x34] sm:$0xf]
        %v8164 = vld [vmem:[#allocation13 + $0x38] sm:$0xf]
        %v8165 = vld [vmem:[#allocation13 + $0x3c] sm:$0xf]
        %v8166 = vld [vmem:[#allocation11 + $0x4] sm:$0xf]
        %v8167 = vld [vmem:[#allocation11 + $0xc] sm:$0xf]
        %v8168 = vld [vmem:[#allocation11 + $0x14] sm:$0xf]
        %v8169 = vld [vmem:[#allocation11 + $0x1c] sm:$0xf]
        %v8170 = vld [vmem:[#allocation11 + $0x24] sm:$0xf]
        %v8171 = vld [vmem:[#allocation11 + $0x2c] sm:$0xf]
        %v8172 = vld [vmem:[#allocation11 + $0x34] sm:$0xf]
        %v8173 = vld [vmem:[#allocation11 + $0x3c] sm:$0xf]
        %v8174 = vld [vmem:[#allocation11 + $0x44] sm:$0xf]
        %v8175 = vld [vmem:[#allocation11 + $0x4c] sm:$0xf]
        %v8176 = vld [vmem:[#allocation11 + $0x54] sm:$0xf]
        %v8177 = vld [vmem:[#allocation11 + $0x5c] sm:$0xf]
        %v8178 = vld [vmem:[#allocation11 + $0x64] sm:$0xf]
        %v8179 = vld [vmem:[#allocation11 + $0x6c] sm:$0xf]
        %v8180 = vld [vmem:[#allocation11 + $0x74] sm:$0xf]
        %v8181 = vld [vmem:[#allocation11 + $0x7c] sm:$0xf]
        %v8182 = vld [vmem:[%s9 + $0x1] sm:$0x1]
        %v8184 = vperm.slane %v8182, 0
        %v8202 = vunpack.c.l.b16 %v8166
        %v8203 = vunpack.c.l.b16 %v8167
        %v8204 = vunpack.c.l.b16 %v8168
        %v8205 = vunpack.c.l.b16 %v8169
        %v8206 = vunpack.c.l.b16 %v8170
        %v8207 = vunpack.c.l.b16 %v8171
        %v8208 = vunpack.c.l.b16 %v8172
        %v8209 = vunpack.c.l.b16 %v8173
        %v8210 = vunpack.c.l.b16 %v8174
        %v8211 = vunpack.c.l.b16 %v8175
        %v8212 = vunpack.c.l.b16 %v8176
        %v8213 = vunpack.c.l.b16 %v8177
        %v8214 = vunpack.c.l.b16 %v8178
        %v8215 = vunpack.c.l.b16 %v8179
        %v8216 = vunpack.c.l.b16 %v8180
        %v8217 = vunpack.c.l.b16 %v8181
        %v8218 = vpack.c.b16 %v8203, %v8202
        %v8219 = vpack.c.b16 %v8205, %v8204
        %v8220 = vpack.c.b16 %v8207, %v8206
        %v8221 = vpack.c.b16 %v8209, %v8208
        %v8222 = vpack.c.b16 %v8211, %v8210
        %v8223 = vpack.c.b16 %v8213, %v8212
        %v8224 = vpack.c.b16 %v8215, %v8214
        %v8225 = vpack.c.b16 %v8217, %v8216
        %8234 = vmatpush.bf16.msra.mxu0 %v8225
        %8235 = vmatpush.bf16.msra.mxu0 %v8224
        %8236 = vmatpush.bf16.msra.mxu0 %v8223
        %8237 = vmatpush.bf16.msra.mxu0 %v8222
        %8238 = vmatpush.bf16.msra.mxu0 %v8221
        %8239 = vmatpush.bf16.msra.mxu0 %v8220
        %8240 = vmatpush.bf16.msra.mxu0 %v8219
        %8241 = vmatpush.bf16.msra.mxu0 %v8218
        %8242 = vmatmul.bf16.gmra.mxu0 %v8055
        %v8243 = vpop.f32.mrf.mxu0
        %v8244 = vadd.f32 %v8184, %v8243
        %v8245 = vpop.f32.mrf.mxu0
        %v8246 = vadd.f32 %v8184, %v8245
        %8247 = vmatmul.bf16.gmra.mxu0 %v8056
        %v8248 = vpop.f32.mrf.mxu0
        %v8249 = vadd.f32 %v8184, %v8248
        %v8250 = vpop.f32.mrf.mxu0
        %v8251 = vadd.f32 %v8184, %v8250
        %8252 = vdwg.mxu0
        %v8253 = vmax.f32 %v8244, 0.0
        %v8254 = vmax.f32 %v8246, 0.0
        %v8255 = vmax.f32 %v8249, 0.0
        %v8256 = vmax.f32 %v8251, 0.0
        %v8257 = vpack.c.bf16 %v8254, %v8253
        %v8258 = vpack.c.bf16 %v8256, %v8255
        %v8259 = vld [vmem:[#allocation13 + $0x40] sm:$0xf]
        %v8260 = vld [vmem:[#allocation13 + $0x44] sm:$0xf]
        %v8261 = vld [vmem:[#allocation13 + $0x48] sm:$0xf]
        %v8262 = vld [vmem:[#allocation13 + $0x4c] sm:$0xf]
        %v8263 = vld [vmem:[#allocation13 + $0x50] sm:$0xf]
        %v8264 = vld [vmem:[#allocation13 + $0x54] sm:$0xf]
        %v8265 = vld [vmem:[#allocation13 + $0x58] sm:$0xf]
        %v8266 = vld [vmem:[#allocation13 + $0x5c] sm:$0xf]
        %v8267 = vld [vmem:[#allocation13 + $0x60] sm:$0xf]
        %v8268 = vld [vmem:[#allocation13 + $0x64] sm:$0xf]
        %v8269 = vld [vmem:[#allocation13 + $0x68] sm:$0xf]
        %v8270 = vld [vmem:[#allocation13 + $0x6c] sm:$0xf]
        %v8271 = vld [vmem:[#allocation13 + $0x70] sm:$0xf]
        %v8272 = vld [vmem:[#allocation13 + $0x74] sm:$0xf]
        %v8273 = vld [vmem:[#allocation13 + $0x78] sm:$0xf]
        %v8274 = vld [vmem:[#allocation13 + $0x7c] sm:$0xf]
        %v8291 = vunpack.c.l.b16 %v8259
        %v8292 = vunpack.c.l.b16 %v8260
        %v8293 = vunpack.c.l.b16 %v8261
        %v8294 = vunpack.c.l.b16 %v8262
        %v8295 = vunpack.c.l.b16 %v8263
        %v8296 = vunpack.c.l.b16 %v8264
        %v8297 = vunpack.c.l.b16 %v8265
        %v8298 = vunpack.c.l.b16 %v8266
        %v8299 = vunpack.c.l.b16 %v8267
        %v8300 = vunpack.c.l.b16 %v8268
        %v8301 = vunpack.c.l.b16 %v8269
        %v8302 = vunpack.c.l.b16 %v8270
        %v8303 = vunpack.c.l.b16 %v8271
        %v8304 = vunpack.c.l.b16 %v8272
        %v8305 = vunpack.c.l.b16 %v8273
        %v8306 = vunpack.c.l.b16 %v8274
        %v8307 = vpack.c.b16 %v8292, %v8291
        %v8308 = vpack.c.b16 %v8294, %v8293
        %v8309 = vpack.c.b16 %v8296, %v8295
        %v8310 = vpack.c.b16 %v8298, %v8297
        %v8311 = vpack.c.b16 %v8300, %v8299
        %v8312 = vpack.c.b16 %v8302, %v8301
        %v8313 = vpack.c.b16 %v8304, %v8303
        %v8314 = vpack.c.b16 %v8306, %v8305
        %8323 = vmatpush.bf16.msra.mxu0 %v8314
        %8324 = vmatpush.bf16.msra.mxu0 %v8313
        %8325 = vmatpush.bf16.msra.mxu0 %v8312
        %8326 = vmatpush.bf16.msra.mxu0 %v8311
        %8327 = vmatpush.bf16.msra.mxu0 %v8310
        %8328 = vmatpush.bf16.msra.mxu0 %v8309
        %8329 = vmatpush.bf16.msra.mxu0 %v8308
        %8330 = vmatpush.bf16.msra.mxu0 %v8307
        %8331 = vmatmul.bf16.gmra.mxu0 %v8257
        %v8332 = vpop.f32.mrf.mxu0
        %v8333 = vadd.f32 0.0, %v8332
        %v8334 = vpop.f32.mrf.mxu0
        %v8335 = vadd.f32 0.0, %v8334
        %8336 = vmatmul.bf16.gmra.mxu0 %v8258
        %v8337 = vpop.f32.mrf.mxu0
        %v8338 = vadd.f32 0.0, %v8337
        %v8339 = vpop.f32.mrf.mxu0
        %v8340 = vadd.f32 0.0, %v8339
        %8341 = vdwg.mxu0
        %v8358 = vunpack.c.l.b16 %v8150
        %v8359 = vunpack.c.l.b16 %v8151
        %v8360 = vunpack.c.l.b16 %v8152
        %v8361 = vunpack.c.l.b16 %v8153
        %v8362 = vunpack.c.l.b16 %v8154
        %v8363 = vunpack.c.l.b16 %v8155
        %v8364 = vunpack.c.l.b16 %v8156
        %v8365 = vunpack.c.l.b16 %v8157
        %v8366 = vunpack.c.l.b16 %v8158
        %v8367 = vunpack.c.l.b16 %v8159
        %v8368 = vunpack.c.l.b16 %v8160
        %v8369 = vunpack.c.l.b16 %v8161
        %v8370 = vunpack.c.l.b16 %v8162
        %v8371 = vunpack.c.l.b16 %v8163
        %v8372 = vunpack.c.l.b16 %v8164
        %v8373 = vunpack.c.l.b16 %v8165
        %v8374 = vpack.c.b16 %v8359, %v8358
        %v8375 = vpack.c.b16 %v8361, %v8360
        %v8376 = vpack.c.b16 %v8363, %v8362
        %v8377 = vpack.c.b16 %v8365, %v8364
        %v8378 = vpack.c.b16 %v8367, %v8366
        %v8379 = vpack.c.b16 %v8369, %v8368
        %v8380 = vpack.c.b16 %v8371, %v8370
        %v8381 = vpack.c.b16 %v8373, %v8372
        %8390 = vmatpush.bf16.msra.mxu0 %v8381
        %8391 = vmatpush.bf16.msra.mxu0 %v8380
        %8392 = vmatpush.bf16.msra.mxu0 %v8379
        %8393 = vmatpush.bf16.msra.mxu0 %v8378
        %8394 = vmatpush.bf16.msra.mxu0 %v8377
        %8395 = vmatpush.bf16.msra.mxu0 %v8376
        %8396 = vmatpush.bf16.msra.mxu0 %v8375
        %8397 = vmatpush.bf16.msra.mxu0 %v8374
        %8398 = vmatmul.bf16.gmra.mxu0 %v8148
        %v8399 = vpop.f32.mrf.mxu0
        %v8400 = vadd.f32 %v8333, %v8399
        %v8401 = vpop.f32.mrf.mxu0
        %v8402 = vadd.f32 %v8335, %v8401
        %8403 = vmatmul.bf16.gmra.mxu0 %v8149
        %v8404 = vpop.f32.mrf.mxu0
        %v8405 = vadd.f32 %v8338, %v8404
        %v8406 = vpop.f32.mrf.mxu0
        %v8407 = vadd.f32 %v8340, %v8406
        %8408 = vdwg.mxu0
        %v8409 = vld [vmem:[%s11] sm:$0x1]
        %v8411 = vperm.slane %v8409, 0
        %v8413 = vadd.f32 %v8400, %v8411
        %v8414 = vadd.f32 %v8402, %v8411
        %v8415 = vadd.f32 %v8405, %v8411
        %v8416 = vadd.f32 %v8407, %v8411
        %v8417 = vadd.f32 %v8051, %v8413
        %v8418 = vadd.f32 %v8052, %v8414
        %v8419 = vadd.f32 %v8053, %v8415
        %v8420 = vadd.f32 %v8054, %v8416
        %v8421 = vld [vmem:[%s14] sm:$0x1]
        %v8422 = vld [vmem:[%s15] sm:$0x1]
        %8423 = vadd.xlane.f32.xlu0 %v8417
        %v8424 = vpop.xlane.xlu0 %8423
        %8425 = vadd.xlane.f32.xlu0 %v8418
        %v8426 = vpop.xlane.xlu0 %8425
        %8427 = vadd.xlane.f32.xlu0 %v8419
        %v8428 = vpop.xlane.xlu0 %8427
        %8429 = vadd.xlane.f32.xlu0 %v8420
        %v8430 = vpop.xlane.xlu0 %8429
        %v8431 = vmul.f32 %v8424, %v7968
        %v8432 = vmul.f32 %v8426, %v7968
        %v8433 = vmul.f32 %v8428, %v7968
        %v8434 = vmul.f32 %v8430, %v7968
        %v8435 = vsub.f32 %v8417, %v8431
        %v8436 = vsub.f32 %v8418, %v8432
        %v8437 = vsub.f32 %v8419, %v8433
        %v8438 = vsub.f32 %v8420, %v8434
        %v8439 = vmul.f32 %v8435, %v8435
        %v8440 = vmul.f32 %v8436, %v8436
        %v8441 = vmul.f32 %v8437, %v8437
        %v8442 = vmul.f32 %v8438, %v8438
        %8443 = vadd.xlane.f32.xlu0 %v8439
        %v8444 = vpop.xlane.xlu0 %8443
        %8445 = vadd.xlane.f32.xlu0 %v8440
        %v8446 = vpop.xlane.xlu0 %8445
        %8447 = vadd.xlane.f32.xlu0 %v8441
        %v8448 = vpop.xlane.xlu0 %8447
        %8449 = vadd.xlane.f32.xlu0 %v8442
        %v8450 = vpop.xlane.xlu0 %8449
        %v8451 = vmul.f32 %v8444, %v7968
        %v8452 = vmul.f32 %v8446, %v7968
        %v8453 = vmul.f32 %v8448, %v7968
        %v8454 = vmul.f32 %v8450, %v7968
        %v8455 = vadd.f32 %v8451, 1e-05
        %v8456 = vadd.f32 %v8452, 1e-05
        %v8457 = vadd.f32 %v8453, 1e-05
        %v8458 = vadd.f32 %v8454, 1e-05
        %v8459 = vrsqrt.pop %v8455
        %v8460 = vmul.f32 %v8459, %v8455
        %v8461 = vmul.f32 %v8460, %v8459
        %v8462 = vmul.f32 0.5, %v8461
        %v8463 = vsub.f32 1.5, %v8462
        %v8464 = vmul.f32 %v8459, %v8463
        %vm8465 = vweird.f32 %v8455
        %vm8466 = vweird.f32 %v8459
        %vm8467 = vmor %vm8465, %vm8466
        %v8468 = vsel %vm8467, %v8459, %v8464
        %v8469 = vrsqrt.pop %v8456
        %v8470 = vmul.f32 %v8469, %v8456
        %v8471 = vmul.f32 %v8470, %v8469
        %v8472 = vmul.f32 0.5, %v8471
        %v8473 = vsub.f32 1.5, %v8472
        %v8474 = vmul.f32 %v8469, %v8473
        %vm8475 = vweird.f32 %v8456
        %vm8476 = vweird.f32 %v8469
        %vm8477 = vmor %vm8475, %vm8476
        %v8478 = vsel %vm8477, %v8469, %v8474
        %v8479 = vrsqrt.pop %v8457
        %v8480 = vmul.f32 %v8479, %v8457
        %v8481 = vmul.f32 %v8480, %v8479
        %v8482 = vmul.f32 0.5, %v8481
        %v8483 = vsub.f32 1.5, %v8482
        %v8484 = vmul.f32 %v8479, %v8483
        %vm8485 = vweird.f32 %v8457
        %vm8486 = vweird.f32 %v8479
        %vm8487 = vmor %vm8485, %vm8486
        %v8488 = vsel %vm8487, %v8479, %v8484
        %v8489 = vrsqrt.pop %v8458
        %v8490 = vmul.f32 %v8489, %v8458
        %v8491 = vmul.f32 %v8490, %v8489
        %v8492 = vmul.f32 0.5, %v8491
        %v8493 = vsub.f32 1.5, %v8492
        %v8494 = vmul.f32 %v8489, %v8493
        %vm8495 = vweird.f32 %v8458
        %vm8496 = vweird.f32 %v8489
        %vm8497 = vmor %vm8495, %vm8496
        %v8498 = vsel %vm8497, %v8489, %v8494
        %v8499 = vmul.f32 %v8435, %v8468
        %v8500 = vmul.f32 %v8436, %v8478
        %v8501 = vmul.f32 %v8437, %v8488
        %v8502 = vmul.f32 %v8438, %v8498
        %v8504 = vperm.slane %v8421, 0
        %v8506 = vmul.f32 %v8499, %v8504
        %v8507 = vmul.f32 %v8500, %v8504
        %v8508 = vmul.f32 %v8501, %v8504
        %v8509 = vmul.f32 %v8502, %v8504
        %v8511 = vperm.slane %v8422, 0
        %v8513 = vadd.f32 %v8506, %v8511
        %v8514 = vadd.f32 %v8507, %v8511
        %v8515 = vadd.f32 %v8508, %v8511
        %v8516 = vadd.f32 %v8509, %v8511
        %8517 = vst [vmem:[%s637] sm:$0xff] %v8513
        %8518 = vst [vmem:[%s637 + $0x8] sm:$0xff] %v8514
        %8519 = vst [vmem:[%s637 + $0x10] sm:$0xff] %v8515
        %8520 = vst [vmem:[%s637 + $0x18] sm:$0xff] %v8516
        %s8521 = sand.u32 %s385, 1
        %s8522 = scalar_lea.sflag [#allocation4], %s8521
        %s8523 = sand.u32 %s385, 1
        %s8524 = smul.addr %s8523, 32
        %s8525 = scalar_lea.vmem [#allocation14], %s8524
        // Predicated region
        $region113: #{tpu_custom_call.1} parent=83 // pred_check
          %p8526 = pneg %p395
        $region114: #{tpu_custom_call.1} parent=83 // pred_check_branch
          %8528 = sbr.rel (%p8526) target = $region116
        $region115: #{tpu_custom_call.1} parent=83 // pred_region
          %s8529 = smul.u32 2, %s36
          %8531 = vsyncadd %s8522, 0
          %s8532 = smul.addr %s8529, 2
          %s8533 = smul.addr %s8532, 8
          %s8534 = scalar_lea.hbm %s16, %s8533
          %s8535 = sshll.u32 %s8525, 4
          %s8536 = int_to_ptr.vmem [resolvable:$true] %s8535
          %s8537 = sshll.u32 %s8534, 4
          %s8538 = int_to_ptr.hbm [resolvable:$true] %s8537
          %8543 = dma.vmem_to_hbm [thread:$0]  %s8536, 512, %s8538, %s8522, 128, 128, 8
        $region116: #{tpu_custom_call.1} parent=83 // pred_fallthru
          _
      $region84: #{tpu_custom_call.1} parent=5 // pred_fallthru
        _
      %p8544 = scmp.le.s32.totalorder 2, %s31
      // Predicated region
      $region117: #{tpu_custom_call.1} parent=5 // pred_check
        %p8545 = pneg %p8544
      $region118: #{tpu_custom_call.1} parent=5 // pred_check_branch
        %8547 = sbr.rel (%p8545) target = $region120
      $region119: #{tpu_custom_call.1} parent=5 // pred_region
        %s8548 = ssub.s32 %s31, 2
        // Predicated region
        $region121: #{tpu_custom_call.1} parent=119 // pred_check
          %p8549 = pneg %p401
        $region122: #{tpu_custom_call.1} parent=119 // pred_check_branch
          %8551 = sbr.rel (%p8549) target = $region124
        $region123: #{tpu_custom_call.1} parent=119 // pred_region
          %s8552 = sand.u32 %s386, 1
          %s8553 = scalar_lea.sflag [#allocation4], %s8552
          %s8554 = sand.u32 %s386, 1
          %s8555 = smul.addr %s8554, 32
          %s8556 = scalar_lea.vmem [#allocation14], %s8555
          %8558 = dma.done %s8553, 512
        $region124: #{tpu_custom_call.1} parent=119 // pred_fallthru
          _
      $region120: #{tpu_custom_call.1} parent=5 // pred_fallthru
        _
    $region6: #{tpu_custom_call.1} parent=1 // loop_footer
      %s35 = sadd.s32 1, %s31
    $region7: #{tpu_custom_call.1} parent=1 // loop_footer_branch
      %30 = sbr.rel target = $region3
    $region8: #{tpu_custom_call.1} parent=1 // loop_exit
      _
    %8559 = vsyncpa [#allocation3], 1
    %s8560 = scalar_lea.sflag [#allocation3], 1
    %8561 = vsyncpa %s8560, 1
    %8562 = vsyncpa [#allocation6], 1
    %8563 = vsyncpa [#allocation9], 1
    %8564 = vsyncpa [#allocation12], 1
    %8565 = vsyncpa [#allocation4], 1
    %s8566 = scalar_lea.sflag [#allocation4], 1
    %8567 = vsyncpa %s8566, 1

</llo_original>
